<compile_context>
chip_gen: v7x
topology: tpu7x:2x2x1
jax: 0.10.0
libtpu: 0.0.40
codegen_flags: <defaults>
</compile_context>

<pallas_src>
import functools
import math

import jax
import jax.numpy as jnp
from jax.experimental import pallas as pl
from jax.experimental.pallas import tpu as pltpu

_LN_EPS = 1e-5          # nn.LayerNorm default eps
_H_TRUE = 750           # logical hidden width (matches PyTorch)
_H_PAD = 768            # lane-aligned hidden width (6 * 128)
_LANE = 128

_VMEM_SPEC = pl.BlockSpec(memory_space=pltpu.MemorySpace.VMEM)


def _bf16(x):
    return x.astype(jnp.bfloat16)


def _ln_pair(xs, xa, g_s, b_s, g_a, b_a, count):
    """LayerNorm over the virtual concatenation [xs, xa] without materializing it."""
    total = jnp.sum(xs, axis=-1, keepdims=True) + jnp.sum(xa, axis=-1, keepdims=True)
    mu = total / float(count)
    ds = xs - mu
    da = xa - mu
    var = (jnp.sum(ds * ds, axis=-1, keepdims=True)
           + jnp.sum(da * da, axis=-1, keepdims=True)) / float(count)
    inv = jax.lax.rsqrt(var + _LN_EPS)
    return ds * inv * g_s + b_s, da * inv * g_a + b_a


def _ln_hidden(x, gamma, beta, true_dim):
    """LayerNorm over a lane-padded hidden activation (B, _H_PAD).

    Lanes >= true_dim are guaranteed zero on input; statistics use only the first
    true_dim lanes; gamma/beta are zero-padded so padded lanes stay exactly zero."""
    mu = jnp.sum(x, axis=-1, keepdims=True) / float(true_dim)
    lane = jax.lax.broadcasted_iota(jnp.int32, x.shape, 1)
    diff = jnp.where(lane < true_dim, x - mu, 0.0)
    var = jnp.sum(diff * diff, axis=-1, keepdims=True) / float(true_dim)
    return diff * jax.lax.rsqrt(var + _LN_EPS) * gamma + beta


def _decoder_body(state, z, hp_ref, sp_ref,
                  d1ws_ref, d1wz_ref, d2w_ref, d3w_ref,
                  *, sd, ld, ad, max_action):
    g_s = sp_ref[6][:, :sd]
    b_s = sp_ref[7][:, :sd]
    g_z = sp_ref[8][:, :ld]
    b_z = sp_ref[9][:, :ld]
    ns, nz = _ln_pair(state, z, g_s, b_s, g_z, b_z, sd + ld)
    a = (jnp.dot(_bf16(ns), d1ws_ref[...], preferred_element_type=jnp.float32)
         + jnp.dot(_bf16(nz), d1wz_ref[...], preferred_element_type=jnp.float32)
         + hp_ref[6])
    a = jnp.maximum(a, 0.0)
    a = _ln_hidden(a, hp_ref[7], hp_ref[8], _H_TRUE)
    a = jnp.maximum(
        jnp.dot(_bf16(a), d2w_ref[...], preferred_element_type=jnp.float32) + hp_ref[9],
        0.0)
    a = _ln_hidden(a, hp_ref[10], hp_ref[11], _H_TRUE)
    u = (jnp.dot(_bf16(a), d3w_ref[...], preferred_element_type=jnp.float32)
         + sp_ref[10][:, :ad])
    return max_action * jnp.tanh(u)


def _fused_vae_kernel(state_ref, action_ref, noise_ref, hp_ref, sp_ref,
                      e1ws_ref, e1wa_ref, e2w_ref, mw_ref, lw_ref,
                      d1ws_ref, d1wz_ref, d2w_ref, d3w_ref,
                      u_ref, mean_ref, std_ref,
                      *, sd, ad, ld, max_action):
    state = state_ref[...]
    action = action_ref[...]

    # ----- encoder -----
    g_s = sp_ref[0][:, :sd]
    b_s = sp_ref[1][:, :sd]
    g_a = sp_ref[2][:, :ad]
    b_a = sp_ref[3][:, :ad]
    ns, na = _ln_pair(state, action, g_s, b_s, g_a, b_a, sd + ad)
    h = (jnp.dot(_bf16(ns), e1ws_ref[...], preferred_element_type=jnp.float32)
         + jnp.dot(_bf16(na), e1wa_ref[...], preferred_element_type=jnp.float32)
         + hp_ref[0])
    h = jnp.maximum(h, 0.0)
    h = _ln_hidden(h, hp_ref[1], hp_ref[2], _H_TRUE)
    h = jnp.maximum(
        jnp.dot(_bf16(h), e2w_ref[...], preferred_element_type=jnp.float32) + hp_ref[3],
        0.0)
    h = _ln_hidden(h, hp_ref[4], hp_ref[5], _H_TRUE)

    hb = _bf16(h)
    mean = jnp.dot(hb, mw_ref[...], preferred_element_type=jnp.float32) + sp_ref[4][:, :ld]
    log_std = jnp.dot(hb, lw_ref[...], preferred_element_type=jnp.float32) + sp_ref[5][:, :ld]
    log_std = jnp.clip(log_std, -4.0, 15.0)
    std = jnp.exp(log_std)
    z = mean + std * noise_ref[...]

    mean_ref[...] = mean
    std_ref[...] = std

    # ----- decoder (fused; consumes z straight from registers) -----
    u_ref[...] = _decoder_body(state, z, hp_ref, sp_ref,
                               d1ws_ref, d1wz_ref, d2w_ref, d3w_ref,
                               sd=sd, ld=ld, ad=ad, max_action=max_action)


def _decoder_only_kernel(state_ref, z_ref, hp_ref, sp_ref,
                         d1ws_ref, d1wz_ref, d2w_ref, d3w_ref, u_ref,
                         *, sd, ld, ad, max_action):
    u_ref[...] = _decoder_body(state_ref[...], z_ref[...], hp_ref, sp_ref,
                               d1ws_ref, d1wz_ref, d2w_ref, d3w_ref,
                               sd=sd, ld=ld, ad=ad, max_action=max_action)


class VAEPallas:
    """Pallas-TPU implementation of the BCQ VAE forward pass."""

    def __init__(self, state_dim, action_dim, latent_dim, max_action, key):
        assert max(state_dim, action_dim, latent_dim) <= _LANE
        self.state_dim = state_dim
        self.action_dim = action_dim
        self.latent_dim = latent_dim
        self.max_action = float(max_action)

        def dense(k, fan_in, fan_out):
            kw, kb = jax.random.split(k)
            bound = 1.0 / math.sqrt(fan_in)
            w = jax.random.uniform(kw, (fan_in, fan_out), jnp.float32, -bound, bound)
            b = jax.random.uniform(kb, (1, fan_out), jnp.float32, -bound, bound)
            return w, b

        def ln(dim):  # PyTorch default: gamma=1, beta=0
            return jnp.ones((1, dim), jnp.float32), jnp.zeros((1, dim), jnp.float32)

        ks = jax.random.split(key, 7)
        sa = state_dim + action_dim
        sz = state_dim + latent_dim

        # f32 master parameters (exact PyTorch layout semantics, weights [in, out])
        self.e_norm1 = ln(sa)
        self.e1 = dense(ks[0], sa, _H_TRUE)
        self.e_norm2 = ln(_H_TRUE)
        self.e2 = dense(ks[1], _H_TRUE, _H_TRUE)
        self.e_norm3 = ln(_H_TRUE)
        self.mean = dense(ks[2], _H_TRUE, latent_dim)
        self.log_std = dense(ks[3], _H_TRUE, latent_dim)
        self.d_norm1 = ln(sz)
        self.d1 = dense(ks[4], sz, _H_TRUE)
        self.d_norm2 = ln(_H_TRUE)
        self.d2 = dense(ks[5], _H_TRUE, _H_TRUE)
        self.d_norm3 = ln(_H_TRUE)
        self.d3 = dense(ks[6], _H_TRUE, action_dim)

        # ---- kernel-ready parameters (padded to 768, bf16 weights, packed vectors) ----
        pad_h = _H_PAD - _H_TRUE

        def pad_cols(x):  # (r, 750) -> (r, 768)
            return jnp.pad(x, ((0, 0), (0, pad_h)))

        def pad_rows(x):  # (750, c) -> (768, c)
            return jnp.pad(x, ((0, pad_h), (0, 0)))

        def pad_lane(x):  # (1, n) -> (1, 128)
            return jnp.pad(x, ((0, 0), (0, _LANE - x.shape[1])))

        e1w_p = pad_cols(self.e1[0])
        d1w_p = pad_cols(self.d1[0])
        self._e1w_s = _bf16(e1w_p[:state_dim])
        self._e1w_a = _bf16(e1w_p[state_dim:])
        self._e2w = _bf16(jnp.pad(self.e2[0], ((0, pad_h), (0, pad_h))))
        self._mw = _bf16(pad_rows(self.mean[0]))
        self._lw = _bf16(pad_rows(self.log_std[0]))
        self._d1w_s = _bf16(d1w_p[:state_dim])
        self._d1w_z = _bf16(d1w_p[state_dim:])
        self._d2w = _bf16(jnp.pad(self.d2[0], ((0, pad_h), (0, pad_h))))
        self._d3w = _bf16(pad_rows(self.d3[0]))

        # hidden-width (768) vectors packed into one array: (12, 1, 768) f32
        hp_rows = [
            pad_cols(self.e1[1]),        # 0: e1 bias
            pad_cols(self.e_norm2[0]),   # 1: e_norm2 gamma
            pad_cols(self.e_norm2[1]),   # 2: e_norm2 beta
            pad_cols(self.e2[1]),        # 3: e2 bias
            pad_cols(self.e_norm3[0]),   # 4: e_norm3 gamma
            pad_cols(self.e_norm3[1]),   # 5: e_norm3 beta
            pad_cols(self.d1[1]),        # 6: d1 bias
            pad_cols(self.d_norm2[0]),   # 7: d_norm2 gamma
            pad_cols(self.d_norm2[1]),   # 8: d_norm2 beta
            pad_cols(self.d2[1]),        # 9: d2 bias
            pad_cols(self.d_norm3[0]),   # 10: d_norm3 gamma
            pad_cols(self.d_norm3[1]),   # 11: d_norm3 beta
        ]
        self._hp = jnp.stack(hp_rows, axis=0)

        # narrow vectors packed into one lane-padded array: (11, 1, 128) f32
        en1_g, en1_b = self.e_norm1
        dn1_g, dn1_b = self.d_norm1
        sp_rows = [
            pad_lane(en1_g[:, :state_dim]),   # 0: e_norm1 gamma (state part)
            pad_lane(en1_b[:, :state_dim]),   # 1: e_norm1 beta  (state part)
            pad_lane(en1_g[:, state_dim:]),   # 2: e_norm1 gamma (action part)
            pad_lane(en1_b[:, state_dim:]),   # 3: e_norm1 beta  (action part)
            pad_lane(self.mean[1]),           # 4: mean bias
            pad_lane(self.log_std[1]),        # 5: log_std bias
            pad_lane(dn1_g[:, :state_dim]),   # 6: d_norm1 gamma (state part)
            pad_lane(dn1_b[:, :state_dim]),   # 7: d_norm1 beta  (state part)
            pad_lane(dn1_g[:, state_dim:]),   # 8: d_norm1 gamma (latent part)
            pad_lane(dn1_b[:, state_dim:]),   # 9: d_norm1 beta  (latent part)
            pad_lane(self.d3[1]),             # 10: d3 bias
        ]
        self._sp = jnp.stack(sp_rows, axis=0)

    def __call__(self, state, action, noise):
        """noise plays the role of torch.randn_like(std)."""
        B = state.shape[0]
        kernel = functools.partial(
            _fused_vae_kernel, sd=self.state_dim, ad=self.action_dim,
            ld=self.latent_dim, max_action=self.max_action)
        u, mean, std = pl.pallas_call(
            kernel,
            out_shape=(
                jax.ShapeDtypeStruct((B, self.action_dim), jnp.float32),
                jax.ShapeDtypeStruct((B, self.latent_dim), jnp.float32),
                jax.ShapeDtypeStruct((B, self.latent_dim), jnp.float32),
            ),
            in_specs=[_VMEM_SPEC] * 14,
            out_specs=(_VMEM_SPEC, _VMEM_SPEC, _VMEM_SPEC),
        )(state, action, noise, self._hp, self._sp,
          self._e1w_s, self._e1w_a, self._e2w, self._mw, self._lw,
          self._d1w_s, self._d1w_z, self._d2w, self._d3w)
        return u, mean, std

    def decode(self, state, z):
        # TODO(synk): the PyTorch decode(z=None) branch samples clamped Gaussian z
        # internally; here the caller must supply z explicitly.
        B = state.shape[0]
        kernel = functools.partial(
            _decoder_only_kernel, sd=self.state_dim, ld=self.latent_dim,
            ad=self.action_dim, max_action=self.max_action)
        return pl.pallas_call(
            kernel,
            out_shape=jax.ShapeDtypeStruct((B, self.action_dim), jnp.float32),
            in_specs=[_VMEM_SPEC] * 8,
            out_specs=_VMEM_SPEC,
        )(state, z, self._hp, self._sp,
          self._d1w_s, self._d1w_z, self._d2w, self._d3w)


# ----------------------- pure-JAX f32 reference (PyTorch semantics) -----------------------
def _ref_linear(x, p):
    w, b = p
    return jnp.dot(x, w) + b


def _ref_ln(x, p):
    g, b = p
    mu = jnp.mean(x, axis=-1, keepdims=True)
    var = jnp.mean((x - mu) ** 2, axis=-1, keepdims=True)
    return (x - mu) / jnp.sqrt(var + _LN_EPS) * g + b


def _reference_decode(vae, state, z):
    a = _ref_ln(jnp.concatenate([state, z], axis=1), vae.d_norm1)
    a = jax.nn.relu(_ref_linear(a, vae.d1))
    a = _ref_ln(a, vae.d_norm2)
    a = jax.nn.relu(_ref_linear(a, vae.d2))
    a = _ref_ln(a, vae.d_norm3)
    return vae.max_action * jnp.tanh(_ref_linear(a, vae.d3))


def _reference_forward(vae, state, action, noise):
    h = _ref_ln(jnp.concatenate([state, action], axis=1), vae.e_norm1)
    h = jax.nn.relu(_ref_linear(h, vae.e1))
    h = _ref_ln(h, vae.e_norm2)
    h = jax.nn.relu(_ref_linear(h, vae.e2))
    h = _ref_ln(h, vae.e_norm3)
    mean = _ref_linear(h, vae.mean)
    log_std = jnp.clip(_ref_linear(h, vae.log_std), -4.0, 15.0)
    std = jnp.exp(log_std)
    z = mean + std * noise
    return _reference_decode(vae, state, z), mean, std


if __name__ == "__main__":
    state_dim, action_dim, latent_dim = 16, 8, 12
    max_action = 1.0
    batch = 4

    key = jax.random.PRNGKey(0)
    k_params, k_state, k_action, k_noise, k_z = jax.random.split(key, 5)

    vae = VAEPallas(state_dim, action_dim, latent_dim, max_action, k_params)

    state = jax.random.normal(k_state, (batch, state_dim), jnp.float32)
    action = jax.random.normal(k_action, (batch, action_dim), jnp.float32)
    # TODO(synk): torch.randn_like RNG cannot be reproduced bit-exactly; Gaussian
    # noise is generated with JAX and fed to the kernel explicitly.
    noise = jax.random.normal(k_noise, (batch, latent_dim), jnp.float32)

    u, mean, std = vae(state, action, noise)
    jax.block_until_ready((u, mean, std))

    u_ref, mean_ref, std_ref = _reference_forward(vae, state, action, noise)
    assert u.shape == (batch, action_dim)
    assert mean.shape == (batch, latent_dim) and std.shape == (batch, latent_dim)
    # bf16 weights widen the tolerance slightly vs the f32 reference.
    assert jnp.allclose(u, u_ref, atol=2e-2, rtol=2e-2)
    assert jnp.allclose(mean, mean_ref, atol=2e-2, rtol=2e-2)
    assert jnp.allclose(std, std_ref, atol=2e-2, rtol=2e-2)

    # Exercise the standalone decode path (used heavily by BCQ).
    z_in = jnp.clip(jax.random.normal(k_z, (batch, latent_dim), jnp.float32), -0.5, 0.5)
    u2 = vae.decode(state, z_in)
    jax.block_until_ready(u2)
    assert jnp.allclose(u2, _reference_decode(vae, state, z_in), atol=2e-2, rtol=2e-2)

    print("KERNEL_OK")
</pallas_src>

<mosaic_0001>
module attributes {stable_mosaic.version = 11 : i64} {
  func.func @_fused_vae_kernel(%arg0: memref<4x16xf32, #tpu.memory_space<vmem>>, %arg1: memref<4x8xf32, #tpu.memory_space<vmem>>, %arg2: memref<4x12xf32, #tpu.memory_space<vmem>>, %arg3: memref<12x1x768xf32, #tpu.memory_space<vmem>>, %arg4: memref<11x1x128xf32, #tpu.memory_space<vmem>>, %arg5: memref<16x768xbf16, #tpu.memory_space<vmem>>, %arg6: memref<8x768xbf16, #tpu.memory_space<vmem>>, %arg7: memref<768x768xbf16, #tpu.memory_space<vmem>>, %arg8: memref<768x12xbf16, #tpu.memory_space<vmem>>, %arg9: memref<768x12xbf16, #tpu.memory_space<vmem>>, %arg10: memref<16x768xbf16, #tpu.memory_space<vmem>>, %arg11: memref<12x768xbf16, #tpu.memory_space<vmem>>, %arg12: memref<768x768xbf16, #tpu.memory_space<vmem>>, %arg13: memref<768x8xbf16, #tpu.memory_space<vmem>>, %arg14: memref<4x8xf32, #tpu.memory_space<vmem>>, %arg15: memref<4x12xf32, #tpu.memory_space<vmem>>, %arg16: memref<4x12xf32, #tpu.memory_space<vmem>>) attributes {dimension_semantics = [], scalar_prefetch = 0 : i64, scratch_operands = 0 : i64, tpu.core_type = #tpu.core_type<tc>} {
    %c0 = arith.constant 0 : index
    %c0_0 = arith.constant 0 : index
    %0 = vector.load %arg0[%c0, %c0_0] : memref<4x16xf32, #tpu.memory_space<vmem>>, vector<4x16xf32>
    %c0_1 = arith.constant 0 : index
    %c0_2 = arith.constant 0 : index
    %1 = vector.load %arg1[%c0_1, %c0_2] : memref<4x8xf32, #tpu.memory_space<vmem>>, vector<4x8xf32>
    %c0_3 = arith.constant 0 : index
    %c0_4 = arith.constant 0 : index
    %c0_5 = arith.constant 0 : index
    %2 = vector.load %arg4[%c0_3, %c0_4, %c0_5] : memref<11x1x128xf32, #tpu.memory_space<vmem>>, vector<1x1x128xf32>
    %3 = vector.shape_cast %2 : vector<1x1x128xf32> to vector<1x128xf32>
    %4 = vector.extract_strided_slice %3 {offsets = [0, 0], sizes = [1, 16], strides = [1, 1]} : vector<1x128xf32> to vector<1x16xf32>
    %c1 = arith.constant 1 : index
    %c0_6 = arith.constant 0 : index
    %c0_7 = arith.constant 0 : index
    %5 = vector.load %arg4[%c1, %c0_6, %c0_7] : memref<11x1x128xf32, #tpu.memory_space<vmem>>, vector<1x1x128xf32>
    %6 = vector.shape_cast %5 : vector<1x1x128xf32> to vector<1x128xf32>
    %7 = vector.extract_strided_slice %6 {offsets = [0, 0], sizes = [1, 16], strides = [1, 1]} : vector<1x128xf32> to vector<1x16xf32>
    %c2 = arith.constant 2 : index
    %c0_8 = arith.constant 0 : index
    %c0_9 = arith.constant 0 : index
    %8 = vector.load %arg4[%c2, %c0_8, %c0_9] : memref<11x1x128xf32, #tpu.memory_space<vmem>>, vector<1x1x128xf32>
    %9 = vector.shape_cast %8 : vector<1x1x128xf32> to vector<1x128xf32>
    %10 = vector.extract_strided_slice %9 {offsets = [0, 0], sizes = [1, 8], strides = [1, 1]} : vector<1x128xf32> to vector<1x8xf32>
    %c3 = arith.constant 3 : index
    %c0_10 = arith.constant 0 : index
    %c0_11 = arith.constant 0 : index
    %11 = vector.load %arg4[%c3, %c0_10, %c0_11] : memref<11x1x128xf32, #tpu.memory_space<vmem>>, vector<1x1x128xf32>
    %12 = vector.shape_cast %11 : vector<1x1x128xf32> to vector<1x128xf32>
    %13 = vector.extract_strided_slice %12 {offsets = [0, 0], sizes = [1, 8], strides = [1, 1]} : vector<1x128xf32> to vector<1x8xf32>
    %cst = arith.constant dense<0.000000e+00> : vector<4xf32>
    %14 = vector.multi_reduction <add>, %0, %cst [1] : vector<4x16xf32> to vector<4xf32>
    %15 = vector.shape_cast %14 : vector<4xf32> to vector<4x1xf32>
    %cst_12 = arith.constant dense<0.000000e+00> : vector<4xf32>
    %16 = vector.multi_reduction <add>, %1, %cst_12 [1] : vector<4x8xf32> to vector<4xf32>
    %17 = vector.shape_cast %16 : vector<4xf32> to vector<4x1xf32>
    %18 = arith.addf %15, %17 : vector<4x1xf32>
    %cst_13 = arith.constant 2.400000e+01 : f32
    %19 = vector.broadcast %cst_13 : f32 to vector<4x1xf32>
    %20 = arith.divf %18, %19 : vector<4x1xf32>
    %21 = vector.broadcast %20 : vector<4x1xf32> to vector<4x16xf32>
    %22 = arith.subf %0, %21 : vector<4x16xf32>
    %23 = vector.broadcast %20 : vector<4x1xf32> to vector<4x8xf32>
    %24 = arith.subf %1, %23 : vector<4x8xf32>
    %25 = arith.mulf %22, %22 : vector<4x16xf32>
    %cst_14 = arith.constant dense<0.000000e+00> : vector<4xf32>
    %26 = vector.multi_reduction <add>, %25, %cst_14 [1] : vector<4x16xf32> to vector<4xf32>
    %27 = vector.shape_cast %26 : vector<4xf32> to vector<4x1xf32>
    %28 = arith.mulf %24, %24 : vector<4x8xf32>
    %cst_15 = arith.constant dense<0.000000e+00> : vector<4xf32>
    %29 = vector.multi_reduction <add>, %28, %cst_15 [1] : vector<4x8xf32> to vector<4xf32>
    %30 = vector.shape_cast %29 : vector<4xf32> to vector<4x1xf32>
    %31 = arith.addf %27, %30 : vector<4x1xf32>
    %cst_16 = arith.constant 2.400000e+01 : f32
    %32 = vector.broadcast %cst_16 : f32 to vector<4x1xf32>
    %33 = arith.divf %31, %32 : vector<4x1xf32>
    %cst_17 = arith.constant 9.99999974E-6 : f32
    %34 = vector.broadcast %cst_17 : f32 to vector<4x1xf32>
    %35 = arith.addf %33, %34 : vector<4x1xf32>
    %36 = math.rsqrt %35 : vector<4x1xf32>
    %37 = vector.broadcast %36 : vector<4x1xf32> to vector<4x16xf32>
    %38 = arith.mulf %22, %37 : vector<4x16xf32>
    %39 = vector.broadcast %4 : vector<1x16xf32> to vector<4x16xf32>
    %40 = arith.mulf %38, %39 : vector<4x16xf32>
    %41 = vector.broadcast %7 : vector<1x16xf32> to vector<4x16xf32>
    %42 = arith.addf %40, %41 : vector<4x16xf32>
    %43 = vector.broadcast %36 : vector<4x1xf32> to vector<4x8xf32>
    %44 = arith.mulf %24, %43 : vector<4x8xf32>
    %45 = vector.broadcast %10 : vector<1x8xf32> to vector<4x8xf32>
    %46 = arith.mulf %44, %45 : vector<4x8xf32>
    %47 = vector.broadcast %13 : vector<1x8xf32> to vector<4x8xf32>
    %48 = arith.addf %46, %47 : vector<4x8xf32>
    %49 = arith.truncf %42 : vector<4x16xf32> to vector<4x16xbf16>
    %c0_18 = arith.constant 0 : index
    %c0_19 = arith.constant 0 : index
    %50 = vector.load %arg5[%c0_18, %c0_19] : memref<16x768xbf16, #tpu.memory_space<vmem>>, vector<16x768xbf16>
    %cst_20 = arith.constant dense<0.000000e+00> : vector<4x768xf32>
    %51 = tpu.matmul %49, %50, %cst_20 {dimension_numbers = #tpu.dot_dimension_numbers<[1], [0], [0], [1], [0, 0, 1, 1], [], []>} : vector<4x16xbf16>, vector<16x768xbf16>, vector<4x768xf32> -> vector<4x768xf32>
    %52 = arith.truncf %48 : vector<4x8xf32> to vector<4x8xbf16>
    %c0_21 = arith.constant 0 : index
    %c0_22 = arith.constant 0 : index
    %53 = vector.load %arg6[%c0_21, %c0_22] : memref<8x768xbf16, #tpu.memory_space<vmem>>, vector<8x768xbf16>
    %cst_23 = arith.constant dense<0.000000e+00> : vector<4x768xf32>
    %54 = tpu.matmul %52, %53, %cst_23 {dimension_numbers = #tpu.dot_dimension_numbers<[1], [0], [0], [1], [0, 0, 1, 1], [], []>} : vector<4x8xbf16>, vector<8x768xbf16>, vector<4x768xf32> -> vector<4x768xf32>
    %55 = arith.addf %51, %54 : vector<4x768xf32>
    %c0_24 = arith.constant 0 : index
    %c0_25 = arith.constant 0 : index
    %c0_26 = arith.constant 0 : index
    %56 = vector.load %arg3[%c0_24, %c0_25, %c0_26] : memref<12x1x768xf32, #tpu.memory_space<vmem>>, vector<1x1x768xf32>
    %57 = vector.shape_cast %56 : vector<1x1x768xf32> to vector<1x768xf32>
    %58 = vector.broadcast %57 : vector<1x768xf32> to vector<4x768xf32>
    %59 = arith.addf %55, %58 : vector<4x768xf32>
    %cst_27 = arith.constant 0.000000e+00 : f32
    %60 = vector.broadcast %cst_27 : f32 to vector<4x768xf32>
    %61 = arith.maximumf %59, %60 : vector<4x768xf32>
    %c1_28 = arith.constant 1 : index
    %c0_29 = arith.constant 0 : index
    %c0_30 = arith.constant 0 : index
    %62 = vector.load %arg3[%c1_28, %c0_29, %c0_30] : memref<12x1x768xf32, #tpu.memory_space<vmem>>, vector<1x1x768xf32>
    %63 = vector.shape_cast %62 : vector<1x1x768xf32> to vector<1x768xf32>
    %c2_31 = arith.constant 2 : index
    %c0_32 = arith.constant 0 : index
    %c0_33 = arith.constant 0 : index
    %64 = vector.load %arg3[%c2_31, %c0_32, %c0_33] : memref<12x1x768xf32, #tpu.memory_space<vmem>>, vector<1x1x768xf32>
    %65 = vector.shape_cast %64 : vector<1x1x768xf32> to vector<1x768xf32>
    %cst_34 = arith.constant dense<0.000000e+00> : vector<4xf32>
    %66 = vector.multi_reduction <add>, %61, %cst_34 [1] : vector<4x768xf32> to vector<4xf32>
    %67 = vector.shape_cast %66 : vector<4xf32> to vector<4x1xf32>
    %cst_35 = arith.constant 7.500000e+02 : f32
    %68 = vector.broadcast %cst_35 : f32 to vector<4x1xf32>
    %69 = arith.divf %67, %68 : vector<4x1xf32>
    %70 = tpu.iota {dimensions = array<i32: 1>} : vector<4x768xi32>
    %c750_i32 = arith.constant 750 : i32
    %71 = vector.broadcast %c750_i32 : i32 to vector<4x768xi32>
    %72 = arith.cmpi slt, %70, %71 : vector<4x768xi32>
    %73 = vector.broadcast %69 : vector<4x1xf32> to vector<4x768xf32>
    %74 = arith.subf %61, %73 : vector<4x768xf32>
    %cst_36 = arith.constant 0.000000e+00 : f32
    %75 = vector.broadcast %cst_36 : f32 to vector<4x768xf32>
    %76 = arith.select %72, %74, %75 : vector<4x768xi1>, vector<4x768xf32>
    %77 = arith.mulf %76, %76 : vector<4x768xf32>
    %cst_37 = arith.constant dense<0.000000e+00> : vector<4xf32>
    %78 = vector.multi_reduction <add>, %77, %cst_37 [1] : vector<4x768xf32> to vector<4xf32>
    %79 = vector.shape_cast %78 : vector<4xf32> to vector<4x1xf32>
    %cst_38 = arith.constant 7.500000e+02 : f32
    %80 = vector.broadcast %cst_38 : f32 to vector<4x1xf32>
    %81 = arith.divf %79, %80 : vector<4x1xf32>
    %cst_39 = arith.constant 9.99999974E-6 : f32
    %82 = vector.broadcast %cst_39 : f32 to vector<4x1xf32>
    %83 = arith.addf %81, %82 : vector<4x1xf32>
    %84 = math.rsqrt %83 : vector<4x1xf32>
    %85 = vector.broadcast %84 : vector<4x1xf32> to vector<4x768xf32>
    %86 = arith.mulf %76, %85 : vector<4x768xf32>
    %87 = vector.broadcast %63 : vector<1x768xf32> to vector<4x768xf32>
    %88 = arith.mulf %86, %87 : vector<4x768xf32>
    %89 = vector.broadcast %65 : vector<1x768xf32> to vector<4x768xf32>
    %90 = arith.addf %88, %89 : vector<4x768xf32>
    %91 = arith.truncf %90 : vector<4x768xf32> to vector<4x768xbf16>
    %c0_40 = arith.constant 0 : index
    %c0_41 = arith.constant 0 : index
    %92 = vector.load %arg7[%c0_40, %c0_41] : memref<768x768xbf16, #tpu.memory_space<vmem>>, vector<768x768xbf16>
    %cst_42 = arith.constant dense<0.000000e+00> : vector<4x768xf32>
    %93 = tpu.matmul %91, %92, %cst_42 {dimension_numbers = #tpu.dot_dimension_numbers<[1], [0], [0], [1], [0, 0, 1, 1], [], []>} : vector<4x768xbf16>, vector<768x768xbf16>, vector<4x768xf32> -> vector<4x768xf32>
    %c3_43 = arith.constant 3 : index
    %c0_44 = arith.constant 0 : index
    %c0_45 = arith.constant 0 : index
    %94 = vector.load %arg3[%c3_43, %c0_44, %c0_45] : memref<12x1x768xf32, #tpu.memory_space<vmem>>, vector<1x1x768xf32>
    %95 = vector.shape_cast %94 : vector<1x1x768xf32> to vector<1x768xf32>
    %96 = vector.broadcast %95 : vector<1x768xf32> to vector<4x768xf32>
    %97 = arith.addf %93, %96 : vector<4x768xf32>
    %cst_46 = arith.constant 0.000000e+00 : f32
    %98 = vector.broadcast %cst_46 : f32 to vector<4x768xf32>
    %99 = arith.maximumf %97, %98 : vector<4x768xf32>
    %c4 = arith.constant 4 : index
    %c0_47 = arith.constant 0 : index
    %c0_48 = arith.constant 0 : index
    %100 = vector.load %arg3[%c4, %c0_47, %c0_48] : memref<12x1x768xf32, #tpu.memory_space<vmem>>, vector<1x1x768xf32>
    %101 = vector.shape_cast %100 : vector<1x1x768xf32> to vector<1x768xf32>
    %c5 = arith.constant 5 : index
    %c0_49 = arith.constant 0 : index
    %c0_50 = arith.constant 0 : index
    %102 = vector.load %arg3[%c5, %c0_49, %c0_50] : memref<12x1x768xf32, #tpu.memory_space<vmem>>, vector<1x1x768xf32>
    %103 = vector.shape_cast %102 : vector<1x1x768xf32> to vector<1x768xf32>
    %cst_51 = arith.constant dense<0.000000e+00> : vector<4xf32>
    %104 = vector.multi_reduction <add>, %99, %cst_51 [1] : vector<4x768xf32> to vector<4xf32>
    %105 = vector.shape_cast %104 : vector<4xf32> to vector<4x1xf32>
    %cst_52 = arith.constant 7.500000e+02 : f32
    %106 = vector.broadcast %cst_52 : f32 to vector<4x1xf32>
    %107 = arith.divf %105, %106 : vector<4x1xf32>
    %108 = tpu.iota {dimensions = array<i32: 1>} : vector<4x768xi32>
    %c750_i32_53 = arith.constant 750 : i32
    %109 = vector.broadcast %c750_i32_53 : i32 to vector<4x768xi32>
    %110 = arith.cmpi slt, %108, %109 : vector<4x768xi32>
    %111 = vector.broadcast %107 : vector<4x1xf32> to vector<4x768xf32>
    %112 = arith.subf %99, %111 : vector<4x768xf32>
    %cst_54 = arith.constant 0.000000e+00 : f32
    %113 = vector.broadcast %cst_54 : f32 to vector<4x768xf32>
    %114 = arith.select %110, %112, %113 : vector<4x768xi1>, vector<4x768xf32>
    %115 = arith.mulf %114, %114 : vector<4x768xf32>
    %cst_55 = arith.constant dense<0.000000e+00> : vector<4xf32>
    %116 = vector.multi_reduction <add>, %115, %cst_55 [1] : vector<4x768xf32> to vector<4xf32>
    %117 = vector.shape_cast %116 : vector<4xf32> to vector<4x1xf32>
    %cst_56 = arith.constant 7.500000e+02 : f32
    %118 = vector.broadcast %cst_56 : f32 to vector<4x1xf32>
    %119 = arith.divf %117, %118 : vector<4x1xf32>
    %cst_57 = arith.constant 9.99999974E-6 : f32
    %120 = vector.broadcast %cst_57 : f32 to vector<4x1xf32>
    %121 = arith.addf %119, %120 : vector<4x1xf32>
    %122 = math.rsqrt %121 : vector<4x1xf32>
    %123 = vector.broadcast %122 : vector<4x1xf32> to vector<4x768xf32>
    %124 = arith.mulf %114, %123 : vector<4x768xf32>
    %125 = vector.broadcast %101 : vector<1x768xf32> to vector<4x768xf32>
    %126 = arith.mulf %124, %125 : vector<4x768xf32>
    %127 = vector.broadcast %103 : vector<1x768xf32> to vector<4x768xf32>
    %128 = arith.addf %126, %127 : vector<4x768xf32>
    %129 = arith.truncf %128 : vector<4x768xf32> to vector<4x768xbf16>
    %c0_58 = arith.constant 0 : index
    %c0_59 = arith.constant 0 : index
    %130 = vector.load %arg8[%c0_58, %c0_59] : memref<768x12xbf16, #tpu.memory_space<vmem>>, vector<768x12xbf16>
    %cst_60 = arith.constant dense<0.000000e+00> : vector<4x12xf32>
    %131 = tpu.matmul %129, %130, %cst_60 {dimension_numbers = #tpu.dot_dimension_numbers<[1], [0], [0], [1], [0, 0, 1, 1], [], []>} : vector<4x768xbf16>, vector<768x12xbf16>, vector<4x12xf32> -> vector<4x12xf32>
    %c4_61 = arith.constant 4 : index
    %c0_62 = arith.constant 0 : index
    %c0_63 = arith.constant 0 : index
    %132 = vector.load %arg4[%c4_61, %c0_62, %c0_63] : memref<11x1x128xf32, #tpu.memory_space<vmem>>, vector<1x1x128xf32>
    %133 = vector.shape_cast %132 : vector<1x1x128xf32> to vector<1x128xf32>
    %134 = vector.extract_strided_slice %133 {offsets = [0, 0], sizes = [1, 12], strides = [1, 1]} : vector<1x128xf32> to vector<1x12xf32>
    %135 = vector.broadcast %134 : vector<1x12xf32> to vector<4x12xf32>
    %136 = arith.addf %131, %135 : vector<4x12xf32>
    %c0_64 = arith.constant 0 : index
    %c0_65 = arith.constant 0 : index
    %137 = vector.load %arg9[%c0_64, %c0_65] : memref<768x12xbf16, #tpu.memory_space<vmem>>, vector<768x12xbf16>
    %cst_66 = arith.constant dense<0.000000e+00> : vector<4x12xf32>
    %138 = tpu.matmul %129, %137, %cst_66 {dimension_numbers = #tpu.dot_dimension_numbers<[1], [0], [0], [1], [0, 0, 1, 1], [], []>} : vector<4x768xbf16>, vector<768x12xbf16>, vector<4x12xf32> -> vector<4x12xf32>
    %c5_67 = arith.constant 5 : index
    %c0_68 = arith.constant 0 : index
    %c0_69 = arith.constant 0 : index
    %139 = vector.load %arg4[%c5_67, %c0_68, %c0_69] : memref<11x1x128xf32, #tpu.memory_space<vmem>>, vector<1x1x128xf32>
    %140 = vector.shape_cast %139 : vector<1x1x128xf32> to vector<1x128xf32>
    %141 = vector.extract_strided_slice %140 {offsets = [0, 0], sizes = [1, 12], strides = [1, 1]} : vector<1x128xf32> to vector<1x12xf32>
    %142 = vector.broadcast %141 : vector<1x12xf32> to vector<4x12xf32>
    %143 = arith.addf %138, %142 : vector<4x12xf32>
    %cst_70 = arith.constant -4.000000e+00 : f32
    %cst_71 = arith.constant 1.500000e+01 : f32
    %144 = vector.broadcast %cst_70 : f32 to vector<4x12xf32>
    %145 = arith.maximumf %144, %143 : vector<4x12xf32>
    %146 = vector.broadcast %cst_71 : f32 to vector<4x12xf32>
    %147 = arith.minimumf %146, %145 : vector<4x12xf32>
    %148 = math.exp %147 : vector<4x12xf32>
    %c0_72 = arith.constant 0 : index
    %c0_73 = arith.constant 0 : index
    %149 = vector.load %arg2[%c0_72, %c0_73] : memref<4x12xf32, #tpu.memory_space<vmem>>, vector<4x12xf32>
    %150 = arith.mulf %148, %149 : vector<4x12xf32>
    %151 = arith.addf %136, %150 : vector<4x12xf32>
    %c0_74 = arith.constant 0 : index
    %c0_75 = arith.constant 0 : index
    %152 = vector.load %arg15[%c0_74, %c0_75] : memref<4x12xf32, #tpu.memory_space<vmem>>, vector<4x12xf32>
    tpu.vector_store %arg15[%c0_74, %c0_75], %136 {strides = array<i32>} : memref<4x12xf32, #tpu.memory_space<vmem>>, vector<4x12xf32>,
    %c0_76 = arith.constant 0 : index
    %c0_77 = arith.constant 0 : index
    %153 = vector.load %arg16[%c0_76, %c0_77] : memref<4x12xf32, #tpu.memory_space<vmem>>, vector<4x12xf32>
    tpu.vector_store %arg16[%c0_76, %c0_77], %148 {strides = array<i32>} : memref<4x12xf32, #tpu.memory_space<vmem>>, vector<4x12xf32>,
    %c6 = arith.constant 6 : index
    %c0_78 = arith.constant 0 : index
    %c0_79 = arith.constant 0 : index
    %154 = vector.load %arg4[%c6, %c0_78, %c0_79] : memref<11x1x128xf32, #tpu.memory_space<vmem>>, vector<1x1x128xf32>
    %155 = vector.shape_cast %154 : vector<1x1x128xf32> to vector<1x128xf32>
    %156 = vector.extract_strided_slice %155 {offsets = [0, 0], sizes = [1, 16], strides = [1, 1]} : vector<1x128xf32> to vector<1x16xf32>
    %c7 = arith.constant 7 : index
    %c0_80 = arith.constant 0 : index
    %c0_81 = arith.constant 0 : index
    %157 = vector.load %arg4[%c7, %c0_80, %c0_81] : memref<11x1x128xf32, #tpu.memory_space<vmem>>, vector<1x1x128xf32>
    %158 = vector.shape_cast %157 : vector<1x1x128xf32> to vector<1x128xf32>
    %159 = vector.extract_strided_slice %158 {offsets = [0, 0], sizes = [1, 16], strides = [1, 1]} : vector<1x128xf32> to vector<1x16xf32>
    %c8 = arith.constant 8 : index
    %c0_82 = arith.constant 0 : index
    %c0_83 = arith.constant 0 : index
    %160 = vector.load %arg4[%c8, %c0_82, %c0_83] : memref<11x1x128xf32, #tpu.memory_space<vmem>>, vector<1x1x128xf32>
    %161 = vector.shape_cast %160 : vector<1x1x128xf32> to vector<1x128xf32>
    %162 = vector.extract_strided_slice %161 {offsets = [0, 0], sizes = [1, 12], strides = [1, 1]} : vector<1x128xf32> to vector<1x12xf32>
    %c9 = arith.constant 9 : index
    %c0_84 = arith.constant 0 : index
    %c0_85 = arith.constant 0 : index
    %163 = vector.load %arg4[%c9, %c0_84, %c0_85] : memref<11x1x128xf32, #tpu.memory_space<vmem>>, vector<1x1x128xf32>
    %164 = vector.shape_cast %163 : vector<1x1x128xf32> to vector<1x128xf32>
    %165 = vector.extract_strided_slice %164 {offsets = [0, 0], sizes = [1, 12], strides = [1, 1]} : vector<1x128xf32> to vector<1x12xf32>
    %cst_86 = arith.constant dense<0.000000e+00> : vector<4xf32>
    %166 = vector.multi_reduction <add>, %0, %cst_86 [1] : vector<4x16xf32> to vector<4xf32>
    %167 = vector.shape_cast %166 : vector<4xf32> to vector<4x1xf32>
    %cst_87 = arith.constant dense<0.000000e+00> : vector<4xf32>
    %168 = vector.multi_reduction <add>, %151, %cst_87 [1] : vector<4x12xf32> to vector<4xf32>
    %169 = vector.shape_cast %168 : vector<4xf32> to vector<4x1xf32>
    %170 = arith.addf %167, %169 : vector<4x1xf32>
    %cst_88 = arith.constant 2.800000e+01 : f32
    %171 = vector.broadcast %cst_88 : f32 to vector<4x1xf32>
    %172 = arith.divf %170, %171 : vector<4x1xf32>
    %173 = vector.broadcast %172 : vector<4x1xf32> to vector<4x16xf32>
    %174 = arith.subf %0, %173 : vector<4x16xf32>
    %175 = vector.broadcast %172 : vector<4x1xf32> to vector<4x12xf32>
    %176 = arith.subf %151, %175 : vector<4x12xf32>
    %177 = arith.mulf %174, %174 : vector<4x16xf32>
    %cst_89 = arith.constant dense<0.000000e+00> : vector<4xf32>
    %178 = vector.multi_reduction <add>, %177, %cst_89 [1] : vector<4x16xf32> to vector<4xf32>
    %179 = vector.shape_cast %178 : vector<4xf32> to vector<4x1xf32>
    %180 = arith.mulf %176, %176 : vector<4x12xf32>
    %cst_90 = arith.constant dense<0.000000e+00> : vector<4xf32>
    %181 = vector.multi_reduction <add>, %180, %cst_90 [1] : vector<4x12xf32> to vector<4xf32>
    %182 = vector.shape_cast %181 : vector<4xf32> to vector<4x1xf32>
    %183 = arith.addf %179, %182 : vector<4x1xf32>
    %cst_91 = arith.constant 2.800000e+01 : f32
    %184 = vector.broadcast %cst_91 : f32 to vector<4x1xf32>
    %185 = arith.divf %183, %184 : vector<4x1xf32>
    %cst_92 = arith.constant 9.99999974E-6 : f32
    %186 = vector.broadcast %cst_92 : f32 to vector<4x1xf32>
    %187 = arith.addf %185, %186 : vector<4x1xf32>
    %188 = math.rsqrt %187 : vector<4x1xf32>
    %189 = vector.broadcast %188 : vector<4x1xf32> to vector<4x16xf32>
    %190 = arith.mulf %174, %189 : vector<4x16xf32>
    %191 = vector.broadcast %156 : vector<1x16xf32> to vector<4x16xf32>
    %192 = arith.mulf %190, %191 : vector<4x16xf32>
    %193 = vector.broadcast %159 : vector<1x16xf32> to vector<4x16xf32>
    %194 = arith.addf %192, %193 : vector<4x16xf32>
    %195 = vector.broadcast %188 : vector<4x1xf32> to vector<4x12xf32>
    %196 = arith.mulf %176, %195 : vector<4x12xf32>
    %197 = vector.broadcast %162 : vector<1x12xf32> to vector<4x12xf32>
    %198 = arith.mulf %196, %197 : vector<4x12xf32>
    %199 = vector.broadcast %165 : vector<1x12xf32> to vector<4x12xf32>
    %200 = arith.addf %198, %199 : vector<4x12xf32>
    %201 = arith.truncf %194 : vector<4x16xf32> to vector<4x16xbf16>
    %c0_93 = arith.constant 0 : index
    %c0_94 = arith.constant 0 : index
    %202 = vector.load %arg10[%c0_93, %c0_94] : memref<16x768xbf16, #tpu.memory_space<vmem>>, vector<16x768xbf16>
    %cst_95 = arith.constant dense<0.000000e+00> : vector<4x768xf32>
    %203 = tpu.matmul %201, %202, %cst_95 {dimension_numbers = #tpu.dot_dimension_numbers<[1], [0], [0], [1], [0, 0, 1, 1], [], []>} : vector<4x16xbf16>, vector<16x768xbf16>, vector<4x768xf32> -> vector<4x768xf32>
    %204 = arith.truncf %200 : vector<4x12xf32> to vector<4x12xbf16>
    %c0_96 = arith.constant 0 : index
    %c0_97 = arith.constant 0 : index
    %205 = vector.load %arg11[%c0_96, %c0_97] : memref<12x768xbf16, #tpu.memory_space<vmem>>, vector<12x768xbf16>
    %cst_98 = arith.constant dense<0.000000e+00> : vector<4x768xf32>
    %206 = tpu.matmul %204, %205, %cst_98 {dimension_numbers = #tpu.dot_dimension_numbers<[1], [0], [0], [1], [0, 0, 1, 1], [], []>} : vector<4x12xbf16>, vector<12x768xbf16>, vector<4x768xf32> -> vector<4x768xf32>
    %207 = arith.addf %203, %206 : vector<4x768xf32>
    %c6_99 = arith.constant 6 : index
    %c0_100 = arith.constant 0 : index
    %c0_101 = arith.constant 0 : index
    %208 = vector.load %arg3[%c6_99, %c0_100, %c0_101] : memref<12x1x768xf32, #tpu.memory_space<vmem>>, vector<1x1x768xf32>
    %209 = vector.shape_cast %208 : vector<1x1x768xf32> to vector<1x768xf32>
    %210 = vector.broadcast %209 : vector<1x768xf32> to vector<4x768xf32>
    %211 = arith.addf %207, %210 : vector<4x768xf32>
    %cst_102 = arith.constant 0.000000e+00 : f32
    %212 = vector.broadcast %cst_102 : f32 to vector<4x768xf32>
    %213 = arith.maximumf %211, %212 : vector<4x768xf32>
    %c7_103 = arith.constant 7 : index
    %c0_104 = arith.constant 0 : index
    %c0_105 = arith.constant 0 : index
    %214 = vector.load %arg3[%c7_103, %c0_104, %c0_105] : memref<12x1x768xf32, #tpu.memory_space<vmem>>, vector<1x1x768xf32>
    %215 = vector.shape_cast %214 : vector<1x1x768xf32> to vector<1x768xf32>
    %c8_106 = arith.constant 8 : index
    %c0_107 = arith.constant 0 : index
    %c0_108 = arith.constant 0 : index
    %216 = vector.load %arg3[%c8_106, %c0_107, %c0_108] : memref<12x1x768xf32, #tpu.memory_space<vmem>>, vector<1x1x768xf32>
    %217 = vector.shape_cast %216 : vector<1x1x768xf32> to vector<1x768xf32>
    %cst_109 = arith.constant dense<0.000000e+00> : vector<4xf32>
    %218 = vector.multi_reduction <add>, %213, %cst_109 [1] : vector<4x768xf32> to vector<4xf32>
    %219 = vector.shape_cast %218 : vector<4xf32> to vector<4x1xf32>
    %cst_110 = arith.constant 7.500000e+02 : f32
    %220 = vector.broadcast %cst_110 : f32 to vector<4x1xf32>
    %221 = arith.divf %219, %220 : vector<4x1xf32>
    %222 = tpu.iota {dimensions = array<i32: 1>} : vector<4x768xi32>
    %c750_i32_111 = arith.constant 750 : i32
    %223 = vector.broadcast %c750_i32_111 : i32 to vector<4x768xi32>
    %224 = arith.cmpi slt, %222, %223 : vector<4x768xi32>
    %225 = vector.broadcast %221 : vector<4x1xf32> to vector<4x768xf32>
    %226 = arith.subf %213, %225 : vector<4x768xf32>
    %cst_112 = arith.constant 0.000000e+00 : f32
    %227 = vector.broadcast %cst_112 : f32 to vector<4x768xf32>
    %228 = arith.select %224, %226, %227 : vector<4x768xi1>, vector<4x768xf32>
    %229 = arith.mulf %228, %228 : vector<4x768xf32>
    %cst_113 = arith.constant dense<0.000000e+00> : vector<4xf32>
    %230 = vector.multi_reduction <add>, %229, %cst_113 [1] : vector<4x768xf32> to vector<4xf32>
    %231 = vector.shape_cast %230 : vector<4xf32> to vector<4x1xf32>
    %cst_114 = arith.constant 7.500000e+02 : f32
    %232 = vector.broadcast %cst_114 : f32 to vector<4x1xf32>
    %233 = arith.divf %231, %232 : vector<4x1xf32>
    %cst_115 = arith.constant 9.99999974E-6 : f32
    %234 = vector.broadcast %cst_115 : f32 to vector<4x1xf32>
    %235 = arith.addf %233, %234 : vector<4x1xf32>
    %236 = math.rsqrt %235 : vector<4x1xf32>
    %237 = vector.broadcast %236 : vector<4x1xf32> to vector<4x768xf32>
    %238 = arith.mulf %228, %237 : vector<4x768xf32>
    %239 = vector.broadcast %215 : vector<1x768xf32> to vector<4x768xf32>
    %240 = arith.mulf %238, %239 : vector<4x768xf32>
    %241 = vector.broadcast %217 : vector<1x768xf32> to vector<4x768xf32>
    %242 = arith.addf %240, %241 : vector<4x768xf32>
    %243 = arith.truncf %242 : vector<4x768xf32> to vector<4x768xbf16>
    %c0_116 = arith.constant 0 : index
    %c0_117 = arith.constant 0 : index
    %244 = vector.load %arg12[%c0_116, %c0_117] : memref<768x768xbf16, #tpu.memory_space<vmem>>, vector<768x768xbf16>
    %cst_118 = arith.constant dense<0.000000e+00> : vector<4x768xf32>
    %245 = tpu.matmul %243, %244, %cst_118 {dimension_numbers = #tpu.dot_dimension_numbers<[1], [0], [0], [1], [0, 0, 1, 1], [], []>} : vector<4x768xbf16>, vector<768x768xbf16>, vector<4x768xf32> -> vector<4x768xf32>
    %c9_119 = arith.constant 9 : index
    %c0_120 = arith.constant 0 : index
    %c0_121 = arith.constant 0 : index
    %246 = vector.load %arg3[%c9_119, %c0_120, %c0_121] : memref<12x1x768xf32, #tpu.memory_space<vmem>>, vector<1x1x768xf32>
    %247 = vector.shape_cast %246 : vector<1x1x768xf32> to vector<1x768xf32>
    %248 = vector.broadcast %247 : vector<1x768xf32> to vector<4x768xf32>
    %249 = arith.addf %245, %248 : vector<4x768xf32>
    %cst_122 = arith.constant 0.000000e+00 : f32
    %250 = vector.broadcast %cst_122 : f32 to vector<4x768xf32>
    %251 = arith.maximumf %249, %250 : vector<4x768xf32>
    %c10 = arith.constant 10 : index
    %c0_123 = arith.constant 0 : index
    %c0_124 = arith.constant 0 : index
    %252 = vector.load %arg3[%c10, %c0_123, %c0_124] : memref<12x1x768xf32, #tpu.memory_space<vmem>>, vector<1x1x768xf32>
    %253 = vector.shape_cast %252 : vector<1x1x768xf32> to vector<1x768xf32>
    %c11 = arith.constant 11 : index
    %c0_125 = arith.constant 0 : index
    %c0_126 = arith.constant 0 : index
    %254 = vector.load %arg3[%c11, %c0_125, %c0_126] : memref<12x1x768xf32, #tpu.memory_space<vmem>>, vector<1x1x768xf32>
    %255 = vector.shape_cast %254 : vector<1x1x768xf32> to vector<1x768xf32>
    %cst_127 = arith.constant dense<0.000000e+00> : vector<4xf32>
    %256 = vector.multi_reduction <add>, %251, %cst_127 [1] : vector<4x768xf32> to vector<4xf32>
    %257 = vector.shape_cast %256 : vector<4xf32> to vector<4x1xf32>
    %cst_128 = arith.constant 7.500000e+02 : f32
    %258 = vector.broadcast %cst_128 : f32 to vector<4x1xf32>
    %259 = arith.divf %257, %258 : vector<4x1xf32>
    %260 = tpu.iota {dimensions = array<i32: 1>} : vector<4x768xi32>
    %c750_i32_129 = arith.constant 750 : i32
    %261 = vector.broadcast %c750_i32_129 : i32 to vector<4x768xi32>
    %262 = arith.cmpi slt, %260, %261 : vector<4x768xi32>
    %263 = vector.broadcast %259 : vector<4x1xf32> to vector<4x768xf32>
    %264 = arith.subf %251, %263 : vector<4x768xf32>
    %cst_130 = arith.constant 0.000000e+00 : f32
    %265 = vector.broadcast %cst_130 : f32 to vector<4x768xf32>
    %266 = arith.select %262, %264, %265 : vector<4x768xi1>, vector<4x768xf32>
    %267 = arith.mulf %266, %266 : vector<4x768xf32>
    %cst_131 = arith.constant dense<0.000000e+00> : vector<4xf32>
    %268 = vector.multi_reduction <add>, %267, %cst_131 [1] : vector<4x768xf32> to vector<4xf32>
    %269 = vector.shape_cast %268 : vector<4xf32> to vector<4x1xf32>
    %cst_132 = arith.constant 7.500000e+02 : f32
    %270 = vector.broadcast %cst_132 : f32 to vector<4x1xf32>
    %271 = arith.divf %269, %270 : vector<4x1xf32>
    %cst_133 = arith.constant 9.99999974E-6 : f32
    %272 = vector.broadcast %cst_133 : f32 to vector<4x1xf32>
    %273 = arith.addf %271, %272 : vector<4x1xf32>
    %274 = math.rsqrt %273 : vector<4x1xf32>
    %275 = vector.broadcast %274 : vector<4x1xf32> to vector<4x768xf32>
    %276 = arith.mulf %266, %275 : vector<4x768xf32>
    %277 = vector.broadcast %253 : vector<1x768xf32> to vector<4x768xf32>
    %278 = arith.mulf %276, %277 : vector<4x768xf32>
    %279 = vector.broadcast %255 : vector<1x768xf32> to vector<4x768xf32>
    %280 = arith.addf %278, %279 : vector<4x768xf32>
    %281 = arith.truncf %280 : vector<4x768xf32> to vector<4x768xbf16>
    %c0_134 = arith.constant 0 : index
    %c0_135 = arith.constant 0 : index
    %282 = vector.load %arg13[%c0_134, %c0_135] : memref<768x8xbf16, #tpu.memory_space<vmem>>, vector<768x8xbf16>
    %cst_136 = arith.constant dense<0.000000e+00> : vector<4x8xf32>
    %283 = tpu.matmul %281, %282, %cst_136 {dimension_numbers = #tpu.dot_dimension_numbers<[1], [0], [0], [1], [0, 0, 1, 1], [], []>} : vector<4x768xbf16>, vector<768x8xbf16>, vector<4x8xf32> -> vector<4x8xf32>
    %c10_137 = arith.constant 10 : index
    %c0_138 = arith.constant 0 : index
    %c0_139 = arith.constant 0 : index
    %284 = vector.load %arg4[%c10_137, %c0_138, %c0_139] : memref<11x1x128xf32, #tpu.memory_space<vmem>>, vector<1x1x128xf32>
    %285 = vector.shape_cast %284 : vector<1x1x128xf32> to vector<1x128xf32>
    %286 = vector.extract_strided_slice %285 {offsets = [0, 0], sizes = [1, 8], strides = [1, 1]} : vector<1x128xf32> to vector<1x8xf32>
    %287 = vector.broadcast %286 : vector<1x8xf32> to vector<4x8xf32>
    %288 = arith.addf %283, %287 : vector<4x8xf32>
    %289 = math.tanh %288 : vector<4x8xf32>
    %cst_140 = arith.constant 1.000000e+00 : f32
    %290 = vector.broadcast %cst_140 : f32 to vector<4x8xf32>
    %291 = arith.mulf %290, %289 : vector<4x8xf32>
    %c0_141 = arith.constant 0 : index
    %c0_142 = arith.constant 0 : index
    %292 = vector.load %arg14[%c0_141, %c0_142] : memref<4x8xf32, #tpu.memory_space<vmem>>, vector<4x8xf32>
    tpu.vector_store %arg14[%c0_141, %c0_142], %291 {strides = array<i32>} : memref<4x8xf32, #tpu.memory_space<vmem>>, vector<4x8xf32>,
    return
  }
}

</mosaic_0001>

<llo_original>
// kernel: tpu_custom_call.1
$region0: #{tpu_custom_call.1}
  #allocation0 [shape = 'u32[]', space=smem, size = 0x4, offset = 0x4, fixed_abs, tag = 'smem constant byte address 0x4 - core index']
  #allocation1 [shape = 'u32[144,128]{1,0:T(1,128)}', space=vmem, size = 0x12000, scoped, tag = 'internal scratch']
  %s0 = inlined_call_operand.hbm [shape: f32[4,16], index: 0, kind: input, shape index: {}]
  %s1 = inlined_call_operand.hbm [shape: f32[4,8], index: 1, kind: input, shape index: {}]
  %s2 = inlined_call_operand.hbm [shape: f32[4,12], index: 2, kind: input, shape index: {}]
  %s3 = inlined_call_operand.hbm [shape: f32[12,1,768], index: 3, kind: input, shape index: {}]
  %s4 = inlined_call_operand.hbm [shape: f32[11,1,128], index: 4, kind: input, shape index: {}]
  %s5 = inlined_call_operand.hbm [shape: bf16[16,768], index: 5, kind: input, shape index: {}]
  %s6 = inlined_call_operand.hbm [shape: bf16[8,768], index: 6, kind: input, shape index: {}]
  %s7 = inlined_call_operand.hbm [shape: bf16[768,768], index: 7, kind: input, shape index: {}]
  %s8 = inlined_call_operand.vmem [shape: bf16[768,12], index: 8, kind: input, shape index: {}]
  %s9 = inlined_call_operand.vmem [shape: bf16[768,12], index: 9, kind: input, shape index: {}]
  %s10 = inlined_call_operand.hbm [shape: bf16[16,768], index: 10, kind: input, shape index: {}]
  %s11 = inlined_call_operand.hbm [shape: bf16[12,768], index: 11, kind: input, shape index: {}]
  %s12 = inlined_call_operand.hbm [shape: bf16[768,768], index: 12, kind: input, shape index: {}]
  %s13 = inlined_call_operand.vmem [shape: bf16[768,8], index: 13, kind: input, shape index: {}]
  %s14 = inlined_call_operand.hbm [shape: f32[4,8], index: 14, kind: output, shape index: {0}]
  %s15 = inlined_call_operand.hbm [shape: f32[4,12], index: 15, kind: output, shape index: {1}]
  %s16 = inlined_call_operand.hbm [shape: f32[4,12], index: 16, kind: output, shape index: {2}]
  %17 = xla_tuple %s14, %s15, %s16
  %s18 = sld [smem:[#allocation0]]
  $region126: #{tpu_custom_call.1} parent=0
    _
  %s20 = ssub.s32 1, %s18
  %s21 = scalar_select 0, %s20, %s18
  $region1: #{tpu_custom_call.1} parent=0
    #allocation2 [shape = 'u8[2048]{0}', space=vmem, size = 0x800, scoped, tag = 'input window, operand 0, single buffered']
    #allocation3 [shape = 's32[1]{0}', space=sflag, size = 0x4, scoped, tag = 'scoped memory for tpu_custom_call.1']
    #allocation4 [shape = 's32[1]{0}', space=sflag, size = 0x4, scoped, tag = 'scoped memory for tpu_custom_call.1']
    #allocation5 [shape = 'u8[2048]{0}', space=vmem, size = 0x800, scoped, tag = 'input window, operand 1, single buffered']
    #allocation6 [shape = 's32[1]{0}', space=sflag, size = 0x4, scoped, tag = 'scoped memory for tpu_custom_call.1']
    #allocation7 [shape = 'u8[2048]{0}', space=vmem, size = 0x800, scoped, tag = 'input window, operand 2, single buffered']
    #allocation8 [shape = 'u8[36864]{0}', space=vmem, size = 0x9000, scoped, tag = 'input window, operand 3, single buffered']
    #allocation9 [shape = 's32[1]{0}', space=sflag, size = 0x4, scoped, tag = 'scoped memory for tpu_custom_call.1']
    #allocation10 [shape = 'u8[5632]{0}', space=vmem, size = 0x1800, scoped, tag = 'input window, operand 4, single buffered']
    #allocation11 [shape = 'u8[24576]{0}', space=vmem, size = 0x6000, scoped, tag = 'input window, operand 5, single buffered']
    #allocation12 [shape = 's32[1]{0}', space=sflag, size = 0x4, scoped, tag = 'scoped memory for tpu_custom_call.1']
    #allocation13 [shape = 'u8[12288]{0}', space=vmem, size = 0x3000, scoped, tag = 'input window, operand 6, single buffered']
    #allocation14 [shape = 'u8[1179648]{0}', space=vmem, size = 0x120000, scoped, tag = 'input window, operand 7, single buffered']
    #allocation15 [shape = 's32[1]{0}', space=sflag, size = 0x4, scoped, tag = 'scoped memory for tpu_custom_call.1']
    #allocation16 [shape = 'u8[24576]{0}', space=vmem, size = 0x6000, scoped, tag = 'input window, operand 10, single buffered']
    #allocation17 [shape = 'u8[24576]{0}', space=vmem, size = 0x6000, scoped, tag = 'input window, operand 11, single buffered']
    #allocation18 [shape = 's32[1]{0}', space=sflag, size = 0x4, scoped, tag = 'scoped memory for tpu_custom_call.1']
    #allocation19 [shape = 'u8[1179648]{0}', space=vmem, size = 0x120000, scoped, tag = 'input window, operand 12, single buffered']
    #allocation20 [shape = 'u8[2048]{0}', space=vmem, size = 0x800, scoped, tag = 'output window, operand 0, single buffered']
    #allocation21 [shape = 'u8[2048]{0}', space=vmem, size = 0x800, scoped, tag = 'output window, operand 1, single buffered']
    #allocation22 [shape = 's32[1]{0}', space=sflag, size = 0x4, scoped, tag = 'scoped memory for tpu_custom_call.1']
    #allocation23 [shape = 'u8[2048]{0}', space=vmem, size = 0x800, scoped, tag = 'output window, operand 2, single buffered']
    %22 = vsyncpa [#allocation3], 0
    %23 = vsyncpa [#allocation6], 0
    %24 = vsyncpa [#allocation9], 0
    %25 = vsyncpa [#allocation12], 0
    %26 = vsyncpa [#allocation15], 0
    %27 = vsyncpa [#allocation18], 0
    %28 = vsyncpa [#allocation4], 0
    %29 = vsyncpa [#allocation22], 0
    // Predicated region
    $region2: #{tpu_custom_call.1} parent=1 // pred_check
      _
    $region3: #{tpu_custom_call.1} parent=1 // pred_check_branch
      %31 = sbr.rel (0) target = $region5
    $region4: #{tpu_custom_call.1} parent=1 // pred_region
      %s33 = ssub.s32 64, 64
      %34 = vsyncadd [#allocation3], %s33
      %s36 = sshll.u32 [#allocation2], 4
      %s37 = int_to_ptr.vmem [resolvable:$true] %s36
      %39 = dma.hbm_to_vmem [thread:$0]  %s0, 64, %s37, [#allocation3]
    $region5: #{tpu_custom_call.1} parent=1 // pred_fallthru
      _
    // Predicated region
    $region6: #{tpu_custom_call.1} parent=1 // pred_check
      _
    $region7: #{tpu_custom_call.1} parent=1 // pred_check_branch
      %41 = sbr.rel (0) target = $region9
    $region8: #{tpu_custom_call.1} parent=1 // pred_region
      %s43 = ssub.s32 64, 64
      %44 = vsyncadd [#allocation6], %s43
      %s46 = sshll.u32 [#allocation5], 4
      %s47 = int_to_ptr.vmem [resolvable:$true] %s46
      %49 = dma.hbm_to_vmem [thread:$0]  %s1, 64, %s47, [#allocation6]
    $region9: #{tpu_custom_call.1} parent=1 // pred_fallthru
      _
    // Predicated region
    $region10: #{tpu_custom_call.1} parent=1 // pred_check
      _
    $region11: #{tpu_custom_call.1} parent=1 // pred_check_branch
      %51 = sbr.rel (0) target = $region13
    $region12: #{tpu_custom_call.1} parent=1 // pred_region
      %s53 = ssub.s32 64, 64
      %54 = vsyncadd [#allocation6], %s53
      %s56 = sshll.u32 [#allocation7], 4
      %s57 = int_to_ptr.vmem [resolvable:$true] %s56
      %59 = dma.hbm_to_vmem [thread:$0]  %s2, 64, %s57, [#allocation6]
    $region13: #{tpu_custom_call.1} parent=1 // pred_fallthru
      _
    // Predicated region
    $region14: #{tpu_custom_call.1} parent=1 // pred_check
      _
    $region15: #{tpu_custom_call.1} parent=1 // pred_check_branch
      %61 = sbr.rel (0) target = $region17
    $region16: #{tpu_custom_call.1} parent=1 // pred_region
      %s63 = ssub.s32 1152, 1152
      %64 = vsyncadd [#allocation9], %s63
      %s65 = sshll.u32 [#allocation8], 4
      %s66 = int_to_ptr.vmem [resolvable:$true] %s65
      %71 = dma.hbm_to_vmem [thread:$0]  %s3, 1152, %s66, [#allocation9], 96, 96, 6
    $region17: #{tpu_custom_call.1} parent=1 // pred_fallthru
      _
    // Predicated region
    $region18: #{tpu_custom_call.1} parent=1 // pred_check
      _
    $region19: #{tpu_custom_call.1} parent=1 // pred_check_branch
      %73 = sbr.rel (0) target = $region21
    $region20: #{tpu_custom_call.1} parent=1 // pred_region
      %s75 = ssub.s32 176, 176
      %76 = vsyncadd [#allocation9], %s75
      %s77 = sshll.u32 [#allocation10], 4
      %s78 = int_to_ptr.vmem [resolvable:$true] %s77
      %83 = dma.hbm_to_vmem [thread:$0]  %s4, 176, %s78, [#allocation9], 16, 16, 1
    $region21: #{tpu_custom_call.1} parent=1 // pred_fallthru
      _
    // Predicated region
    $region22: #{tpu_custom_call.1} parent=1 // pred_check
      _
    $region23: #{tpu_custom_call.1} parent=1 // pred_check_branch
      %85 = sbr.rel (0) target = $region25
    $region24: #{tpu_custom_call.1} parent=1 // pred_region
      %s87 = ssub.s32 768, 768
      %88 = vsyncadd [#allocation12], %s87
      %s89 = sshll.u32 [#allocation11], 4
      %s90 = int_to_ptr.vmem [resolvable:$true] %s89
      %95 = dma.hbm_to_vmem [thread:$0]  %s5, 768, %s90, [#allocation12], 384, 384, 24
    $region25: #{tpu_custom_call.1} parent=1 // pred_fallthru
      _
    // Predicated region
    $region26: #{tpu_custom_call.1} parent=1 // pred_check
      _
    $region27: #{tpu_custom_call.1} parent=1 // pred_check_branch
      %97 = sbr.rel (0) target = $region29
    $region28: #{tpu_custom_call.1} parent=1 // pred_region
      %s99 = ssub.s32 384, 384
      %100 = vsyncadd [#allocation12], %s99
      %s102 = sshll.u32 [#allocation13], 4
      %s103 = int_to_ptr.vmem [resolvable:$true] %s102
      %105 = dma.hbm_to_vmem [thread:$0]  %s6, 384, %s103, [#allocation12]
    $region29: #{tpu_custom_call.1} parent=1 // pred_fallthru
      _
    // Predicated region
    $region30: #{tpu_custom_call.1} parent=1 // pred_check
      _
    $region31: #{tpu_custom_call.1} parent=1 // pred_check_branch
      %107 = sbr.rel (0) target = $region33
    $region32: #{tpu_custom_call.1} parent=1 // pred_region
      %s109 = ssub.s32 36864, 36864
      %110 = vsyncadd [#allocation15], %s109
      %s111 = sshll.u32 [#allocation14], 4
      %s112 = int_to_ptr.vmem [resolvable:$true] %s111
      %117 = dma.hbm_to_vmem [thread:$0]  %s7, 36864, %s112, [#allocation15], 384, 384, 24
    $region33: #{tpu_custom_call.1} parent=1 // pred_fallthru
      _
    // Predicated region
    $region34: #{tpu_custom_call.1} parent=1 // pred_check
      _
    $region35: #{tpu_custom_call.1} parent=1 // pred_check_branch
      %119 = sbr.rel (0) target = $region37
    $region36: #{tpu_custom_call.1} parent=1 // pred_region
      _
    $region37: #{tpu_custom_call.1} parent=1 // pred_fallthru
      _
    // Predicated region
    $region38: #{tpu_custom_call.1} parent=1 // pred_check
      _
    $region39: #{tpu_custom_call.1} parent=1 // pred_check_branch
      %121 = sbr.rel (0) target = $region41
    $region40: #{tpu_custom_call.1} parent=1 // pred_region
      _
    $region41: #{tpu_custom_call.1} parent=1 // pred_fallthru
      _
    // Predicated region
    $region42: #{tpu_custom_call.1} parent=1 // pred_check
      _
    $region43: #{tpu_custom_call.1} parent=1 // pred_check_branch
      %123 = sbr.rel (0) target = $region45
    $region44: #{tpu_custom_call.1} parent=1 // pred_region
      %s125 = ssub.s32 768, 768
      %126 = vsyncadd [#allocation15], %s125
      %s127 = sshll.u32 [#allocation16], 4
      %s128 = int_to_ptr.vmem [resolvable:$true] %s127
      %133 = dma.hbm_to_vmem [thread:$0]  %s10, 768, %s128, [#allocation15], 384, 384, 24
    $region45: #{tpu_custom_call.1} parent=1 // pred_fallthru
      _
    // Predicated region
    $region46: #{tpu_custom_call.1} parent=1 // pred_check
      _
    $region47: #{tpu_custom_call.1} parent=1 // pred_check_branch
      %135 = sbr.rel (0) target = $region49
    $region48: #{tpu_custom_call.1} parent=1 // pred_region
      %s137 = ssub.s32 768, 768
      %138 = vsyncadd [#allocation18], %s137
      %s139 = sshll.u32 [#allocation17], 4
      %s140 = int_to_ptr.vmem [resolvable:$true] %s139
      %145 = dma.hbm_to_vmem [thread:$0]  %s11, 768, %s140, [#allocation18], 384, 384, 24
    $region49: #{tpu_custom_call.1} parent=1 // pred_fallthru
      _
    // Predicated region
    $region50: #{tpu_custom_call.1} parent=1 // pred_check
      _
    $region51: #{tpu_custom_call.1} parent=1 // pred_check_branch
      %147 = sbr.rel (0) target = $region53
    $region52: #{tpu_custom_call.1} parent=1 // pred_region
      %s149 = ssub.s32 36864, 36864
      %150 = vsyncadd [#allocation18], %s149
      %s151 = sshll.u32 [#allocation19], 4
      %s152 = int_to_ptr.vmem [resolvable:$true] %s151
      %157 = dma.hbm_to_vmem [thread:$0]  %s12, 36864, %s152, [#allocation18], 384, 384, 24
    $region53: #{tpu_custom_call.1} parent=1 // pred_fallthru
      _
    // Predicated region
    $region54: #{tpu_custom_call.1} parent=1 // pred_check
      _
    $region55: #{tpu_custom_call.1} parent=1 // pred_check_branch
      %159 = sbr.rel (0) target = $region57
    $region56: #{tpu_custom_call.1} parent=1 // pred_region
      _
    $region57: #{tpu_custom_call.1} parent=1 // pred_fallthru
      _
    // Predicated region
    $region58: #{tpu_custom_call.1} parent=1 // pred_check
      _
    $region59: #{tpu_custom_call.1} parent=1 // pred_check_branch
      %161 = sbr.rel (0) target = $region61
    $region60: #{tpu_custom_call.1} parent=1 // pred_region
      %162 = dma.done [#allocation3], 64
    $region61: #{tpu_custom_call.1} parent=1 // pred_fallthru
      _
    // Predicated region
    $region62: #{tpu_custom_call.1} parent=1 // pred_check
      _
    $region63: #{tpu_custom_call.1} parent=1 // pred_check_branch
      %164 = sbr.rel (0) target = $region65
    $region64: #{tpu_custom_call.1} parent=1 // pred_region
      %165 = dma.done [#allocation6], 64
    $region65: #{tpu_custom_call.1} parent=1 // pred_fallthru
      _
    // Predicated region
    $region66: #{tpu_custom_call.1} parent=1 // pred_check
      _
    $region67: #{tpu_custom_call.1} parent=1 // pred_check_branch
      %167 = sbr.rel (0) target = $region69
    $region68: #{tpu_custom_call.1} parent=1 // pred_region
      %168 = dma.done [#allocation6], 64
    $region69: #{tpu_custom_call.1} parent=1 // pred_fallthru
      _
    // Predicated region
    $region70: #{tpu_custom_call.1} parent=1 // pred_check
      _
    $region71: #{tpu_custom_call.1} parent=1 // pred_check_branch
      %170 = sbr.rel (0) target = $region73
    $region72: #{tpu_custom_call.1} parent=1 // pred_region
      %171 = dma.done [#allocation9], 1152
    $region73: #{tpu_custom_call.1} parent=1 // pred_fallthru
      _
    // Predicated region
    $region74: #{tpu_custom_call.1} parent=1 // pred_check
      _
    $region75: #{tpu_custom_call.1} parent=1 // pred_check_branch
      %173 = sbr.rel (0) target = $region77
    $region76: #{tpu_custom_call.1} parent=1 // pred_region
      %174 = dma.done [#allocation9], 176
    $region77: #{tpu_custom_call.1} parent=1 // pred_fallthru
      _
    // Predicated region
    $region78: #{tpu_custom_call.1} parent=1 // pred_check
      _
    $region79: #{tpu_custom_call.1} parent=1 // pred_check_branch
      %176 = sbr.rel (0) target = $region81
    $region80: #{tpu_custom_call.1} parent=1 // pred_region
      %177 = dma.done [#allocation12], 768
    $region81: #{tpu_custom_call.1} parent=1 // pred_fallthru
      _
    // Predicated region
    $region82: #{tpu_custom_call.1} parent=1 // pred_check
      _
    $region83: #{tpu_custom_call.1} parent=1 // pred_check_branch
      %179 = sbr.rel (0) target = $region85
    $region84: #{tpu_custom_call.1} parent=1 // pred_region
      %180 = dma.done [#allocation12], 384
    $region85: #{tpu_custom_call.1} parent=1 // pred_fallthru
      _
    // Predicated region
    $region86: #{tpu_custom_call.1} parent=1 // pred_check
      _
    $region87: #{tpu_custom_call.1} parent=1 // pred_check_branch
      %182 = sbr.rel (0) target = $region89
    $region88: #{tpu_custom_call.1} parent=1 // pred_region
      %183 = dma.done [#allocation15], 36864
    $region89: #{tpu_custom_call.1} parent=1 // pred_fallthru
      _
    // Predicated region
    $region90: #{tpu_custom_call.1} parent=1 // pred_check
      _
    $region91: #{tpu_custom_call.1} parent=1 // pred_check_branch
      %185 = sbr.rel (0) target = $region93
    $region92: #{tpu_custom_call.1} parent=1 // pred_region
      %186 = dma.done [#allocation15], 768
    $region93: #{tpu_custom_call.1} parent=1 // pred_fallthru
      _
    // Predicated region
    $region94: #{tpu_custom_call.1} parent=1 // pred_check
      _
    $region95: #{tpu_custom_call.1} parent=1 // pred_check_branch
      %188 = sbr.rel (0) target = $region97
    $region96: #{tpu_custom_call.1} parent=1 // pred_region
      %189 = dma.done [#allocation18], 768
    $region97: #{tpu_custom_call.1} parent=1 // pred_fallthru
      _
    // Predicated region
    $region98: #{tpu_custom_call.1} parent=1 // pred_check
      _
    $region99: #{tpu_custom_call.1} parent=1 // pred_check_branch
      %191 = sbr.rel (0) target = $region101
    $region100: #{tpu_custom_call.1} parent=1 // pred_region
      %192 = dma.done [#allocation18], 36864
    $region101: #{tpu_custom_call.1} parent=1 // pred_fallthru
      _
    %v194 = vld [vmem:[#allocation2] sm:$0xf]
    %v195 = vld [vmem:[#allocation5] sm:$0xf]
    %v196 = vld [vmem:[#allocation10] sm:$0x1]
    %s197 = scalar_lea.vmem [#allocation10], 1
    %v198 = vld [vmem:[%s197] sm:$0x1]
    %s199 = scalar_lea.vmem [#allocation10], 2
    %v200 = vld [vmem:[%s199] sm:$0x1]
    %s201 = scalar_lea.vmem [#allocation10], 3
    %v202 = vld [vmem:[%s201] sm:$0x1]
    %vm203 = vcmask 125952
    %v204 = vsel %vm203, %v194, 0.0
    %205 = vadd.xlane.f32.xlu0 %v204
    %v206 = vpop.xlane.xlu0 %205
    %vm207 = vcmask 60416
    %v208 = vsel %vm207, %v195, 0.0
    %209 = vadd.xlane.f32.xlu0 %v208
    %v210 = vpop.xlane.xlu0 %209
    %v211 = vadd.f32 %v206, %v210
    %v212 = vrcp.pop 24.0
    %v213 = vmul.f32 %v211, %v212
    %v214 = vsub.f32 %v194, %v213
    %v215 = vsub.f32 %v195, %v213
    %v216 = vmul.f32 %v214, %v214
    %v217 = vsel %vm203, %v216, 0.0
    %218 = vadd.xlane.f32.xlu0 %v217
    %v219 = vpop.xlane.xlu0 %218
    %v220 = vmul.f32 %v215, %v215
    %v221 = vsel %vm207, %v220, 0.0
    %222 = vadd.xlane.f32.xlu0 %v221
    %v223 = vpop.xlane.xlu0 %222
    %v224 = vadd.f32 %v219, %v223
    %v225 = vmul.f32 %v224, %v212
    %v226 = vadd.f32 %v225, 1e-05
    %v227 = vrsqrt.pop %v226
    %v228 = vmul.f32 %v214, %v227
    %v230 = vlaneseq
    %v231 = vshrl.u32 %v230, 7
    %v232 = vsub.s32 0, %v231
    %v233 = vrot.slane %v196, %v232
    %v235 = vmul.f32 %v228, %v233
    %v237 = vlaneseq
    %v238 = vshrl.u32 %v237, 7
    %v239 = vsub.s32 0, %v238
    %v240 = vrot.slane %v198, %v239
    %v242 = vadd.f32 %v235, %v240
    %v243 = vmul.f32 %v215, %v227
    %v245 = vlaneseq
    %v246 = vshrl.u32 %v245, 7
    %v247 = vsub.s32 0, %v246
    %v248 = vrot.slane %v200, %v247
    %v250 = vmul.f32 %v243, %v248
    %v252 = vlaneseq
    %v253 = vshrl.u32 %v252, 7
    %v254 = vsub.s32 0, %v253
    %v255 = vrot.slane %v202, %v254
    %v257 = vadd.f32 %v250, %v255
    %v258 = vpack.c.bf16 %v242, %v242
    %v259 = vld [vmem:[#allocation11] sm:$0xff]
    %v260 = vld [vmem:[#allocation11 + $0x8] sm:$0xff]
    %v261 = vld [vmem:[#allocation11 + $0x10] sm:$0xff]
    %v262 = vld [vmem:[#allocation11 + $0x18] sm:$0xff]
    %v263 = vld [vmem:[#allocation11 + $0x20] sm:$0xff]
    %v264 = vld [vmem:[#allocation11 + $0x28] sm:$0xff]
    %v265 = vpack.c.bf16 %v257, %v257
    %v266 = vld [vmem:[#allocation13] sm:$0xff]
    %v267 = vld [vmem:[#allocation13 + $0x8] sm:$0xff]
    %v268 = vld [vmem:[#allocation13 + $0x10] sm:$0xff]
    %v272 = vunpack.c.l.b16 %v266
    %v273 = vunpack.c.h.b16 %v266
    %v274 = vunpack.c.l.b16 %v267
    %v275 = vunpack.c.h.b16 %v267
    %v276 = vunpack.c.l.b16 %v268
    %v277 = vunpack.c.h.b16 %v268
    %v278 = vpack.c.b16 %v272, %v272
    %v279 = vpack.c.b16 %v273, %v273
    %v280 = vpack.c.b16 %v274, %v274
    %v281 = vpack.c.b16 %v275, %v275
    %v282 = vpack.c.b16 %v276, %v276
    %v283 = vpack.c.b16 %v277, %v277
    %vm284 = vcmask 64512
    %v286 = vsel %vm284, %v265, 0
    %vm288 = vcmask 1043456
    %v290 = vsel %vm288, %v278, 0
    %v293 = vsel %vm288, %v279, 0
    %v296 = vsel %vm288, %v280, 0
    %v299 = vsel %vm288, %v281, 0
    %v302 = vsel %vm288, %v282, 0
    %v305 = vsel %vm288, %v283, 0
    %307 = vmatprep.subr.bf16.mxu0 %v293
    %308 = vmatpush1.bf16.msra.mxu0 %v290
    %309 = vmatprep.subr.bf16.mxu0 0
    %310 = vmatpush1.bf16.msra.mxu0 0
    %311 = vmatprep.subr.bf16.mxu0 0
    %312 = vmatpush1.bf16.msra.mxu0 0
    %313 = vmatprep.subr.bf16.mxu0 0
    %314 = vmatpush1.bf16.msra.mxu0 0
    %315 = vmatprep.subr.bf16.mxu0 0
    %316 = vmatpush1.bf16.msra.mxu0 0
    %317 = vmatprep.subr.bf16.mxu0 0
    %318 = vmatpush1.bf16.msra.mxu0 0
    %319 = vmatprep.subr.bf16.mxu0 0
    %320 = vmatpush1.bf16.msra.mxu0 0
    %321 = vmatprep.subr.bf16.mxu0 0
    %322 = vmatpush1.bf16.msra.mxu0 0
    %323 = vmatprep.subr.bf16.mxu0 0
    %324 = vmatpush1.bf16.msra.mxu0 0
    %325 = vmatprep.subr.bf16.mxu0 0
    %326 = vmatpush1.bf16.msra.mxu0 0
    %327 = vmatprep.subr.bf16.mxu0 0
    %328 = vmatpush1.bf16.msra.mxu0 0
    %329 = vmatprep.subr.bf16.mxu0 0
    %330 = vmatpush1.bf16.msra.mxu0 0
    %331 = vmatprep.subr.bf16.mxu0 0
    %332 = vmatpush1.bf16.msra.mxu0 0
    %333 = vmatprep.subr.bf16.mxu0 0
    %334 = vmatpush1.bf16.msra.mxu0 0
    %335 = vmatprep.subr.bf16.mxu0 0
    %336 = vmatpush1.bf16.msra.mxu0 0
    %337 = vmatprep.subr.bf16.mxu0 0
    %338 = vmatpush1.bf16.msra.mxu0 0
    %339 = vmatprep.mubr.bf16.mxu0 0
    %340 = vmatmul.mubr.bf16.gmra.mrb[0].mxu0 %v286
    %v341 = vpop.f32.mrb[0].mxu0
    %v342 = vadd.f32 0.0, %v341
    %v343 = vpop.f32.mrb[0].mxu0
    %v344 = vadd.f32 0.0, %v343
    %v345 = vpop.f32.mrb[0].mxu0
    %v346 = vpop.f32.mrb[0].mxu0
    %347 = vdwg.mxu0
    %348 = vmatprep.subr.bf16.mxu0 %v299
    %349 = vmatpush1.bf16.msra.mxu0 %v296
    %350 = vmatprep.subr.bf16.mxu0 0
    %351 = vmatpush1.bf16.msra.mxu0 0
    %352 = vmatprep.subr.bf16.mxu0 0
    %353 = vmatpush1.bf16.msra.mxu0 0
    %354 = vmatprep.subr.bf16.mxu0 0
    %355 = vmatpush1.bf16.msra.mxu0 0
    %356 = vmatprep.subr.bf16.mxu0 0
    %357 = vmatpush1.bf16.msra.mxu0 0
    %358 = vmatprep.subr.bf16.mxu0 0
    %359 = vmatpush1.bf16.msra.mxu0 0
    %360 = vmatprep.subr.bf16.mxu0 0
    %361 = vmatpush1.bf16.msra.mxu0 0
    %362 = vmatprep.subr.bf16.mxu0 0
    %363 = vmatpush1.bf16.msra.mxu0 0
    %364 = vmatprep.subr.bf16.mxu0 0
    %365 = vmatpush1.bf16.msra.mxu0 0
    %366 = vmatprep.subr.bf16.mxu0 0
    %367 = vmatpush1.bf16.msra.mxu0 0
    %368 = vmatprep.subr.bf16.mxu0 0
    %369 = vmatpush1.bf16.msra.mxu0 0
    %370 = vmatprep.subr.bf16.mxu0 0
    %371 = vmatpush1.bf16.msra.mxu0 0
    %372 = vmatprep.subr.bf16.mxu0 0
    %373 = vmatpush1.bf16.msra.mxu0 0
    %374 = vmatprep.subr.bf16.mxu0 0
    %375 = vmatpush1.bf16.msra.mxu0 0
    %376 = vmatprep.subr.bf16.mxu0 0
    %377 = vmatpush1.bf16.msra.mxu0 0
    %378 = vmatprep.subr.bf16.mxu0 0
    %379 = vmatpush1.bf16.msra.mxu0 0
    %380 = vmatprep.mubr.bf16.mxu0 0
    %381 = vmatmul.mubr.bf16.gmra.mrb[0].mxu0 %v286
    %v382 = vpop.f32.mrb[0].mxu0
    %v383 = vadd.f32 0.0, %v382
    %v384 = vpop.f32.mrb[0].mxu0
    %v385 = vadd.f32 0.0, %v384
    %v386 = vpop.f32.mrb[0].mxu0
    %v387 = vpop.f32.mrb[0].mxu0
    %388 = vdwg.mxu0
    %389 = vmatprep.subr.bf16.mxu0 %v305
    %390 = vmatpush1.bf16.msra.mxu0 %v302
    %391 = vmatprep.subr.bf16.mxu0 0
    %392 = vmatpush1.bf16.msra.mxu0 0
    %393 = vmatprep.subr.bf16.mxu0 0
    %394 = vmatpush1.bf16.msra.mxu0 0
    %395 = vmatprep.subr.bf16.mxu0 0
    %396 = vmatpush1.bf16.msra.mxu0 0
    %397 = vmatprep.subr.bf16.mxu0 0
    %398 = vmatpush1.bf16.msra.mxu0 0
    %399 = vmatprep.subr.bf16.mxu0 0
    %400 = vmatpush1.bf16.msra.mxu0 0
    %401 = vmatprep.subr.bf16.mxu0 0
    %402 = vmatpush1.bf16.msra.mxu0 0
    %403 = vmatprep.subr.bf16.mxu0 0
    %404 = vmatpush1.bf16.msra.mxu0 0
    %405 = vmatprep.subr.bf16.mxu0 0
    %406 = vmatpush1.bf16.msra.mxu0 0
    %407 = vmatprep.subr.bf16.mxu0 0
    %408 = vmatpush1.bf16.msra.mxu0 0
    %409 = vmatprep.subr.bf16.mxu0 0
    %410 = vmatpush1.bf16.msra.mxu0 0
    %411 = vmatprep.subr.bf16.mxu0 0
    %412 = vmatpush1.bf16.msra.mxu0 0
    %413 = vmatprep.subr.bf16.mxu0 0
    %414 = vmatpush1.bf16.msra.mxu0 0
    %415 = vmatprep.subr.bf16.mxu0 0
    %416 = vmatpush1.bf16.msra.mxu0 0
    %417 = vmatprep.subr.bf16.mxu0 0
    %418 = vmatpush1.bf16.msra.mxu0 0
    %419 = vmatprep.subr.bf16.mxu0 0
    %420 = vmatpush1.bf16.msra.mxu0 0
    %421 = vmatprep.mubr.bf16.mxu0 0
    %422 = vmatmul.mubr.bf16.gmra.mrb[0].mxu0 %v286
    %v423 = vpop.f32.mrb[0].mxu0
    %v424 = vadd.f32 0.0, %v423
    %v425 = vpop.f32.mrb[0].mxu0
    %v426 = vadd.f32 0.0, %v425
    %v427 = vpop.f32.mrb[0].mxu0
    %v428 = vpop.f32.mrb[0].mxu0
    %429 = vdwg.mxu0
    %v436 = vunpack.c.l.b16 %v259
    %v437 = vunpack.c.h.b16 %v259
    %v438 = vunpack.c.l.b16 %v260
    %v439 = vunpack.c.h.b16 %v260
    %v440 = vunpack.c.l.b16 %v261
    %v441 = vunpack.c.h.b16 %v261
    %v442 = vunpack.c.l.b16 %v262
    %v443 = vunpack.c.h.b16 %v262
    %v444 = vunpack.c.l.b16 %v263
    %v445 = vunpack.c.h.b16 %v263
    %v446 = vunpack.c.l.b16 %v264
    %v447 = vunpack.c.h.b16 %v264
    %v448 = vpack.c.b16 %v442, %v436
    %v449 = vpack.c.b16 %v443, %v437
    %v450 = vpack.c.b16 %v444, %v438
    %v451 = vpack.c.b16 %v445, %v439
    %v452 = vpack.c.b16 %v446, %v440
    %v453 = vpack.c.b16 %v447, %v441
    %vm460 = vcmask 130048
    %v462 = vsel %vm460, %v258, 0
    %464 = vmatprep.subr.bf16.mxu0 %v449
    %465 = vmatpush1.bf16.msra.mxu0 %v448
    %466 = vmatprep.subr.bf16.mxu0 0
    %467 = vmatpush1.bf16.msra.mxu0 0
    %468 = vmatprep.subr.bf16.mxu0 0
    %469 = vmatpush1.bf16.msra.mxu0 0
    %470 = vmatprep.subr.bf16.mxu0 0
    %471 = vmatpush1.bf16.msra.mxu0 0
    %472 = vmatprep.subr.bf16.mxu0 0
    %473 = vmatpush1.bf16.msra.mxu0 0
    %474 = vmatprep.subr.bf16.mxu0 0
    %475 = vmatpush1.bf16.msra.mxu0 0
    %476 = vmatprep.subr.bf16.mxu0 0
    %477 = vmatpush1.bf16.msra.mxu0 0
    %478 = vmatprep.subr.bf16.mxu0 0
    %479 = vmatpush1.bf16.msra.mxu0 0
    %480 = vmatprep.subr.bf16.mxu0 0
    %481 = vmatpush1.bf16.msra.mxu0 0
    %482 = vmatprep.subr.bf16.mxu0 0
    %483 = vmatpush1.bf16.msra.mxu0 0
    %484 = vmatprep.subr.bf16.mxu0 0
    %485 = vmatpush1.bf16.msra.mxu0 0
    %486 = vmatprep.subr.bf16.mxu0 0
    %487 = vmatpush1.bf16.msra.mxu0 0
    %488 = vmatprep.subr.bf16.mxu0 0
    %489 = vmatpush1.bf16.msra.mxu0 0
    %490 = vmatprep.subr.bf16.mxu0 0
    %491 = vmatpush1.bf16.msra.mxu0 0
    %492 = vmatprep.subr.bf16.mxu0 0
    %493 = vmatpush1.bf16.msra.mxu0 0
    %494 = vmatprep.subr.bf16.mxu0 0
    %495 = vmatpush1.bf16.msra.mxu0 0
    %496 = vmatprep.mubr.bf16.mxu0 0
    %497 = vmatmul.mubr.bf16.gmra.mrb[0].mxu0 %v462
    %v498 = vpop.f32.mrb[0].mxu0
    %v499 = vadd.f32 %v342, %v498
    %v500 = vpop.f32.mrb[0].mxu0
    %v501 = vadd.f32 %v344, %v500
    %v502 = vpop.f32.mrb[0].mxu0
    %v503 = vpop.f32.mrb[0].mxu0
    %504 = vdwg.mxu0
    %505 = vmatprep.subr.bf16.mxu0 %v451
    %506 = vmatpush1.bf16.msra.mxu0 %v450
    %507 = vmatprep.subr.bf16.mxu0 0
    %508 = vmatpush1.bf16.msra.mxu0 0
    %509 = vmatprep.subr.bf16.mxu0 0
    %510 = vmatpush1.bf16.msra.mxu0 0
    %511 = vmatprep.subr.bf16.mxu0 0
    %512 = vmatpush1.bf16.msra.mxu0 0
    %513 = vmatprep.subr.bf16.mxu0 0
    %514 = vmatpush1.bf16.msra.mxu0 0
    %515 = vmatprep.subr.bf16.mxu0 0
    %516 = vmatpush1.bf16.msra.mxu0 0
    %517 = vmatprep.subr.bf16.mxu0 0
    %518 = vmatpush1.bf16.msra.mxu0 0
    %519 = vmatprep.subr.bf16.mxu0 0
    %520 = vmatpush1.bf16.msra.mxu0 0
    %521 = vmatprep.subr.bf16.mxu0 0
    %522 = vmatpush1.bf16.msra.mxu0 0
    %523 = vmatprep.subr.bf16.mxu0 0
    %524 = vmatpush1.bf16.msra.mxu0 0
    %525 = vmatprep.subr.bf16.mxu0 0
    %526 = vmatpush1.bf16.msra.mxu0 0
    %527 = vmatprep.subr.bf16.mxu0 0
    %528 = vmatpush1.bf16.msra.mxu0 0
    %529 = vmatprep.subr.bf16.mxu0 0
    %530 = vmatpush1.bf16.msra.mxu0 0
    %531 = vmatprep.subr.bf16.mxu0 0
    %532 = vmatpush1.bf16.msra.mxu0 0
    %533 = vmatprep.subr.bf16.mxu0 0
    %534 = vmatpush1.bf16.msra.mxu0 0
    %535 = vmatprep.subr.bf16.mxu0 0
    %536 = vmatpush1.bf16.msra.mxu0 0
    %537 = vmatprep.mubr.bf16.mxu0 0
    %538 = vmatmul.mubr.bf16.gmra.mrb[0].mxu0 %v462
    %v539 = vpop.f32.mrb[0].mxu0
    %v540 = vadd.f32 %v383, %v539
    %v541 = vpop.f32.mrb[0].mxu0
    %v542 = vadd.f32 %v385, %v541
    %v543 = vpop.f32.mrb[0].mxu0
    %v544 = vpop.f32.mrb[0].mxu0
    %545 = vdwg.mxu0
    %546 = vmatprep.subr.bf16.mxu0 %v453
    %547 = vmatpush1.bf16.msra.mxu0 %v452
    %548 = vmatprep.subr.bf16.mxu0 0
    %549 = vmatpush1.bf16.msra.mxu0 0
    %550 = vmatprep.subr.bf16.mxu0 0
    %551 = vmatpush1.bf16.msra.mxu0 0
    %552 = vmatprep.subr.bf16.mxu0 0
    %553 = vmatpush1.bf16.msra.mxu0 0
    %554 = vmatprep.subr.bf16.mxu0 0
    %555 = vmatpush1.bf16.msra.mxu0 0
    %556 = vmatprep.subr.bf16.mxu0 0
    %557 = vmatpush1.bf16.msra.mxu0 0
    %558 = vmatprep.subr.bf16.mxu0 0
    %559 = vmatpush1.bf16.msra.mxu0 0
    %560 = vmatprep.subr.bf16.mxu0 0
    %561 = vmatpush1.bf16.msra.mxu0 0
    %562 = vmatprep.subr.bf16.mxu0 0
    %563 = vmatpush1.bf16.msra.mxu0 0
    %564 = vmatprep.subr.bf16.mxu0 0
    %565 = vmatpush1.bf16.msra.mxu0 0
    %566 = vmatprep.subr.bf16.mxu0 0
    %567 = vmatpush1.bf16.msra.mxu0 0
    %568 = vmatprep.subr.bf16.mxu0 0
    %569 = vmatpush1.bf16.msra.mxu0 0
    %570 = vmatprep.subr.bf16.mxu0 0
    %571 = vmatpush1.bf16.msra.mxu0 0
    %572 = vmatprep.subr.bf16.mxu0 0
    %573 = vmatpush1.bf16.msra.mxu0 0
    %574 = vmatprep.subr.bf16.mxu0 0
    %575 = vmatpush1.bf16.msra.mxu0 0
    %576 = vmatprep.subr.bf16.mxu0 0
    %577 = vmatpush1.bf16.msra.mxu0 0
    %578 = vmatprep.mubr.bf16.mxu0 0
    %579 = vmatmul.mubr.bf16.gmra.mrb[0].mxu0 %v462
    %v580 = vpop.f32.mrb[0].mxu0
    %v581 = vadd.f32 %v424, %v580
    %v582 = vpop.f32.mrb[0].mxu0
    %v583 = vadd.f32 %v426, %v582
    %v584 = vpop.f32.mrb[0].mxu0
    %v585 = vpop.f32.mrb[0].mxu0
    %586 = vdwg.mxu0
    %v587 = vld [vmem:[#allocation8] sm:$0x3f]
    %v589 = vlaneseq
    %v590 = vshrl.u32 %v589, 7
    %v591 = vsub.s32 0, %v590
    %v592 = vrot.slane %v587, %v591
    %v593 = vlaneseq
    %v594 = vshrl.u32 %v593, 7
    %v595 = vsub.s32 1, %v594
    %v596 = vrot.slane %v587, %v595
    %v597 = vlaneseq
    %v598 = vshrl.u32 %v597, 7
    %v599 = vsub.s32 2, %v598
    %v600 = vrot.slane %v587, %v599
    %v601 = vlaneseq
    %v602 = vshrl.u32 %v601, 7
    %v603 = vsub.s32 3, %v602
    %v604 = vrot.slane %v587, %v603
    %v605 = vlaneseq
    %v606 = vshrl.u32 %v605, 7
    %v607 = vsub.s32 4, %v606
    %v608 = vrot.slane %v587, %v607
    %v609 = vlaneseq
    %v610 = vshrl.u32 %v609, 7
    %v611 = vsub.s32 5, %v610
    %v612 = vrot.slane %v587, %v611
    %v619 = vadd.f32 %v499, %v592
    %v620 = vadd.f32 %v501, %v596
    %v621 = vadd.f32 %v540, %v600
    %v622 = vadd.f32 %v542, %v604
    %v623 = vadd.f32 %v581, %v608
    %v624 = vadd.f32 %v583, %v612
    %v625 = vmax.f32 %v619, 0.0
    %v626 = vmax.f32 %v620, 0.0
    %v627 = vmax.f32 %v621, 0.0
    %v628 = vmax.f32 %v622, 0.0
    %v629 = vmax.f32 %v623, 0.0
    %v630 = vmax.f32 %v624, 0.0
    %s631 = scalar_lea.vmem [#allocation8], 6
    %v632 = vld [vmem:[%s631] sm:$0x3f]
    %s633 = scalar_lea.vmem [#allocation8], 12
    %v634 = vld [vmem:[%s633] sm:$0x3f]
    %v635 = vsel %vm288, %v625, 0.0
    %v636 = vsel %vm288, %v626, 0.0
    %v637 = vadd.f32 %v635, %v636
    %v638 = vsel %vm288, %v627, 0.0
    %v639 = vadd.f32 %v637, %v638
    %v640 = vsel %vm288, %v628, 0.0
    %v641 = vadd.f32 %v639, %v640
    %v642 = vsel %vm288, %v629, 0.0
    %v643 = vadd.f32 %v641, %v642
    %v644 = vsel %vm288, %v630, 0.0
    %v645 = vadd.f32 %v643, %v644
    %646 = vadd.xlane.f32.xlu0 %v645
    %v647 = vpop.xlane.xlu0 %646
    %v648 = vrcp.pop 750.0
    %v649 = vmul.f32 %v647, %v648
    %v650 = vlaneseq
    %v651 = vand.u32 %v650, 127
    %v652 = vadd.s32 %v651, 128
    %v653 = vadd.s32 %v651, 256
    %v654 = vadd.s32 %v651, 384
    %v655 = vadd.s32 %v651, 512
    %v656 = vadd.s32 %v651, 640
    %vm657 = vcmp.lt.s32.totalorder %v651, 750
    %vm658 = vcmp.lt.s32.totalorder %v652, 750
    %vm659 = vcmp.lt.s32.totalorder %v653, 750
    %vm660 = vcmp.lt.s32.totalorder %v654, 750
    %vm661 = vcmp.lt.s32.totalorder %v655, 750
    %vm662 = vcmp.lt.s32.totalorder %v656, 750
    %v663 = vsub.f32 %v625, %v649
    %v664 = vsub.f32 %v626, %v649
    %v665 = vsub.f32 %v627, %v649
    %v666 = vsub.f32 %v628, %v649
    %v667 = vsub.f32 %v629, %v649
    %v668 = vsub.f32 %v630, %v649
    %v669 = vsel %vm657, %v663, 0.0
    %v670 = vsel %vm658, %v664, 0.0
    %v671 = vsel %vm659, %v665, 0.0
    %v672 = vsel %vm660, %v666, 0.0
    %v673 = vsel %vm661, %v667, 0.0
    %v674 = vsel %vm662, %v668, 0.0
    %v675 = vmul.f32 %v669, %v669
    %v676 = vmul.f32 %v670, %v670
    %v677 = vmul.f32 %v671, %v671
    %v678 = vmul.f32 %v672, %v672
    %v679 = vmul.f32 %v673, %v673
    %v680 = vmul.f32 %v674, %v674
    %v681 = vsel %vm288, %v675, 0.0
    %v682 = vsel %vm288, %v676, 0.0
    %v683 = vadd.f32 %v681, %v682
    %v684 = vsel %vm288, %v677, 0.0
    %v685 = vadd.f32 %v683, %v684
    %v686 = vsel %vm288, %v678, 0.0
    %v687 = vadd.f32 %v685, %v686
    %v688 = vsel %vm288, %v679, 0.0
    %v689 = vadd.f32 %v687, %v688
    %v690 = vsel %vm288, %v680, 0.0
    %v691 = vadd.f32 %v689, %v690
    %692 = vadd.xlane.f32.xlu0 %v691
    %v693 = vpop.xlane.xlu0 %692
    %v694 = vmul.f32 %v693, %v648
    %v695 = vadd.f32 %v694, 1e-05
    %v696 = vrsqrt.pop %v695
    %v697 = vmul.f32 %v669, %v696
    %v698 = vmul.f32 %v670, %v696
    %v699 = vmul.f32 %v671, %v696
    %v700 = vmul.f32 %v672, %v696
    %v701 = vmul.f32 %v673, %v696
    %v702 = vmul.f32 %v674, %v696
    %v704 = vlaneseq
    %v705 = vshrl.u32 %v704, 7
    %v706 = vsub.s32 0, %v705
    %v707 = vrot.slane %v632, %v706
    %v708 = vlaneseq
    %v709 = vshrl.u32 %v708, 7
    %v710 = vsub.s32 1, %v709
    %v711 = vrot.slane %v632, %v710
    %v712 = vlaneseq
    %v713 = vshrl.u32 %v712, 7
    %v714 = vsub.s32 2, %v713
    %v715 = vrot.slane %v632, %v714
    %v716 = vlaneseq
    %v717 = vshrl.u32 %v716, 7
    %v718 = vsub.s32 3, %v717
    %v719 = vrot.slane %v632, %v718
    %v720 = vlaneseq
    %v721 = vshrl.u32 %v720, 7
    %v722 = vsub.s32 4, %v721
    %v723 = vrot.slane %v632, %v722
    %v724 = vlaneseq
    %v725 = vshrl.u32 %v724, 7
    %v726 = vsub.s32 5, %v725
    %v727 = vrot.slane %v632, %v726
    %v734 = vmul.f32 %v697, %v707
    %v735 = vmul.f32 %v698, %v711
    %v736 = vmul.f32 %v699, %v715
    %v737 = vmul.f32 %v700, %v719
    %v738 = vmul.f32 %v701, %v723
    %v739 = vmul.f32 %v702, %v727
    %v741 = vlaneseq
    %v742 = vshrl.u32 %v741, 7
    %v743 = vsub.s32 0, %v742
    %v744 = vrot.slane %v634, %v743
    %v745 = vlaneseq
    %v746 = vshrl.u32 %v745, 7
    %v747 = vsub.s32 1, %v746
    %v748 = vrot.slane %v634, %v747
    %v749 = vlaneseq
    %v750 = vshrl.u32 %v749, 7
    %v751 = vsub.s32 2, %v750
    %v752 = vrot.slane %v634, %v751
    %v753 = vlaneseq
    %v754 = vshrl.u32 %v753, 7
    %v755 = vsub.s32 3, %v754
    %v756 = vrot.slane %v634, %v755
    %v757 = vlaneseq
    %v758 = vshrl.u32 %v757, 7
    %v759 = vsub.s32 4, %v758
    %v760 = vrot.slane %v634, %v759
    %v761 = vlaneseq
    %v762 = vshrl.u32 %v761, 7
    %v763 = vsub.s32 5, %v762
    %v764 = vrot.slane %v634, %v763
    %v771 = vadd.f32 %v734, %v744
    %v772 = vadd.f32 %v735, %v748
    %v773 = vadd.f32 %v736, %v752
    %v774 = vadd.f32 %v737, %v756
    %v775 = vadd.f32 %v738, %v760
    %v776 = vadd.f32 %v739, %v764
    %v777 = vpack.c.bf16 %v771, %v771
    %v778 = vpack.c.bf16 %v772, %v772
    %v779 = vpack.c.bf16 %v773, %v773
    %v780 = vpack.c.bf16 %v774, %v774
    %v781 = vpack.c.bf16 %v775, %v775
    %v782 = vpack.c.bf16 %v776, %v776
    %v783 = vld [vmem:[#allocation14] sm:$0xff]
    %v784 = vld [vmem:[#allocation14 + $0x8] sm:$0xff]
    %v785 = vld [vmem:[#allocation14 + $0x10] sm:$0xff]
    %v786 = vld [vmem:[#allocation14 + $0x18] sm:$0xff]
    %v787 = vld [vmem:[#allocation14 + $0x20] sm:$0xff]
    %v788 = vld [vmem:[#allocation14 + $0x28] sm:$0xff]
    %v789 = vld [vmem:[#allocation14 + $0x30] sm:$0xff]
    %v790 = vld [vmem:[#allocation14 + $0x38] sm:$0xff]
    %v791 = vld [vmem:[#allocation14 + $0x40] sm:$0xff]
    %v792 = vld [vmem:[#allocation14 + $0x48] sm:$0xff]
    %v793 = vld [vmem:[#allocation14 + $0x50] sm:$0xff]
    %v794 = vld [vmem:[#allocation14 + $0x58] sm:$0xff]
    %v795 = vld [vmem:[#allocation14 + $0x60] sm:$0xff]
    %v796 = vld [vmem:[#allocation14 + $0x68] sm:$0xff]
    %v797 = vld [vmem:[#allocation14 + $0x70] sm:$0xff]
    %v798 = vld [vmem:[#allocation14 + $0x78] sm:$0xff]
    %v799 = vld [vmem:[#allocation14 + $0x80] sm:$0xff]
    %v800 = vld [vmem:[#allocation14 + $0x88] sm:$0xff]
    %v801 = vld [vmem:[#allocation14 + $0x90] sm:$0xff]
    %v802 = vld [vmem:[#allocation14 + $0x98] sm:$0xff]
    %v803 = vld [vmem:[#allocation14 + $0xa0] sm:$0xff]
    %v804 = vld [vmem:[#allocation14 + $0xa8] sm:$0xff]
    %v805 = vld [vmem:[#allocation14 + $0xb0] sm:$0xff]
    %v806 = vld [vmem:[#allocation14 + $0xb8] sm:$0xff]
    %v807 = vld [vmem:[#allocation14 + $0xc0] sm:$0xff]
    %v808 = vld [vmem:[#allocation14 + $0xc8] sm:$0xff]
    %v809 = vld [vmem:[#allocation14 + $0xd0] sm:$0xff]
    %v810 = vld [vmem:[#allocation14 + $0xd8] sm:$0xff]
    %v811 = vld [vmem:[#allocation14 + $0xe0] sm:$0xff]
    %v812 = vld [vmem:[#allocation14 + $0xe8] sm:$0xff]
    %v813 = vld [vmem:[#allocation14 + $0xf0] sm:$0xff]
    %v814 = vld [vmem:[#allocation14 + $0xf8] sm:$0xff]
    %v815 = vld [vmem:[#allocation14 + $0x100] sm:$0xff]
    %v816 = vld [vmem:[#allocation14 + $0x108] sm:$0xff]
    %v817 = vld [vmem:[#allocation14 + $0x110] sm:$0xff]
    %v818 = vld [vmem:[#allocation14 + $0x118] sm:$0xff]
    %v819 = vld [vmem:[#allocation14 + $0x120] sm:$0xff]
    %v820 = vld [vmem:[#allocation14 + $0x128] sm:$0xff]
    %v821 = vld [vmem:[#allocation14 + $0x130] sm:$0xff]
    %v822 = vld [vmem:[#allocation14 + $0x138] sm:$0xff]
    %v823 = vld [vmem:[#allocation14 + $0x140] sm:$0xff]
    %v824 = vld [vmem:[#allocation14 + $0x148] sm:$0xff]
    %v825 = vld [vmem:[#allocation14 + $0x150] sm:$0xff]
    %v826 = vld [vmem:[#allocation14 + $0x158] sm:$0xff]
    %v827 = vld [vmem:[#allocation14 + $0x160] sm:$0xff]
    %v828 = vld [vmem:[#allocation14 + $0x168] sm:$0xff]
    %v829 = vld [vmem:[#allocation14 + $0x170] sm:$0xff]
    %v830 = vld [vmem:[#allocation14 + $0x178] sm:$0xff]
    %v831 = vld [vmem:[#allocation14 + $0x180] sm:$0xff]
    %v832 = vld [vmem:[#allocation14 + $0x188] sm:$0xff]
    %v833 = vld [vmem:[#allocation14 + $0x190] sm:$0xff]
    %v834 = vld [vmem:[#allocation14 + $0x198] sm:$0xff]
    %v835 = vld [vmem:[#allocation14 + $0x1a0] sm:$0xff]
    %v836 = vld [vmem:[#allocation14 + $0x1a8] sm:$0xff]
    %v837 = vld [vmem:[#allocation14 + $0x1b0] sm:$0xff]
    %v838 = vld [vmem:[#allocation14 + $0x1b8] sm:$0xff]
    %v839 = vld [vmem:[#allocation14 + $0x1c0] sm:$0xff]
    %v840 = vld [vmem:[#allocation14 + $0x1c8] sm:$0xff]
    %v841 = vld [vmem:[#allocation14 + $0x1d0] sm:$0xff]
    %v842 = vld [vmem:[#allocation14 + $0x1d8] sm:$0xff]
    %v843 = vld [vmem:[#allocation14 + $0x1e0] sm:$0xff]
    %v844 = vld [vmem:[#allocation14 + $0x1e8] sm:$0xff]
    %v845 = vld [vmem:[#allocation14 + $0x1f0] sm:$0xff]
    %v846 = vld [vmem:[#allocation14 + $0x1f8] sm:$0xff]
    %v847 = vld [vmem:[#allocation14 + $0x200] sm:$0xff]
    %v848 = vld [vmem:[#allocation14 + $0x208] sm:$0xff]
    %v849 = vld [vmem:[#allocation14 + $0x210] sm:$0xff]
    %v850 = vld [vmem:[#allocation14 + $0x218] sm:$0xff]
    %v851 = vld [vmem:[#allocation14 + $0x220] sm:$0xff]
    %v852 = vld [vmem:[#allocation14 + $0x228] sm:$0xff]
    %v853 = vld [vmem:[#allocation14 + $0x230] sm:$0xff]
    %v854 = vld [vmem:[#allocation14 + $0x238] sm:$0xff]
    %v855 = vld [vmem:[#allocation14 + $0x240] sm:$0xff]
    %v856 = vld [vmem:[#allocation14 + $0x248] sm:$0xff]
    %v857 = vld [vmem:[#allocation14 + $0x250] sm:$0xff]
    %v858 = vld [vmem:[#allocation14 + $0x258] sm:$0xff]
    %v859 = vld [vmem:[#allocation14 + $0x260] sm:$0xff]
    %v860 = vld [vmem:[#allocation14 + $0x268] sm:$0xff]
    %v861 = vld [vmem:[#allocation14 + $0x270] sm:$0xff]
    %v862 = vld [vmem:[#allocation14 + $0x278] sm:$0xff]
    %v863 = vld [vmem:[#allocation14 + $0x280] sm:$0xff]
    %v864 = vld [vmem:[#allocation14 + $0x288] sm:$0xff]
    %v865 = vld [vmem:[#allocation14 + $0x290] sm:$0xff]
    %v866 = vld [vmem:[#allocation14 + $0x298] sm:$0xff]
    %v867 = vld [vmem:[#allocation14 + $0x2a0] sm:$0xff]
    %v868 = vld [vmem:[#allocation14 + $0x2a8] sm:$0xff]
    %v869 = vld [vmem:[#allocation14 + $0x2b0] sm:$0xff]
    %v870 = vld [vmem:[#allocation14 + $0x2b8] sm:$0xff]
    %v871 = vld [vmem:[#allocation14 + $0x2c0] sm:$0xff]
    %v872 = vld [vmem:[#allocation14 + $0x2c8] sm:$0xff]
    %v873 = vld [vmem:[#allocation14 + $0x2d0] sm:$0xff]
    %v874 = vld [vmem:[#allocation14 + $0x2d8] sm:$0xff]
    %v875 = vld [vmem:[#allocation14 + $0x2e0] sm:$0xff]
    %v876 = vld [vmem:[#allocation14 + $0x2e8] sm:$0xff]
    %v877 = vld [vmem:[#allocation14 + $0x2f0] sm:$0xff]
    %v878 = vld [vmem:[#allocation14 + $0x2f8] sm:$0xff]
    %v879 = vld [vmem:[#allocation14 + $0x300] sm:$0xff]
    %v880 = vld [vmem:[#allocation14 + $0x308] sm:$0xff]
    %v881 = vld [vmem:[#allocation14 + $0x310] sm:$0xff]
    %v882 = vld [vmem:[#allocation14 + $0x318] sm:$0xff]
    %v883 = vld [vmem:[#allocation14 + $0x320] sm:$0xff]
    %v884 = vld [vmem:[#allocation14 + $0x328] sm:$0xff]
    %v885 = vld [vmem:[#allocation14 + $0x330] sm:$0xff]
    %v886 = vld [vmem:[#allocation14 + $0x338] sm:$0xff]
    %v887 = vld [vmem:[#allocation14 + $0x340] sm:$0xff]
    %v888 = vld [vmem:[#allocation14 + $0x348] sm:$0xff]
    %v889 = vld [vmem:[#allocation14 + $0x350] sm:$0xff]
    %v890 = vld [vmem:[#allocation14 + $0x358] sm:$0xff]
    %v891 = vld [vmem:[#allocation14 + $0x360] sm:$0xff]
    %v892 = vld [vmem:[#allocation14 + $0x368] sm:$0xff]
    %v893 = vld [vmem:[#allocation14 + $0x370] sm:$0xff]
    %v894 = vld [vmem:[#allocation14 + $0x378] sm:$0xff]
    %v895 = vld [vmem:[#allocation14 + $0x380] sm:$0xff]
    %v896 = vld [vmem:[#allocation14 + $0x388] sm:$0xff]
    %v897 = vld [vmem:[#allocation14 + $0x390] sm:$0xff]
    %v898 = vld [vmem:[#allocation14 + $0x398] sm:$0xff]
    %v899 = vld [vmem:[#allocation14 + $0x3a0] sm:$0xff]
    %v900 = vld [vmem:[#allocation14 + $0x3a8] sm:$0xff]
    %v901 = vld [vmem:[#allocation14 + $0x3b0] sm:$0xff]
    %v902 = vld [vmem:[#allocation14 + $0x3b8] sm:$0xff]
    %v903 = vld [vmem:[#allocation14 + $0x3c0] sm:$0xff]
    %v904 = vld [vmem:[#allocation14 + $0x3c8] sm:$0xff]
    %v905 = vld [vmem:[#allocation14 + $0x3d0] sm:$0xff]
    %v906 = vld [vmem:[#allocation14 + $0x3d8] sm:$0xff]
    %v907 = vld [vmem:[#allocation14 + $0x3e0] sm:$0xff]
    %v908 = vld [vmem:[#allocation14 + $0x3e8] sm:$0xff]
    %v909 = vld [vmem:[#allocation14 + $0x3f0] sm:$0xff]
    %v910 = vld [vmem:[#allocation14 + $0x3f8] sm:$0xff]
    %v911 = vld [vmem:[#allocation14 + $0x400] sm:$0xff]
    %v912 = vld [vmem:[#allocation14 + $0x408] sm:$0xff]
    %v913 = vld [vmem:[#allocation14 + $0x410] sm:$0xff]
    %v914 = vld [vmem:[#allocation14 + $0x418] sm:$0xff]
    %v915 = vld [vmem:[#allocation14 + $0x420] sm:$0xff]
    %v916 = vld [vmem:[#allocation14 + $0x428] sm:$0xff]
    %v917 = vld [vmem:[#allocation14 + $0x430] sm:$0xff]
    %v918 = vld [vmem:[#allocation14 + $0x438] sm:$0xff]
    %v919 = vld [vmem:[#allocation14 + $0x440] sm:$0xff]
    %v920 = vld [vmem:[#allocation14 + $0x448] sm:$0xff]
    %v921 = vld [vmem:[#allocation14 + $0x450] sm:$0xff]
    %v922 = vld [vmem:[#allocation14 + $0x458] sm:$0xff]
    %v923 = vld [vmem:[#allocation14 + $0x460] sm:$0xff]
    %v924 = vld [vmem:[#allocation14 + $0x468] sm:$0xff]
    %v925 = vld [vmem:[#allocation14 + $0x470] sm:$0xff]
    %v926 = vld [vmem:[#allocation14 + $0x478] sm:$0xff]
    %v927 = vld [vmem:[#allocation14 + $0x480] sm:$0xff]
    %v928 = vld [vmem:[#allocation14 + $0x488] sm:$0xff]
    %v929 = vld [vmem:[#allocation14 + $0x490] sm:$0xff]
    %v930 = vld [vmem:[#allocation14 + $0x498] sm:$0xff]
    %v931 = vld [vmem:[#allocation14 + $0x4a0] sm:$0xff]
    %v932 = vld [vmem:[#allocation14 + $0x4a8] sm:$0xff]
    %v933 = vld [vmem:[#allocation14 + $0x4b0] sm:$0xff]
    %v934 = vld [vmem:[#allocation14 + $0x4b8] sm:$0xff]
    %v935 = vld [vmem:[#allocation14 + $0x4c0] sm:$0xff]
    %v936 = vld [vmem:[#allocation14 + $0x4c8] sm:$0xff]
    %v937 = vld [vmem:[#allocation14 + $0x4d0] sm:$0xff]
    %v938 = vld [vmem:[#allocation14 + $0x4d8] sm:$0xff]
    %v939 = vld [vmem:[#allocation14 + $0x4e0] sm:$0xff]
    %v940 = vld [vmem:[#allocation14 + $0x4e8] sm:$0xff]
    %v941 = vld [vmem:[#allocation14 + $0x4f0] sm:$0xff]
    %v942 = vld [vmem:[#allocation14 + $0x4f8] sm:$0xff]
    %v943 = vld [vmem:[#allocation14 + $0x500] sm:$0xff]
    %v944 = vld [vmem:[#allocation14 + $0x508] sm:$0xff]
    %v945 = vld [vmem:[#allocation14 + $0x510] sm:$0xff]
    %v946 = vld [vmem:[#allocation14 + $0x518] sm:$0xff]
    %v947 = vld [vmem:[#allocation14 + $0x520] sm:$0xff]
    %v948 = vld [vmem:[#allocation14 + $0x528] sm:$0xff]
    %v949 = vld [vmem:[#allocation14 + $0x530] sm:$0xff]
    %v950 = vld [vmem:[#allocation14 + $0x538] sm:$0xff]
    %v951 = vld [vmem:[#allocation14 + $0x540] sm:$0xff]
    %v952 = vld [vmem:[#allocation14 + $0x548] sm:$0xff]
    %v953 = vld [vmem:[#allocation14 + $0x550] sm:$0xff]
    %v954 = vld [vmem:[#allocation14 + $0x558] sm:$0xff]
    %v955 = vld [vmem:[#allocation14 + $0x560] sm:$0xff]
    %v956 = vld [vmem:[#allocation14 + $0x568] sm:$0xff]
    %v957 = vld [vmem:[#allocation14 + $0x570] sm:$0xff]
    %v958 = vld [vmem:[#allocation14 + $0x578] sm:$0xff]
    %v959 = vld [vmem:[#allocation14 + $0x580] sm:$0xff]
    %v960 = vld [vmem:[#allocation14 + $0x588] sm:$0xff]
    %v961 = vld [vmem:[#allocation14 + $0x590] sm:$0xff]
    %v962 = vld [vmem:[#allocation14 + $0x598] sm:$0xff]
    %v963 = vld [vmem:[#allocation14 + $0x5a0] sm:$0xff]
    %v964 = vld [vmem:[#allocation14 + $0x5a8] sm:$0xff]
    %v965 = vld [vmem:[#allocation14 + $0x5b0] sm:$0xff]
    %v966 = vld [vmem:[#allocation14 + $0x5b8] sm:$0xff]
    %v967 = vld [vmem:[#allocation14 + $0x5c0] sm:$0xff]
    %v968 = vld [vmem:[#allocation14 + $0x5c8] sm:$0xff]
    %v969 = vld [vmem:[#allocation14 + $0x5d0] sm:$0xff]
    %v970 = vld [vmem:[#allocation14 + $0x5d8] sm:$0xff]
    %v971 = vld [vmem:[#allocation14 + $0x5e0] sm:$0xff]
    %v972 = vld [vmem:[#allocation14 + $0x5e8] sm:$0xff]
    %v973 = vld [vmem:[#allocation14 + $0x5f0] sm:$0xff]
    %v974 = vld [vmem:[#allocation14 + $0x5f8] sm:$0xff]
    %v975 = vld [vmem:[#allocation14 + $0x600] sm:$0xff]
    %v976 = vld [vmem:[#allocation14 + $0x608] sm:$0xff]
    %v977 = vld [vmem:[#allocation14 + $0x610] sm:$0xff]
    %v978 = vld [vmem:[#allocation14 + $0x618] sm:$0xff]
    %v979 = vld [vmem:[#allocation14 + $0x620] sm:$0xff]
    %v980 = vld [vmem:[#allocation14 + $0x628] sm:$0xff]
    %v981 = vld [vmem:[#allocation14 + $0x630] sm:$0xff]
    %v982 = vld [vmem:[#allocation14 + $0x638] sm:$0xff]
    %v983 = vld [vmem:[#allocation14 + $0x640] sm:$0xff]
    %v984 = vld [vmem:[#allocation14 + $0x648] sm:$0xff]
    %v985 = vld [vmem:[#allocation14 + $0x650] sm:$0xff]
    %v986 = vld [vmem:[#allocation14 + $0x658] sm:$0xff]
    %v987 = vld [vmem:[#allocation14 + $0x660] sm:$0xff]
    %v988 = vld [vmem:[#allocation14 + $0x668] sm:$0xff]
    %v989 = vld [vmem:[#allocation14 + $0x670] sm:$0xff]
    %v990 = vld [vmem:[#allocation14 + $0x678] sm:$0xff]
    %v991 = vld [vmem:[#allocation14 + $0x680] sm:$0xff]
    %v992 = vld [vmem:[#allocation14 + $0x688] sm:$0xff]
    %v993 = vld [vmem:[#allocation14 + $0x690] sm:$0xff]
    %v994 = vld [vmem:[#allocation14 + $0x698] sm:$0xff]
    %v995 = vld [vmem:[#allocation14 + $0x6a0] sm:$0xff]
    %v996 = vld [vmem:[#allocation14 + $0x6a8] sm:$0xff]
    %v997 = vld [vmem:[#allocation14 + $0x6b0] sm:$0xff]
    %v998 = vld [vmem:[#allocation14 + $0x6b8] sm:$0xff]
    %v999 = vld [vmem:[#allocation14 + $0x6c0] sm:$0xff]
    %v1000 = vld [vmem:[#allocation14 + $0x6c8] sm:$0xff]
    %v1001 = vld [vmem:[#allocation14 + $0x6d0] sm:$0xff]
    %v1002 = vld [vmem:[#allocation14 + $0x6d8] sm:$0xff]
    %v1003 = vld [vmem:[#allocation14 + $0x6e0] sm:$0xff]
    %v1004 = vld [vmem:[#allocation14 + $0x6e8] sm:$0xff]
    %v1005 = vld [vmem:[#allocation14 + $0x6f0] sm:$0xff]
    %v1006 = vld [vmem:[#allocation14 + $0x6f8] sm:$0xff]
    %v1007 = vld [vmem:[#allocation14 + $0x700] sm:$0xff]
    %v1008 = vld [vmem:[#allocation14 + $0x708] sm:$0xff]
    %v1009 = vld [vmem:[#allocation14 + $0x710] sm:$0xff]
    %v1010 = vld [vmem:[#allocation14 + $0x718] sm:$0xff]
    %v1011 = vld [vmem:[#allocation14 + $0x720] sm:$0xff]
    %v1012 = vld [vmem:[#allocation14 + $0x728] sm:$0xff]
    %v1013 = vld [vmem:[#allocation14 + $0x730] sm:$0xff]
    %v1014 = vld [vmem:[#allocation14 + $0x738] sm:$0xff]
    %v1015 = vld [vmem:[#allocation14 + $0x740] sm:$0xff]
    %v1016 = vld [vmem:[#allocation14 + $0x748] sm:$0xff]
    %v1017 = vld [vmem:[#allocation14 + $0x750] sm:$0xff]
    %v1018 = vld [vmem:[#allocation14 + $0x758] sm:$0xff]
    %v1019 = vld [vmem:[#allocation14 + $0x760] sm:$0xff]
    %v1020 = vld [vmem:[#allocation14 + $0x768] sm:$0xff]
    %v1021 = vld [vmem:[#allocation14 + $0x770] sm:$0xff]
    %v1022 = vld [vmem:[#allocation14 + $0x778] sm:$0xff]
    %v1023 = vld [vmem:[#allocation14 + $0x780] sm:$0xff]
    %v1024 = vld [vmem:[#allocation14 + $0x788] sm:$0xff]
    %v1025 = vld [vmem:[#allocation14 + $0x790] sm:$0xff]
    %v1026 = vld [vmem:[#allocation14 + $0x798] sm:$0xff]
    %v1027 = vld [vmem:[#allocation14 + $0x7a0] sm:$0xff]
    %v1028 = vld [vmem:[#allocation14 + $0x7a8] sm:$0xff]
    %v1029 = vld [vmem:[#allocation14 + $0x7b0] sm:$0xff]
    %v1030 = vld [vmem:[#allocation14 + $0x7b8] sm:$0xff]
    %v1031 = vld [vmem:[#allocation14 + $0x7c0] sm:$0xff]
    %v1032 = vld [vmem:[#allocation14 + $0x7c8] sm:$0xff]
    %v1033 = vld [vmem:[#allocation14 + $0x7d0] sm:$0xff]
    %v1034 = vld [vmem:[#allocation14 + $0x7d8] sm:$0xff]
    %v1035 = vld [vmem:[#allocation14 + $0x7e0] sm:$0xff]
    %v1036 = vld [vmem:[#allocation14 + $0x7e8] sm:$0xff]
    %v1037 = vld [vmem:[#allocation14 + $0x7f0] sm:$0xff]
    %v1038 = vld [vmem:[#allocation14 + $0x7f8] sm:$0xff]
    %v1039 = vld [vmem:[#allocation14 + $0x800] sm:$0xff]
    %v1040 = vld [vmem:[#allocation14 + $0x808] sm:$0xff]
    %v1041 = vld [vmem:[#allocation14 + $0x810] sm:$0xff]
    %v1042 = vld [vmem:[#allocation14 + $0x818] sm:$0xff]
    %v1043 = vld [vmem:[#allocation14 + $0x820] sm:$0xff]
    %v1044 = vld [vmem:[#allocation14 + $0x828] sm:$0xff]
    %v1045 = vld [vmem:[#allocation14 + $0x830] sm:$0xff]
    %v1046 = vld [vmem:[#allocation14 + $0x838] sm:$0xff]
    %v1047 = vld [vmem:[#allocation14 + $0x840] sm:$0xff]
    %v1048 = vld [vmem:[#allocation14 + $0x848] sm:$0xff]
    %v1049 = vld [vmem:[#allocation14 + $0x850] sm:$0xff]
    %v1050 = vld [vmem:[#allocation14 + $0x858] sm:$0xff]
    %v1051 = vld [vmem:[#allocation14 + $0x860] sm:$0xff]
    %v1052 = vld [vmem:[#allocation14 + $0x868] sm:$0xff]
    %v1053 = vld [vmem:[#allocation14 + $0x870] sm:$0xff]
    %v1054 = vld [vmem:[#allocation14 + $0x878] sm:$0xff]
    %v1055 = vld [vmem:[#allocation14 + $0x880] sm:$0xff]
    %v1056 = vld [vmem:[#allocation14 + $0x888] sm:$0xff]
    %v1057 = vld [vmem:[#allocation14 + $0x890] sm:$0xff]
    %v1058 = vld [vmem:[#allocation14 + $0x898] sm:$0xff]
    %v1059 = vld [vmem:[#allocation14 + $0x8a0] sm:$0xff]
    %v1060 = vld [vmem:[#allocation14 + $0x8a8] sm:$0xff]
    %v1061 = vld [vmem:[#allocation14 + $0x8b0] sm:$0xff]
    %v1062 = vld [vmem:[#allocation14 + $0x8b8] sm:$0xff]
    %v1063 = vld [vmem:[#allocation14 + $0x8c0] sm:$0xff]
    %v1064 = vld [vmem:[#allocation14 + $0x8c8] sm:$0xff]
    %v1065 = vld [vmem:[#allocation14 + $0x8d0] sm:$0xff]
    %v1066 = vld [vmem:[#allocation14 + $0x8d8] sm:$0xff]
    %v1067 = vld [vmem:[#allocation14 + $0x8e0] sm:$0xff]
    %v1068 = vld [vmem:[#allocation14 + $0x8e8] sm:$0xff]
    %v1069 = vld [vmem:[#allocation14 + $0x8f0] sm:$0xff]
    %v1070 = vld [vmem:[#allocation14 + $0x8f8] sm:$0xff]
    %s1071 = scalar_lea.vmem [#allocation8], 18
    %v1072 = vld [vmem:[%s1071] sm:$0x3f]
    %v1074 = vlaneseq
    %v1075 = vshrl.u32 %v1074, 7
    %v1076 = vsub.s32 0, %v1075
    %v1077 = vrot.slane %v1072, %v1076
    %v1078 = vlaneseq
    %v1079 = vshrl.u32 %v1078, 7
    %v1080 = vsub.s32 1, %v1079
    %v1081 = vrot.slane %v1072, %v1080
    %v1082 = vlaneseq
    %v1083 = vshrl.u32 %v1082, 7
    %v1084 = vsub.s32 2, %v1083
    %v1085 = vrot.slane %v1072, %v1084
    %v1086 = vlaneseq
    %v1087 = vshrl.u32 %v1086, 7
    %v1088 = vsub.s32 3, %v1087
    %v1089 = vrot.slane %v1072, %v1088
    %v1090 = vlaneseq
    %v1091 = vshrl.u32 %v1090, 7
    %v1092 = vsub.s32 4, %v1091
    %v1093 = vrot.slane %v1072, %v1092
    %v1094 = vlaneseq
    %v1095 = vshrl.u32 %v1094, 7
    %v1096 = vsub.s32 5, %v1095
    %v1097 = vrot.slane %v1072, %v1096
    %v1392 = vunpack.c.l.b16 %v783
    %v1393 = vunpack.c.h.b16 %v783
    %v1394 = vunpack.c.l.b16 %v784
    %v1395 = vunpack.c.h.b16 %v784
    %v1396 = vunpack.c.l.b16 %v785
    %v1397 = vunpack.c.h.b16 %v785
    %v1398 = vunpack.c.l.b16 %v786
    %v1399 = vunpack.c.h.b16 %v786
    %v1400 = vunpack.c.l.b16 %v787
    %v1401 = vunpack.c.h.b16 %v787
    %v1402 = vunpack.c.l.b16 %v788
    %v1403 = vunpack.c.h.b16 %v788
    %v1404 = vunpack.c.l.b16 %v789
    %v1405 = vunpack.c.h.b16 %v789
    %v1406 = vunpack.c.l.b16 %v790
    %v1407 = vunpack.c.h.b16 %v790
    %v1408 = vunpack.c.l.b16 %v791
    %v1409 = vunpack.c.h.b16 %v791
    %v1410 = vunpack.c.l.b16 %v792
    %v1411 = vunpack.c.h.b16 %v792
    %v1412 = vunpack.c.l.b16 %v793
    %v1413 = vunpack.c.h.b16 %v793
    %v1414 = vunpack.c.l.b16 %v794
    %v1415 = vunpack.c.h.b16 %v794
    %v1416 = vunpack.c.l.b16 %v795
    %v1417 = vunpack.c.h.b16 %v795
    %v1418 = vunpack.c.l.b16 %v796
    %v1419 = vunpack.c.h.b16 %v796
    %v1420 = vunpack.c.l.b16 %v797
    %v1421 = vunpack.c.h.b16 %v797
    %v1422 = vunpack.c.l.b16 %v798
    %v1423 = vunpack.c.h.b16 %v798
    %v1424 = vunpack.c.l.b16 %v799
    %v1425 = vunpack.c.h.b16 %v799
    %v1426 = vunpack.c.l.b16 %v800
    %v1427 = vunpack.c.h.b16 %v800
    %v1428 = vunpack.c.l.b16 %v801
    %v1429 = vunpack.c.h.b16 %v801
    %v1430 = vunpack.c.l.b16 %v802
    %v1431 = vunpack.c.h.b16 %v802
    %v1432 = vunpack.c.l.b16 %v803
    %v1433 = vunpack.c.h.b16 %v803
    %v1434 = vunpack.c.l.b16 %v804
    %v1435 = vunpack.c.h.b16 %v804
    %v1436 = vunpack.c.l.b16 %v805
    %v1437 = vunpack.c.h.b16 %v805
    %v1438 = vunpack.c.l.b16 %v806
    %v1439 = vunpack.c.h.b16 %v806
    %v1440 = vunpack.c.l.b16 %v807
    %v1441 = vunpack.c.h.b16 %v807
    %v1442 = vunpack.c.l.b16 %v808
    %v1443 = vunpack.c.h.b16 %v808
    %v1444 = vunpack.c.l.b16 %v809
    %v1445 = vunpack.c.h.b16 %v809
    %v1446 = vunpack.c.l.b16 %v810
    %v1447 = vunpack.c.h.b16 %v810
    %v1448 = vunpack.c.l.b16 %v811
    %v1449 = vunpack.c.h.b16 %v811
    %v1450 = vunpack.c.l.b16 %v812
    %v1451 = vunpack.c.h.b16 %v812
    %v1452 = vunpack.c.l.b16 %v813
    %v1453 = vunpack.c.h.b16 %v813
    %v1454 = vunpack.c.l.b16 %v814
    %v1455 = vunpack.c.h.b16 %v814
    %v1456 = vunpack.c.l.b16 %v815
    %v1457 = vunpack.c.h.b16 %v815
    %v1458 = vunpack.c.l.b16 %v816
    %v1459 = vunpack.c.h.b16 %v816
    %v1460 = vunpack.c.l.b16 %v817
    %v1461 = vunpack.c.h.b16 %v817
    %v1462 = vunpack.c.l.b16 %v818
    %v1463 = vunpack.c.h.b16 %v818
    %v1464 = vunpack.c.l.b16 %v819
    %v1465 = vunpack.c.h.b16 %v819
    %v1466 = vunpack.c.l.b16 %v820
    %v1467 = vunpack.c.h.b16 %v820
    %v1468 = vunpack.c.l.b16 %v821
    %v1469 = vunpack.c.h.b16 %v821
    %v1470 = vunpack.c.l.b16 %v822
    %v1471 = vunpack.c.h.b16 %v822
    %v1472 = vunpack.c.l.b16 %v823
    %v1473 = vunpack.c.h.b16 %v823
    %v1474 = vunpack.c.l.b16 %v824
    %v1475 = vunpack.c.h.b16 %v824
    %v1476 = vunpack.c.l.b16 %v825
    %v1477 = vunpack.c.h.b16 %v825
    %v1478 = vunpack.c.l.b16 %v826
    %v1479 = vunpack.c.h.b16 %v826
    %v1480 = vunpack.c.l.b16 %v827
    %v1481 = vunpack.c.h.b16 %v827
    %v1482 = vunpack.c.l.b16 %v828
    %v1483 = vunpack.c.h.b16 %v828
    %v1484 = vunpack.c.l.b16 %v829
    %v1485 = vunpack.c.h.b16 %v829
    %v1486 = vunpack.c.l.b16 %v830
    %v1487 = vunpack.c.h.b16 %v830
    %v1488 = vunpack.c.l.b16 %v831
    %v1489 = vunpack.c.h.b16 %v831
    %v1490 = vunpack.c.l.b16 %v832
    %v1491 = vunpack.c.h.b16 %v832
    %v1492 = vunpack.c.l.b16 %v833
    %v1493 = vunpack.c.h.b16 %v833
    %v1494 = vunpack.c.l.b16 %v834
    %v1495 = vunpack.c.h.b16 %v834
    %v1496 = vunpack.c.l.b16 %v835
    %v1497 = vunpack.c.h.b16 %v835
    %v1498 = vunpack.c.l.b16 %v836
    %v1499 = vunpack.c.h.b16 %v836
    %v1500 = vunpack.c.l.b16 %v837
    %v1501 = vunpack.c.h.b16 %v837
    %v1502 = vunpack.c.l.b16 %v838
    %v1503 = vunpack.c.h.b16 %v838
    %v1504 = vunpack.c.l.b16 %v839
    %v1505 = vunpack.c.h.b16 %v839
    %v1506 = vunpack.c.l.b16 %v840
    %v1507 = vunpack.c.h.b16 %v840
    %v1508 = vunpack.c.l.b16 %v841
    %v1509 = vunpack.c.h.b16 %v841
    %v1510 = vunpack.c.l.b16 %v842
    %v1511 = vunpack.c.h.b16 %v842
    %v1512 = vunpack.c.l.b16 %v843
    %v1513 = vunpack.c.h.b16 %v843
    %v1514 = vunpack.c.l.b16 %v844
    %v1515 = vunpack.c.h.b16 %v844
    %v1516 = vunpack.c.l.b16 %v845
    %v1517 = vunpack.c.h.b16 %v845
    %v1518 = vunpack.c.l.b16 %v846
    %v1519 = vunpack.c.h.b16 %v846
    %v1520 = vunpack.c.l.b16 %v847
    %v1521 = vunpack.c.h.b16 %v847
    %v1522 = vunpack.c.l.b16 %v848
    %v1523 = vunpack.c.h.b16 %v848
    %v1524 = vunpack.c.l.b16 %v849
    %v1525 = vunpack.c.h.b16 %v849
    %v1526 = vunpack.c.l.b16 %v850
    %v1527 = vunpack.c.h.b16 %v850
    %v1528 = vunpack.c.l.b16 %v851
    %v1529 = vunpack.c.h.b16 %v851
    %v1530 = vunpack.c.l.b16 %v852
    %v1531 = vunpack.c.h.b16 %v852
    %v1532 = vunpack.c.l.b16 %v853
    %v1533 = vunpack.c.h.b16 %v853
    %v1534 = vunpack.c.l.b16 %v854
    %v1535 = vunpack.c.h.b16 %v854
    %v1536 = vunpack.c.l.b16 %v855
    %v1537 = vunpack.c.h.b16 %v855
    %v1538 = vunpack.c.l.b16 %v856
    %v1539 = vunpack.c.h.b16 %v856
    %v1540 = vunpack.c.l.b16 %v857
    %v1541 = vunpack.c.h.b16 %v857
    %v1542 = vunpack.c.l.b16 %v858
    %v1543 = vunpack.c.h.b16 %v858
    %v1544 = vunpack.c.l.b16 %v859
    %v1545 = vunpack.c.h.b16 %v859
    %v1546 = vunpack.c.l.b16 %v860
    %v1547 = vunpack.c.h.b16 %v860
    %v1548 = vunpack.c.l.b16 %v861
    %v1549 = vunpack.c.h.b16 %v861
    %v1550 = vunpack.c.l.b16 %v862
    %v1551 = vunpack.c.h.b16 %v862
    %v1552 = vunpack.c.l.b16 %v863
    %v1553 = vunpack.c.h.b16 %v863
    %v1554 = vunpack.c.l.b16 %v864
    %v1555 = vunpack.c.h.b16 %v864
    %v1556 = vunpack.c.l.b16 %v865
    %v1557 = vunpack.c.h.b16 %v865
    %v1558 = vunpack.c.l.b16 %v866
    %v1559 = vunpack.c.h.b16 %v866
    %v1560 = vunpack.c.l.b16 %v867
    %v1561 = vunpack.c.h.b16 %v867
    %v1562 = vunpack.c.l.b16 %v868
    %v1563 = vunpack.c.h.b16 %v868
    %v1564 = vunpack.c.l.b16 %v869
    %v1565 = vunpack.c.h.b16 %v869
    %v1566 = vunpack.c.l.b16 %v870
    %v1567 = vunpack.c.h.b16 %v870
    %v1568 = vunpack.c.l.b16 %v871
    %v1569 = vunpack.c.h.b16 %v871
    %v1570 = vunpack.c.l.b16 %v872
    %v1571 = vunpack.c.h.b16 %v872
    %v1572 = vunpack.c.l.b16 %v873
    %v1573 = vunpack.c.h.b16 %v873
    %v1574 = vunpack.c.l.b16 %v874
    %v1575 = vunpack.c.h.b16 %v874
    %v1576 = vunpack.c.l.b16 %v875
    %v1577 = vunpack.c.h.b16 %v875
    %v1578 = vunpack.c.l.b16 %v876
    %v1579 = vunpack.c.h.b16 %v876
    %v1580 = vunpack.c.l.b16 %v877
    %v1581 = vunpack.c.h.b16 %v877
    %v1582 = vunpack.c.l.b16 %v878
    %v1583 = vunpack.c.h.b16 %v878
    %v1584 = vunpack.c.l.b16 %v879
    %v1585 = vunpack.c.h.b16 %v879
    %v1586 = vunpack.c.l.b16 %v880
    %v1587 = vunpack.c.h.b16 %v880
    %v1588 = vunpack.c.l.b16 %v881
    %v1589 = vunpack.c.h.b16 %v881
    %v1590 = vunpack.c.l.b16 %v882
    %v1591 = vunpack.c.h.b16 %v882
    %v1592 = vunpack.c.l.b16 %v883
    %v1593 = vunpack.c.h.b16 %v883
    %v1594 = vunpack.c.l.b16 %v884
    %v1595 = vunpack.c.h.b16 %v884
    %v1596 = vunpack.c.l.b16 %v885
    %v1597 = vunpack.c.h.b16 %v885
    %v1598 = vunpack.c.l.b16 %v886
    %v1599 = vunpack.c.h.b16 %v886
    %v1600 = vunpack.c.l.b16 %v887
    %v1601 = vunpack.c.h.b16 %v887
    %v1602 = vunpack.c.l.b16 %v888
    %v1603 = vunpack.c.h.b16 %v888
    %v1604 = vunpack.c.l.b16 %v889
    %v1605 = vunpack.c.h.b16 %v889
    %v1606 = vunpack.c.l.b16 %v890
    %v1607 = vunpack.c.h.b16 %v890
    %v1608 = vunpack.c.l.b16 %v891
    %v1609 = vunpack.c.h.b16 %v891
    %v1610 = vunpack.c.l.b16 %v892
    %v1611 = vunpack.c.h.b16 %v892
    %v1612 = vunpack.c.l.b16 %v893
    %v1613 = vunpack.c.h.b16 %v893
    %v1614 = vunpack.c.l.b16 %v894
    %v1615 = vunpack.c.h.b16 %v894
    %v1616 = vunpack.c.l.b16 %v895
    %v1617 = vunpack.c.h.b16 %v895
    %v1618 = vunpack.c.l.b16 %v896
    %v1619 = vunpack.c.h.b16 %v896
    %v1620 = vunpack.c.l.b16 %v897
    %v1621 = vunpack.c.h.b16 %v897
    %v1622 = vunpack.c.l.b16 %v898
    %v1623 = vunpack.c.h.b16 %v898
    %v1624 = vunpack.c.l.b16 %v899
    %v1625 = vunpack.c.h.b16 %v899
    %v1626 = vunpack.c.l.b16 %v900
    %v1627 = vunpack.c.h.b16 %v900
    %v1628 = vunpack.c.l.b16 %v901
    %v1629 = vunpack.c.h.b16 %v901
    %v1630 = vunpack.c.l.b16 %v902
    %v1631 = vunpack.c.h.b16 %v902
    %v1632 = vunpack.c.l.b16 %v903
    %v1633 = vunpack.c.h.b16 %v903
    %v1634 = vunpack.c.l.b16 %v904
    %v1635 = vunpack.c.h.b16 %v904
    %v1636 = vunpack.c.l.b16 %v905
    %v1637 = vunpack.c.h.b16 %v905
    %v1638 = vunpack.c.l.b16 %v906
    %v1639 = vunpack.c.h.b16 %v906
    %v1640 = vunpack.c.l.b16 %v907
    %v1641 = vunpack.c.h.b16 %v907
    %v1642 = vunpack.c.l.b16 %v908
    %v1643 = vunpack.c.h.b16 %v908
    %v1644 = vunpack.c.l.b16 %v909
    %v1645 = vunpack.c.h.b16 %v909
    %v1646 = vunpack.c.l.b16 %v910
    %v1647 = vunpack.c.h.b16 %v910
    %v1648 = vunpack.c.l.b16 %v911
    %v1649 = vunpack.c.h.b16 %v911
    %v1650 = vunpack.c.l.b16 %v912
    %v1651 = vunpack.c.h.b16 %v912
    %v1652 = vunpack.c.l.b16 %v913
    %v1653 = vunpack.c.h.b16 %v913
    %v1654 = vunpack.c.l.b16 %v914
    %v1655 = vunpack.c.h.b16 %v914
    %v1656 = vunpack.c.l.b16 %v915
    %v1657 = vunpack.c.h.b16 %v915
    %v1658 = vunpack.c.l.b16 %v916
    %v1659 = vunpack.c.h.b16 %v916
    %v1660 = vunpack.c.l.b16 %v917
    %v1661 = vunpack.c.h.b16 %v917
    %v1662 = vunpack.c.l.b16 %v918
    %v1663 = vunpack.c.h.b16 %v918
    %v1664 = vunpack.c.l.b16 %v919
    %v1665 = vunpack.c.h.b16 %v919
    %v1666 = vunpack.c.l.b16 %v920
    %v1667 = vunpack.c.h.b16 %v920
    %v1668 = vunpack.c.l.b16 %v921
    %v1669 = vunpack.c.h.b16 %v921
    %v1670 = vunpack.c.l.b16 %v922
    %v1671 = vunpack.c.h.b16 %v922
    %v1672 = vunpack.c.l.b16 %v923
    %v1673 = vunpack.c.h.b16 %v923
    %v1674 = vunpack.c.l.b16 %v924
    %v1675 = vunpack.c.h.b16 %v924
    %v1676 = vunpack.c.l.b16 %v925
    %v1677 = vunpack.c.h.b16 %v925
    %v1678 = vunpack.c.l.b16 %v926
    %v1679 = vunpack.c.h.b16 %v926
    %v1680 = vunpack.c.l.b16 %v927
    %v1681 = vunpack.c.h.b16 %v927
    %v1682 = vunpack.c.l.b16 %v928
    %v1683 = vunpack.c.h.b16 %v928
    %v1684 = vunpack.c.l.b16 %v929
    %v1685 = vunpack.c.h.b16 %v929
    %v1686 = vunpack.c.l.b16 %v930
    %v1687 = vunpack.c.h.b16 %v930
    %v1688 = vunpack.c.l.b16 %v931
    %v1689 = vunpack.c.h.b16 %v931
    %v1690 = vunpack.c.l.b16 %v932
    %v1691 = vunpack.c.h.b16 %v932
    %v1692 = vunpack.c.l.b16 %v933
    %v1693 = vunpack.c.h.b16 %v933
    %v1694 = vunpack.c.l.b16 %v934
    %v1695 = vunpack.c.h.b16 %v934
    %v1696 = vunpack.c.l.b16 %v935
    %v1697 = vunpack.c.h.b16 %v935
    %v1698 = vunpack.c.l.b16 %v936
    %v1699 = vunpack.c.h.b16 %v936
    %v1700 = vunpack.c.l.b16 %v937
    %v1701 = vunpack.c.h.b16 %v937
    %v1702 = vunpack.c.l.b16 %v938
    %v1703 = vunpack.c.h.b16 %v938
    %v1704 = vunpack.c.l.b16 %v939
    %v1705 = vunpack.c.h.b16 %v939
    %v1706 = vunpack.c.l.b16 %v940
    %v1707 = vunpack.c.h.b16 %v940
    %v1708 = vunpack.c.l.b16 %v941
    %v1709 = vunpack.c.h.b16 %v941
    %v1710 = vunpack.c.l.b16 %v942
    %v1711 = vunpack.c.h.b16 %v942
    %v1712 = vunpack.c.l.b16 %v943
    %v1713 = vunpack.c.h.b16 %v943
    %v1714 = vunpack.c.l.b16 %v944
    %v1715 = vunpack.c.h.b16 %v944
    %v1716 = vunpack.c.l.b16 %v945
    %v1717 = vunpack.c.h.b16 %v945
    %v1718 = vunpack.c.l.b16 %v946
    %v1719 = vunpack.c.h.b16 %v946
    %v1720 = vunpack.c.l.b16 %v947
    %v1721 = vunpack.c.h.b16 %v947
    %v1722 = vunpack.c.l.b16 %v948
    %v1723 = vunpack.c.h.b16 %v948
    %v1724 = vunpack.c.l.b16 %v949
    %v1725 = vunpack.c.h.b16 %v949
    %v1726 = vunpack.c.l.b16 %v950
    %v1727 = vunpack.c.h.b16 %v950
    %v1728 = vunpack.c.l.b16 %v951
    %v1729 = vunpack.c.h.b16 %v951
    %v1730 = vunpack.c.l.b16 %v952
    %v1731 = vunpack.c.h.b16 %v952
    %v1732 = vunpack.c.l.b16 %v953
    %v1733 = vunpack.c.h.b16 %v953
    %v1734 = vunpack.c.l.b16 %v954
    %v1735 = vunpack.c.h.b16 %v954
    %v1736 = vunpack.c.l.b16 %v955
    %v1737 = vunpack.c.h.b16 %v955
    %v1738 = vunpack.c.l.b16 %v956
    %v1739 = vunpack.c.h.b16 %v956
    %v1740 = vunpack.c.l.b16 %v957
    %v1741 = vunpack.c.h.b16 %v957
    %v1742 = vunpack.c.l.b16 %v958
    %v1743 = vunpack.c.h.b16 %v958
    %v1744 = vunpack.c.l.b16 %v959
    %v1745 = vunpack.c.h.b16 %v959
    %v1746 = vunpack.c.l.b16 %v960
    %v1747 = vunpack.c.h.b16 %v960
    %v1748 = vunpack.c.l.b16 %v961
    %v1749 = vunpack.c.h.b16 %v961
    %v1750 = vunpack.c.l.b16 %v962
    %v1751 = vunpack.c.h.b16 %v962
    %v1752 = vunpack.c.l.b16 %v963
    %v1753 = vunpack.c.h.b16 %v963
    %v1754 = vunpack.c.l.b16 %v964
    %v1755 = vunpack.c.h.b16 %v964
    %v1756 = vunpack.c.l.b16 %v965
    %v1757 = vunpack.c.h.b16 %v965
    %v1758 = vunpack.c.l.b16 %v966
    %v1759 = vunpack.c.h.b16 %v966
    %v1760 = vunpack.c.l.b16 %v967
    %v1761 = vunpack.c.h.b16 %v967
    %v1762 = vunpack.c.l.b16 %v968
    %v1763 = vunpack.c.h.b16 %v968
    %v1764 = vunpack.c.l.b16 %v969
    %v1765 = vunpack.c.h.b16 %v969
    %v1766 = vunpack.c.l.b16 %v970
    %v1767 = vunpack.c.h.b16 %v970
    %v1768 = vunpack.c.l.b16 %v971
    %v1769 = vunpack.c.h.b16 %v971
    %v1770 = vunpack.c.l.b16 %v972
    %v1771 = vunpack.c.h.b16 %v972
    %v1772 = vunpack.c.l.b16 %v973
    %v1773 = vunpack.c.h.b16 %v973
    %v1774 = vunpack.c.l.b16 %v974
    %v1775 = vunpack.c.h.b16 %v974
    %v1776 = vunpack.c.l.b16 %v975
    %v1777 = vunpack.c.h.b16 %v975
    %v1778 = vunpack.c.l.b16 %v976
    %v1779 = vunpack.c.h.b16 %v976
    %v1780 = vunpack.c.l.b16 %v977
    %v1781 = vunpack.c.h.b16 %v977
    %v1782 = vunpack.c.l.b16 %v978
    %v1783 = vunpack.c.h.b16 %v978
    %v1784 = vunpack.c.l.b16 %v979
    %v1785 = vunpack.c.h.b16 %v979
    %v1786 = vunpack.c.l.b16 %v980
    %v1787 = vunpack.c.h.b16 %v980
    %v1788 = vunpack.c.l.b16 %v981
    %v1789 = vunpack.c.h.b16 %v981
    %v1790 = vunpack.c.l.b16 %v982
    %v1791 = vunpack.c.h.b16 %v982
    %v1792 = vunpack.c.l.b16 %v983
    %v1793 = vunpack.c.h.b16 %v983
    %v1794 = vunpack.c.l.b16 %v984
    %v1795 = vunpack.c.h.b16 %v984
    %v1796 = vunpack.c.l.b16 %v985
    %v1797 = vunpack.c.h.b16 %v985
    %v1798 = vunpack.c.l.b16 %v986
    %v1799 = vunpack.c.h.b16 %v986
    %v1800 = vunpack.c.l.b16 %v987
    %v1801 = vunpack.c.h.b16 %v987
    %v1802 = vunpack.c.l.b16 %v988
    %v1803 = vunpack.c.h.b16 %v988
    %v1804 = vunpack.c.l.b16 %v989
    %v1805 = vunpack.c.h.b16 %v989
    %v1806 = vunpack.c.l.b16 %v990
    %v1807 = vunpack.c.h.b16 %v990
    %v1808 = vunpack.c.l.b16 %v991
    %v1809 = vunpack.c.h.b16 %v991
    %v1810 = vunpack.c.l.b16 %v992
    %v1811 = vunpack.c.h.b16 %v992
    %v1812 = vunpack.c.l.b16 %v993
    %v1813 = vunpack.c.h.b16 %v993
    %v1814 = vunpack.c.l.b16 %v994
    %v1815 = vunpack.c.h.b16 %v994
    %v1816 = vunpack.c.l.b16 %v995
    %v1817 = vunpack.c.h.b16 %v995
    %v1818 = vunpack.c.l.b16 %v996
    %v1819 = vunpack.c.h.b16 %v996
    %v1820 = vunpack.c.l.b16 %v997
    %v1821 = vunpack.c.h.b16 %v997
    %v1822 = vunpack.c.l.b16 %v998
    %v1823 = vunpack.c.h.b16 %v998
    %v1824 = vunpack.c.l.b16 %v999
    %v1825 = vunpack.c.h.b16 %v999
    %v1826 = vunpack.c.l.b16 %v1000
    %v1827 = vunpack.c.h.b16 %v1000
    %v1828 = vunpack.c.l.b16 %v1001
    %v1829 = vunpack.c.h.b16 %v1001
    %v1830 = vunpack.c.l.b16 %v1002
    %v1831 = vunpack.c.h.b16 %v1002
    %v1832 = vunpack.c.l.b16 %v1003
    %v1833 = vunpack.c.h.b16 %v1003
    %v1834 = vunpack.c.l.b16 %v1004
    %v1835 = vunpack.c.h.b16 %v1004
    %v1836 = vunpack.c.l.b16 %v1005
    %v1837 = vunpack.c.h.b16 %v1005
    %v1838 = vunpack.c.l.b16 %v1006
    %v1839 = vunpack.c.h.b16 %v1006
    %v1840 = vunpack.c.l.b16 %v1007
    %v1841 = vunpack.c.h.b16 %v1007
    %v1842 = vunpack.c.l.b16 %v1008
    %v1843 = vunpack.c.h.b16 %v1008
    %v1844 = vunpack.c.l.b16 %v1009
    %v1845 = vunpack.c.h.b16 %v1009
    %v1846 = vunpack.c.l.b16 %v1010
    %v1847 = vunpack.c.h.b16 %v1010
    %v1848 = vunpack.c.l.b16 %v1011
    %v1849 = vunpack.c.h.b16 %v1011
    %v1850 = vunpack.c.l.b16 %v1012
    %v1851 = vunpack.c.h.b16 %v1012
    %v1852 = vunpack.c.l.b16 %v1013
    %v1853 = vunpack.c.h.b16 %v1013
    %v1854 = vunpack.c.l.b16 %v1014
    %v1855 = vunpack.c.h.b16 %v1014
    %v1856 = vunpack.c.l.b16 %v1015
    %v1857 = vunpack.c.h.b16 %v1015
    %v1858 = vunpack.c.l.b16 %v1016
    %v1859 = vunpack.c.h.b16 %v1016
    %v1860 = vunpack.c.l.b16 %v1017
    %v1861 = vunpack.c.h.b16 %v1017
    %v1862 = vunpack.c.l.b16 %v1018
    %v1863 = vunpack.c.h.b16 %v1018
    %v1864 = vunpack.c.l.b16 %v1019
    %v1865 = vunpack.c.h.b16 %v1019
    %v1866 = vunpack.c.l.b16 %v1020
    %v1867 = vunpack.c.h.b16 %v1020
    %v1868 = vunpack.c.l.b16 %v1021
    %v1869 = vunpack.c.h.b16 %v1021
    %v1870 = vunpack.c.l.b16 %v1022
    %v1871 = vunpack.c.h.b16 %v1022
    %v1872 = vunpack.c.l.b16 %v1023
    %v1873 = vunpack.c.h.b16 %v1023
    %v1874 = vunpack.c.l.b16 %v1024
    %v1875 = vunpack.c.h.b16 %v1024
    %v1876 = vunpack.c.l.b16 %v1025
    %v1877 = vunpack.c.h.b16 %v1025
    %v1878 = vunpack.c.l.b16 %v1026
    %v1879 = vunpack.c.h.b16 %v1026
    %v1880 = vunpack.c.l.b16 %v1027
    %v1881 = vunpack.c.h.b16 %v1027
    %v1882 = vunpack.c.l.b16 %v1028
    %v1883 = vunpack.c.h.b16 %v1028
    %v1884 = vunpack.c.l.b16 %v1029
    %v1885 = vunpack.c.h.b16 %v1029
    %v1886 = vunpack.c.l.b16 %v1030
    %v1887 = vunpack.c.h.b16 %v1030
    %v1888 = vunpack.c.l.b16 %v1031
    %v1889 = vunpack.c.h.b16 %v1031
    %v1890 = vunpack.c.l.b16 %v1032
    %v1891 = vunpack.c.h.b16 %v1032
    %v1892 = vunpack.c.l.b16 %v1033
    %v1893 = vunpack.c.h.b16 %v1033
    %v1894 = vunpack.c.l.b16 %v1034
    %v1895 = vunpack.c.h.b16 %v1034
    %v1896 = vunpack.c.l.b16 %v1035
    %v1897 = vunpack.c.h.b16 %v1035
    %v1898 = vunpack.c.l.b16 %v1036
    %v1899 = vunpack.c.h.b16 %v1036
    %v1900 = vunpack.c.l.b16 %v1037
    %v1901 = vunpack.c.h.b16 %v1037
    %v1902 = vunpack.c.l.b16 %v1038
    %v1903 = vunpack.c.h.b16 %v1038
    %v1904 = vunpack.c.l.b16 %v1039
    %v1905 = vunpack.c.h.b16 %v1039
    %v1906 = vunpack.c.l.b16 %v1040
    %v1907 = vunpack.c.h.b16 %v1040
    %v1908 = vunpack.c.l.b16 %v1041
    %v1909 = vunpack.c.h.b16 %v1041
    %v1910 = vunpack.c.l.b16 %v1042
    %v1911 = vunpack.c.h.b16 %v1042
    %v1912 = vunpack.c.l.b16 %v1043
    %v1913 = vunpack.c.h.b16 %v1043
    %v1914 = vunpack.c.l.b16 %v1044
    %v1915 = vunpack.c.h.b16 %v1044
    %v1916 = vunpack.c.l.b16 %v1045
    %v1917 = vunpack.c.h.b16 %v1045
    %v1918 = vunpack.c.l.b16 %v1046
    %v1919 = vunpack.c.h.b16 %v1046
    %v1920 = vunpack.c.l.b16 %v1047
    %v1921 = vunpack.c.h.b16 %v1047
    %v1922 = vunpack.c.l.b16 %v1048
    %v1923 = vunpack.c.h.b16 %v1048
    %v1924 = vunpack.c.l.b16 %v1049
    %v1925 = vunpack.c.h.b16 %v1049
    %v1926 = vunpack.c.l.b16 %v1050
    %v1927 = vunpack.c.h.b16 %v1050
    %v1928 = vunpack.c.l.b16 %v1051
    %v1929 = vunpack.c.h.b16 %v1051
    %v1930 = vunpack.c.l.b16 %v1052
    %v1931 = vunpack.c.h.b16 %v1052
    %v1932 = vunpack.c.l.b16 %v1053
    %v1933 = vunpack.c.h.b16 %v1053
    %v1934 = vunpack.c.l.b16 %v1054
    %v1935 = vunpack.c.h.b16 %v1054
    %v1936 = vunpack.c.l.b16 %v1055
    %v1937 = vunpack.c.h.b16 %v1055
    %v1938 = vunpack.c.l.b16 %v1056
    %v1939 = vunpack.c.h.b16 %v1056
    %v1940 = vunpack.c.l.b16 %v1057
    %v1941 = vunpack.c.h.b16 %v1057
    %v1942 = vunpack.c.l.b16 %v1058
    %v1943 = vunpack.c.h.b16 %v1058
    %v1944 = vunpack.c.l.b16 %v1059
    %v1945 = vunpack.c.h.b16 %v1059
    %v1946 = vunpack.c.l.b16 %v1060
    %v1947 = vunpack.c.h.b16 %v1060
    %v1948 = vunpack.c.l.b16 %v1061
    %v1949 = vunpack.c.h.b16 %v1061
    %v1950 = vunpack.c.l.b16 %v1062
    %v1951 = vunpack.c.h.b16 %v1062
    %v1952 = vunpack.c.l.b16 %v1063
    %v1953 = vunpack.c.h.b16 %v1063
    %v1954 = vunpack.c.l.b16 %v1064
    %v1955 = vunpack.c.h.b16 %v1064
    %v1956 = vunpack.c.l.b16 %v1065
    %v1957 = vunpack.c.h.b16 %v1065
    %v1958 = vunpack.c.l.b16 %v1066
    %v1959 = vunpack.c.h.b16 %v1066
    %v1960 = vunpack.c.l.b16 %v1067
    %v1961 = vunpack.c.h.b16 %v1067
    %v1962 = vunpack.c.l.b16 %v1068
    %v1963 = vunpack.c.h.b16 %v1068
    %v1964 = vunpack.c.l.b16 %v1069
    %v1965 = vunpack.c.h.b16 %v1069
    %v1966 = vunpack.c.l.b16 %v1070
    %v1967 = vunpack.c.h.b16 %v1070
    %v1968 = vpack.c.b16 %v1398, %v1392
    %v1969 = vpack.c.b16 %v1399, %v1393
    %v1970 = vpack.c.b16 %v1400, %v1394
    %v1971 = vpack.c.b16 %v1401, %v1395
    %v1972 = vpack.c.b16 %v1402, %v1396
    %v1973 = vpack.c.b16 %v1403, %v1397
    %v1974 = vpack.c.b16 %v1410, %v1404
    %v1975 = vpack.c.b16 %v1411, %v1405
    %v1976 = vpack.c.b16 %v1412, %v1406
    %v1977 = vpack.c.b16 %v1413, %v1407
    %v1978 = vpack.c.b16 %v1414, %v1408
    %v1979 = vpack.c.b16 %v1415, %v1409
    %v1980 = vpack.c.b16 %v1422, %v1416
    %v1981 = vpack.c.b16 %v1423, %v1417
    %v1982 = vpack.c.b16 %v1424, %v1418
    %v1983 = vpack.c.b16 %v1425, %v1419
    %v1984 = vpack.c.b16 %v1426, %v1420
    %v1985 = vpack.c.b16 %v1427, %v1421
    %v1986 = vpack.c.b16 %v1434, %v1428
    %v1987 = vpack.c.b16 %v1435, %v1429
    %v1988 = vpack.c.b16 %v1436, %v1430
    %v1989 = vpack.c.b16 %v1437, %v1431
    %v1990 = vpack.c.b16 %v1438, %v1432
    %v1991 = vpack.c.b16 %v1439, %v1433
    %v1992 = vpack.c.b16 %v1446, %v1440
    %v1993 = vpack.c.b16 %v1447, %v1441
    %v1994 = vpack.c.b16 %v1448, %v1442
    %v1995 = vpack.c.b16 %v1449, %v1443
    %v1996 = vpack.c.b16 %v1450, %v1444
    %v1997 = vpack.c.b16 %v1451, %v1445
    %v1998 = vpack.c.b16 %v1458, %v1452
    %v1999 = vpack.c.b16 %v1459, %v1453
    %v2000 = vpack.c.b16 %v1460, %v1454
    %v2001 = vpack.c.b16 %v1461, %v1455
    %v2002 = vpack.c.b16 %v1462, %v1456
    %v2003 = vpack.c.b16 %v1463, %v1457
    %v2004 = vpack.c.b16 %v1470, %v1464
    %v2005 = vpack.c.b16 %v1471, %v1465
    %v2006 = vpack.c.b16 %v1472, %v1466
    %v2007 = vpack.c.b16 %v1473, %v1467
    %v2008 = vpack.c.b16 %v1474, %v1468
    %v2009 = vpack.c.b16 %v1475, %v1469
    %v2010 = vpack.c.b16 %v1482, %v1476
    %v2011 = vpack.c.b16 %v1483, %v1477
    %v2012 = vpack.c.b16 %v1484, %v1478
    %v2013 = vpack.c.b16 %v1485, %v1479
    %v2014 = vpack.c.b16 %v1486, %v1480
    %v2015 = vpack.c.b16 %v1487, %v1481
    %v2016 = vpack.c.b16 %v1494, %v1488
    %v2017 = vpack.c.b16 %v1495, %v1489
    %v2018 = vpack.c.b16 %v1496, %v1490
    %v2019 = vpack.c.b16 %v1497, %v1491
    %v2020 = vpack.c.b16 %v1498, %v1492
    %v2021 = vpack.c.b16 %v1499, %v1493
    %v2022 = vpack.c.b16 %v1506, %v1500
    %v2023 = vpack.c.b16 %v1507, %v1501
    %v2024 = vpack.c.b16 %v1508, %v1502
    %v2025 = vpack.c.b16 %v1509, %v1503
    %v2026 = vpack.c.b16 %v1510, %v1504
    %v2027 = vpack.c.b16 %v1511, %v1505
    %v2028 = vpack.c.b16 %v1518, %v1512
    %v2029 = vpack.c.b16 %v1519, %v1513
    %v2030 = vpack.c.b16 %v1520, %v1514
    %v2031 = vpack.c.b16 %v1521, %v1515
    %v2032 = vpack.c.b16 %v1522, %v1516
    %v2033 = vpack.c.b16 %v1523, %v1517
    %v2034 = vpack.c.b16 %v1530, %v1524
    %v2035 = vpack.c.b16 %v1531, %v1525
    %v2036 = vpack.c.b16 %v1532, %v1526
    %v2037 = vpack.c.b16 %v1533, %v1527
    %v2038 = vpack.c.b16 %v1534, %v1528
    %v2039 = vpack.c.b16 %v1535, %v1529
    %v2040 = vpack.c.b16 %v1542, %v1536
    %v2041 = vpack.c.b16 %v1543, %v1537
    %v2042 = vpack.c.b16 %v1544, %v1538
    %v2043 = vpack.c.b16 %v1545, %v1539
    %v2044 = vpack.c.b16 %v1546, %v1540
    %v2045 = vpack.c.b16 %v1547, %v1541
    %v2046 = vpack.c.b16 %v1554, %v1548
    %v2047 = vpack.c.b16 %v1555, %v1549
    %v2048 = vpack.c.b16 %v1556, %v1550
    %v2049 = vpack.c.b16 %v1557, %v1551
    %v2050 = vpack.c.b16 %v1558, %v1552
    %v2051 = vpack.c.b16 %v1559, %v1553
    %v2052 = vpack.c.b16 %v1566, %v1560
    %v2053 = vpack.c.b16 %v1567, %v1561
    %v2054 = vpack.c.b16 %v1568, %v1562
    %v2055 = vpack.c.b16 %v1569, %v1563
    %v2056 = vpack.c.b16 %v1570, %v1564
    %v2057 = vpack.c.b16 %v1571, %v1565
    %v2058 = vpack.c.b16 %v1578, %v1572
    %v2059 = vpack.c.b16 %v1579, %v1573
    %v2060 = vpack.c.b16 %v1580, %v1574
    %v2061 = vpack.c.b16 %v1581, %v1575
    %v2062 = vpack.c.b16 %v1582, %v1576
    %v2063 = vpack.c.b16 %v1583, %v1577
    %v2064 = vpack.c.b16 %v1590, %v1584
    %v2065 = vpack.c.b16 %v1591, %v1585
    %v2066 = vpack.c.b16 %v1592, %v1586
    %v2067 = vpack.c.b16 %v1593, %v1587
    %v2068 = vpack.c.b16 %v1594, %v1588
    %v2069 = vpack.c.b16 %v1595, %v1589
    %v2070 = vpack.c.b16 %v1602, %v1596
    %v2071 = vpack.c.b16 %v1603, %v1597
    %v2072 = vpack.c.b16 %v1604, %v1598
    %v2073 = vpack.c.b16 %v1605, %v1599
    %v2074 = vpack.c.b16 %v1606, %v1600
    %v2075 = vpack.c.b16 %v1607, %v1601
    %v2076 = vpack.c.b16 %v1614, %v1608
    %v2077 = vpack.c.b16 %v1615, %v1609
    %v2078 = vpack.c.b16 %v1616, %v1610
    %v2079 = vpack.c.b16 %v1617, %v1611
    %v2080 = vpack.c.b16 %v1618, %v1612
    %v2081 = vpack.c.b16 %v1619, %v1613
    %v2082 = vpack.c.b16 %v1626, %v1620
    %v2083 = vpack.c.b16 %v1627, %v1621
    %v2084 = vpack.c.b16 %v1628, %v1622
    %v2085 = vpack.c.b16 %v1629, %v1623
    %v2086 = vpack.c.b16 %v1630, %v1624
    %v2087 = vpack.c.b16 %v1631, %v1625
    %v2088 = vpack.c.b16 %v1638, %v1632
    %v2089 = vpack.c.b16 %v1639, %v1633
    %v2090 = vpack.c.b16 %v1640, %v1634
    %v2091 = vpack.c.b16 %v1641, %v1635
    %v2092 = vpack.c.b16 %v1642, %v1636
    %v2093 = vpack.c.b16 %v1643, %v1637
    %v2094 = vpack.c.b16 %v1650, %v1644
    %v2095 = vpack.c.b16 %v1651, %v1645
    %v2096 = vpack.c.b16 %v1652, %v1646
    %v2097 = vpack.c.b16 %v1653, %v1647
    %v2098 = vpack.c.b16 %v1654, %v1648
    %v2099 = vpack.c.b16 %v1655, %v1649
    %v2100 = vpack.c.b16 %v1662, %v1656
    %v2101 = vpack.c.b16 %v1663, %v1657
    %v2102 = vpack.c.b16 %v1664, %v1658
    %v2103 = vpack.c.b16 %v1665, %v1659
    %v2104 = vpack.c.b16 %v1666, %v1660
    %v2105 = vpack.c.b16 %v1667, %v1661
    %v2106 = vpack.c.b16 %v1674, %v1668
    %v2107 = vpack.c.b16 %v1675, %v1669
    %v2108 = vpack.c.b16 %v1676, %v1670
    %v2109 = vpack.c.b16 %v1677, %v1671
    %v2110 = vpack.c.b16 %v1678, %v1672
    %v2111 = vpack.c.b16 %v1679, %v1673
    %v2112 = vpack.c.b16 %v1686, %v1680
    %v2113 = vpack.c.b16 %v1687, %v1681
    %v2114 = vpack.c.b16 %v1688, %v1682
    %v2115 = vpack.c.b16 %v1689, %v1683
    %v2116 = vpack.c.b16 %v1690, %v1684
    %v2117 = vpack.c.b16 %v1691, %v1685
    %v2118 = vpack.c.b16 %v1698, %v1692
    %v2119 = vpack.c.b16 %v1699, %v1693
    %v2120 = vpack.c.b16 %v1700, %v1694
    %v2121 = vpack.c.b16 %v1701, %v1695
    %v2122 = vpack.c.b16 %v1702, %v1696
    %v2123 = vpack.c.b16 %v1703, %v1697
    %v2124 = vpack.c.b16 %v1710, %v1704
    %v2125 = vpack.c.b16 %v1711, %v1705
    %v2126 = vpack.c.b16 %v1712, %v1706
    %v2127 = vpack.c.b16 %v1713, %v1707
    %v2128 = vpack.c.b16 %v1714, %v1708
    %v2129 = vpack.c.b16 %v1715, %v1709
    %v2130 = vpack.c.b16 %v1722, %v1716
    %v2131 = vpack.c.b16 %v1723, %v1717
    %v2132 = vpack.c.b16 %v1724, %v1718
    %v2133 = vpack.c.b16 %v1725, %v1719
    %v2134 = vpack.c.b16 %v1726, %v1720
    %v2135 = vpack.c.b16 %v1727, %v1721
    %v2136 = vpack.c.b16 %v1734, %v1728
    %v2137 = vpack.c.b16 %v1735, %v1729
    %v2138 = vpack.c.b16 %v1736, %v1730
    %v2139 = vpack.c.b16 %v1737, %v1731
    %v2140 = vpack.c.b16 %v1738, %v1732
    %v2141 = vpack.c.b16 %v1739, %v1733
    %v2142 = vpack.c.b16 %v1746, %v1740
    %v2143 = vpack.c.b16 %v1747, %v1741
    %v2144 = vpack.c.b16 %v1748, %v1742
    %v2145 = vpack.c.b16 %v1749, %v1743
    %v2146 = vpack.c.b16 %v1750, %v1744
    %v2147 = vpack.c.b16 %v1751, %v1745
    %v2148 = vpack.c.b16 %v1758, %v1752
    %v2149 = vpack.c.b16 %v1759, %v1753
    %v2150 = vpack.c.b16 %v1760, %v1754
    %v2151 = vpack.c.b16 %v1761, %v1755
    %v2152 = vpack.c.b16 %v1762, %v1756
    %v2153 = vpack.c.b16 %v1763, %v1757
    %v2154 = vpack.c.b16 %v1770, %v1764
    %v2155 = vpack.c.b16 %v1771, %v1765
    %v2156 = vpack.c.b16 %v1772, %v1766
    %v2157 = vpack.c.b16 %v1773, %v1767
    %v2158 = vpack.c.b16 %v1774, %v1768
    %v2159 = vpack.c.b16 %v1775, %v1769
    %v2160 = vpack.c.b16 %v1782, %v1776
    %v2161 = vpack.c.b16 %v1783, %v1777
    %v2162 = vpack.c.b16 %v1784, %v1778
    %v2163 = vpack.c.b16 %v1785, %v1779
    %v2164 = vpack.c.b16 %v1786, %v1780
    %v2165 = vpack.c.b16 %v1787, %v1781
    %v2166 = vpack.c.b16 %v1794, %v1788
    %v2167 = vpack.c.b16 %v1795, %v1789
    %v2168 = vpack.c.b16 %v1796, %v1790
    %v2169 = vpack.c.b16 %v1797, %v1791
    %v2170 = vpack.c.b16 %v1798, %v1792
    %v2171 = vpack.c.b16 %v1799, %v1793
    %v2172 = vpack.c.b16 %v1806, %v1800
    %v2173 = vpack.c.b16 %v1807, %v1801
    %v2174 = vpack.c.b16 %v1808, %v1802
    %v2175 = vpack.c.b16 %v1809, %v1803
    %v2176 = vpack.c.b16 %v1810, %v1804
    %v2177 = vpack.c.b16 %v1811, %v1805
    %v2178 = vpack.c.b16 %v1818, %v1812
    %v2179 = vpack.c.b16 %v1819, %v1813
    %v2180 = vpack.c.b16 %v1820, %v1814
    %v2181 = vpack.c.b16 %v1821, %v1815
    %v2182 = vpack.c.b16 %v1822, %v1816
    %v2183 = vpack.c.b16 %v1823, %v1817
    %v2184 = vpack.c.b16 %v1830, %v1824
    %v2185 = vpack.c.b16 %v1831, %v1825
    %v2186 = vpack.c.b16 %v1832, %v1826
    %v2187 = vpack.c.b16 %v1833, %v1827
    %v2188 = vpack.c.b16 %v1834, %v1828
    %v2189 = vpack.c.b16 %v1835, %v1829
    %v2190 = vpack.c.b16 %v1842, %v1836
    %v2191 = vpack.c.b16 %v1843, %v1837
    %v2192 = vpack.c.b16 %v1844, %v1838
    %v2193 = vpack.c.b16 %v1845, %v1839
    %v2194 = vpack.c.b16 %v1846, %v1840
    %v2195 = vpack.c.b16 %v1847, %v1841
    %v2196 = vpack.c.b16 %v1854, %v1848
    %v2197 = vpack.c.b16 %v1855, %v1849
    %v2198 = vpack.c.b16 %v1856, %v1850
    %v2199 = vpack.c.b16 %v1857, %v1851
    %v2200 = vpack.c.b16 %v1858, %v1852
    %v2201 = vpack.c.b16 %v1859, %v1853
    %v2202 = vpack.c.b16 %v1866, %v1860
    %v2203 = vpack.c.b16 %v1867, %v1861
    %v2204 = vpack.c.b16 %v1868, %v1862
    %v2205 = vpack.c.b16 %v1869, %v1863
    %v2206 = vpack.c.b16 %v1870, %v1864
    %v2207 = vpack.c.b16 %v1871, %v1865
    %v2208 = vpack.c.b16 %v1878, %v1872
    %v2209 = vpack.c.b16 %v1879, %v1873
    %v2210 = vpack.c.b16 %v1880, %v1874
    %v2211 = vpack.c.b16 %v1881, %v1875
    %v2212 = vpack.c.b16 %v1882, %v1876
    %v2213 = vpack.c.b16 %v1883, %v1877
    %v2214 = vpack.c.b16 %v1890, %v1884
    %v2215 = vpack.c.b16 %v1891, %v1885
    %v2216 = vpack.c.b16 %v1892, %v1886
    %v2217 = vpack.c.b16 %v1893, %v1887
    %v2218 = vpack.c.b16 %v1894, %v1888
    %v2219 = vpack.c.b16 %v1895, %v1889
    %v2220 = vpack.c.b16 %v1902, %v1896
    %v2221 = vpack.c.b16 %v1903, %v1897
    %v2222 = vpack.c.b16 %v1904, %v1898
    %v2223 = vpack.c.b16 %v1905, %v1899
    %v2224 = vpack.c.b16 %v1906, %v1900
    %v2225 = vpack.c.b16 %v1907, %v1901
    %v2226 = vpack.c.b16 %v1914, %v1908
    %v2227 = vpack.c.b16 %v1915, %v1909
    %v2228 = vpack.c.b16 %v1916, %v1910
    %v2229 = vpack.c.b16 %v1917, %v1911
    %v2230 = vpack.c.b16 %v1918, %v1912
    %v2231 = vpack.c.b16 %v1919, %v1913
    %v2232 = vpack.c.b16 %v1926, %v1920
    %v2233 = vpack.c.b16 %v1927, %v1921
    %v2234 = vpack.c.b16 %v1928, %v1922
    %v2235 = vpack.c.b16 %v1929, %v1923
    %v2236 = vpack.c.b16 %v1930, %v1924
    %v2237 = vpack.c.b16 %v1931, %v1925
    %v2238 = vpack.c.b16 %v1938, %v1932
    %v2239 = vpack.c.b16 %v1939, %v1933
    %v2240 = vpack.c.b16 %v1940, %v1934
    %v2241 = vpack.c.b16 %v1941, %v1935
    %v2242 = vpack.c.b16 %v1942, %v1936
    %v2243 = vpack.c.b16 %v1943, %v1937
    %v2244 = vpack.c.b16 %v1950, %v1944
    %v2245 = vpack.c.b16 %v1951, %v1945
    %v2246 = vpack.c.b16 %v1952, %v1946
    %v2247 = vpack.c.b16 %v1953, %v1947
    %v2248 = vpack.c.b16 %v1954, %v1948
    %v2249 = vpack.c.b16 %v1955, %v1949
    %v2250 = vpack.c.b16 %v1962, %v1956
    %v2251 = vpack.c.b16 %v1963, %v1957
    %v2252 = vpack.c.b16 %v1964, %v1958
    %v2253 = vpack.c.b16 %v1965, %v1959
    %v2254 = vpack.c.b16 %v1966, %v1960
    %v2255 = vpack.c.b16 %v1967, %v1961
    %2544 = vmatprep.subr.bf16.mxu0 %v1969
    %2545 = vmatpush1.bf16.msra.mxu0 %v1968
    %2546 = vmatprep.subr.bf16.mxu0 %v1975
    %2547 = vmatpush1.bf16.msra.mxu0 %v1974
    %2548 = vmatprep.subr.bf16.mxu0 %v1981
    %2549 = vmatpush1.bf16.msra.mxu0 %v1980
    %2550 = vmatprep.subr.bf16.mxu0 %v1987
    %2551 = vmatpush1.bf16.msra.mxu0 %v1986
    %2552 = vmatprep.subr.bf16.mxu0 %v1993
    %2553 = vmatpush1.bf16.msra.mxu0 %v1992
    %2554 = vmatprep.subr.bf16.mxu0 %v1999
    %2555 = vmatpush1.bf16.msra.mxu0 %v1998
    %2556 = vmatprep.subr.bf16.mxu0 %v2005
    %2557 = vmatpush1.bf16.msra.mxu0 %v2004
    %2558 = vmatprep.subr.bf16.mxu0 %v2011
    %2559 = vmatpush1.bf16.msra.mxu0 %v2010
    %2560 = vmatprep.subr.bf16.mxu0 %v2017
    %2561 = vmatpush1.bf16.msra.mxu0 %v2016
    %2562 = vmatprep.subr.bf16.mxu0 %v2023
    %2563 = vmatpush1.bf16.msra.mxu0 %v2022
    %2564 = vmatprep.subr.bf16.mxu0 %v2029
    %2565 = vmatpush1.bf16.msra.mxu0 %v2028
    %2566 = vmatprep.subr.bf16.mxu0 %v2035
    %2567 = vmatpush1.bf16.msra.mxu0 %v2034
    %2568 = vmatprep.subr.bf16.mxu0 %v2041
    %2569 = vmatpush1.bf16.msra.mxu0 %v2040
    %2570 = vmatprep.subr.bf16.mxu0 %v2047
    %2571 = vmatpush1.bf16.msra.mxu0 %v2046
    %2572 = vmatprep.subr.bf16.mxu0 %v2053
    %2573 = vmatpush1.bf16.msra.mxu0 %v2052
    %2574 = vmatprep.subr.bf16.mxu0 %v2059
    %2575 = vmatpush1.bf16.msra.mxu0 %v2058
    %2576 = vmatprep.mubr.bf16.mxu0 %v778
    %2577 = vmatmul.mubr.bf16.gmra.mrb[0].mxu0 %v777
    %v2578 = vpop.f32.mrb[0].mxu0
    %v2579 = vadd.f32 %v1077, %v2578
    %v2580 = vpop.f32.mrb[0].mxu0
    %v2581 = vadd.f32 %v1081, %v2580
    %v2582 = vpop.f32.mrb[0].mxu0
    %v2583 = vpop.f32.mrb[0].mxu0
    %2584 = vdwg.mxu0
    %2585 = vmatprep.subr.bf16.mxu0 %v2065
    %2586 = vmatpush1.bf16.msra.mxu0 %v2064
    %2587 = vmatprep.subr.bf16.mxu0 %v2071
    %2588 = vmatpush1.bf16.msra.mxu0 %v2070
    %2589 = vmatprep.subr.bf16.mxu0 %v2077
    %2590 = vmatpush1.bf16.msra.mxu0 %v2076
    %2591 = vmatprep.subr.bf16.mxu0 %v2083
    %2592 = vmatpush1.bf16.msra.mxu0 %v2082
    %2593 = vmatprep.subr.bf16.mxu0 %v2089
    %2594 = vmatpush1.bf16.msra.mxu0 %v2088
    %2595 = vmatprep.subr.bf16.mxu0 %v2095
    %2596 = vmatpush1.bf16.msra.mxu0 %v2094
    %2597 = vmatprep.subr.bf16.mxu0 %v2101
    %2598 = vmatpush1.bf16.msra.mxu0 %v2100
    %2599 = vmatprep.subr.bf16.mxu0 %v2107
    %2600 = vmatpush1.bf16.msra.mxu0 %v2106
    %2601 = vmatprep.subr.bf16.mxu0 %v2113
    %2602 = vmatpush1.bf16.msra.mxu0 %v2112
    %2603 = vmatprep.subr.bf16.mxu0 %v2119
    %2604 = vmatpush1.bf16.msra.mxu0 %v2118
    %2605 = vmatprep.subr.bf16.mxu0 %v2125
    %2606 = vmatpush1.bf16.msra.mxu0 %v2124
    %2607 = vmatprep.subr.bf16.mxu0 %v2131
    %2608 = vmatpush1.bf16.msra.mxu0 %v2130
    %2609 = vmatprep.subr.bf16.mxu0 %v2137
    %2610 = vmatpush1.bf16.msra.mxu0 %v2136
    %2611 = vmatprep.subr.bf16.mxu0 %v2143
    %2612 = vmatpush1.bf16.msra.mxu0 %v2142
    %2613 = vmatprep.subr.bf16.mxu0 %v2149
    %2614 = vmatpush1.bf16.msra.mxu0 %v2148
    %2615 = vmatprep.subr.bf16.mxu0 %v2155
    %2616 = vmatpush1.bf16.msra.mxu0 %v2154
    %2617 = vmatprep.mubr.bf16.mxu0 %v780
    %2618 = vmatmul.mubr.bf16.gmra.mrb[0].mxu0 %v779
    %v2619 = vpop.f32.mrb[0].mxu0
    %v2620 = vadd.f32 %v2579, %v2619
    %v2621 = vpop.f32.mrb[0].mxu0
    %v2622 = vadd.f32 %v2581, %v2621
    %v2623 = vpop.f32.mrb[0].mxu0
    %v2624 = vpop.f32.mrb[0].mxu0
    %2625 = vdwg.mxu0
    %2626 = vmatprep.subr.bf16.mxu0 %v2161
    %2627 = vmatpush1.bf16.msra.mxu0 %v2160
    %2628 = vmatprep.subr.bf16.mxu0 %v2167
    %2629 = vmatpush1.bf16.msra.mxu0 %v2166
    %2630 = vmatprep.subr.bf16.mxu0 %v2173
    %2631 = vmatpush1.bf16.msra.mxu0 %v2172
    %2632 = vmatprep.subr.bf16.mxu0 %v2179
    %2633 = vmatpush1.bf16.msra.mxu0 %v2178
    %2634 = vmatprep.subr.bf16.mxu0 %v2185
    %2635 = vmatpush1.bf16.msra.mxu0 %v2184
    %2636 = vmatprep.subr.bf16.mxu0 %v2191
    %2637 = vmatpush1.bf16.msra.mxu0 %v2190
    %2638 = vmatprep.subr.bf16.mxu0 %v2197
    %2639 = vmatpush1.bf16.msra.mxu0 %v2196
    %2640 = vmatprep.subr.bf16.mxu0 %v2203
    %2641 = vmatpush1.bf16.msra.mxu0 %v2202
    %2642 = vmatprep.subr.bf16.mxu0 %v2209
    %2643 = vmatpush1.bf16.msra.mxu0 %v2208
    %2644 = vmatprep.subr.bf16.mxu0 %v2215
    %2645 = vmatpush1.bf16.msra.mxu0 %v2214
    %2646 = vmatprep.subr.bf16.mxu0 %v2221
    %2647 = vmatpush1.bf16.msra.mxu0 %v2220
    %2648 = vmatprep.subr.bf16.mxu0 %v2227
    %2649 = vmatpush1.bf16.msra.mxu0 %v2226
    %2650 = vmatprep.subr.bf16.mxu0 %v2233
    %2651 = vmatpush1.bf16.msra.mxu0 %v2232
    %2652 = vmatprep.subr.bf16.mxu0 %v2239
    %2653 = vmatpush1.bf16.msra.mxu0 %v2238
    %2654 = vmatprep.subr.bf16.mxu0 %v2245
    %2655 = vmatpush1.bf16.msra.mxu0 %v2244
    %2656 = vmatprep.subr.bf16.mxu0 %v2251
    %2657 = vmatpush1.bf16.msra.mxu0 %v2250
    %2658 = vmatprep.mubr.bf16.mxu0 %v782
    %2659 = vmatmul.mubr.bf16.gmra.mrb[0].mxu0 %v781
    %v2660 = vpop.f32.mrb[0].mxu0
    %v2661 = vadd.f32 %v2620, %v2660
    %v2662 = vpop.f32.mrb[0].mxu0
    %v2663 = vadd.f32 %v2622, %v2662
    %v2664 = vpop.f32.mrb[0].mxu0
    %v2665 = vpop.f32.mrb[0].mxu0
    %2666 = vdwg.mxu0
    %2667 = vmatprep.subr.bf16.mxu0 %v1971
    %2668 = vmatpush1.bf16.msra.mxu0 %v1970
    %2669 = vmatprep.subr.bf16.mxu0 %v1977
    %2670 = vmatpush1.bf16.msra.mxu0 %v1976
    %2671 = vmatprep.subr.bf16.mxu0 %v1983
    %2672 = vmatpush1.bf16.msra.mxu0 %v1982
    %2673 = vmatprep.subr.bf16.mxu0 %v1989
    %2674 = vmatpush1.bf16.msra.mxu0 %v1988
    %2675 = vmatprep.subr.bf16.mxu0 %v1995
    %2676 = vmatpush1.bf16.msra.mxu0 %v1994
    %2677 = vmatprep.subr.bf16.mxu0 %v2001
    %2678 = vmatpush1.bf16.msra.mxu0 %v2000
    %2679 = vmatprep.subr.bf16.mxu0 %v2007
    %2680 = vmatpush1.bf16.msra.mxu0 %v2006
    %2681 = vmatprep.subr.bf16.mxu0 %v2013
    %2682 = vmatpush1.bf16.msra.mxu0 %v2012
    %2683 = vmatprep.subr.bf16.mxu0 %v2019
    %2684 = vmatpush1.bf16.msra.mxu0 %v2018
    %2685 = vmatprep.subr.bf16.mxu0 %v2025
    %2686 = vmatpush1.bf16.msra.mxu0 %v2024
    %2687 = vmatprep.subr.bf16.mxu0 %v2031
    %2688 = vmatpush1.bf16.msra.mxu0 %v2030
    %2689 = vmatprep.subr.bf16.mxu0 %v2037
    %2690 = vmatpush1.bf16.msra.mxu0 %v2036
    %2691 = vmatprep.subr.bf16.mxu0 %v2043
    %2692 = vmatpush1.bf16.msra.mxu0 %v2042
    %2693 = vmatprep.subr.bf16.mxu0 %v2049
    %2694 = vmatpush1.bf16.msra.mxu0 %v2048
    %2695 = vmatprep.subr.bf16.mxu0 %v2055
    %2696 = vmatpush1.bf16.msra.mxu0 %v2054
    %2697 = vmatprep.subr.bf16.mxu0 %v2061
    %2698 = vmatpush1.bf16.msra.mxu0 %v2060
    %2699 = vmatprep.mubr.bf16.mxu0 %v778
    %2700 = vmatmul.mubr.bf16.gmra.mrb[0].mxu0 %v777
    %v2701 = vpop.f32.mrb[0].mxu0
    %v2702 = vadd.f32 %v1085, %v2701
    %v2703 = vpop.f32.mrb[0].mxu0
    %v2704 = vadd.f32 %v1089, %v2703
    %v2705 = vpop.f32.mrb[0].mxu0
    %v2706 = vpop.f32.mrb[0].mxu0
    %2707 = vdwg.mxu0
    %2708 = vmatprep.subr.bf16.mxu0 %v2067
    %2709 = vmatpush1.bf16.msra.mxu0 %v2066
    %2710 = vmatprep.subr.bf16.mxu0 %v2073
    %2711 = vmatpush1.bf16.msra.mxu0 %v2072
    %2712 = vmatprep.subr.bf16.mxu0 %v2079
    %2713 = vmatpush1.bf16.msra.mxu0 %v2078
    %2714 = vmatprep.subr.bf16.mxu0 %v2085
    %2715 = vmatpush1.bf16.msra.mxu0 %v2084
    %2716 = vmatprep.subr.bf16.mxu0 %v2091
    %2717 = vmatpush1.bf16.msra.mxu0 %v2090
    %2718 = vmatprep.subr.bf16.mxu0 %v2097
    %2719 = vmatpush1.bf16.msra.mxu0 %v2096
    %2720 = vmatprep.subr.bf16.mxu0 %v2103
    %2721 = vmatpush1.bf16.msra.mxu0 %v2102
    %2722 = vmatprep.subr.bf16.mxu0 %v2109
    %2723 = vmatpush1.bf16.msra.mxu0 %v2108
    %2724 = vmatprep.subr.bf16.mxu0 %v2115
    %2725 = vmatpush1.bf16.msra.mxu0 %v2114
    %2726 = vmatprep.subr.bf16.mxu0 %v2121
    %2727 = vmatpush1.bf16.msra.mxu0 %v2120
    %2728 = vmatprep.subr.bf16.mxu0 %v2127
    %2729 = vmatpush1.bf16.msra.mxu0 %v2126
    %2730 = vmatprep.subr.bf16.mxu0 %v2133
    %2731 = vmatpush1.bf16.msra.mxu0 %v2132
    %2732 = vmatprep.subr.bf16.mxu0 %v2139
    %2733 = vmatpush1.bf16.msra.mxu0 %v2138
    %2734 = vmatprep.subr.bf16.mxu0 %v2145
    %2735 = vmatpush1.bf16.msra.mxu0 %v2144
    %2736 = vmatprep.subr.bf16.mxu0 %v2151
    %2737 = vmatpush1.bf16.msra.mxu0 %v2150
    %2738 = vmatprep.subr.bf16.mxu0 %v2157
    %2739 = vmatpush1.bf16.msra.mxu0 %v2156
    %2740 = vmatprep.mubr.bf16.mxu0 %v780
    %2741 = vmatmul.mubr.bf16.gmra.mrb[0].mxu0 %v779
    %v2742 = vpop.f32.mrb[0].mxu0
    %v2743 = vadd.f32 %v2702, %v2742
    %v2744 = vpop.f32.mrb[0].mxu0
    %v2745 = vadd.f32 %v2704, %v2744
    %v2746 = vpop.f32.mrb[0].mxu0
    %v2747 = vpop.f32.mrb[0].mxu0
    %2748 = vdwg.mxu0
    %2749 = vmatprep.subr.bf16.mxu0 %v2163
    %2750 = vmatpush1.bf16.msra.mxu0 %v2162
    %2751 = vmatprep.subr.bf16.mxu0 %v2169
    %2752 = vmatpush1.bf16.msra.mxu0 %v2168
    %2753 = vmatprep.subr.bf16.mxu0 %v2175
    %2754 = vmatpush1.bf16.msra.mxu0 %v2174
    %2755 = vmatprep.subr.bf16.mxu0 %v2181
    %2756 = vmatpush1.bf16.msra.mxu0 %v2180
    %2757 = vmatprep.subr.bf16.mxu0 %v2187
    %2758 = vmatpush1.bf16.msra.mxu0 %v2186
    %2759 = vmatprep.subr.bf16.mxu0 %v2193
    %2760 = vmatpush1.bf16.msra.mxu0 %v2192
    %2761 = vmatprep.subr.bf16.mxu0 %v2199
    %2762 = vmatpush1.bf16.msra.mxu0 %v2198
    %2763 = vmatprep.subr.bf16.mxu0 %v2205
    %2764 = vmatpush1.bf16.msra.mxu0 %v2204
    %2765 = vmatprep.subr.bf16.mxu0 %v2211
    %2766 = vmatpush1.bf16.msra.mxu0 %v2210
    %2767 = vmatprep.subr.bf16.mxu0 %v2217
    %2768 = vmatpush1.bf16.msra.mxu0 %v2216
    %2769 = vmatprep.subr.bf16.mxu0 %v2223
    %2770 = vmatpush1.bf16.msra.mxu0 %v2222
    %2771 = vmatprep.subr.bf16.mxu0 %v2229
    %2772 = vmatpush1.bf16.msra.mxu0 %v2228
    %2773 = vmatprep.subr.bf16.mxu0 %v2235
    %2774 = vmatpush1.bf16.msra.mxu0 %v2234
    %2775 = vmatprep.subr.bf16.mxu0 %v2241
    %2776 = vmatpush1.bf16.msra.mxu0 %v2240
    %2777 = vmatprep.subr.bf16.mxu0 %v2247
    %2778 = vmatpush1.bf16.msra.mxu0 %v2246
    %2779 = vmatprep.subr.bf16.mxu0 %v2253
    %2780 = vmatpush1.bf16.msra.mxu0 %v2252
    %2781 = vmatprep.mubr.bf16.mxu0 %v782
    %2782 = vmatmul.mubr.bf16.gmra.mrb[0].mxu0 %v781
    %v2783 = vpop.f32.mrb[0].mxu0
    %v2784 = vadd.f32 %v2743, %v2783
    %v2785 = vpop.f32.mrb[0].mxu0
    %v2786 = vadd.f32 %v2745, %v2785
    %v2787 = vpop.f32.mrb[0].mxu0
    %v2788 = vpop.f32.mrb[0].mxu0
    %2789 = vdwg.mxu0
    %2790 = vmatprep.subr.bf16.mxu0 %v1973
    %2791 = vmatpush1.bf16.msra.mxu0 %v1972
    %2792 = vmatprep.subr.bf16.mxu0 %v1979
    %2793 = vmatpush1.bf16.msra.mxu0 %v1978
    %2794 = vmatprep.subr.bf16.mxu0 %v1985
    %2795 = vmatpush1.bf16.msra.mxu0 %v1984
    %2796 = vmatprep.subr.bf16.mxu0 %v1991
    %2797 = vmatpush1.bf16.msra.mxu0 %v1990
    %2798 = vmatprep.subr.bf16.mxu0 %v1997
    %2799 = vmatpush1.bf16.msra.mxu0 %v1996
    %2800 = vmatprep.subr.bf16.mxu0 %v2003
    %2801 = vmatpush1.bf16.msra.mxu0 %v2002
    %2802 = vmatprep.subr.bf16.mxu0 %v2009
    %2803 = vmatpush1.bf16.msra.mxu0 %v2008
    %2804 = vmatprep.subr.bf16.mxu0 %v2015
    %2805 = vmatpush1.bf16.msra.mxu0 %v2014
    %2806 = vmatprep.subr.bf16.mxu0 %v2021
    %2807 = vmatpush1.bf16.msra.mxu0 %v2020
    %2808 = vmatprep.subr.bf16.mxu0 %v2027
    %2809 = vmatpush1.bf16.msra.mxu0 %v2026
    %2810 = vmatprep.subr.bf16.mxu0 %v2033
    %2811 = vmatpush1.bf16.msra.mxu0 %v2032
    %2812 = vmatprep.subr.bf16.mxu0 %v2039
    %2813 = vmatpush1.bf16.msra.mxu0 %v2038
    %2814 = vmatprep.subr.bf16.mxu0 %v2045
    %2815 = vmatpush1.bf16.msra.mxu0 %v2044
    %2816 = vmatprep.subr.bf16.mxu0 %v2051
    %2817 = vmatpush1.bf16.msra.mxu0 %v2050
    %2818 = vmatprep.subr.bf16.mxu0 %v2057
    %2819 = vmatpush1.bf16.msra.mxu0 %v2056
    %2820 = vmatprep.subr.bf16.mxu0 %v2063
    %2821 = vmatpush1.bf16.msra.mxu0 %v2062
    %2822 = vmatprep.mubr.bf16.mxu0 %v778
    %2823 = vmatmul.mubr.bf16.gmra.mrb[0].mxu0 %v777
    %v2824 = vpop.f32.mrb[0].mxu0
    %v2825 = vadd.f32 %v1093, %v2824
    %v2826 = vpop.f32.mrb[0].mxu0
    %v2827 = vadd.f32 %v1097, %v2826
    %v2828 = vpop.f32.mrb[0].mxu0
    %v2829 = vpop.f32.mrb[0].mxu0
    %2830 = vdwg.mxu0
    %2831 = vmatprep.subr.bf16.mxu0 %v2069
    %2832 = vmatpush1.bf16.msra.mxu0 %v2068
    %2833 = vmatprep.subr.bf16.mxu0 %v2075
    %2834 = vmatpush1.bf16.msra.mxu0 %v2074
    %2835 = vmatprep.subr.bf16.mxu0 %v2081
    %2836 = vmatpush1.bf16.msra.mxu0 %v2080
    %2837 = vmatprep.subr.bf16.mxu0 %v2087
    %2838 = vmatpush1.bf16.msra.mxu0 %v2086
    %2839 = vmatprep.subr.bf16.mxu0 %v2093
    %2840 = vmatpush1.bf16.msra.mxu0 %v2092
    %2841 = vmatprep.subr.bf16.mxu0 %v2099
    %2842 = vmatpush1.bf16.msra.mxu0 %v2098
    %2843 = vmatprep.subr.bf16.mxu0 %v2105
    %2844 = vmatpush1.bf16.msra.mxu0 %v2104
    %2845 = vmatprep.subr.bf16.mxu0 %v2111
    %2846 = vmatpush1.bf16.msra.mxu0 %v2110
    %2847 = vmatprep.subr.bf16.mxu0 %v2117
    %2848 = vmatpush1.bf16.msra.mxu0 %v2116
    %2849 = vmatprep.subr.bf16.mxu0 %v2123
    %2850 = vmatpush1.bf16.msra.mxu0 %v2122
    %2851 = vmatprep.subr.bf16.mxu0 %v2129
    %2852 = vmatpush1.bf16.msra.mxu0 %v2128
    %2853 = vmatprep.subr.bf16.mxu0 %v2135
    %2854 = vmatpush1.bf16.msra.mxu0 %v2134
    %2855 = vmatprep.subr.bf16.mxu0 %v2141
    %2856 = vmatpush1.bf16.msra.mxu0 %v2140
    %2857 = vmatprep.subr.bf16.mxu0 %v2147
    %2858 = vmatpush1.bf16.msra.mxu0 %v2146
    %2859 = vmatprep.subr.bf16.mxu0 %v2153
    %2860 = vmatpush1.bf16.msra.mxu0 %v2152
    %2861 = vmatprep.subr.bf16.mxu0 %v2159
    %2862 = vmatpush1.bf16.msra.mxu0 %v2158
    %2863 = vmatprep.mubr.bf16.mxu0 %v780
    %2864 = vmatmul.mubr.bf16.gmra.mrb[0].mxu0 %v779
    %v2865 = vpop.f32.mrb[0].mxu0
    %v2866 = vadd.f32 %v2825, %v2865
    %v2867 = vpop.f32.mrb[0].mxu0
    %v2868 = vadd.f32 %v2827, %v2867
    %v2869 = vpop.f32.mrb[0].mxu0
    %v2870 = vpop.f32.mrb[0].mxu0
    %2871 = vdwg.mxu0
    %2872 = vmatprep.subr.bf16.mxu0 %v2165
    %2873 = vmatpush1.bf16.msra.mxu0 %v2164
    %2874 = vmatprep.subr.bf16.mxu0 %v2171
    %2875 = vmatpush1.bf16.msra.mxu0 %v2170
    %2876 = vmatprep.subr.bf16.mxu0 %v2177
    %2877 = vmatpush1.bf16.msra.mxu0 %v2176
    %2878 = vmatprep.subr.bf16.mxu0 %v2183
    %2879 = vmatpush1.bf16.msra.mxu0 %v2182
    %2880 = vmatprep.subr.bf16.mxu0 %v2189
    %2881 = vmatpush1.bf16.msra.mxu0 %v2188
    %2882 = vmatprep.subr.bf16.mxu0 %v2195
    %2883 = vmatpush1.bf16.msra.mxu0 %v2194
    %2884 = vmatprep.subr.bf16.mxu0 %v2201
    %2885 = vmatpush1.bf16.msra.mxu0 %v2200
    %2886 = vmatprep.subr.bf16.mxu0 %v2207
    %2887 = vmatpush1.bf16.msra.mxu0 %v2206
    %2888 = vmatprep.subr.bf16.mxu0 %v2213
    %2889 = vmatpush1.bf16.msra.mxu0 %v2212
    %2890 = vmatprep.subr.bf16.mxu0 %v2219
    %2891 = vmatpush1.bf16.msra.mxu0 %v2218
    %2892 = vmatprep.subr.bf16.mxu0 %v2225
    %2893 = vmatpush1.bf16.msra.mxu0 %v2224
    %2894 = vmatprep.subr.bf16.mxu0 %v2231
    %2895 = vmatpush1.bf16.msra.mxu0 %v2230
    %2896 = vmatprep.subr.bf16.mxu0 %v2237
    %2897 = vmatpush1.bf16.msra.mxu0 %v2236
    %2898 = vmatprep.subr.bf16.mxu0 %v2243
    %2899 = vmatpush1.bf16.msra.mxu0 %v2242
    %2900 = vmatprep.subr.bf16.mxu0 %v2249
    %2901 = vmatpush1.bf16.msra.mxu0 %v2248
    %2902 = vmatprep.subr.bf16.mxu0 %v2255
    %2903 = vmatpush1.bf16.msra.mxu0 %v2254
    %2904 = vmatprep.mubr.bf16.mxu0 %v782
    %2905 = vmatmul.mubr.bf16.gmra.mrb[0].mxu0 %v781
    %v2906 = vpop.f32.mrb[0].mxu0
    %v2907 = vadd.f32 %v2866, %v2906
    %v2908 = vpop.f32.mrb[0].mxu0
    %v2909 = vadd.f32 %v2868, %v2908
    %v2910 = vpop.f32.mrb[0].mxu0
    %v2911 = vpop.f32.mrb[0].mxu0
    %2912 = vdwg.mxu0
    %v2913 = vmax.f32 %v2661, 0.0
    %v2914 = vmax.f32 %v2663, 0.0
    %v2915 = vmax.f32 %v2784, 0.0
    %v2916 = vmax.f32 %v2786, 0.0
    %v2917 = vmax.f32 %v2907, 0.0
    %v2918 = vmax.f32 %v2909, 0.0
    %s2919 = scalar_lea.vmem [#allocation8], 24
    %v2920 = vld [vmem:[%s2919] sm:$0x3f]
    %s2921 = scalar_lea.vmem [#allocation8], 30
    %v2922 = vld [vmem:[%s2921] sm:$0x3f]
    %v2923 = vsel %vm288, %v2913, 0.0
    %v2924 = vsel %vm288, %v2914, 0.0
    %v2925 = vadd.f32 %v2923, %v2924
    %v2926 = vsel %vm288, %v2915, 0.0
    %v2927 = vadd.f32 %v2925, %v2926
    %v2928 = vsel %vm288, %v2916, 0.0
    %v2929 = vadd.f32 %v2927, %v2928
    %v2930 = vsel %vm288, %v2917, 0.0
    %v2931 = vadd.f32 %v2929, %v2930
    %v2932 = vsel %vm288, %v2918, 0.0
    %v2933 = vadd.f32 %v2931, %v2932
    %2934 = vadd.xlane.f32.xlu0 %v2933
    %v2935 = vpop.xlane.xlu0 %2934
    %v2936 = vmul.f32 %v2935, %v648
    %v2937 = vsub.f32 %v2913, %v2936
    %v2938 = vsub.f32 %v2914, %v2936
    %v2939 = vsub.f32 %v2915, %v2936
    %v2940 = vsub.f32 %v2916, %v2936
    %v2941 = vsub.f32 %v2917, %v2936
    %v2942 = vsub.f32 %v2918, %v2936
    %v2943 = vsel %vm657, %v2937, 0.0
    %v2944 = vsel %vm658, %v2938, 0.0
    %v2945 = vsel %vm659, %v2939, 0.0
    %v2946 = vsel %vm660, %v2940, 0.0
    %v2947 = vsel %vm661, %v2941, 0.0
    %v2948 = vsel %vm662, %v2942, 0.0
    %v2949 = vmul.f32 %v2943, %v2943
    %v2950 = vmul.f32 %v2944, %v2944
    %v2951 = vmul.f32 %v2945, %v2945
    %v2952 = vmul.f32 %v2946, %v2946
    %v2953 = vmul.f32 %v2947, %v2947
    %v2954 = vmul.f32 %v2948, %v2948
    %v2955 = vsel %vm288, %v2949, 0.0
    %v2956 = vsel %vm288, %v2950, 0.0
    %v2957 = vadd.f32 %v2955, %v2956
    %v2958 = vsel %vm288, %v2951, 0.0
    %v2959 = vadd.f32 %v2957, %v2958
    %v2960 = vsel %vm288, %v2952, 0.0
    %v2961 = vadd.f32 %v2959, %v2960
    %v2962 = vsel %vm288, %v2953, 0.0
    %v2963 = vadd.f32 %v2961, %v2962
    %v2964 = vsel %vm288, %v2954, 0.0
    %v2965 = vadd.f32 %v2963, %v2964
    %2966 = vadd.xlane.f32.xlu0 %v2965
    %v2967 = vpop.xlane.xlu0 %2966
    %v2968 = vmul.f32 %v2967, %v648
    %v2969 = vadd.f32 %v2968, 1e-05
    %v2970 = vrsqrt.pop %v2969
    %v2971 = vmul.f32 %v2943, %v2970
    %v2972 = vmul.f32 %v2944, %v2970
    %v2973 = vmul.f32 %v2945, %v2970
    %v2974 = vmul.f32 %v2946, %v2970
    %v2975 = vmul.f32 %v2947, %v2970
    %v2976 = vmul.f32 %v2948, %v2970
    %v2978 = vlaneseq
    %v2979 = vshrl.u32 %v2978, 7
    %v2980 = vsub.s32 0, %v2979
    %v2981 = vrot.slane %v2920, %v2980
    %v2982 = vlaneseq
    %v2983 = vshrl.u32 %v2982, 7
    %v2984 = vsub.s32 1, %v2983
    %v2985 = vrot.slane %v2920, %v2984
    %v2986 = vlaneseq
    %v2987 = vshrl.u32 %v2986, 7
    %v2988 = vsub.s32 2, %v2987
    %v2989 = vrot.slane %v2920, %v2988
    %v2990 = vlaneseq
    %v2991 = vshrl.u32 %v2990, 7
    %v2992 = vsub.s32 3, %v2991
    %v2993 = vrot.slane %v2920, %v2992
    %v2994 = vlaneseq
    %v2995 = vshrl.u32 %v2994, 7
    %v2996 = vsub.s32 4, %v2995
    %v2997 = vrot.slane %v2920, %v2996
    %v2998 = vlaneseq
    %v2999 = vshrl.u32 %v2998, 7
    %v3000 = vsub.s32 5, %v2999
    %v3001 = vrot.slane %v2920, %v3000
    %v3008 = vmul.f32 %v2971, %v2981
    %v3009 = vmul.f32 %v2972, %v2985
    %v3010 = vmul.f32 %v2973, %v2989
    %v3011 = vmul.f32 %v2974, %v2993
    %v3012 = vmul.f32 %v2975, %v2997
    %v3013 = vmul.f32 %v2976, %v3001
    %v3015 = vlaneseq
    %v3016 = vshrl.u32 %v3015, 7
    %v3017 = vsub.s32 0, %v3016
    %v3018 = vrot.slane %v2922, %v3017
    %v3019 = vlaneseq
    %v3020 = vshrl.u32 %v3019, 7
    %v3021 = vsub.s32 1, %v3020
    %v3022 = vrot.slane %v2922, %v3021
    %v3023 = vlaneseq
    %v3024 = vshrl.u32 %v3023, 7
    %v3025 = vsub.s32 2, %v3024
    %v3026 = vrot.slane %v2922, %v3025
    %v3027 = vlaneseq
    %v3028 = vshrl.u32 %v3027, 7
    %v3029 = vsub.s32 3, %v3028
    %v3030 = vrot.slane %v2922, %v3029
    %v3031 = vlaneseq
    %v3032 = vshrl.u32 %v3031, 7
    %v3033 = vsub.s32 4, %v3032
    %v3034 = vrot.slane %v2922, %v3033
    %v3035 = vlaneseq
    %v3036 = vshrl.u32 %v3035, 7
    %v3037 = vsub.s32 5, %v3036
    %v3038 = vrot.slane %v2922, %v3037
    %v3045 = vadd.f32 %v3008, %v3018
    %v3046 = vadd.f32 %v3009, %v3022
    %v3047 = vadd.f32 %v3010, %v3026
    %v3048 = vadd.f32 %v3011, %v3030
    %v3049 = vadd.f32 %v3012, %v3034
    %v3050 = vadd.f32 %v3013, %v3038
    %v3051 = vpack.c.bf16 %v3045, %v3045
    %v3052 = vpack.c.bf16 %v3046, %v3046
    %v3053 = vpack.c.bf16 %v3047, %v3047
    %v3054 = vpack.c.bf16 %v3048, %v3048
    %v3055 = vpack.c.bf16 %v3049, %v3049
    %v3056 = vpack.c.bf16 %v3050, %v3050
    %v3057 = vld [vmem:[%s8] sm:$0xf]
    %v3058 = vld [vmem:[%s8 + $0x4] sm:$0xf]
    %v3059 = vld [vmem:[%s8 + $0x8] sm:$0xf]
    %v3060 = vld [vmem:[%s8 + $0xc] sm:$0xf]
    %v3061 = vld [vmem:[%s8 + $0x10] sm:$0xf]
    %v3062 = vld [vmem:[%s8 + $0x14] sm:$0xf]
    %v3063 = vld [vmem:[%s8 + $0x18] sm:$0xf]
    %v3064 = vld [vmem:[%s8 + $0x1c] sm:$0xf]
    %v3065 = vld [vmem:[%s8 + $0x20] sm:$0xf]
    %v3066 = vld [vmem:[%s8 + $0x24] sm:$0xf]
    %v3067 = vld [vmem:[%s8 + $0x28] sm:$0xf]
    %v3068 = vld [vmem:[%s8 + $0x2c] sm:$0xf]
    %v3069 = vld [vmem:[%s8 + $0x30] sm:$0xf]
    %v3070 = vld [vmem:[%s8 + $0x34] sm:$0xf]
    %v3071 = vld [vmem:[%s8 + $0x38] sm:$0xf]
    %v3072 = vld [vmem:[%s8 + $0x3c] sm:$0xf]
    %v3073 = vld [vmem:[%s8 + $0x40] sm:$0xf]
    %v3074 = vld [vmem:[%s8 + $0x44] sm:$0xf]
    %v3075 = vld [vmem:[%s8 + $0x48] sm:$0xf]
    %v3076 = vld [vmem:[%s8 + $0x4c] sm:$0xf]
    %v3077 = vld [vmem:[%s8 + $0x50] sm:$0xf]
    %v3078 = vld [vmem:[%s8 + $0x54] sm:$0xf]
    %v3079 = vld [vmem:[%s8 + $0x58] sm:$0xf]
    %v3080 = vld [vmem:[%s8 + $0x5c] sm:$0xf]
    %v3081 = vld [vmem:[%s8 + $0x60] sm:$0xf]
    %v3082 = vld [vmem:[%s8 + $0x64] sm:$0xf]
    %v3083 = vld [vmem:[%s8 + $0x68] sm:$0xf]
    %v3084 = vld [vmem:[%s8 + $0x6c] sm:$0xf]
    %v3085 = vld [vmem:[%s8 + $0x70] sm:$0xf]
    %v3086 = vld [vmem:[%s8 + $0x74] sm:$0xf]
    %v3087 = vld [vmem:[%s8 + $0x78] sm:$0xf]
    %v3088 = vld [vmem:[%s8 + $0x7c] sm:$0xf]
    %v3089 = vld [vmem:[%s8 + $0x80] sm:$0xf]
    %v3090 = vld [vmem:[%s8 + $0x84] sm:$0xf]
    %v3091 = vld [vmem:[%s8 + $0x88] sm:$0xf]
    %v3092 = vld [vmem:[%s8 + $0x8c] sm:$0xf]
    %v3093 = vld [vmem:[%s8 + $0x90] sm:$0xf]
    %v3094 = vld [vmem:[%s8 + $0x94] sm:$0xf]
    %v3095 = vld [vmem:[%s8 + $0x98] sm:$0xf]
    %v3096 = vld [vmem:[%s8 + $0x9c] sm:$0xf]
    %v3097 = vld [vmem:[%s8 + $0xa0] sm:$0xf]
    %v3098 = vld [vmem:[%s8 + $0xa4] sm:$0xf]
    %v3099 = vld [vmem:[%s8 + $0xa8] sm:$0xf]
    %v3100 = vld [vmem:[%s8 + $0xac] sm:$0xf]
    %v3101 = vld [vmem:[%s8 + $0xb0] sm:$0xf]
    %v3102 = vld [vmem:[%s8 + $0xb4] sm:$0xf]
    %v3103 = vld [vmem:[%s8 + $0xb8] sm:$0xf]
    %v3104 = vld [vmem:[%s8 + $0xbc] sm:$0xf]
    %v3105 = vld [vmem:[%s8 + $0xc0] sm:$0xf]
    %v3106 = vld [vmem:[%s8 + $0xc4] sm:$0xf]
    %v3107 = vld [vmem:[%s8 + $0xc8] sm:$0xf]
    %v3108 = vld [vmem:[%s8 + $0xcc] sm:$0xf]
    %v3109 = vld [vmem:[%s8 + $0xd0] sm:$0xf]
    %v3110 = vld [vmem:[%s8 + $0xd4] sm:$0xf]
    %v3111 = vld [vmem:[%s8 + $0xd8] sm:$0xf]
    %v3112 = vld [vmem:[%s8 + $0xdc] sm:$0xf]
    %v3113 = vld [vmem:[%s8 + $0xe0] sm:$0xf]
    %v3114 = vld [vmem:[%s8 + $0xe4] sm:$0xf]
    %v3115 = vld [vmem:[%s8 + $0xe8] sm:$0xf]
    %v3116 = vld [vmem:[%s8 + $0xec] sm:$0xf]
    %v3117 = vld [vmem:[%s8 + $0xf0] sm:$0xf]
    %v3118 = vld [vmem:[%s8 + $0xf4] sm:$0xf]
    %v3119 = vld [vmem:[%s8 + $0xf8] sm:$0xf]
    %v3120 = vld [vmem:[%s8 + $0xfc] sm:$0xf]
    %v3121 = vld [vmem:[%s8 + $0x100] sm:$0xf]
    %v3122 = vld [vmem:[%s8 + $0x104] sm:$0xf]
    %v3123 = vld [vmem:[%s8 + $0x108] sm:$0xf]
    %v3124 = vld [vmem:[%s8 + $0x10c] sm:$0xf]
    %v3125 = vld [vmem:[%s8 + $0x110] sm:$0xf]
    %v3126 = vld [vmem:[%s8 + $0x114] sm:$0xf]
    %v3127 = vld [vmem:[%s8 + $0x118] sm:$0xf]
    %v3128 = vld [vmem:[%s8 + $0x11c] sm:$0xf]
    %v3129 = vld [vmem:[%s8 + $0x120] sm:$0xf]
    %v3130 = vld [vmem:[%s8 + $0x124] sm:$0xf]
    %v3131 = vld [vmem:[%s8 + $0x128] sm:$0xf]
    %v3132 = vld [vmem:[%s8 + $0x12c] sm:$0xf]
    %v3133 = vld [vmem:[%s8 + $0x130] sm:$0xf]
    %v3134 = vld [vmem:[%s8 + $0x134] sm:$0xf]
    %v3135 = vld [vmem:[%s8 + $0x138] sm:$0xf]
    %v3136 = vld [vmem:[%s8 + $0x13c] sm:$0xf]
    %v3137 = vld [vmem:[%s8 + $0x140] sm:$0xf]
    %v3138 = vld [vmem:[%s8 + $0x144] sm:$0xf]
    %v3139 = vld [vmem:[%s8 + $0x148] sm:$0xf]
    %v3140 = vld [vmem:[%s8 + $0x14c] sm:$0xf]
    %v3141 = vld [vmem:[%s8 + $0x150] sm:$0xf]
    %v3142 = vld [vmem:[%s8 + $0x154] sm:$0xf]
    %v3143 = vld [vmem:[%s8 + $0x158] sm:$0xf]
    %v3144 = vld [vmem:[%s8 + $0x15c] sm:$0xf]
    %v3145 = vld [vmem:[%s8 + $0x160] sm:$0xf]
    %v3146 = vld [vmem:[%s8 + $0x164] sm:$0xf]
    %v3147 = vld [vmem:[%s8 + $0x168] sm:$0xf]
    %v3148 = vld [vmem:[%s8 + $0x16c] sm:$0xf]
    %v3149 = vld [vmem:[%s8 + $0x170] sm:$0xf]
    %v3150 = vld [vmem:[%s8 + $0x174] sm:$0xf]
    %v3151 = vld [vmem:[%s8 + $0x178] sm:$0xf]
    %v3152 = vld [vmem:[%s8 + $0x17c] sm:$0xf]
    %s3153 = scalar_lea.vmem [#allocation10], 4
    %v3154 = vld [vmem:[%s3153] sm:$0x1]
    %v3156 = vlaneseq
    %v3157 = vshrl.u32 %v3156, 7
    %v3158 = vsub.s32 0, %v3157
    %v3159 = vrot.slane %v3154, %v3158
    %v3257 = vunpack.c.l.b16 %v3057
    %v3258 = vunpack.c.l.b16 %v3058
    %v3259 = vunpack.c.l.b16 %v3059
    %v3260 = vunpack.c.l.b16 %v3060
    %v3261 = vunpack.c.l.b16 %v3061
    %v3262 = vunpack.c.l.b16 %v3062
    %v3263 = vunpack.c.l.b16 %v3063
    %v3264 = vunpack.c.l.b16 %v3064
    %v3265 = vunpack.c.l.b16 %v3065
    %v3266 = vunpack.c.l.b16 %v3066
    %v3267 = vunpack.c.l.b16 %v3067
    %v3268 = vunpack.c.l.b16 %v3068
    %v3269 = vunpack.c.l.b16 %v3069
    %v3270 = vunpack.c.l.b16 %v3070
    %v3271 = vunpack.c.l.b16 %v3071
    %v3272 = vunpack.c.l.b16 %v3072
    %v3273 = vunpack.c.l.b16 %v3073
    %v3274 = vunpack.c.l.b16 %v3074
    %v3275 = vunpack.c.l.b16 %v3075
    %v3276 = vunpack.c.l.b16 %v3076
    %v3277 = vunpack.c.l.b16 %v3077
    %v3278 = vunpack.c.l.b16 %v3078
    %v3279 = vunpack.c.l.b16 %v3079
    %v3280 = vunpack.c.l.b16 %v3080
    %v3281 = vunpack.c.l.b16 %v3081
    %v3282 = vunpack.c.l.b16 %v3082
    %v3283 = vunpack.c.l.b16 %v3083
    %v3284 = vunpack.c.l.b16 %v3084
    %v3285 = vunpack.c.l.b16 %v3085
    %v3286 = vunpack.c.l.b16 %v3086
    %v3287 = vunpack.c.l.b16 %v3087
    %v3288 = vunpack.c.l.b16 %v3088
    %v3289 = vunpack.c.l.b16 %v3089
    %v3290 = vunpack.c.l.b16 %v3090
    %v3291 = vunpack.c.l.b16 %v3091
    %v3292 = vunpack.c.l.b16 %v3092
    %v3293 = vunpack.c.l.b16 %v3093
    %v3294 = vunpack.c.l.b16 %v3094
    %v3295 = vunpack.c.l.b16 %v3095
    %v3296 = vunpack.c.l.b16 %v3096
    %v3297 = vunpack.c.l.b16 %v3097
    %v3298 = vunpack.c.l.b16 %v3098
    %v3299 = vunpack.c.l.b16 %v3099
    %v3300 = vunpack.c.l.b16 %v3100
    %v3301 = vunpack.c.l.b16 %v3101
    %v3302 = vunpack.c.l.b16 %v3102
    %v3303 = vunpack.c.l.b16 %v3103
    %v3304 = vunpack.c.l.b16 %v3104
    %v3305 = vunpack.c.l.b16 %v3105
    %v3306 = vunpack.c.l.b16 %v3106
    %v3307 = vunpack.c.l.b16 %v3107
    %v3308 = vunpack.c.l.b16 %v3108
    %v3309 = vunpack.c.l.b16 %v3109
    %v3310 = vunpack.c.l.b16 %v3110
    %v3311 = vunpack.c.l.b16 %v3111
    %v3312 = vunpack.c.l.b16 %v3112
    %v3313 = vunpack.c.l.b16 %v3113
    %v3314 = vunpack.c.l.b16 %v3114
    %v3315 = vunpack.c.l.b16 %v3115
    %v3316 = vunpack.c.l.b16 %v3116
    %v3317 = vunpack.c.l.b16 %v3117
    %v3318 = vunpack.c.l.b16 %v3118
    %v3319 = vunpack.c.l.b16 %v3119
    %v3320 = vunpack.c.l.b16 %v3120
    %v3321 = vunpack.c.l.b16 %v3121
    %v3322 = vunpack.c.l.b16 %v3122
    %v3323 = vunpack.c.l.b16 %v3123
    %v3324 = vunpack.c.l.b16 %v3124
    %v3325 = vunpack.c.l.b16 %v3125
    %v3326 = vunpack.c.l.b16 %v3126
    %v3327 = vunpack.c.l.b16 %v3127
    %v3328 = vunpack.c.l.b16 %v3128
    %v3329 = vunpack.c.l.b16 %v3129
    %v3330 = vunpack.c.l.b16 %v3130
    %v3331 = vunpack.c.l.b16 %v3131
    %v3332 = vunpack.c.l.b16 %v3132
    %v3333 = vunpack.c.l.b16 %v3133
    %v3334 = vunpack.c.l.b16 %v3134
    %v3335 = vunpack.c.l.b16 %v3135
    %v3336 = vunpack.c.l.b16 %v3136
    %v3337 = vunpack.c.l.b16 %v3137
    %v3338 = vunpack.c.l.b16 %v3138
    %v3339 = vunpack.c.l.b16 %v3139
    %v3340 = vunpack.c.l.b16 %v3140
    %v3341 = vunpack.c.l.b16 %v3141
    %v3342 = vunpack.c.l.b16 %v3142
    %v3343 = vunpack.c.l.b16 %v3143
    %v3344 = vunpack.c.l.b16 %v3144
    %v3345 = vunpack.c.l.b16 %v3145
    %v3346 = vunpack.c.l.b16 %v3146
    %v3347 = vunpack.c.l.b16 %v3147
    %v3348 = vunpack.c.l.b16 %v3148
    %v3349 = vunpack.c.l.b16 %v3149
    %v3350 = vunpack.c.l.b16 %v3150
    %v3351 = vunpack.c.l.b16 %v3151
    %v3352 = vunpack.c.l.b16 %v3152
    %v3353 = vpack.c.b16 %v3258, %v3257
    %v3354 = vpack.c.b16 %v3260, %v3259
    %v3355 = vpack.c.b16 %v3262, %v3261
    %v3356 = vpack.c.b16 %v3264, %v3263
    %v3357 = vpack.c.b16 %v3266, %v3265
    %v3358 = vpack.c.b16 %v3268, %v3267
    %v3359 = vpack.c.b16 %v3270, %v3269
    %v3360 = vpack.c.b16 %v3272, %v3271
    %v3361 = vpack.c.b16 %v3274, %v3273
    %v3362 = vpack.c.b16 %v3276, %v3275
    %v3363 = vpack.c.b16 %v3278, %v3277
    %v3364 = vpack.c.b16 %v3280, %v3279
    %v3365 = vpack.c.b16 %v3282, %v3281
    %v3366 = vpack.c.b16 %v3284, %v3283
    %v3367 = vpack.c.b16 %v3286, %v3285
    %v3368 = vpack.c.b16 %v3288, %v3287
    %v3369 = vpack.c.b16 %v3290, %v3289
    %v3370 = vpack.c.b16 %v3292, %v3291
    %v3371 = vpack.c.b16 %v3294, %v3293
    %v3372 = vpack.c.b16 %v3296, %v3295
    %v3373 = vpack.c.b16 %v3298, %v3297
    %v3374 = vpack.c.b16 %v3300, %v3299
    %v3375 = vpack.c.b16 %v3302, %v3301
    %v3376 = vpack.c.b16 %v3304, %v3303
    %v3377 = vpack.c.b16 %v3306, %v3305
    %v3378 = vpack.c.b16 %v3308, %v3307
    %v3379 = vpack.c.b16 %v3310, %v3309
    %v3380 = vpack.c.b16 %v3312, %v3311
    %v3381 = vpack.c.b16 %v3314, %v3313
    %v3382 = vpack.c.b16 %v3316, %v3315
    %v3383 = vpack.c.b16 %v3318, %v3317
    %v3384 = vpack.c.b16 %v3320, %v3319
    %v3385 = vpack.c.b16 %v3322, %v3321
    %v3386 = vpack.c.b16 %v3324, %v3323
    %v3387 = vpack.c.b16 %v3326, %v3325
    %v3388 = vpack.c.b16 %v3328, %v3327
    %v3389 = vpack.c.b16 %v3330, %v3329
    %v3390 = vpack.c.b16 %v3332, %v3331
    %v3391 = vpack.c.b16 %v3334, %v3333
    %v3392 = vpack.c.b16 %v3336, %v3335
    %v3393 = vpack.c.b16 %v3338, %v3337
    %v3394 = vpack.c.b16 %v3340, %v3339
    %v3395 = vpack.c.b16 %v3342, %v3341
    %v3396 = vpack.c.b16 %v3344, %v3343
    %v3397 = vpack.c.b16 %v3346, %v3345
    %v3398 = vpack.c.b16 %v3348, %v3347
    %v3399 = vpack.c.b16 %v3350, %v3349
    %v3400 = vpack.c.b16 %v3352, %v3351
    %3449 = vmatprep.subr.bf16.mxu0 0
    %3450 = vmatpush1.bf16.msra.mxu0 %v3353
    %3451 = vmatprep.subr.bf16.mxu0 0
    %3452 = vmatpush1.bf16.msra.mxu0 %v3354
    %3453 = vmatprep.subr.bf16.mxu0 0
    %3454 = vmatpush1.bf16.msra.mxu0 %v3355
    %3455 = vmatprep.subr.bf16.mxu0 0
    %3456 = vmatpush1.bf16.msra.mxu0 %v3356
    %3457 = vmatprep.subr.bf16.mxu0 0
    %3458 = vmatpush1.bf16.msra.mxu0 %v3357
    %3459 = vmatprep.subr.bf16.mxu0 0
    %3460 = vmatpush1.bf16.msra.mxu0 %v3358
    %3461 = vmatprep.subr.bf16.mxu0 0
    %3462 = vmatpush1.bf16.msra.mxu0 %v3359
    %3463 = vmatprep.subr.bf16.mxu0 0
    %3464 = vmatpush1.bf16.msra.mxu0 %v3360
    %3465 = vmatprep.subr.bf16.mxu0 0
    %3466 = vmatpush1.bf16.msra.mxu0 %v3361
    %3467 = vmatprep.subr.bf16.mxu0 0
    %3468 = vmatpush1.bf16.msra.mxu0 %v3362
    %3469 = vmatprep.subr.bf16.mxu0 0
    %3470 = vmatpush1.bf16.msra.mxu0 %v3363
    %3471 = vmatprep.subr.bf16.mxu0 0
    %3472 = vmatpush1.bf16.msra.mxu0 %v3364
    %3473 = vmatprep.subr.bf16.mxu0 0
    %3474 = vmatpush1.bf16.msra.mxu0 %v3365
    %3475 = vmatprep.subr.bf16.mxu0 0
    %3476 = vmatpush1.bf16.msra.mxu0 %v3366
    %3477 = vmatprep.subr.bf16.mxu0 0
    %3478 = vmatpush1.bf16.msra.mxu0 %v3367
    %3479 = vmatprep.subr.bf16.mxu0 0
    %3480 = vmatpush1.bf16.msra.mxu0 %v3368
    %3481 = vmatprep.mubr.bf16.mxu0 %v3052
    %3482 = vmatmul.mubr.bf16.gmra.mrb[0].mxu0 %v3051
    %v3483 = vpop.f32.mrb[0].mxu0
    %v3484 = vadd.f32 %v3159, %v3483
    %v3485 = vpop.f32.mrb[0].mxu0
    %v3486 = vpop.f32.mrb[0].mxu0
    %v3487 = vpop.f32.mrb[0].mxu0
    %3488 = vdwg.mxu0
    %3489 = vmatprep.subr.bf16.mxu0 0
    %3490 = vmatpush1.bf16.msra.mxu0 %v3369
    %3491 = vmatprep.subr.bf16.mxu0 0
    %3492 = vmatpush1.bf16.msra.mxu0 %v3370
    %3493 = vmatprep.subr.bf16.mxu0 0
    %3494 = vmatpush1.bf16.msra.mxu0 %v3371
    %3495 = vmatprep.subr.bf16.mxu0 0
    %3496 = vmatpush1.bf16.msra.mxu0 %v3372
    %3497 = vmatprep.subr.bf16.mxu0 0
    %3498 = vmatpush1.bf16.msra.mxu0 %v3373
    %3499 = vmatprep.subr.bf16.mxu0 0
    %3500 = vmatpush1.bf16.msra.mxu0 %v3374
    %3501 = vmatprep.subr.bf16.mxu0 0
    %3502 = vmatpush1.bf16.msra.mxu0 %v3375
    %3503 = vmatprep.subr.bf16.mxu0 0
    %3504 = vmatpush1.bf16.msra.mxu0 %v3376
    %3505 = vmatprep.subr.bf16.mxu0 0
    %3506 = vmatpush1.bf16.msra.mxu0 %v3377
    %3507 = vmatprep.subr.bf16.mxu0 0
    %3508 = vmatpush1.bf16.msra.mxu0 %v3378
    %3509 = vmatprep.subr.bf16.mxu0 0
    %3510 = vmatpush1.bf16.msra.mxu0 %v3379
    %3511 = vmatprep.subr.bf16.mxu0 0
    %3512 = vmatpush1.bf16.msra.mxu0 %v3380
    %3513 = vmatprep.subr.bf16.mxu0 0
    %3514 = vmatpush1.bf16.msra.mxu0 %v3381
    %3515 = vmatprep.subr.bf16.mxu0 0
    %3516 = vmatpush1.bf16.msra.mxu0 %v3382
    %3517 = vmatprep.subr.bf16.mxu0 0
    %3518 = vmatpush1.bf16.msra.mxu0 %v3383
    %3519 = vmatprep.subr.bf16.mxu0 0
    %3520 = vmatpush1.bf16.msra.mxu0 %v3384
    %3521 = vmatprep.mubr.bf16.mxu0 %v3054
    %3522 = vmatmul.mubr.bf16.gmra.mrb[0].mxu0 %v3053
    %v3523 = vpop.f32.mrb[0].mxu0
    %v3524 = vadd.f32 %v3484, %v3523
    %v3525 = vpop.f32.mrb[0].mxu0
    %v3526 = vpop.f32.mrb[0].mxu0
    %v3527 = vpop.f32.mrb[0].mxu0
    %3528 = vdwg.mxu0
    %3529 = vmatprep.subr.bf16.mxu0 0
    %3530 = vmatpush1.bf16.msra.mxu0 %v3385
    %3531 = vmatprep.subr.bf16.mxu0 0
    %3532 = vmatpush1.bf16.msra.mxu0 %v3386
    %3533 = vmatprep.subr.bf16.mxu0 0
    %3534 = vmatpush1.bf16.msra.mxu0 %v3387
    %3535 = vmatprep.subr.bf16.mxu0 0
    %3536 = vmatpush1.bf16.msra.mxu0 %v3388
    %3537 = vmatprep.subr.bf16.mxu0 0
    %3538 = vmatpush1.bf16.msra.mxu0 %v3389
    %3539 = vmatprep.subr.bf16.mxu0 0
    %3540 = vmatpush1.bf16.msra.mxu0 %v3390
    %3541 = vmatprep.subr.bf16.mxu0 0
    %3542 = vmatpush1.bf16.msra.mxu0 %v3391
    %3543 = vmatprep.subr.bf16.mxu0 0
    %3544 = vmatpush1.bf16.msra.mxu0 %v3392
    %3545 = vmatprep.subr.bf16.mxu0 0
    %3546 = vmatpush1.bf16.msra.mxu0 %v3393
    %3547 = vmatprep.subr.bf16.mxu0 0
    %3548 = vmatpush1.bf16.msra.mxu0 %v3394
    %3549 = vmatprep.subr.bf16.mxu0 0
    %3550 = vmatpush1.bf16.msra.mxu0 %v3395
    %3551 = vmatprep.subr.bf16.mxu0 0
    %3552 = vmatpush1.bf16.msra.mxu0 %v3396
    %3553 = vmatprep.subr.bf16.mxu0 0
    %3554 = vmatpush1.bf16.msra.mxu0 %v3397
    %3555 = vmatprep.subr.bf16.mxu0 0
    %3556 = vmatpush1.bf16.msra.mxu0 %v3398
    %3557 = vmatprep.subr.bf16.mxu0 0
    %3558 = vmatpush1.bf16.msra.mxu0 %v3399
    %3559 = vmatprep.subr.bf16.mxu0 0
    %3560 = vmatpush1.bf16.msra.mxu0 %v3400
    %3561 = vmatprep.mubr.bf16.mxu0 %v3056
    %3562 = vmatmul.mubr.bf16.gmra.mrb[0].mxu0 %v3055
    %v3563 = vpop.f32.mrb[0].mxu0
    %v3564 = vadd.f32 %v3524, %v3563
    %v3565 = vpop.f32.mrb[0].mxu0
    %v3566 = vpop.f32.mrb[0].mxu0
    %v3567 = vpop.f32.mrb[0].mxu0
    %3568 = vdwg.mxu0
    %v3569 = vld [vmem:[%s9] sm:$0xf]
    %v3570 = vld [vmem:[%s9 + $0x4] sm:$0xf]
    %v3571 = vld [vmem:[%s9 + $0x8] sm:$0xf]
    %v3572 = vld [vmem:[%s9 + $0xc] sm:$0xf]
    %v3573 = vld [vmem:[%s9 + $0x10] sm:$0xf]
    %v3574 = vld [vmem:[%s9 + $0x14] sm:$0xf]
    %v3575 = vld [vmem:[%s9 + $0x18] sm:$0xf]
    %v3576 = vld [vmem:[%s9 + $0x1c] sm:$0xf]
    %v3577 = vld [vmem:[%s9 + $0x20] sm:$0xf]
    %v3578 = vld [vmem:[%s9 + $0x24] sm:$0xf]
    %v3579 = vld [vmem:[%s9 + $0x28] sm:$0xf]
    %v3580 = vld [vmem:[%s9 + $0x2c] sm:$0xf]
    %v3581 = vld [vmem:[%s9 + $0x30] sm:$0xf]
    %v3582 = vld [vmem:[%s9 + $0x34] sm:$0xf]
    %v3583 = vld [vmem:[%s9 + $0x38] sm:$0xf]
    %v3584 = vld [vmem:[%s9 + $0x3c] sm:$0xf]
    %v3585 = vld [vmem:[%s9 + $0x40] sm:$0xf]
    %v3586 = vld [vmem:[%s9 + $0x44] sm:$0xf]
    %v3587 = vld [vmem:[%s9 + $0x48] sm:$0xf]
    %v3588 = vld [vmem:[%s9 + $0x4c] sm:$0xf]
    %v3589 = vld [vmem:[%s9 + $0x50] sm:$0xf]
    %v3590 = vld [vmem:[%s9 + $0x54] sm:$0xf]
    %v3591 = vld [vmem:[%s9 + $0x58] sm:$0xf]
    %v3592 = vld [vmem:[%s9 + $0x5c] sm:$0xf]
    %v3593 = vld [vmem:[%s9 + $0x60] sm:$0xf]
    %v3594 = vld [vmem:[%s9 + $0x64] sm:$0xf]
    %v3595 = vld [vmem:[%s9 + $0x68] sm:$0xf]
    %v3596 = vld [vmem:[%s9 + $0x6c] sm:$0xf]
    %v3597 = vld [vmem:[%s9 + $0x70] sm:$0xf]
    %v3598 = vld [vmem:[%s9 + $0x74] sm:$0xf]
    %v3599 = vld [vmem:[%s9 + $0x78] sm:$0xf]
    %v3600 = vld [vmem:[%s9 + $0x7c] sm:$0xf]
    %v3601 = vld [vmem:[%s9 + $0x80] sm:$0xf]
    %v3602 = vld [vmem:[%s9 + $0x84] sm:$0xf]
    %v3603 = vld [vmem:[%s9 + $0x88] sm:$0xf]
    %v3604 = vld [vmem:[%s9 + $0x8c] sm:$0xf]
    %v3605 = vld [vmem:[%s9 + $0x90] sm:$0xf]
    %v3606 = vld [vmem:[%s9 + $0x94] sm:$0xf]
    %v3607 = vld [vmem:[%s9 + $0x98] sm:$0xf]
    %v3608 = vld [vmem:[%s9 + $0x9c] sm:$0xf]
    %v3609 = vld [vmem:[%s9 + $0xa0] sm:$0xf]
    %v3610 = vld [vmem:[%s9 + $0xa4] sm:$0xf]
    %v3611 = vld [vmem:[%s9 + $0xa8] sm:$0xf]
    %v3612 = vld [vmem:[%s9 + $0xac] sm:$0xf]
    %v3613 = vld [vmem:[%s9 + $0xb0] sm:$0xf]
    %v3614 = vld [vmem:[%s9 + $0xb4] sm:$0xf]
    %v3615 = vld [vmem:[%s9 + $0xb8] sm:$0xf]
    %v3616 = vld [vmem:[%s9 + $0xbc] sm:$0xf]
    %v3617 = vld [vmem:[%s9 + $0xc0] sm:$0xf]
    %v3618 = vld [vmem:[%s9 + $0xc4] sm:$0xf]
    %v3619 = vld [vmem:[%s9 + $0xc8] sm:$0xf]
    %v3620 = vld [vmem:[%s9 + $0xcc] sm:$0xf]
    %v3621 = vld [vmem:[%s9 + $0xd0] sm:$0xf]
    %v3622 = vld [vmem:[%s9 + $0xd4] sm:$0xf]
    %v3623 = vld [vmem:[%s9 + $0xd8] sm:$0xf]
    %v3624 = vld [vmem:[%s9 + $0xdc] sm:$0xf]
    %v3625 = vld [vmem:[%s9 + $0xe0] sm:$0xf]
    %v3626 = vld [vmem:[%s9 + $0xe4] sm:$0xf]
    %v3627 = vld [vmem:[%s9 + $0xe8] sm:$0xf]
    %v3628 = vld [vmem:[%s9 + $0xec] sm:$0xf]
    %v3629 = vld [vmem:[%s9 + $0xf0] sm:$0xf]
    %v3630 = vld [vmem:[%s9 + $0xf4] sm:$0xf]
    %v3631 = vld [vmem:[%s9 + $0xf8] sm:$0xf]
    %v3632 = vld [vmem:[%s9 + $0xfc] sm:$0xf]
    %v3633 = vld [vmem:[%s9 + $0x100] sm:$0xf]
    %v3634 = vld [vmem:[%s9 + $0x104] sm:$0xf]
    %v3635 = vld [vmem:[%s9 + $0x108] sm:$0xf]
    %v3636 = vld [vmem:[%s9 + $0x10c] sm:$0xf]
    %v3637 = vld [vmem:[%s9 + $0x110] sm:$0xf]
    %v3638 = vld [vmem:[%s9 + $0x114] sm:$0xf]
    %v3639 = vld [vmem:[%s9 + $0x118] sm:$0xf]
    %v3640 = vld [vmem:[%s9 + $0x11c] sm:$0xf]
    %v3641 = vld [vmem:[%s9 + $0x120] sm:$0xf]
    %v3642 = vld [vmem:[%s9 + $0x124] sm:$0xf]
    %v3643 = vld [vmem:[%s9 + $0x128] sm:$0xf]
    %v3644 = vld [vmem:[%s9 + $0x12c] sm:$0xf]
    %v3645 = vld [vmem:[%s9 + $0x130] sm:$0xf]
    %v3646 = vld [vmem:[%s9 + $0x134] sm:$0xf]
    %v3647 = vld [vmem:[%s9 + $0x138] sm:$0xf]
    %v3648 = vld [vmem:[%s9 + $0x13c] sm:$0xf]
    %v3649 = vld [vmem:[%s9 + $0x140] sm:$0xf]
    %v3650 = vld [vmem:[%s9 + $0x144] sm:$0xf]
    %v3651 = vld [vmem:[%s9 + $0x148] sm:$0xf]
    %v3652 = vld [vmem:[%s9 + $0x14c] sm:$0xf]
    %v3653 = vld [vmem:[%s9 + $0x150] sm:$0xf]
    %v3654 = vld [vmem:[%s9 + $0x154] sm:$0xf]
    %v3655 = vld [vmem:[%s9 + $0x158] sm:$0xf]
    %v3656 = vld [vmem:[%s9 + $0x15c] sm:$0xf]
    %v3657 = vld [vmem:[%s9 + $0x160] sm:$0xf]
    %v3658 = vld [vmem:[%s9 + $0x164] sm:$0xf]
    %v3659 = vld [vmem:[%s9 + $0x168] sm:$0xf]
    %v3660 = vld [vmem:[%s9 + $0x16c] sm:$0xf]
    %v3661 = vld [vmem:[%s9 + $0x170] sm:$0xf]
    %v3662 = vld [vmem:[%s9 + $0x174] sm:$0xf]
    %v3663 = vld [vmem:[%s9 + $0x178] sm:$0xf]
    %v3664 = vld [vmem:[%s9 + $0x17c] sm:$0xf]
    %s3665 = scalar_lea.vmem [#allocation10], 5
    %v3666 = vld [vmem:[%s3665] sm:$0x1]
    %v3668 = vlaneseq
    %v3669 = vshrl.u32 %v3668, 7
    %v3670 = vsub.s32 0, %v3669
    %v3671 = vrot.slane %v3666, %v3670
    %v3769 = vunpack.c.l.b16 %v3569
    %v3770 = vunpack.c.l.b16 %v3570
    %v3771 = vunpack.c.l.b16 %v3571
    %v3772 = vunpack.c.l.b16 %v3572
    %v3773 = vunpack.c.l.b16 %v3573
    %v3774 = vunpack.c.l.b16 %v3574
    %v3775 = vunpack.c.l.b16 %v3575
    %v3776 = vunpack.c.l.b16 %v3576
    %v3777 = vunpack.c.l.b16 %v3577
    %v3778 = vunpack.c.l.b16 %v3578
    %v3779 = vunpack.c.l.b16 %v3579
    %v3780 = vunpack.c.l.b16 %v3580
    %v3781 = vunpack.c.l.b16 %v3581
    %v3782 = vunpack.c.l.b16 %v3582
    %v3783 = vunpack.c.l.b16 %v3583
    %v3784 = vunpack.c.l.b16 %v3584
    %v3785 = vunpack.c.l.b16 %v3585
    %v3786 = vunpack.c.l.b16 %v3586
    %v3787 = vunpack.c.l.b16 %v3587
    %v3788 = vunpack.c.l.b16 %v3588
    %v3789 = vunpack.c.l.b16 %v3589
    %v3790 = vunpack.c.l.b16 %v3590
    %v3791 = vunpack.c.l.b16 %v3591
    %v3792 = vunpack.c.l.b16 %v3592
    %v3793 = vunpack.c.l.b16 %v3593
    %v3794 = vunpack.c.l.b16 %v3594
    %v3795 = vunpack.c.l.b16 %v3595
    %v3796 = vunpack.c.l.b16 %v3596
    %v3797 = vunpack.c.l.b16 %v3597
    %v3798 = vunpack.c.l.b16 %v3598
    %v3799 = vunpack.c.l.b16 %v3599
    %v3800 = vunpack.c.l.b16 %v3600
    %v3801 = vunpack.c.l.b16 %v3601
    %v3802 = vunpack.c.l.b16 %v3602
    %v3803 = vunpack.c.l.b16 %v3603
    %v3804 = vunpack.c.l.b16 %v3604
    %v3805 = vunpack.c.l.b16 %v3605
    %v3806 = vunpack.c.l.b16 %v3606
    %v3807 = vunpack.c.l.b16 %v3607
    %v3808 = vunpack.c.l.b16 %v3608
    %v3809 = vunpack.c.l.b16 %v3609
    %v3810 = vunpack.c.l.b16 %v3610
    %v3811 = vunpack.c.l.b16 %v3611
    %v3812 = vunpack.c.l.b16 %v3612
    %v3813 = vunpack.c.l.b16 %v3613
    %v3814 = vunpack.c.l.b16 %v3614
    %v3815 = vunpack.c.l.b16 %v3615
    %v3816 = vunpack.c.l.b16 %v3616
    %v3817 = vunpack.c.l.b16 %v3617
    %v3818 = vunpack.c.l.b16 %v3618
    %v3819 = vunpack.c.l.b16 %v3619
    %v3820 = vunpack.c.l.b16 %v3620
    %v3821 = vunpack.c.l.b16 %v3621
    %v3822 = vunpack.c.l.b16 %v3622
    %v3823 = vunpack.c.l.b16 %v3623
    %v3824 = vunpack.c.l.b16 %v3624
    %v3825 = vunpack.c.l.b16 %v3625
    %v3826 = vunpack.c.l.b16 %v3626
    %v3827 = vunpack.c.l.b16 %v3627
    %v3828 = vunpack.c.l.b16 %v3628
    %v3829 = vunpack.c.l.b16 %v3629
    %v3830 = vunpack.c.l.b16 %v3630
    %v3831 = vunpack.c.l.b16 %v3631
    %v3832 = vunpack.c.l.b16 %v3632
    %v3833 = vunpack.c.l.b16 %v3633
    %v3834 = vunpack.c.l.b16 %v3634
    %v3835 = vunpack.c.l.b16 %v3635
    %v3836 = vunpack.c.l.b16 %v3636
    %v3837 = vunpack.c.l.b16 %v3637
    %v3838 = vunpack.c.l.b16 %v3638
    %v3839 = vunpack.c.l.b16 %v3639
    %v3840 = vunpack.c.l.b16 %v3640
    %v3841 = vunpack.c.l.b16 %v3641
    %v3842 = vunpack.c.l.b16 %v3642
    %v3843 = vunpack.c.l.b16 %v3643
    %v3844 = vunpack.c.l.b16 %v3644
    %v3845 = vunpack.c.l.b16 %v3645
    %v3846 = vunpack.c.l.b16 %v3646
    %v3847 = vunpack.c.l.b16 %v3647
    %v3848 = vunpack.c.l.b16 %v3648
    %v3849 = vunpack.c.l.b16 %v3649
    %v3850 = vunpack.c.l.b16 %v3650
    %v3851 = vunpack.c.l.b16 %v3651
    %v3852 = vunpack.c.l.b16 %v3652
    %v3853 = vunpack.c.l.b16 %v3653
    %v3854 = vunpack.c.l.b16 %v3654
    %v3855 = vunpack.c.l.b16 %v3655
    %v3856 = vunpack.c.l.b16 %v3656
    %v3857 = vunpack.c.l.b16 %v3657
    %v3858 = vunpack.c.l.b16 %v3658
    %v3859 = vunpack.c.l.b16 %v3659
    %v3860 = vunpack.c.l.b16 %v3660
    %v3861 = vunpack.c.l.b16 %v3661
    %v3862 = vunpack.c.l.b16 %v3662
    %v3863 = vunpack.c.l.b16 %v3663
    %v3864 = vunpack.c.l.b16 %v3664
    %v3865 = vpack.c.b16 %v3770, %v3769
    %v3866 = vpack.c.b16 %v3772, %v3771
    %v3867 = vpack.c.b16 %v3774, %v3773
    %v3868 = vpack.c.b16 %v3776, %v3775
    %v3869 = vpack.c.b16 %v3778, %v3777
    %v3870 = vpack.c.b16 %v3780, %v3779
    %v3871 = vpack.c.b16 %v3782, %v3781
    %v3872 = vpack.c.b16 %v3784, %v3783
    %v3873 = vpack.c.b16 %v3786, %v3785
    %v3874 = vpack.c.b16 %v3788, %v3787
    %v3875 = vpack.c.b16 %v3790, %v3789
    %v3876 = vpack.c.b16 %v3792, %v3791
    %v3877 = vpack.c.b16 %v3794, %v3793
    %v3878 = vpack.c.b16 %v3796, %v3795
    %v3879 = vpack.c.b16 %v3798, %v3797
    %v3880 = vpack.c.b16 %v3800, %v3799
    %v3881 = vpack.c.b16 %v3802, %v3801
    %v3882 = vpack.c.b16 %v3804, %v3803
    %v3883 = vpack.c.b16 %v3806, %v3805
    %v3884 = vpack.c.b16 %v3808, %v3807
    %v3885 = vpack.c.b16 %v3810, %v3809
    %v3886 = vpack.c.b16 %v3812, %v3811
    %v3887 = vpack.c.b16 %v3814, %v3813
    %v3888 = vpack.c.b16 %v3816, %v3815
    %v3889 = vpack.c.b16 %v3818, %v3817
    %v3890 = vpack.c.b16 %v3820, %v3819
    %v3891 = vpack.c.b16 %v3822, %v3821
    %v3892 = vpack.c.b16 %v3824, %v3823
    %v3893 = vpack.c.b16 %v3826, %v3825
    %v3894 = vpack.c.b16 %v3828, %v3827
    %v3895 = vpack.c.b16 %v3830, %v3829
    %v3896 = vpack.c.b16 %v3832, %v3831
    %v3897 = vpack.c.b16 %v3834, %v3833
    %v3898 = vpack.c.b16 %v3836, %v3835
    %v3899 = vpack.c.b16 %v3838, %v3837
    %v3900 = vpack.c.b16 %v3840, %v3839
    %v3901 = vpack.c.b16 %v3842, %v3841
    %v3902 = vpack.c.b16 %v3844, %v3843
    %v3903 = vpack.c.b16 %v3846, %v3845
    %v3904 = vpack.c.b16 %v3848, %v3847
    %v3905 = vpack.c.b16 %v3850, %v3849
    %v3906 = vpack.c.b16 %v3852, %v3851
    %v3907 = vpack.c.b16 %v3854, %v3853
    %v3908 = vpack.c.b16 %v3856, %v3855
    %v3909 = vpack.c.b16 %v3858, %v3857
    %v3910 = vpack.c.b16 %v3860, %v3859
    %v3911 = vpack.c.b16 %v3862, %v3861
    %v3912 = vpack.c.b16 %v3864, %v3863
    %3961 = vmatprep.subr.bf16.mxu0 0
    %3962 = vmatpush1.bf16.msra.mxu0 %v3865
    %3963 = vmatprep.subr.bf16.mxu0 0
    %3964 = vmatpush1.bf16.msra.mxu0 %v3866
    %3965 = vmatprep.subr.bf16.mxu0 0
    %3966 = vmatpush1.bf16.msra.mxu0 %v3867
    %3967 = vmatprep.subr.bf16.mxu0 0
    %3968 = vmatpush1.bf16.msra.mxu0 %v3868
    %3969 = vmatprep.subr.bf16.mxu0 0
    %3970 = vmatpush1.bf16.msra.mxu0 %v3869
    %3971 = vmatprep.subr.bf16.mxu0 0
    %3972 = vmatpush1.bf16.msra.mxu0 %v3870
    %3973 = vmatprep.subr.bf16.mxu0 0
    %3974 = vmatpush1.bf16.msra.mxu0 %v3871
    %3975 = vmatprep.subr.bf16.mxu0 0
    %3976 = vmatpush1.bf16.msra.mxu0 %v3872
    %3977 = vmatprep.subr.bf16.mxu0 0
    %3978 = vmatpush1.bf16.msra.mxu0 %v3873
    %3979 = vmatprep.subr.bf16.mxu0 0
    %3980 = vmatpush1.bf16.msra.mxu0 %v3874
    %3981 = vmatprep.subr.bf16.mxu0 0
    %3982 = vmatpush1.bf16.msra.mxu0 %v3875
    %3983 = vmatprep.subr.bf16.mxu0 0
    %3984 = vmatpush1.bf16.msra.mxu0 %v3876
    %3985 = vmatprep.subr.bf16.mxu0 0
    %3986 = vmatpush1.bf16.msra.mxu0 %v3877
    %3987 = vmatprep.subr.bf16.mxu0 0
    %3988 = vmatpush1.bf16.msra.mxu0 %v3878
    %3989 = vmatprep.subr.bf16.mxu0 0
    %3990 = vmatpush1.bf16.msra.mxu0 %v3879
    %3991 = vmatprep.subr.bf16.mxu0 0
    %3992 = vmatpush1.bf16.msra.mxu0 %v3880
    %3993 = vmatprep.mubr.bf16.mxu0 %v3052
    %3994 = vmatmul.mubr.bf16.gmra.mrb[0].mxu0 %v3051
    %v3995 = vpop.f32.mrb[0].mxu0
    %v3996 = vadd.f32 %v3671, %v3995
    %v3997 = vpop.f32.mrb[0].mxu0
    %v3998 = vpop.f32.mrb[0].mxu0
    %v3999 = vpop.f32.mrb[0].mxu0
    %4000 = vdwg.mxu0
    %4001 = vmatprep.subr.bf16.mxu0 0
    %4002 = vmatpush1.bf16.msra.mxu0 %v3881
    %4003 = vmatprep.subr.bf16.mxu0 0
    %4004 = vmatpush1.bf16.msra.mxu0 %v3882
    %4005 = vmatprep.subr.bf16.mxu0 0
    %4006 = vmatpush1.bf16.msra.mxu0 %v3883
    %4007 = vmatprep.subr.bf16.mxu0 0
    %4008 = vmatpush1.bf16.msra.mxu0 %v3884
    %4009 = vmatprep.subr.bf16.mxu0 0
    %4010 = vmatpush1.bf16.msra.mxu0 %v3885
    %4011 = vmatprep.subr.bf16.mxu0 0
    %4012 = vmatpush1.bf16.msra.mxu0 %v3886
    %4013 = vmatprep.subr.bf16.mxu0 0
    %4014 = vmatpush1.bf16.msra.mxu0 %v3887
    %4015 = vmatprep.subr.bf16.mxu0 0
    %4016 = vmatpush1.bf16.msra.mxu0 %v3888
    %4017 = vmatprep.subr.bf16.mxu0 0
    %4018 = vmatpush1.bf16.msra.mxu0 %v3889
    %4019 = vmatprep.subr.bf16.mxu0 0
    %4020 = vmatpush1.bf16.msra.mxu0 %v3890
    %4021 = vmatprep.subr.bf16.mxu0 0
    %4022 = vmatpush1.bf16.msra.mxu0 %v3891
    %4023 = vmatprep.subr.bf16.mxu0 0
    %4024 = vmatpush1.bf16.msra.mxu0 %v3892
    %4025 = vmatprep.subr.bf16.mxu0 0
    %4026 = vmatpush1.bf16.msra.mxu0 %v3893
    %4027 = vmatprep.subr.bf16.mxu0 0
    %4028 = vmatpush1.bf16.msra.mxu0 %v3894
    %4029 = vmatprep.subr.bf16.mxu0 0
    %4030 = vmatpush1.bf16.msra.mxu0 %v3895
    %4031 = vmatprep.subr.bf16.mxu0 0
    %4032 = vmatpush1.bf16.msra.mxu0 %v3896
    %4033 = vmatprep.mubr.bf16.mxu0 %v3054
    %4034 = vmatmul.mubr.bf16.gmra.mrb[0].mxu0 %v3053
    %v4035 = vpop.f32.mrb[0].mxu0
    %v4036 = vadd.f32 %v3996, %v4035
    %v4037 = vpop.f32.mrb[0].mxu0
    %v4038 = vpop.f32.mrb[0].mxu0
    %v4039 = vpop.f32.mrb[0].mxu0
    %4040 = vdwg.mxu0
    %4041 = vmatprep.subr.bf16.mxu0 0
    %4042 = vmatpush1.bf16.msra.mxu0 %v3897
    %4043 = vmatprep.subr.bf16.mxu0 0
    %4044 = vmatpush1.bf16.msra.mxu0 %v3898
    %4045 = vmatprep.subr.bf16.mxu0 0
    %4046 = vmatpush1.bf16.msra.mxu0 %v3899
    %4047 = vmatprep.subr.bf16.mxu0 0
    %4048 = vmatpush1.bf16.msra.mxu0 %v3900
    %4049 = vmatprep.subr.bf16.mxu0 0
    %4050 = vmatpush1.bf16.msra.mxu0 %v3901
    %4051 = vmatprep.subr.bf16.mxu0 0
    %4052 = vmatpush1.bf16.msra.mxu0 %v3902
    %4053 = vmatprep.subr.bf16.mxu0 0
    %4054 = vmatpush1.bf16.msra.mxu0 %v3903
    %4055 = vmatprep.subr.bf16.mxu0 0
    %4056 = vmatpush1.bf16.msra.mxu0 %v3904
    %4057 = vmatprep.subr.bf16.mxu0 0
    %4058 = vmatpush1.bf16.msra.mxu0 %v3905
    %4059 = vmatprep.subr.bf16.mxu0 0
    %4060 = vmatpush1.bf16.msra.mxu0 %v3906
    %4061 = vmatprep.subr.bf16.mxu0 0
    %4062 = vmatpush1.bf16.msra.mxu0 %v3907
    %4063 = vmatprep.subr.bf16.mxu0 0
    %4064 = vmatpush1.bf16.msra.mxu0 %v3908
    %4065 = vmatprep.subr.bf16.mxu0 0
    %4066 = vmatpush1.bf16.msra.mxu0 %v3909
    %4067 = vmatprep.subr.bf16.mxu0 0
    %4068 = vmatpush1.bf16.msra.mxu0 %v3910
    %4069 = vmatprep.subr.bf16.mxu0 0
    %4070 = vmatpush1.bf16.msra.mxu0 %v3911
    %4071 = vmatprep.subr.bf16.mxu0 0
    %4072 = vmatpush1.bf16.msra.mxu0 %v3912
    %4073 = vmatprep.mubr.bf16.mxu0 %v3056
    %4074 = vmatmul.mubr.bf16.gmra.mrb[0].mxu0 %v3055
    %v4075 = vpop.f32.mrb[0].mxu0
    %v4076 = vadd.f32 %v4036, %v4075
    %v4077 = vpop.f32.mrb[0].mxu0
    %v4078 = vpop.f32.mrb[0].mxu0
    %v4079 = vpop.f32.mrb[0].mxu0
    %4080 = vdwg.mxu0
    %v4081 = vmax.f32 %v4076, -4.0
    %v4082 = vmin.f32 %v4081, 15.0
    %v4083 = vmul.f32 %v4082, 1.442695
    %v4084 = vpow.pop %v4083
    %v4085 = vld [vmem:[#allocation7] sm:$0xf]
    %v4086 = vmul.f32 %v4084, %v4085
    %v4087 = vadd.f32 %v3564, %v4086
    %vm4088 = vcmask 93184
    %4089 = vst.msk [vmem:[#allocation21] sm:$0xf] %vm4088, %v3564
    %4090 = vst.msk [vmem:[#allocation23] sm:$0xf] %vm4088, %v4084
    %s4091 = scalar_lea.vmem [#allocation10], 6
    %v4092 = vld [vmem:[%s4091] sm:$0x1]
    %s4093 = scalar_lea.vmem [#allocation10], 7
    %v4094 = vld [vmem:[%s4093] sm:$0x1]
    %s4095 = scalar_lea.vmem [#allocation10], 8
    %v4096 = vld [vmem:[%s4095] sm:$0x1]
    %s4097 = scalar_lea.vmem [#allocation10], 9
    %v4098 = vld [vmem:[%s4097] sm:$0x1]
    %v4099 = vsel %vm4088, %v4087, 0.0
    %4100 = vadd.xlane.f32.xlu0 %v4099
    %v4101 = vpop.xlane.xlu0 %4100
    %v4102 = vadd.f32 %v206, %v4101
    %v4103 = vrcp.pop 28.0
    %v4104 = vmul.f32 %v4102, %v4103
    %v4105 = vsub.f32 %v194, %v4104
    %v4106 = vsub.f32 %v4087, %v4104
    %v4107 = vmul.f32 %v4105, %v4105
    %v4108 = vsel %vm203, %v4107, 0.0
    %4109 = vadd.xlane.f32.xlu0 %v4108
    %v4110 = vpop.xlane.xlu0 %4109
    %v4111 = vmul.f32 %v4106, %v4106
    %v4112 = vsel %vm4088, %v4111, 0.0
    %4113 = vadd.xlane.f32.xlu0 %v4112
    %v4114 = vpop.xlane.xlu0 %4113
    %v4115 = vadd.f32 %v4110, %v4114
    %v4116 = vmul.f32 %v4115, %v4103
    %v4117 = vadd.f32 %v4116, 1e-05
    %v4118 = vrsqrt.pop %v4117
    %v4119 = vmul.f32 %v4105, %v4118
    %v4121 = vlaneseq
    %v4122 = vshrl.u32 %v4121, 7
    %v4123 = vsub.s32 0, %v4122
    %v4124 = vrot.slane %v4092, %v4123
    %v4126 = vmul.f32 %v4119, %v4124
    %v4128 = vlaneseq
    %v4129 = vshrl.u32 %v4128, 7
    %v4130 = vsub.s32 0, %v4129
    %v4131 = vrot.slane %v4094, %v4130
    %v4133 = vadd.f32 %v4126, %v4131
    %v4134 = vmul.f32 %v4106, %v4118
    %v4136 = vlaneseq
    %v4137 = vshrl.u32 %v4136, 7
    %v4138 = vsub.s32 0, %v4137
    %v4139 = vrot.slane %v4096, %v4138
    %v4141 = vmul.f32 %v4134, %v4139
    %v4143 = vlaneseq
    %v4144 = vshrl.u32 %v4143, 7
    %v4145 = vsub.s32 0, %v4144
    %v4146 = vrot.slane %v4098, %v4145
    %v4148 = vadd.f32 %v4141, %v4146
    %v4149 = vpack.c.bf16 %v4133, %v4133
    %v4150 = vld [vmem:[#allocation16] sm:$0xff]
    %v4151 = vld [vmem:[#allocation16 + $0x8] sm:$0xff]
    %v4152 = vld [vmem:[#allocation16 + $0x10] sm:$0xff]
    %v4153 = vld [vmem:[#allocation16 + $0x18] sm:$0xff]
    %v4154 = vld [vmem:[#allocation16 + $0x20] sm:$0xff]
    %v4155 = vld [vmem:[#allocation16 + $0x28] sm:$0xff]
    %v4156 = vpack.c.bf16 %v4148, %v4148
    %v4157 = vld [vmem:[#allocation17] sm:$0xff]
    %v4158 = vld [vmem:[#allocation17 + $0x8] sm:$0xff]
    %v4159 = vld [vmem:[#allocation17 + $0x10] sm:$0xff]
    %v4160 = vld [vmem:[#allocation17 + $0x18] sm:$0x33]
    %v4161 = vld [vmem:[#allocation17 + $0x20] sm:$0x33]
    %v4162 = vld [vmem:[#allocation17 + $0x28] sm:$0x33]
    %v4169 = vunpack.c.l.b16 %v4157
    %v4170 = vunpack.c.h.b16 %v4157
    %v4171 = vunpack.c.l.b16 %v4158
    %v4172 = vunpack.c.h.b16 %v4158
    %v4173 = vunpack.c.l.b16 %v4159
    %v4174 = vunpack.c.h.b16 %v4159
    %v4175 = vunpack.c.l.b16 %v4160
    %v4176 = vunpack.c.h.b16 %v4160
    %v4177 = vunpack.c.l.b16 %v4161
    %v4178 = vunpack.c.h.b16 %v4161
    %v4179 = vunpack.c.l.b16 %v4162
    %v4180 = vunpack.c.h.b16 %v4162
    %v4181 = vpack.c.b16 %v4175, %v4169
    %v4182 = vpack.c.b16 %v4176, %v4170
    %v4183 = vpack.c.b16 %v4177, %v4171
    %v4184 = vpack.c.b16 %v4178, %v4172
    %v4185 = vpack.c.b16 %v4179, %v4173
    %v4186 = vpack.c.b16 %v4180, %v4174
    %vm4187 = vcmask 97280
    %v4189 = vsel %vm4187, %v4156, 0
    %vm4191 = vcmask 1045504
    %v4193 = vsel %vm4191, %v4181, 0
    %v4196 = vsel %vm4191, %v4182, 0
    %v4199 = vsel %vm4191, %v4183, 0
    %v4202 = vsel %vm4191, %v4184, 0
    %v4205 = vsel %vm4191, %v4185, 0
    %v4208 = vsel %vm4191, %v4186, 0
    %4210 = vmatprep.subr.bf16.mxu0 %v4196
    %4211 = vmatpush1.bf16.msra.mxu0 %v4193
    %4212 = vmatprep.subr.bf16.mxu0 0
    %4213 = vmatpush1.bf16.msra.mxu0 0
    %4214 = vmatprep.subr.bf16.mxu0 0
    %4215 = vmatpush1.bf16.msra.mxu0 0
    %4216 = vmatprep.subr.bf16.mxu0 0
    %4217 = vmatpush1.bf16.msra.mxu0 0
    %4218 = vmatprep.subr.bf16.mxu0 0
    %4219 = vmatpush1.bf16.msra.mxu0 0
    %4220 = vmatprep.subr.bf16.mxu0 0
    %4221 = vmatpush1.bf16.msra.mxu0 0
    %4222 = vmatprep.subr.bf16.mxu0 0
    %4223 = vmatpush1.bf16.msra.mxu0 0
    %4224 = vmatprep.subr.bf16.mxu0 0
    %4225 = vmatpush1.bf16.msra.mxu0 0
    %4226 = vmatprep.subr.bf16.mxu0 0
    %4227 = vmatpush1.bf16.msra.mxu0 0
    %4228 = vmatprep.subr.bf16.mxu0 0
    %4229 = vmatpush1.bf16.msra.mxu0 0
    %4230 = vmatprep.subr.bf16.mxu0 0
    %4231 = vmatpush1.bf16.msra.mxu0 0
    %4232 = vmatprep.subr.bf16.mxu0 0
    %4233 = vmatpush1.bf16.msra.mxu0 0
    %4234 = vmatprep.subr.bf16.mxu0 0
    %4235 = vmatpush1.bf16.msra.mxu0 0
    %4236 = vmatprep.subr.bf16.mxu0 0
    %4237 = vmatpush1.bf16.msra.mxu0 0
    %4238 = vmatprep.subr.bf16.mxu0 0
    %4239 = vmatpush1.bf16.msra.mxu0 0
    %4240 = vmatprep.subr.bf16.mxu0 0
    %4241 = vmatpush1.bf16.msra.mxu0 0
    %4242 = vmatprep.mubr.bf16.mxu0 0
    %4243 = vmatmul.mubr.bf16.gmra.mrb[0].mxu0 %v4189
    %v4244 = vpop.f32.mrb[0].mxu0
    %v4245 = vadd.f32 0.0, %v4244
    %v4246 = vpop.f32.mrb[0].mxu0
    %v4247 = vadd.f32 0.0, %v4246
    %v4248 = vpop.f32.mrb[0].mxu0
    %v4249 = vpop.f32.mrb[0].mxu0
    %4250 = vdwg.mxu0
    %4251 = vmatprep.subr.bf16.mxu0 %v4202
    %4252 = vmatpush1.bf16.msra.mxu0 %v4199
    %4253 = vmatprep.subr.bf16.mxu0 0
    %4254 = vmatpush1.bf16.msra.mxu0 0
    %4255 = vmatprep.subr.bf16.mxu0 0
    %4256 = vmatpush1.bf16.msra.mxu0 0
    %4257 = vmatprep.subr.bf16.mxu0 0
    %4258 = vmatpush1.bf16.msra.mxu0 0
    %4259 = vmatprep.subr.bf16.mxu0 0
    %4260 = vmatpush1.bf16.msra.mxu0 0
    %4261 = vmatprep.subr.bf16.mxu0 0
    %4262 = vmatpush1.bf16.msra.mxu0 0
    %4263 = vmatprep.subr.bf16.mxu0 0
    %4264 = vmatpush1.bf16.msra.mxu0 0
    %4265 = vmatprep.subr.bf16.mxu0 0
    %4266 = vmatpush1.bf16.msra.mxu0 0
    %4267 = vmatprep.subr.bf16.mxu0 0
    %4268 = vmatpush1.bf16.msra.mxu0 0
    %4269 = vmatprep.subr.bf16.mxu0 0
    %4270 = vmatpush1.bf16.msra.mxu0 0
    %4271 = vmatprep.subr.bf16.mxu0 0
    %4272 = vmatpush1.bf16.msra.mxu0 0
    %4273 = vmatprep.subr.bf16.mxu0 0
    %4274 = vmatpush1.bf16.msra.mxu0 0
    %4275 = vmatprep.subr.bf16.mxu0 0
    %4276 = vmatpush1.bf16.msra.mxu0 0
    %4277 = vmatprep.subr.bf16.mxu0 0
    %4278 = vmatpush1.bf16.msra.mxu0 0
    %4279 = vmatprep.subr.bf16.mxu0 0
    %4280 = vmatpush1.bf16.msra.mxu0 0
    %4281 = vmatprep.subr.bf16.mxu0 0
    %4282 = vmatpush1.bf16.msra.mxu0 0
    %4283 = vmatprep.mubr.bf16.mxu0 0
    %4284 = vmatmul.mubr.bf16.gmra.mrb[0].mxu0 %v4189
    %v4285 = vpop.f32.mrb[0].mxu0
    %v4286 = vadd.f32 0.0, %v4285
    %v4287 = vpop.f32.mrb[0].mxu0
    %v4288 = vadd.f32 0.0, %v4287
    %v4289 = vpop.f32.mrb[0].mxu0
    %v4290 = vpop.f32.mrb[0].mxu0
    %4291 = vdwg.mxu0
    %4292 = vmatprep.subr.bf16.mxu0 %v4208
    %4293 = vmatpush1.bf16.msra.mxu0 %v4205
    %4294 = vmatprep.subr.bf16.mxu0 0
    %4295 = vmatpush1.bf16.msra.mxu0 0
    %4296 = vmatprep.subr.bf16.mxu0 0
    %4297 = vmatpush1.bf16.msra.mxu0 0
    %4298 = vmatprep.subr.bf16.mxu0 0
    %4299 = vmatpush1.bf16.msra.mxu0 0
    %4300 = vmatprep.subr.bf16.mxu0 0
    %4301 = vmatpush1.bf16.msra.mxu0 0
    %4302 = vmatprep.subr.bf16.mxu0 0
    %4303 = vmatpush1.bf16.msra.mxu0 0
    %4304 = vmatprep.subr.bf16.mxu0 0
    %4305 = vmatpush1.bf16.msra.mxu0 0
    %4306 = vmatprep.subr.bf16.mxu0 0
    %4307 = vmatpush1.bf16.msra.mxu0 0
    %4308 = vmatprep.subr.bf16.mxu0 0
    %4309 = vmatpush1.bf16.msra.mxu0 0
    %4310 = vmatprep.subr.bf16.mxu0 0
    %4311 = vmatpush1.bf16.msra.mxu0 0
    %4312 = vmatprep.subr.bf16.mxu0 0
    %4313 = vmatpush1.bf16.msra.mxu0 0
    %4314 = vmatprep.subr.bf16.mxu0 0
    %4315 = vmatpush1.bf16.msra.mxu0 0
    %4316 = vmatprep.subr.bf16.mxu0 0
    %4317 = vmatpush1.bf16.msra.mxu0 0
    %4318 = vmatprep.subr.bf16.mxu0 0
    %4319 = vmatpush1.bf16.msra.mxu0 0
    %4320 = vmatprep.subr.bf16.mxu0 0
    %4321 = vmatpush1.bf16.msra.mxu0 0
    %4322 = vmatprep.subr.bf16.mxu0 0
    %4323 = vmatpush1.bf16.msra.mxu0 0
    %4324 = vmatprep.mubr.bf16.mxu0 0
    %4325 = vmatmul.mubr.bf16.gmra.mrb[0].mxu0 %v4189
    %v4326 = vpop.f32.mrb[0].mxu0
    %v4327 = vadd.f32 0.0, %v4326
    %v4328 = vpop.f32.mrb[0].mxu0
    %v4329 = vadd.f32 0.0, %v4328
    %v4330 = vpop.f32.mrb[0].mxu0
    %v4331 = vpop.f32.mrb[0].mxu0
    %4332 = vdwg.mxu0
    %v4339 = vunpack.c.l.b16 %v4150
    %v4340 = vunpack.c.h.b16 %v4150
    %v4341 = vunpack.c.l.b16 %v4151
    %v4342 = vunpack.c.h.b16 %v4151
    %v4343 = vunpack.c.l.b16 %v4152
    %v4344 = vunpack.c.h.b16 %v4152
    %v4345 = vunpack.c.l.b16 %v4153
    %v4346 = vunpack.c.h.b16 %v4153
    %v4347 = vunpack.c.l.b16 %v4154
    %v4348 = vunpack.c.h.b16 %v4154
    %v4349 = vunpack.c.l.b16 %v4155
    %v4350 = vunpack.c.h.b16 %v4155
    %v4351 = vpack.c.b16 %v4345, %v4339
    %v4352 = vpack.c.b16 %v4346, %v4340
    %v4353 = vpack.c.b16 %v4347, %v4341
    %v4354 = vpack.c.b16 %v4348, %v4342
    %v4355 = vpack.c.b16 %v4349, %v4343
    %v4356 = vpack.c.b16 %v4350, %v4344
    %v4364 = vsel %vm460, %v4149, 0
    %4366 = vmatprep.subr.bf16.mxu0 %v4352
    %4367 = vmatpush1.bf16.msra.mxu0 %v4351
    %4368 = vmatprep.subr.bf16.mxu0 0
    %4369 = vmatpush1.bf16.msra.mxu0 0
    %4370 = vmatprep.subr.bf16.mxu0 0
    %4371 = vmatpush1.bf16.msra.mxu0 0
    %4372 = vmatprep.subr.bf16.mxu0 0
    %4373 = vmatpush1.bf16.msra.mxu0 0
    %4374 = vmatprep.subr.bf16.mxu0 0
    %4375 = vmatpush1.bf16.msra.mxu0 0
    %4376 = vmatprep.subr.bf16.mxu0 0
    %4377 = vmatpush1.bf16.msra.mxu0 0
    %4378 = vmatprep.subr.bf16.mxu0 0
    %4379 = vmatpush1.bf16.msra.mxu0 0
    %4380 = vmatprep.subr.bf16.mxu0 0
    %4381 = vmatpush1.bf16.msra.mxu0 0
    %4382 = vmatprep.subr.bf16.mxu0 0
    %4383 = vmatpush1.bf16.msra.mxu0 0
    %4384 = vmatprep.subr.bf16.mxu0 0
    %4385 = vmatpush1.bf16.msra.mxu0 0
    %4386 = vmatprep.subr.bf16.mxu0 0
    %4387 = vmatpush1.bf16.msra.mxu0 0
    %4388 = vmatprep.subr.bf16.mxu0 0
    %4389 = vmatpush1.bf16.msra.mxu0 0
    %4390 = vmatprep.subr.bf16.mxu0 0
    %4391 = vmatpush1.bf16.msra.mxu0 0
    %4392 = vmatprep.subr.bf16.mxu0 0
    %4393 = vmatpush1.bf16.msra.mxu0 0
    %4394 = vmatprep.subr.bf16.mxu0 0
    %4395 = vmatpush1.bf16.msra.mxu0 0
    %4396 = vmatprep.subr.bf16.mxu0 0
    %4397 = vmatpush1.bf16.msra.mxu0 0
    %4398 = vmatprep.mubr.bf16.mxu0 0
    %4399 = vmatmul.mubr.bf16.gmra.mrb[0].mxu0 %v4364
    %v4400 = vpop.f32.mrb[0].mxu0
    %v4401 = vadd.f32 %v4245, %v4400
    %v4402 = vpop.f32.mrb[0].mxu0
    %v4403 = vadd.f32 %v4247, %v4402
    %v4404 = vpop.f32.mrb[0].mxu0
    %v4405 = vpop.f32.mrb[0].mxu0
    %4406 = vdwg.mxu0
    %4407 = vmatprep.subr.bf16.mxu0 %v4354
    %4408 = vmatpush1.bf16.msra.mxu0 %v4353
    %4409 = vmatprep.subr.bf16.mxu0 0
    %4410 = vmatpush1.bf16.msra.mxu0 0
    %4411 = vmatprep.subr.bf16.mxu0 0
    %4412 = vmatpush1.bf16.msra.mxu0 0
    %4413 = vmatprep.subr.bf16.mxu0 0
    %4414 = vmatpush1.bf16.msra.mxu0 0
    %4415 = vmatprep.subr.bf16.mxu0 0
    %4416 = vmatpush1.bf16.msra.mxu0 0
    %4417 = vmatprep.subr.bf16.mxu0 0
    %4418 = vmatpush1.bf16.msra.mxu0 0
    %4419 = vmatprep.subr.bf16.mxu0 0
    %4420 = vmatpush1.bf16.msra.mxu0 0
    %4421 = vmatprep.subr.bf16.mxu0 0
    %4422 = vmatpush1.bf16.msra.mxu0 0
    %4423 = vmatprep.subr.bf16.mxu0 0
    %4424 = vmatpush1.bf16.msra.mxu0 0
    %4425 = vmatprep.subr.bf16.mxu0 0
    %4426 = vmatpush1.bf16.msra.mxu0 0
    %4427 = vmatprep.subr.bf16.mxu0 0
    %4428 = vmatpush1.bf16.msra.mxu0 0
    %4429 = vmatprep.subr.bf16.mxu0 0
    %4430 = vmatpush1.bf16.msra.mxu0 0
    %4431 = vmatprep.subr.bf16.mxu0 0
    %4432 = vmatpush1.bf16.msra.mxu0 0
    %4433 = vmatprep.subr.bf16.mxu0 0
    %4434 = vmatpush1.bf16.msra.mxu0 0
    %4435 = vmatprep.subr.bf16.mxu0 0
    %4436 = vmatpush1.bf16.msra.mxu0 0
    %4437 = vmatprep.subr.bf16.mxu0 0
    %4438 = vmatpush1.bf16.msra.mxu0 0
    %4439 = vmatprep.mubr.bf16.mxu0 0
    %4440 = vmatmul.mubr.bf16.gmra.mrb[0].mxu0 %v4364
    %v4441 = vpop.f32.mrb[0].mxu0
    %v4442 = vadd.f32 %v4286, %v4441
    %v4443 = vpop.f32.mrb[0].mxu0
    %v4444 = vadd.f32 %v4288, %v4443
    %v4445 = vpop.f32.mrb[0].mxu0
    %v4446 = vpop.f32.mrb[0].mxu0
    %4447 = vdwg.mxu0
    %4448 = vmatprep.subr.bf16.mxu0 %v4356
    %4449 = vmatpush1.bf16.msra.mxu0 %v4355
    %4450 = vmatprep.subr.bf16.mxu0 0
    %4451 = vmatpush1.bf16.msra.mxu0 0
    %4452 = vmatprep.subr.bf16.mxu0 0
    %4453 = vmatpush1.bf16.msra.mxu0 0
    %4454 = vmatprep.subr.bf16.mxu0 0
    %4455 = vmatpush1.bf16.msra.mxu0 0
    %4456 = vmatprep.subr.bf16.mxu0 0
    %4457 = vmatpush1.bf16.msra.mxu0 0
    %4458 = vmatprep.subr.bf16.mxu0 0
    %4459 = vmatpush1.bf16.msra.mxu0 0
    %4460 = vmatprep.subr.bf16.mxu0 0
    %4461 = vmatpush1.bf16.msra.mxu0 0
    %4462 = vmatprep.subr.bf16.mxu0 0
    %4463 = vmatpush1.bf16.msra.mxu0 0
    %4464 = vmatprep.subr.bf16.mxu0 0
    %4465 = vmatpush1.bf16.msra.mxu0 0
    %4466 = vmatprep.subr.bf16.mxu0 0
    %4467 = vmatpush1.bf16.msra.mxu0 0
    %4468 = vmatprep.subr.bf16.mxu0 0
    %4469 = vmatpush1.bf16.msra.mxu0 0
    %4470 = vmatprep.subr.bf16.mxu0 0
    %4471 = vmatpush1.bf16.msra.mxu0 0
    %4472 = vmatprep.subr.bf16.mxu0 0
    %4473 = vmatpush1.bf16.msra.mxu0 0
    %4474 = vmatprep.subr.bf16.mxu0 0
    %4475 = vmatpush1.bf16.msra.mxu0 0
    %4476 = vmatprep.subr.bf16.mxu0 0
    %4477 = vmatpush1.bf16.msra.mxu0 0
    %4478 = vmatprep.subr.bf16.mxu0 0
    %4479 = vmatpush1.bf16.msra.mxu0 0
    %4480 = vmatprep.mubr.bf16.mxu0 0
    %4481 = vmatmul.mubr.bf16.gmra.mrb[0].mxu0 %v4364
    %v4482 = vpop.f32.mrb[0].mxu0
    %v4483 = vadd.f32 %v4327, %v4482
    %v4484 = vpop.f32.mrb[0].mxu0
    %v4485 = vadd.f32 %v4329, %v4484
    %v4486 = vpop.f32.mrb[0].mxu0
    %v4487 = vpop.f32.mrb[0].mxu0
    %4488 = vdwg.mxu0
    %s4489 = scalar_lea.vmem [#allocation8], 36
    %v4490 = vld [vmem:[%s4489] sm:$0x3f]
    %v4492 = vlaneseq
    %v4493 = vshrl.u32 %v4492, 7
    %v4494 = vsub.s32 0, %v4493
    %v4495 = vrot.slane %v4490, %v4494
    %v4496 = vlaneseq
    %v4497 = vshrl.u32 %v4496, 7
    %v4498 = vsub.s32 1, %v4497
    %v4499 = vrot.slane %v4490, %v4498
    %v4500 = vlaneseq
    %v4501 = vshrl.u32 %v4500, 7
    %v4502 = vsub.s32 2, %v4501
    %v4503 = vrot.slane %v4490, %v4502
    %v4504 = vlaneseq
    %v4505 = vshrl.u32 %v4504, 7
    %v4506 = vsub.s32 3, %v4505
    %v4507 = vrot.slane %v4490, %v4506
    %v4508 = vlaneseq
    %v4509 = vshrl.u32 %v4508, 7
    %v4510 = vsub.s32 4, %v4509
    %v4511 = vrot.slane %v4490, %v4510
    %v4512 = vlaneseq
    %v4513 = vshrl.u32 %v4512, 7
    %v4514 = vsub.s32 5, %v4513
    %v4515 = vrot.slane %v4490, %v4514
    %v4522 = vadd.f32 %v4401, %v4495
    %v4523 = vadd.f32 %v4403, %v4499
    %v4524 = vadd.f32 %v4442, %v4503
    %v4525 = vadd.f32 %v4444, %v4507
    %v4526 = vadd.f32 %v4483, %v4511
    %v4527 = vadd.f32 %v4485, %v4515
    %v4528 = vmax.f32 %v4522, 0.0
    %v4529 = vmax.f32 %v4523, 0.0
    %v4530 = vmax.f32 %v4524, 0.0
    %v4531 = vmax.f32 %v4525, 0.0
    %v4532 = vmax.f32 %v4526, 0.0
    %v4533 = vmax.f32 %v4527, 0.0
    %s4534 = scalar_lea.vmem [#allocation8], 42
    %v4535 = vld [vmem:[%s4534] sm:$0x3f]
    %s4536 = scalar_lea.vmem [#allocation8], 48
    %v4537 = vld [vmem:[%s4536] sm:$0x3f]
    %v4538 = vsel %vm288, %v4528, 0.0
    %v4539 = vsel %vm288, %v4529, 0.0
    %v4540 = vadd.f32 %v4538, %v4539
    %v4541 = vsel %vm288, %v4530, 0.0
    %v4542 = vadd.f32 %v4540, %v4541
    %v4543 = vsel %vm288, %v4531, 0.0
    %v4544 = vadd.f32 %v4542, %v4543
    %v4545 = vsel %vm288, %v4532, 0.0
    %v4546 = vadd.f32 %v4544, %v4545
    %v4547 = vsel %vm288, %v4533, 0.0
    %v4548 = vadd.f32 %v4546, %v4547
    %4549 = vadd.xlane.f32.xlu0 %v4548
    %v4550 = vpop.xlane.xlu0 %4549
    %v4551 = vmul.f32 %v4550, %v648
    %v4552 = vsub.f32 %v4528, %v4551
    %v4553 = vsub.f32 %v4529, %v4551
    %v4554 = vsub.f32 %v4530, %v4551
    %v4555 = vsub.f32 %v4531, %v4551
    %v4556 = vsub.f32 %v4532, %v4551
    %v4557 = vsub.f32 %v4533, %v4551
    %v4558 = vsel %vm657, %v4552, 0.0
    %v4559 = vsel %vm658, %v4553, 0.0
    %v4560 = vsel %vm659, %v4554, 0.0
    %v4561 = vsel %vm660, %v4555, 0.0
    %v4562 = vsel %vm661, %v4556, 0.0
    %v4563 = vsel %vm662, %v4557, 0.0
    %v4564 = vmul.f32 %v4558, %v4558
    %v4565 = vmul.f32 %v4559, %v4559
    %v4566 = vmul.f32 %v4560, %v4560
    %v4567 = vmul.f32 %v4561, %v4561
    %v4568 = vmul.f32 %v4562, %v4562
    %v4569 = vmul.f32 %v4563, %v4563
    %v4570 = vsel %vm288, %v4564, 0.0
    %v4571 = vsel %vm288, %v4565, 0.0
    %v4572 = vadd.f32 %v4570, %v4571
    %v4573 = vsel %vm288, %v4566, 0.0
    %v4574 = vadd.f32 %v4572, %v4573
    %v4575 = vsel %vm288, %v4567, 0.0
    %v4576 = vadd.f32 %v4574, %v4575
    %v4577 = vsel %vm288, %v4568, 0.0
    %v4578 = vadd.f32 %v4576, %v4577
    %v4579 = vsel %vm288, %v4569, 0.0
    %v4580 = vadd.f32 %v4578, %v4579
    %4581 = vadd.xlane.f32.xlu0 %v4580
    %v4582 = vpop.xlane.xlu0 %4581
    %v4583 = vmul.f32 %v4582, %v648
    %v4584 = vadd.f32 %v4583, 1e-05
    %v4585 = vrsqrt.pop %v4584
    %v4586 = vmul.f32 %v4558, %v4585
    %v4587 = vmul.f32 %v4559, %v4585
    %v4588 = vmul.f32 %v4560, %v4585
    %v4589 = vmul.f32 %v4561, %v4585
    %v4590 = vmul.f32 %v4562, %v4585
    %v4591 = vmul.f32 %v4563, %v4585
    %v4593 = vlaneseq
    %v4594 = vshrl.u32 %v4593, 7
    %v4595 = vsub.s32 0, %v4594
    %v4596 = vrot.slane %v4535, %v4595
    %v4597 = vlaneseq
    %v4598 = vshrl.u32 %v4597, 7
    %v4599 = vsub.s32 1, %v4598
    %v4600 = vrot.slane %v4535, %v4599
    %v4601 = vlaneseq
    %v4602 = vshrl.u32 %v4601, 7
    %v4603 = vsub.s32 2, %v4602
    %v4604 = vrot.slane %v4535, %v4603
    %v4605 = vlaneseq
    %v4606 = vshrl.u32 %v4605, 7
    %v4607 = vsub.s32 3, %v4606
    %v4608 = vrot.slane %v4535, %v4607
    %v4609 = vlaneseq
    %v4610 = vshrl.u32 %v4609, 7
    %v4611 = vsub.s32 4, %v4610
    %v4612 = vrot.slane %v4535, %v4611
    %v4613 = vlaneseq
    %v4614 = vshrl.u32 %v4613, 7
    %v4615 = vsub.s32 5, %v4614
    %v4616 = vrot.slane %v4535, %v4615
    %v4623 = vmul.f32 %v4586, %v4596
    %v4624 = vmul.f32 %v4587, %v4600
    %v4625 = vmul.f32 %v4588, %v4604
    %v4626 = vmul.f32 %v4589, %v4608
    %v4627 = vmul.f32 %v4590, %v4612
    %v4628 = vmul.f32 %v4591, %v4616
    %v4630 = vlaneseq
    %v4631 = vshrl.u32 %v4630, 7
    %v4632 = vsub.s32 0, %v4631
    %v4633 = vrot.slane %v4537, %v4632
    %v4634 = vlaneseq
    %v4635 = vshrl.u32 %v4634, 7
    %v4636 = vsub.s32 1, %v4635
    %v4637 = vrot.slane %v4537, %v4636
    %v4638 = vlaneseq
    %v4639 = vshrl.u32 %v4638, 7
    %v4640 = vsub.s32 2, %v4639
    %v4641 = vrot.slane %v4537, %v4640
    %v4642 = vlaneseq
    %v4643 = vshrl.u32 %v4642, 7
    %v4644 = vsub.s32 3, %v4643
    %v4645 = vrot.slane %v4537, %v4644
    %v4646 = vlaneseq
    %v4647 = vshrl.u32 %v4646, 7
    %v4648 = vsub.s32 4, %v4647
    %v4649 = vrot.slane %v4537, %v4648
    %v4650 = vlaneseq
    %v4651 = vshrl.u32 %v4650, 7
    %v4652 = vsub.s32 5, %v4651
    %v4653 = vrot.slane %v4537, %v4652
    %v4660 = vadd.f32 %v4623, %v4633
    %v4661 = vadd.f32 %v4624, %v4637
    %v4662 = vadd.f32 %v4625, %v4641
    %v4663 = vadd.f32 %v4626, %v4645
    %v4664 = vadd.f32 %v4627, %v4649
    %v4665 = vadd.f32 %v4628, %v4653
    %v4666 = vpack.c.bf16 %v4660, %v4660
    %v4667 = vpack.c.bf16 %v4661, %v4661
    %v4668 = vpack.c.bf16 %v4662, %v4662
    %v4669 = vpack.c.bf16 %v4663, %v4663
    %v4670 = vpack.c.bf16 %v4664, %v4664
    %v4671 = vpack.c.bf16 %v4665, %v4665
    %v4672 = vld [vmem:[#allocation19] sm:$0xff]
    %v4673 = vld [vmem:[#allocation19 + $0x8] sm:$0xff]
    %v4674 = vld [vmem:[#allocation19 + $0x10] sm:$0xff]
    %v4675 = vld [vmem:[#allocation19 + $0x18] sm:$0xff]
    %v4676 = vld [vmem:[#allocation19 + $0x20] sm:$0xff]
    %v4677 = vld [vmem:[#allocation19 + $0x28] sm:$0xff]
    %v4678 = vld [vmem:[#allocation19 + $0x30] sm:$0xff]
    %v4679 = vld [vmem:[#allocation19 + $0x38] sm:$0xff]
    %v4680 = vld [vmem:[#allocation19 + $0x40] sm:$0xff]
    %v4681 = vld [vmem:[#allocation19 + $0x48] sm:$0xff]
    %v4682 = vld [vmem:[#allocation19 + $0x50] sm:$0xff]
    %v4683 = vld [vmem:[#allocation19 + $0x58] sm:$0xff]
    %v4684 = vld [vmem:[#allocation19 + $0x60] sm:$0xff]
    %v4685 = vld [vmem:[#allocation19 + $0x68] sm:$0xff]
    %v4686 = vld [vmem:[#allocation19 + $0x70] sm:$0xff]
    %v4687 = vld [vmem:[#allocation19 + $0x78] sm:$0xff]
    %v4688 = vld [vmem:[#allocation19 + $0x80] sm:$0xff]
    %v4689 = vld [vmem:[#allocation19 + $0x88] sm:$0xff]
    %v4690 = vld [vmem:[#allocation19 + $0x90] sm:$0xff]
    %v4691 = vld [vmem:[#allocation19 + $0x98] sm:$0xff]
    %v4692 = vld [vmem:[#allocation19 + $0xa0] sm:$0xff]
    %v4693 = vld [vmem:[#allocation19 + $0xa8] sm:$0xff]
    %v4694 = vld [vmem:[#allocation19 + $0xb0] sm:$0xff]
    %v4695 = vld [vmem:[#allocation19 + $0xb8] sm:$0xff]
    %v4696 = vld [vmem:[#allocation19 + $0xc0] sm:$0xff]
    %v4697 = vld [vmem:[#allocation19 + $0xc8] sm:$0xff]
    %v4698 = vld [vmem:[#allocation19 + $0xd0] sm:$0xff]
    %v4699 = vld [vmem:[#allocation19 + $0xd8] sm:$0xff]
    %v4700 = vld [vmem:[#allocation19 + $0xe0] sm:$0xff]
    %v4701 = vld [vmem:[#allocation19 + $0xe8] sm:$0xff]
    %v4702 = vld [vmem:[#allocation19 + $0xf0] sm:$0xff]
    %v4703 = vld [vmem:[#allocation19 + $0xf8] sm:$0xff]
    %v4704 = vld [vmem:[#allocation19 + $0x100] sm:$0xff]
    %v4705 = vld [vmem:[#allocation19 + $0x108] sm:$0xff]
    %v4706 = vld [vmem:[#allocation19 + $0x110] sm:$0xff]
    %v4707 = vld [vmem:[#allocation19 + $0x118] sm:$0xff]
    %v4708 = vld [vmem:[#allocation19 + $0x120] sm:$0xff]
    %v4709 = vld [vmem:[#allocation19 + $0x128] sm:$0xff]
    %v4710 = vld [vmem:[#allocation19 + $0x130] sm:$0xff]
    %v4711 = vld [vmem:[#allocation19 + $0x138] sm:$0xff]
    %v4712 = vld [vmem:[#allocation19 + $0x140] sm:$0xff]
    %v4713 = vld [vmem:[#allocation19 + $0x148] sm:$0xff]
    %v4714 = vld [vmem:[#allocation19 + $0x150] sm:$0xff]
    %v4715 = vld [vmem:[#allocation19 + $0x158] sm:$0xff]
    %v4716 = vld [vmem:[#allocation19 + $0x160] sm:$0xff]
    %v4717 = vld [vmem:[#allocation19 + $0x168] sm:$0xff]
    %v4718 = vld [vmem:[#allocation19 + $0x170] sm:$0xff]
    %v4719 = vld [vmem:[#allocation19 + $0x178] sm:$0xff]
    %v4720 = vld [vmem:[#allocation19 + $0x180] sm:$0xff]
    %v4721 = vld [vmem:[#allocation19 + $0x188] sm:$0xff]
    %v4722 = vld [vmem:[#allocation19 + $0x190] sm:$0xff]
    %v4723 = vld [vmem:[#allocation19 + $0x198] sm:$0xff]
    %v4724 = vld [vmem:[#allocation19 + $0x1a0] sm:$0xff]
    %v4725 = vld [vmem:[#allocation19 + $0x1a8] sm:$0xff]
    %v4726 = vld [vmem:[#allocation19 + $0x1b0] sm:$0xff]
    %v4727 = vld [vmem:[#allocation19 + $0x1b8] sm:$0xff]
    %v4728 = vld [vmem:[#allocation19 + $0x1c0] sm:$0xff]
    %v4729 = vld [vmem:[#allocation19 + $0x1c8] sm:$0xff]
    %v4730 = vld [vmem:[#allocation19 + $0x1d0] sm:$0xff]
    %v4731 = vld [vmem:[#allocation19 + $0x1d8] sm:$0xff]
    %v4732 = vld [vmem:[#allocation19 + $0x1e0] sm:$0xff]
    %v4733 = vld [vmem:[#allocation19 + $0x1e8] sm:$0xff]
    %v4734 = vld [vmem:[#allocation19 + $0x1f0] sm:$0xff]
    %v4735 = vld [vmem:[#allocation19 + $0x1f8] sm:$0xff]
    %v4736 = vld [vmem:[#allocation19 + $0x200] sm:$0xff]
    %v4737 = vld [vmem:[#allocation19 + $0x208] sm:$0xff]
    %v4738 = vld [vmem:[#allocation19 + $0x210] sm:$0xff]
    %v4739 = vld [vmem:[#allocation19 + $0x218] sm:$0xff]
    %v4740 = vld [vmem:[#allocation19 + $0x220] sm:$0xff]
    %v4741 = vld [vmem:[#allocation19 + $0x228] sm:$0xff]
    %v4742 = vld [vmem:[#allocation19 + $0x230] sm:$0xff]
    %v4743 = vld [vmem:[#allocation19 + $0x238] sm:$0xff]
    %v4744 = vld [vmem:[#allocation19 + $0x240] sm:$0xff]
    %v4745 = vld [vmem:[#allocation19 + $0x248] sm:$0xff]
    %v4746 = vld [vmem:[#allocation19 + $0x250] sm:$0xff]
    %v4747 = vld [vmem:[#allocation19 + $0x258] sm:$0xff]
    %v4748 = vld [vmem:[#allocation19 + $0x260] sm:$0xff]
    %v4749 = vld [vmem:[#allocation19 + $0x268] sm:$0xff]
    %v4750 = vld [vmem:[#allocation19 + $0x270] sm:$0xff]
    %v4751 = vld [vmem:[#allocation19 + $0x278] sm:$0xff]
    %v4752 = vld [vmem:[#allocation19 + $0x280] sm:$0xff]
    %v4753 = vld [vmem:[#allocation19 + $0x288] sm:$0xff]
    %v4754 = vld [vmem:[#allocation19 + $0x290] sm:$0xff]
    %v4755 = vld [vmem:[#allocation19 + $0x298] sm:$0xff]
    %v4756 = vld [vmem:[#allocation19 + $0x2a0] sm:$0xff]
    %v4757 = vld [vmem:[#allocation19 + $0x2a8] sm:$0xff]
    %v4758 = vld [vmem:[#allocation19 + $0x2b0] sm:$0xff]
    %v4759 = vld [vmem:[#allocation19 + $0x2b8] sm:$0xff]
    %v4760 = vld [vmem:[#allocation19 + $0x2c0] sm:$0xff]
    %v4761 = vld [vmem:[#allocation19 + $0x2c8] sm:$0xff]
    %v4762 = vld [vmem:[#allocation19 + $0x2d0] sm:$0xff]
    %v4763 = vld [vmem:[#allocation19 + $0x2d8] sm:$0xff]
    %v4764 = vld [vmem:[#allocation19 + $0x2e0] sm:$0xff]
    %v4765 = vld [vmem:[#allocation19 + $0x2e8] sm:$0xff]
    %v4766 = vld [vmem:[#allocation19 + $0x2f0] sm:$0xff]
    %v4767 = vld [vmem:[#allocation19 + $0x2f8] sm:$0xff]
    %v4768 = vld [vmem:[#allocation19 + $0x300] sm:$0xff]
    %v4769 = vld [vmem:[#allocation19 + $0x308] sm:$0xff]
    %v4770 = vld [vmem:[#allocation19 + $0x310] sm:$0xff]
    %v4771 = vld [vmem:[#allocation19 + $0x318] sm:$0xff]
    %v4772 = vld [vmem:[#allocation19 + $0x320] sm:$0xff]
    %v4773 = vld [vmem:[#allocation19 + $0x328] sm:$0xff]
    %v4774 = vld [vmem:[#allocation19 + $0x330] sm:$0xff]
    %v4775 = vld [vmem:[#allocation19 + $0x338] sm:$0xff]
    %v4776 = vld [vmem:[#allocation19 + $0x340] sm:$0xff]
    %v4777 = vld [vmem:[#allocation19 + $0x348] sm:$0xff]
    %v4778 = vld [vmem:[#allocation19 + $0x350] sm:$0xff]
    %v4779 = vld [vmem:[#allocation19 + $0x358] sm:$0xff]
    %v4780 = vld [vmem:[#allocation19 + $0x360] sm:$0xff]
    %v4781 = vld [vmem:[#allocation19 + $0x368] sm:$0xff]
    %v4782 = vld [vmem:[#allocation19 + $0x370] sm:$0xff]
    %v4783 = vld [vmem:[#allocation19 + $0x378] sm:$0xff]
    %v4784 = vld [vmem:[#allocation19 + $0x380] sm:$0xff]
    %v4785 = vld [vmem:[#allocation19 + $0x388] sm:$0xff]
    %v4786 = vld [vmem:[#allocation19 + $0x390] sm:$0xff]
    %v4787 = vld [vmem:[#allocation19 + $0x398] sm:$0xff]
    %v4788 = vld [vmem:[#allocation19 + $0x3a0] sm:$0xff]
    %v4789 = vld [vmem:[#allocation19 + $0x3a8] sm:$0xff]
    %v4790 = vld [vmem:[#allocation19 + $0x3b0] sm:$0xff]
    %v4791 = vld [vmem:[#allocation19 + $0x3b8] sm:$0xff]
    %v4792 = vld [vmem:[#allocation19 + $0x3c0] sm:$0xff]
    %v4793 = vld [vmem:[#allocation19 + $0x3c8] sm:$0xff]
    %v4794 = vld [vmem:[#allocation19 + $0x3d0] sm:$0xff]
    %v4795 = vld [vmem:[#allocation19 + $0x3d8] sm:$0xff]
    %v4796 = vld [vmem:[#allocation19 + $0x3e0] sm:$0xff]
    %v4797 = vld [vmem:[#allocation19 + $0x3e8] sm:$0xff]
    %v4798 = vld [vmem:[#allocation19 + $0x3f0] sm:$0xff]
    %v4799 = vld [vmem:[#allocation19 + $0x3f8] sm:$0xff]
    %v4800 = vld [vmem:[#allocation19 + $0x400] sm:$0xff]
    %v4801 = vld [vmem:[#allocation19 + $0x408] sm:$0xff]
    %v4802 = vld [vmem:[#allocation19 + $0x410] sm:$0xff]
    %v4803 = vld [vmem:[#allocation19 + $0x418] sm:$0xff]
    %v4804 = vld [vmem:[#allocation19 + $0x420] sm:$0xff]
    %v4805 = vld [vmem:[#allocation19 + $0x428] sm:$0xff]
    %v4806 = vld [vmem:[#allocation19 + $0x430] sm:$0xff]
    %v4807 = vld [vmem:[#allocation19 + $0x438] sm:$0xff]
    %v4808 = vld [vmem:[#allocation19 + $0x440] sm:$0xff]
    %v4809 = vld [vmem:[#allocation19 + $0x448] sm:$0xff]
    %v4810 = vld [vmem:[#allocation19 + $0x450] sm:$0xff]
    %v4811 = vld [vmem:[#allocation19 + $0x458] sm:$0xff]
    %v4812 = vld [vmem:[#allocation19 + $0x460] sm:$0xff]
    %v4813 = vld [vmem:[#allocation19 + $0x468] sm:$0xff]
    %v4814 = vld [vmem:[#allocation19 + $0x470] sm:$0xff]
    %v4815 = vld [vmem:[#allocation19 + $0x478] sm:$0xff]
    %v4816 = vld [vmem:[#allocation19 + $0x480] sm:$0xff]
    %v4817 = vld [vmem:[#allocation19 + $0x488] sm:$0xff]
    %v4818 = vld [vmem:[#allocation19 + $0x490] sm:$0xff]
    %v4819 = vld [vmem:[#allocation19 + $0x498] sm:$0xff]
    %v4820 = vld [vmem:[#allocation19 + $0x4a0] sm:$0xff]
    %v4821 = vld [vmem:[#allocation19 + $0x4a8] sm:$0xff]
    %v4822 = vld [vmem:[#allocation19 + $0x4b0] sm:$0xff]
    %v4823 = vld [vmem:[#allocation19 + $0x4b8] sm:$0xff]
    %v4824 = vld [vmem:[#allocation19 + $0x4c0] sm:$0xff]
    %v4825 = vld [vmem:[#allocation19 + $0x4c8] sm:$0xff]
    %v4826 = vld [vmem:[#allocation19 + $0x4d0] sm:$0xff]
    %v4827 = vld [vmem:[#allocation19 + $0x4d8] sm:$0xff]
    %v4828 = vld [vmem:[#allocation19 + $0x4e0] sm:$0xff]
    %v4829 = vld [vmem:[#allocation19 + $0x4e8] sm:$0xff]
    %v4830 = vld [vmem:[#allocation19 + $0x4f0] sm:$0xff]
    %v4831 = vld [vmem:[#allocation19 + $0x4f8] sm:$0xff]
    %v4832 = vld [vmem:[#allocation19 + $0x500] sm:$0xff]
    %v4833 = vld [vmem:[#allocation19 + $0x508] sm:$0xff]
    %v4834 = vld [vmem:[#allocation19 + $0x510] sm:$0xff]
    %v4835 = vld [vmem:[#allocation19 + $0x518] sm:$0xff]
    %v4836 = vld [vmem:[#allocation19 + $0x520] sm:$0xff]
    %v4837 = vld [vmem:[#allocation19 + $0x528] sm:$0xff]
    %v4838 = vld [vmem:[#allocation19 + $0x530] sm:$0xff]
    %v4839 = vld [vmem:[#allocation19 + $0x538] sm:$0xff]
    %v4840 = vld [vmem:[#allocation19 + $0x540] sm:$0xff]
    %v4841 = vld [vmem:[#allocation19 + $0x548] sm:$0xff]
    %v4842 = vld [vmem:[#allocation19 + $0x550] sm:$0xff]
    %v4843 = vld [vmem:[#allocation19 + $0x558] sm:$0xff]
    %v4844 = vld [vmem:[#allocation19 + $0x560] sm:$0xff]
    %v4845 = vld [vmem:[#allocation19 + $0x568] sm:$0xff]
    %v4846 = vld [vmem:[#allocation19 + $0x570] sm:$0xff]
    %v4847 = vld [vmem:[#allocation19 + $0x578] sm:$0xff]
    %v4848 = vld [vmem:[#allocation19 + $0x580] sm:$0xff]
    %v4849 = vld [vmem:[#allocation19 + $0x588] sm:$0xff]
    %v4850 = vld [vmem:[#allocation19 + $0x590] sm:$0xff]
    %v4851 = vld [vmem:[#allocation19 + $0x598] sm:$0xff]
    %v4852 = vld [vmem:[#allocation19 + $0x5a0] sm:$0xff]
    %v4853 = vld [vmem:[#allocation19 + $0x5a8] sm:$0xff]
    %v4854 = vld [vmem:[#allocation19 + $0x5b0] sm:$0xff]
    %v4855 = vld [vmem:[#allocation19 + $0x5b8] sm:$0xff]
    %v4856 = vld [vmem:[#allocation19 + $0x5c0] sm:$0xff]
    %v4857 = vld [vmem:[#allocation19 + $0x5c8] sm:$0xff]
    %v4858 = vld [vmem:[#allocation19 + $0x5d0] sm:$0xff]
    %v4859 = vld [vmem:[#allocation19 + $0x5d8] sm:$0xff]
    %v4860 = vld [vmem:[#allocation19 + $0x5e0] sm:$0xff]
    %v4861 = vld [vmem:[#allocation19 + $0x5e8] sm:$0xff]
    %v4862 = vld [vmem:[#allocation19 + $0x5f0] sm:$0xff]
    %v4863 = vld [vmem:[#allocation19 + $0x5f8] sm:$0xff]
    %v4864 = vld [vmem:[#allocation19 + $0x600] sm:$0xff]
    %v4865 = vld [vmem:[#allocation19 + $0x608] sm:$0xff]
    %v4866 = vld [vmem:[#allocation19 + $0x610] sm:$0xff]
    %v4867 = vld [vmem:[#allocation19 + $0x618] sm:$0xff]
    %v4868 = vld [vmem:[#allocation19 + $0x620] sm:$0xff]
    %v4869 = vld [vmem:[#allocation19 + $0x628] sm:$0xff]
    %v4870 = vld [vmem:[#allocation19 + $0x630] sm:$0xff]
    %v4871 = vld [vmem:[#allocation19 + $0x638] sm:$0xff]
    %v4872 = vld [vmem:[#allocation19 + $0x640] sm:$0xff]
    %v4873 = vld [vmem:[#allocation19 + $0x648] sm:$0xff]
    %v4874 = vld [vmem:[#allocation19 + $0x650] sm:$0xff]
    %v4875 = vld [vmem:[#allocation19 + $0x658] sm:$0xff]
    %v4876 = vld [vmem:[#allocation19 + $0x660] sm:$0xff]
    %v4877 = vld [vmem:[#allocation19 + $0x668] sm:$0xff]
    %v4878 = vld [vmem:[#allocation19 + $0x670] sm:$0xff]
    %v4879 = vld [vmem:[#allocation19 + $0x678] sm:$0xff]
    %v4880 = vld [vmem:[#allocation19 + $0x680] sm:$0xff]
    %v4881 = vld [vmem:[#allocation19 + $0x688] sm:$0xff]
    %v4882 = vld [vmem:[#allocation19 + $0x690] sm:$0xff]
    %v4883 = vld [vmem:[#allocation19 + $0x698] sm:$0xff]
    %v4884 = vld [vmem:[#allocation19 + $0x6a0] sm:$0xff]
    %v4885 = vld [vmem:[#allocation19 + $0x6a8] sm:$0xff]
    %v4886 = vld [vmem:[#allocation19 + $0x6b0] sm:$0xff]
    %v4887 = vld [vmem:[#allocation19 + $0x6b8] sm:$0xff]
    %v4888 = vld [vmem:[#allocation19 + $0x6c0] sm:$0xff]
    %v4889 = vld [vmem:[#allocation19 + $0x6c8] sm:$0xff]
    %v4890 = vld [vmem:[#allocation19 + $0x6d0] sm:$0xff]
    %v4891 = vld [vmem:[#allocation19 + $0x6d8] sm:$0xff]
    %v4892 = vld [vmem:[#allocation19 + $0x6e0] sm:$0xff]
    %v4893 = vld [vmem:[#allocation19 + $0x6e8] sm:$0xff]
    %v4894 = vld [vmem:[#allocation19 + $0x6f0] sm:$0xff]
    %v4895 = vld [vmem:[#allocation19 + $0x6f8] sm:$0xff]
    %v4896 = vld [vmem:[#allocation19 + $0x700] sm:$0xff]
    %v4897 = vld [vmem:[#allocation19 + $0x708] sm:$0xff]
    %v4898 = vld [vmem:[#allocation19 + $0x710] sm:$0xff]
    %v4899 = vld [vmem:[#allocation19 + $0x718] sm:$0xff]
    %v4900 = vld [vmem:[#allocation19 + $0x720] sm:$0xff]
    %v4901 = vld [vmem:[#allocation19 + $0x728] sm:$0xff]
    %v4902 = vld [vmem:[#allocation19 + $0x730] sm:$0xff]
    %v4903 = vld [vmem:[#allocation19 + $0x738] sm:$0xff]
    %v4904 = vld [vmem:[#allocation19 + $0x740] sm:$0xff]
    %v4905 = vld [vmem:[#allocation19 + $0x748] sm:$0xff]
    %v4906 = vld [vmem:[#allocation19 + $0x750] sm:$0xff]
    %v4907 = vld [vmem:[#allocation19 + $0x758] sm:$0xff]
    %v4908 = vld [vmem:[#allocation19 + $0x760] sm:$0xff]
    %v4909 = vld [vmem:[#allocation19 + $0x768] sm:$0xff]
    %v4910 = vld [vmem:[#allocation19 + $0x770] sm:$0xff]
    %v4911 = vld [vmem:[#allocation19 + $0x778] sm:$0xff]
    %v4912 = vld [vmem:[#allocation19 + $0x780] sm:$0xff]
    %v4913 = vld [vmem:[#allocation19 + $0x788] sm:$0xff]
    %v4914 = vld [vmem:[#allocation19 + $0x790] sm:$0xff]
    %v4915 = vld [vmem:[#allocation19 + $0x798] sm:$0xff]
    %v4916 = vld [vmem:[#allocation19 + $0x7a0] sm:$0xff]
    %v4917 = vld [vmem:[#allocation19 + $0x7a8] sm:$0xff]
    %v4918 = vld [vmem:[#allocation19 + $0x7b0] sm:$0xff]
    %v4919 = vld [vmem:[#allocation19 + $0x7b8] sm:$0xff]
    %v4920 = vld [vmem:[#allocation19 + $0x7c0] sm:$0xff]
    %v4921 = vld [vmem:[#allocation19 + $0x7c8] sm:$0xff]
    %v4922 = vld [vmem:[#allocation19 + $0x7d0] sm:$0xff]
    %v4923 = vld [vmem:[#allocation19 + $0x7d8] sm:$0xff]
    %v4924 = vld [vmem:[#allocation19 + $0x7e0] sm:$0xff]
    %v4925 = vld [vmem:[#allocation19 + $0x7e8] sm:$0xff]
    %v4926 = vld [vmem:[#allocation19 + $0x7f0] sm:$0xff]
    %v4927 = vld [vmem:[#allocation19 + $0x7f8] sm:$0xff]
    %v4928 = vld [vmem:[#allocation19 + $0x800] sm:$0xff]
    %v4929 = vld [vmem:[#allocation19 + $0x808] sm:$0xff]
    %v4930 = vld [vmem:[#allocation19 + $0x810] sm:$0xff]
    %v4931 = vld [vmem:[#allocation19 + $0x818] sm:$0xff]
    %v4932 = vld [vmem:[#allocation19 + $0x820] sm:$0xff]
    %v4933 = vld [vmem:[#allocation19 + $0x828] sm:$0xff]
    %v4934 = vld [vmem:[#allocation19 + $0x830] sm:$0xff]
    %v4935 = vld [vmem:[#allocation19 + $0x838] sm:$0xff]
    %v4936 = vld [vmem:[#allocation19 + $0x840] sm:$0xff]
    %v4937 = vld [vmem:[#allocation19 + $0x848] sm:$0xff]
    %v4938 = vld [vmem:[#allocation19 + $0x850] sm:$0xff]
    %v4939 = vld [vmem:[#allocation19 + $0x858] sm:$0xff]
    %v4940 = vld [vmem:[#allocation19 + $0x860] sm:$0xff]
    %v4941 = vld [vmem:[#allocation19 + $0x868] sm:$0xff]
    %v4942 = vld [vmem:[#allocation19 + $0x870] sm:$0xff]
    %v4943 = vld [vmem:[#allocation19 + $0x878] sm:$0xff]
    %v4944 = vld [vmem:[#allocation19 + $0x880] sm:$0xff]
    %v4945 = vld [vmem:[#allocation19 + $0x888] sm:$0xff]
    %v4946 = vld [vmem:[#allocation19 + $0x890] sm:$0xff]
    %v4947 = vld [vmem:[#allocation19 + $0x898] sm:$0xff]
    %v4948 = vld [vmem:[#allocation19 + $0x8a0] sm:$0xff]
    %v4949 = vld [vmem:[#allocation19 + $0x8a8] sm:$0xff]
    %v4950 = vld [vmem:[#allocation19 + $0x8b0] sm:$0xff]
    %v4951 = vld [vmem:[#allocation19 + $0x8b8] sm:$0xff]
    %v4952 = vld [vmem:[#allocation19 + $0x8c0] sm:$0xff]
    %v4953 = vld [vmem:[#allocation19 + $0x8c8] sm:$0xff]
    %v4954 = vld [vmem:[#allocation19 + $0x8d0] sm:$0xff]
    %v4955 = vld [vmem:[#allocation19 + $0x8d8] sm:$0xff]
    %v4956 = vld [vmem:[#allocation19 + $0x8e0] sm:$0xff]
    %v4957 = vld [vmem:[#allocation19 + $0x8e8] sm:$0xff]
    %v4958 = vld [vmem:[#allocation19 + $0x8f0] sm:$0xff]
    %v4959 = vld [vmem:[#allocation19 + $0x8f8] sm:$0xff]
    %s4960 = scalar_lea.vmem [#allocation8], 54
    %v4961 = vld [vmem:[%s4960] sm:$0x3f]
    %v4963 = vlaneseq
    %v4964 = vshrl.u32 %v4963, 7
    %v4965 = vsub.s32 0, %v4964
    %v4966 = vrot.slane %v4961, %v4965
    %v4967 = vlaneseq
    %v4968 = vshrl.u32 %v4967, 7
    %v4969 = vsub.s32 1, %v4968
    %v4970 = vrot.slane %v4961, %v4969
    %v4971 = vlaneseq
    %v4972 = vshrl.u32 %v4971, 7
    %v4973 = vsub.s32 2, %v4972
    %v4974 = vrot.slane %v4961, %v4973
    %v4975 = vlaneseq
    %v4976 = vshrl.u32 %v4975, 7
    %v4977 = vsub.s32 3, %v4976
    %v4978 = vrot.slane %v4961, %v4977
    %v4979 = vlaneseq
    %v4980 = vshrl.u32 %v4979, 7
    %v4981 = vsub.s32 4, %v4980
    %v4982 = vrot.slane %v4961, %v4981
    %v4983 = vlaneseq
    %v4984 = vshrl.u32 %v4983, 7
    %v4985 = vsub.s32 5, %v4984
    %v4986 = vrot.slane %v4961, %v4985
    %v5281 = vunpack.c.l.b16 %v4672
    %v5282 = vunpack.c.h.b16 %v4672
    %v5283 = vunpack.c.l.b16 %v4673
    %v5284 = vunpack.c.h.b16 %v4673
    %v5285 = vunpack.c.l.b16 %v4674
    %v5286 = vunpack.c.h.b16 %v4674
    %v5287 = vunpack.c.l.b16 %v4675
    %v5288 = vunpack.c.h.b16 %v4675
    %v5289 = vunpack.c.l.b16 %v4676
    %v5290 = vunpack.c.h.b16 %v4676
    %v5291 = vunpack.c.l.b16 %v4677
    %v5292 = vunpack.c.h.b16 %v4677
    %v5293 = vunpack.c.l.b16 %v4678
    %v5294 = vunpack.c.h.b16 %v4678
    %v5295 = vunpack.c.l.b16 %v4679
    %v5296 = vunpack.c.h.b16 %v4679
    %v5297 = vunpack.c.l.b16 %v4680
    %v5298 = vunpack.c.h.b16 %v4680
    %v5299 = vunpack.c.l.b16 %v4681
    %v5300 = vunpack.c.h.b16 %v4681
    %v5301 = vunpack.c.l.b16 %v4682
    %v5302 = vunpack.c.h.b16 %v4682
    %v5303 = vunpack.c.l.b16 %v4683
    %v5304 = vunpack.c.h.b16 %v4683
    %v5305 = vunpack.c.l.b16 %v4684
    %v5306 = vunpack.c.h.b16 %v4684
    %v5307 = vunpack.c.l.b16 %v4685
    %v5308 = vunpack.c.h.b16 %v4685
    %v5309 = vunpack.c.l.b16 %v4686
    %v5310 = vunpack.c.h.b16 %v4686
    %v5311 = vunpack.c.l.b16 %v4687
    %v5312 = vunpack.c.h.b16 %v4687
    %v5313 = vunpack.c.l.b16 %v4688
    %v5314 = vunpack.c.h.b16 %v4688
    %v5315 = vunpack.c.l.b16 %v4689
    %v5316 = vunpack.c.h.b16 %v4689
    %v5317 = vunpack.c.l.b16 %v4690
    %v5318 = vunpack.c.h.b16 %v4690
    %v5319 = vunpack.c.l.b16 %v4691
    %v5320 = vunpack.c.h.b16 %v4691
    %v5321 = vunpack.c.l.b16 %v4692
    %v5322 = vunpack.c.h.b16 %v4692
    %v5323 = vunpack.c.l.b16 %v4693
    %v5324 = vunpack.c.h.b16 %v4693
    %v5325 = vunpack.c.l.b16 %v4694
    %v5326 = vunpack.c.h.b16 %v4694
    %v5327 = vunpack.c.l.b16 %v4695
    %v5328 = vunpack.c.h.b16 %v4695
    %v5329 = vunpack.c.l.b16 %v4696
    %v5330 = vunpack.c.h.b16 %v4696
    %v5331 = vunpack.c.l.b16 %v4697
    %v5332 = vunpack.c.h.b16 %v4697
    %v5333 = vunpack.c.l.b16 %v4698
    %v5334 = vunpack.c.h.b16 %v4698
    %v5335 = vunpack.c.l.b16 %v4699
    %v5336 = vunpack.c.h.b16 %v4699
    %v5337 = vunpack.c.l.b16 %v4700
    %v5338 = vunpack.c.h.b16 %v4700
    %v5339 = vunpack.c.l.b16 %v4701
    %v5340 = vunpack.c.h.b16 %v4701
    %v5341 = vunpack.c.l.b16 %v4702
    %v5342 = vunpack.c.h.b16 %v4702
    %v5343 = vunpack.c.l.b16 %v4703
    %v5344 = vunpack.c.h.b16 %v4703
    %v5345 = vunpack.c.l.b16 %v4704
    %v5346 = vunpack.c.h.b16 %v4704
    %v5347 = vunpack.c.l.b16 %v4705
    %v5348 = vunpack.c.h.b16 %v4705
    %v5349 = vunpack.c.l.b16 %v4706
    %v5350 = vunpack.c.h.b16 %v4706
    %v5351 = vunpack.c.l.b16 %v4707
    %v5352 = vunpack.c.h.b16 %v4707
    %v5353 = vunpack.c.l.b16 %v4708
    %v5354 = vunpack.c.h.b16 %v4708
    %v5355 = vunpack.c.l.b16 %v4709
    %v5356 = vunpack.c.h.b16 %v4709
    %v5357 = vunpack.c.l.b16 %v4710
    %v5358 = vunpack.c.h.b16 %v4710
    %v5359 = vunpack.c.l.b16 %v4711
    %v5360 = vunpack.c.h.b16 %v4711
    %v5361 = vunpack.c.l.b16 %v4712
    %v5362 = vunpack.c.h.b16 %v4712
    %v5363 = vunpack.c.l.b16 %v4713
    %v5364 = vunpack.c.h.b16 %v4713
    %v5365 = vunpack.c.l.b16 %v4714
    %v5366 = vunpack.c.h.b16 %v4714
    %v5367 = vunpack.c.l.b16 %v4715
    %v5368 = vunpack.c.h.b16 %v4715
    %v5369 = vunpack.c.l.b16 %v4716
    %v5370 = vunpack.c.h.b16 %v4716
    %v5371 = vunpack.c.l.b16 %v4717
    %v5372 = vunpack.c.h.b16 %v4717
    %v5373 = vunpack.c.l.b16 %v4718
    %v5374 = vunpack.c.h.b16 %v4718
    %v5375 = vunpack.c.l.b16 %v4719
    %v5376 = vunpack.c.h.b16 %v4719
    %v5377 = vunpack.c.l.b16 %v4720
    %v5378 = vunpack.c.h.b16 %v4720
    %v5379 = vunpack.c.l.b16 %v4721
    %v5380 = vunpack.c.h.b16 %v4721
    %v5381 = vunpack.c.l.b16 %v4722
    %v5382 = vunpack.c.h.b16 %v4722
    %v5383 = vunpack.c.l.b16 %v4723
    %v5384 = vunpack.c.h.b16 %v4723
    %v5385 = vunpack.c.l.b16 %v4724
    %v5386 = vunpack.c.h.b16 %v4724
    %v5387 = vunpack.c.l.b16 %v4725
    %v5388 = vunpack.c.h.b16 %v4725
    %v5389 = vunpack.c.l.b16 %v4726
    %v5390 = vunpack.c.h.b16 %v4726
    %v5391 = vunpack.c.l.b16 %v4727
    %v5392 = vunpack.c.h.b16 %v4727
    %v5393 = vunpack.c.l.b16 %v4728
    %v5394 = vunpack.c.h.b16 %v4728
    %v5395 = vunpack.c.l.b16 %v4729
    %v5396 = vunpack.c.h.b16 %v4729
    %v5397 = vunpack.c.l.b16 %v4730
    %v5398 = vunpack.c.h.b16 %v4730
    %v5399 = vunpack.c.l.b16 %v4731
    %v5400 = vunpack.c.h.b16 %v4731
    %v5401 = vunpack.c.l.b16 %v4732
    %v5402 = vunpack.c.h.b16 %v4732
    %v5403 = vunpack.c.l.b16 %v4733
    %v5404 = vunpack.c.h.b16 %v4733
    %v5405 = vunpack.c.l.b16 %v4734
    %v5406 = vunpack.c.h.b16 %v4734
    %v5407 = vunpack.c.l.b16 %v4735
    %v5408 = vunpack.c.h.b16 %v4735
    %v5409 = vunpack.c.l.b16 %v4736
    %v5410 = vunpack.c.h.b16 %v4736
    %v5411 = vunpack.c.l.b16 %v4737
    %v5412 = vunpack.c.h.b16 %v4737
    %v5413 = vunpack.c.l.b16 %v4738
    %v5414 = vunpack.c.h.b16 %v4738
    %v5415 = vunpack.c.l.b16 %v4739
    %v5416 = vunpack.c.h.b16 %v4739
    %v5417 = vunpack.c.l.b16 %v4740
    %v5418 = vunpack.c.h.b16 %v4740
    %v5419 = vunpack.c.l.b16 %v4741
    %v5420 = vunpack.c.h.b16 %v4741
    %v5421 = vunpack.c.l.b16 %v4742
    %v5422 = vunpack.c.h.b16 %v4742
    %v5423 = vunpack.c.l.b16 %v4743
    %v5424 = vunpack.c.h.b16 %v4743
    %v5425 = vunpack.c.l.b16 %v4744
    %v5426 = vunpack.c.h.b16 %v4744
    %v5427 = vunpack.c.l.b16 %v4745
    %v5428 = vunpack.c.h.b16 %v4745
    %v5429 = vunpack.c.l.b16 %v4746
    %v5430 = vunpack.c.h.b16 %v4746
    %v5431 = vunpack.c.l.b16 %v4747
    %v5432 = vunpack.c.h.b16 %v4747
    %v5433 = vunpack.c.l.b16 %v4748
    %v5434 = vunpack.c.h.b16 %v4748
    %v5435 = vunpack.c.l.b16 %v4749
    %v5436 = vunpack.c.h.b16 %v4749
    %v5437 = vunpack.c.l.b16 %v4750
    %v5438 = vunpack.c.h.b16 %v4750
    %v5439 = vunpack.c.l.b16 %v4751
    %v5440 = vunpack.c.h.b16 %v4751
    %v5441 = vunpack.c.l.b16 %v4752
    %v5442 = vunpack.c.h.b16 %v4752
    %v5443 = vunpack.c.l.b16 %v4753
    %v5444 = vunpack.c.h.b16 %v4753
    %v5445 = vunpack.c.l.b16 %v4754
    %v5446 = vunpack.c.h.b16 %v4754
    %v5447 = vunpack.c.l.b16 %v4755
    %v5448 = vunpack.c.h.b16 %v4755
    %v5449 = vunpack.c.l.b16 %v4756
    %v5450 = vunpack.c.h.b16 %v4756
    %v5451 = vunpack.c.l.b16 %v4757
    %v5452 = vunpack.c.h.b16 %v4757
    %v5453 = vunpack.c.l.b16 %v4758
    %v5454 = vunpack.c.h.b16 %v4758
    %v5455 = vunpack.c.l.b16 %v4759
    %v5456 = vunpack.c.h.b16 %v4759
    %v5457 = vunpack.c.l.b16 %v4760
    %v5458 = vunpack.c.h.b16 %v4760
    %v5459 = vunpack.c.l.b16 %v4761
    %v5460 = vunpack.c.h.b16 %v4761
    %v5461 = vunpack.c.l.b16 %v4762
    %v5462 = vunpack.c.h.b16 %v4762
    %v5463 = vunpack.c.l.b16 %v4763
    %v5464 = vunpack.c.h.b16 %v4763
    %v5465 = vunpack.c.l.b16 %v4764
    %v5466 = vunpack.c.h.b16 %v4764
    %v5467 = vunpack.c.l.b16 %v4765
    %v5468 = vunpack.c.h.b16 %v4765
    %v5469 = vunpack.c.l.b16 %v4766
    %v5470 = vunpack.c.h.b16 %v4766
    %v5471 = vunpack.c.l.b16 %v4767
    %v5472 = vunpack.c.h.b16 %v4767
    %v5473 = vunpack.c.l.b16 %v4768
    %v5474 = vunpack.c.h.b16 %v4768
    %v5475 = vunpack.c.l.b16 %v4769
    %v5476 = vunpack.c.h.b16 %v4769
    %v5477 = vunpack.c.l.b16 %v4770
    %v5478 = vunpack.c.h.b16 %v4770
    %v5479 = vunpack.c.l.b16 %v4771
    %v5480 = vunpack.c.h.b16 %v4771
    %v5481 = vunpack.c.l.b16 %v4772
    %v5482 = vunpack.c.h.b16 %v4772
    %v5483 = vunpack.c.l.b16 %v4773
    %v5484 = vunpack.c.h.b16 %v4773
    %v5485 = vunpack.c.l.b16 %v4774
    %v5486 = vunpack.c.h.b16 %v4774
    %v5487 = vunpack.c.l.b16 %v4775
    %v5488 = vunpack.c.h.b16 %v4775
    %v5489 = vunpack.c.l.b16 %v4776
    %v5490 = vunpack.c.h.b16 %v4776
    %v5491 = vunpack.c.l.b16 %v4777
    %v5492 = vunpack.c.h.b16 %v4777
    %v5493 = vunpack.c.l.b16 %v4778
    %v5494 = vunpack.c.h.b16 %v4778
    %v5495 = vunpack.c.l.b16 %v4779
    %v5496 = vunpack.c.h.b16 %v4779
    %v5497 = vunpack.c.l.b16 %v4780
    %v5498 = vunpack.c.h.b16 %v4780
    %v5499 = vunpack.c.l.b16 %v4781
    %v5500 = vunpack.c.h.b16 %v4781
    %v5501 = vunpack.c.l.b16 %v4782
    %v5502 = vunpack.c.h.b16 %v4782
    %v5503 = vunpack.c.l.b16 %v4783
    %v5504 = vunpack.c.h.b16 %v4783
    %v5505 = vunpack.c.l.b16 %v4784
    %v5506 = vunpack.c.h.b16 %v4784
    %v5507 = vunpack.c.l.b16 %v4785
    %v5508 = vunpack.c.h.b16 %v4785
    %v5509 = vunpack.c.l.b16 %v4786
    %v5510 = vunpack.c.h.b16 %v4786
    %v5511 = vunpack.c.l.b16 %v4787
    %v5512 = vunpack.c.h.b16 %v4787
    %v5513 = vunpack.c.l.b16 %v4788
    %v5514 = vunpack.c.h.b16 %v4788
    %v5515 = vunpack.c.l.b16 %v4789
    %v5516 = vunpack.c.h.b16 %v4789
    %v5517 = vunpack.c.l.b16 %v4790
    %v5518 = vunpack.c.h.b16 %v4790
    %v5519 = vunpack.c.l.b16 %v4791
    %v5520 = vunpack.c.h.b16 %v4791
    %v5521 = vunpack.c.l.b16 %v4792
    %v5522 = vunpack.c.h.b16 %v4792
    %v5523 = vunpack.c.l.b16 %v4793
    %v5524 = vunpack.c.h.b16 %v4793
    %v5525 = vunpack.c.l.b16 %v4794
    %v5526 = vunpack.c.h.b16 %v4794
    %v5527 = vunpack.c.l.b16 %v4795
    %v5528 = vunpack.c.h.b16 %v4795
    %v5529 = vunpack.c.l.b16 %v4796
    %v5530 = vunpack.c.h.b16 %v4796
    %v5531 = vunpack.c.l.b16 %v4797
    %v5532 = vunpack.c.h.b16 %v4797
    %v5533 = vunpack.c.l.b16 %v4798
    %v5534 = vunpack.c.h.b16 %v4798
    %v5535 = vunpack.c.l.b16 %v4799
    %v5536 = vunpack.c.h.b16 %v4799
    %v5537 = vunpack.c.l.b16 %v4800
    %v5538 = vunpack.c.h.b16 %v4800
    %v5539 = vunpack.c.l.b16 %v4801
    %v5540 = vunpack.c.h.b16 %v4801
    %v5541 = vunpack.c.l.b16 %v4802
    %v5542 = vunpack.c.h.b16 %v4802
    %v5543 = vunpack.c.l.b16 %v4803
    %v5544 = vunpack.c.h.b16 %v4803
    %v5545 = vunpack.c.l.b16 %v4804
    %v5546 = vunpack.c.h.b16 %v4804
    %v5547 = vunpack.c.l.b16 %v4805
    %v5548 = vunpack.c.h.b16 %v4805
    %v5549 = vunpack.c.l.b16 %v4806
    %v5550 = vunpack.c.h.b16 %v4806
    %v5551 = vunpack.c.l.b16 %v4807
    %v5552 = vunpack.c.h.b16 %v4807
    %v5553 = vunpack.c.l.b16 %v4808
    %v5554 = vunpack.c.h.b16 %v4808
    %v5555 = vunpack.c.l.b16 %v4809
    %v5556 = vunpack.c.h.b16 %v4809
    %v5557 = vunpack.c.l.b16 %v4810
    %v5558 = vunpack.c.h.b16 %v4810
    %v5559 = vunpack.c.l.b16 %v4811
    %v5560 = vunpack.c.h.b16 %v4811
    %v5561 = vunpack.c.l.b16 %v4812
    %v5562 = vunpack.c.h.b16 %v4812
    %v5563 = vunpack.c.l.b16 %v4813
    %v5564 = vunpack.c.h.b16 %v4813
    %v5565 = vunpack.c.l.b16 %v4814
    %v5566 = vunpack.c.h.b16 %v4814
    %v5567 = vunpack.c.l.b16 %v4815
    %v5568 = vunpack.c.h.b16 %v4815
    %v5569 = vunpack.c.l.b16 %v4816
    %v5570 = vunpack.c.h.b16 %v4816
    %v5571 = vunpack.c.l.b16 %v4817
    %v5572 = vunpack.c.h.b16 %v4817
    %v5573 = vunpack.c.l.b16 %v4818
    %v5574 = vunpack.c.h.b16 %v4818
    %v5575 = vunpack.c.l.b16 %v4819
    %v5576 = vunpack.c.h.b16 %v4819
    %v5577 = vunpack.c.l.b16 %v4820
    %v5578 = vunpack.c.h.b16 %v4820
    %v5579 = vunpack.c.l.b16 %v4821
    %v5580 = vunpack.c.h.b16 %v4821
    %v5581 = vunpack.c.l.b16 %v4822
    %v5582 = vunpack.c.h.b16 %v4822
    %v5583 = vunpack.c.l.b16 %v4823
    %v5584 = vunpack.c.h.b16 %v4823
    %v5585 = vunpack.c.l.b16 %v4824
    %v5586 = vunpack.c.h.b16 %v4824
    %v5587 = vunpack.c.l.b16 %v4825
    %v5588 = vunpack.c.h.b16 %v4825
    %v5589 = vunpack.c.l.b16 %v4826
    %v5590 = vunpack.c.h.b16 %v4826
    %v5591 = vunpack.c.l.b16 %v4827
    %v5592 = vunpack.c.h.b16 %v4827
    %v5593 = vunpack.c.l.b16 %v4828
    %v5594 = vunpack.c.h.b16 %v4828
    %v5595 = vunpack.c.l.b16 %v4829
    %v5596 = vunpack.c.h.b16 %v4829
    %v5597 = vunpack.c.l.b16 %v4830
    %v5598 = vunpack.c.h.b16 %v4830
    %v5599 = vunpack.c.l.b16 %v4831
    %v5600 = vunpack.c.h.b16 %v4831
    %v5601 = vunpack.c.l.b16 %v4832
    %v5602 = vunpack.c.h.b16 %v4832
    %v5603 = vunpack.c.l.b16 %v4833
    %v5604 = vunpack.c.h.b16 %v4833
    %v5605 = vunpack.c.l.b16 %v4834
    %v5606 = vunpack.c.h.b16 %v4834
    %v5607 = vunpack.c.l.b16 %v4835
    %v5608 = vunpack.c.h.b16 %v4835
    %v5609 = vunpack.c.l.b16 %v4836
    %v5610 = vunpack.c.h.b16 %v4836
    %v5611 = vunpack.c.l.b16 %v4837
    %v5612 = vunpack.c.h.b16 %v4837
    %v5613 = vunpack.c.l.b16 %v4838
    %v5614 = vunpack.c.h.b16 %v4838
    %v5615 = vunpack.c.l.b16 %v4839
    %v5616 = vunpack.c.h.b16 %v4839
    %v5617 = vunpack.c.l.b16 %v4840
    %v5618 = vunpack.c.h.b16 %v4840
    %v5619 = vunpack.c.l.b16 %v4841
    %v5620 = vunpack.c.h.b16 %v4841
    %v5621 = vunpack.c.l.b16 %v4842
    %v5622 = vunpack.c.h.b16 %v4842
    %v5623 = vunpack.c.l.b16 %v4843
    %v5624 = vunpack.c.h.b16 %v4843
    %v5625 = vunpack.c.l.b16 %v4844
    %v5626 = vunpack.c.h.b16 %v4844
    %v5627 = vunpack.c.l.b16 %v4845
    %v5628 = vunpack.c.h.b16 %v4845
    %v5629 = vunpack.c.l.b16 %v4846
    %v5630 = vunpack.c.h.b16 %v4846
    %v5631 = vunpack.c.l.b16 %v4847
    %v5632 = vunpack.c.h.b16 %v4847
    %v5633 = vunpack.c.l.b16 %v4848
    %v5634 = vunpack.c.h.b16 %v4848
    %v5635 = vunpack.c.l.b16 %v4849
    %v5636 = vunpack.c.h.b16 %v4849
    %v5637 = vunpack.c.l.b16 %v4850
    %v5638 = vunpack.c.h.b16 %v4850
    %v5639 = vunpack.c.l.b16 %v4851
    %v5640 = vunpack.c.h.b16 %v4851
    %v5641 = vunpack.c.l.b16 %v4852
    %v5642 = vunpack.c.h.b16 %v4852
    %v5643 = vunpack.c.l.b16 %v4853
    %v5644 = vunpack.c.h.b16 %v4853
    %v5645 = vunpack.c.l.b16 %v4854
    %v5646 = vunpack.c.h.b16 %v4854
    %v5647 = vunpack.c.l.b16 %v4855
    %v5648 = vunpack.c.h.b16 %v4855
    %v5649 = vunpack.c.l.b16 %v4856
    %v5650 = vunpack.c.h.b16 %v4856
    %v5651 = vunpack.c.l.b16 %v4857
    %v5652 = vunpack.c.h.b16 %v4857
    %v5653 = vunpack.c.l.b16 %v4858
    %v5654 = vunpack.c.h.b16 %v4858
    %v5655 = vunpack.c.l.b16 %v4859
    %v5656 = vunpack.c.h.b16 %v4859
    %v5657 = vunpack.c.l.b16 %v4860
    %v5658 = vunpack.c.h.b16 %v4860
    %v5659 = vunpack.c.l.b16 %v4861
    %v5660 = vunpack.c.h.b16 %v4861
    %v5661 = vunpack.c.l.b16 %v4862
    %v5662 = vunpack.c.h.b16 %v4862
    %v5663 = vunpack.c.l.b16 %v4863
    %v5664 = vunpack.c.h.b16 %v4863
    %v5665 = vunpack.c.l.b16 %v4864
    %v5666 = vunpack.c.h.b16 %v4864
    %v5667 = vunpack.c.l.b16 %v4865
    %v5668 = vunpack.c.h.b16 %v4865
    %v5669 = vunpack.c.l.b16 %v4866
    %v5670 = vunpack.c.h.b16 %v4866
    %v5671 = vunpack.c.l.b16 %v4867
    %v5672 = vunpack.c.h.b16 %v4867
    %v5673 = vunpack.c.l.b16 %v4868
    %v5674 = vunpack.c.h.b16 %v4868
    %v5675 = vunpack.c.l.b16 %v4869
    %v5676 = vunpack.c.h.b16 %v4869
    %v5677 = vunpack.c.l.b16 %v4870
    %v5678 = vunpack.c.h.b16 %v4870
    %v5679 = vunpack.c.l.b16 %v4871
    %v5680 = vunpack.c.h.b16 %v4871
    %v5681 = vunpack.c.l.b16 %v4872
    %v5682 = vunpack.c.h.b16 %v4872
    %v5683 = vunpack.c.l.b16 %v4873
    %v5684 = vunpack.c.h.b16 %v4873
    %v5685 = vunpack.c.l.b16 %v4874
    %v5686 = vunpack.c.h.b16 %v4874
    %v5687 = vunpack.c.l.b16 %v4875
    %v5688 = vunpack.c.h.b16 %v4875
    %v5689 = vunpack.c.l.b16 %v4876
    %v5690 = vunpack.c.h.b16 %v4876
    %v5691 = vunpack.c.l.b16 %v4877
    %v5692 = vunpack.c.h.b16 %v4877
    %v5693 = vunpack.c.l.b16 %v4878
    %v5694 = vunpack.c.h.b16 %v4878
    %v5695 = vunpack.c.l.b16 %v4879
    %v5696 = vunpack.c.h.b16 %v4879
    %v5697 = vunpack.c.l.b16 %v4880
    %v5698 = vunpack.c.h.b16 %v4880
    %v5699 = vunpack.c.l.b16 %v4881
    %v5700 = vunpack.c.h.b16 %v4881
    %v5701 = vunpack.c.l.b16 %v4882
    %v5702 = vunpack.c.h.b16 %v4882
    %v5703 = vunpack.c.l.b16 %v4883
    %v5704 = vunpack.c.h.b16 %v4883
    %v5705 = vunpack.c.l.b16 %v4884
    %v5706 = vunpack.c.h.b16 %v4884
    %v5707 = vunpack.c.l.b16 %v4885
    %v5708 = vunpack.c.h.b16 %v4885
    %v5709 = vunpack.c.l.b16 %v4886
    %v5710 = vunpack.c.h.b16 %v4886
    %v5711 = vunpack.c.l.b16 %v4887
    %v5712 = vunpack.c.h.b16 %v4887
    %v5713 = vunpack.c.l.b16 %v4888
    %v5714 = vunpack.c.h.b16 %v4888
    %v5715 = vunpack.c.l.b16 %v4889
    %v5716 = vunpack.c.h.b16 %v4889
    %v5717 = vunpack.c.l.b16 %v4890
    %v5718 = vunpack.c.h.b16 %v4890
    %v5719 = vunpack.c.l.b16 %v4891
    %v5720 = vunpack.c.h.b16 %v4891
    %v5721 = vunpack.c.l.b16 %v4892
    %v5722 = vunpack.c.h.b16 %v4892
    %v5723 = vunpack.c.l.b16 %v4893
    %v5724 = vunpack.c.h.b16 %v4893
    %v5725 = vunpack.c.l.b16 %v4894
    %v5726 = vunpack.c.h.b16 %v4894
    %v5727 = vunpack.c.l.b16 %v4895
    %v5728 = vunpack.c.h.b16 %v4895
    %v5729 = vunpack.c.l.b16 %v4896
    %v5730 = vunpack.c.h.b16 %v4896
    %v5731 = vunpack.c.l.b16 %v4897
    %v5732 = vunpack.c.h.b16 %v4897
    %v5733 = vunpack.c.l.b16 %v4898
    %v5734 = vunpack.c.h.b16 %v4898
    %v5735 = vunpack.c.l.b16 %v4899
    %v5736 = vunpack.c.h.b16 %v4899
    %v5737 = vunpack.c.l.b16 %v4900
    %v5738 = vunpack.c.h.b16 %v4900
    %v5739 = vunpack.c.l.b16 %v4901
    %v5740 = vunpack.c.h.b16 %v4901
    %v5741 = vunpack.c.l.b16 %v4902
    %v5742 = vunpack.c.h.b16 %v4902
    %v5743 = vunpack.c.l.b16 %v4903
    %v5744 = vunpack.c.h.b16 %v4903
    %v5745 = vunpack.c.l.b16 %v4904
    %v5746 = vunpack.c.h.b16 %v4904
    %v5747 = vunpack.c.l.b16 %v4905
    %v5748 = vunpack.c.h.b16 %v4905
    %v5749 = vunpack.c.l.b16 %v4906
    %v5750 = vunpack.c.h.b16 %v4906
    %v5751 = vunpack.c.l.b16 %v4907
    %v5752 = vunpack.c.h.b16 %v4907
    %v5753 = vunpack.c.l.b16 %v4908
    %v5754 = vunpack.c.h.b16 %v4908
    %v5755 = vunpack.c.l.b16 %v4909
    %v5756 = vunpack.c.h.b16 %v4909
    %v5757 = vunpack.c.l.b16 %v4910
    %v5758 = vunpack.c.h.b16 %v4910
    %v5759 = vunpack.c.l.b16 %v4911
    %v5760 = vunpack.c.h.b16 %v4911
    %v5761 = vunpack.c.l.b16 %v4912
    %v5762 = vunpack.c.h.b16 %v4912
    %v5763 = vunpack.c.l.b16 %v4913
    %v5764 = vunpack.c.h.b16 %v4913
    %v5765 = vunpack.c.l.b16 %v4914
    %v5766 = vunpack.c.h.b16 %v4914
    %v5767 = vunpack.c.l.b16 %v4915
    %v5768 = vunpack.c.h.b16 %v4915
    %v5769 = vunpack.c.l.b16 %v4916
    %v5770 = vunpack.c.h.b16 %v4916
    %v5771 = vunpack.c.l.b16 %v4917
    %v5772 = vunpack.c.h.b16 %v4917
    %v5773 = vunpack.c.l.b16 %v4918
    %v5774 = vunpack.c.h.b16 %v4918
    %v5775 = vunpack.c.l.b16 %v4919
    %v5776 = vunpack.c.h.b16 %v4919
    %v5777 = vunpack.c.l.b16 %v4920
    %v5778 = vunpack.c.h.b16 %v4920
    %v5779 = vunpack.c.l.b16 %v4921
    %v5780 = vunpack.c.h.b16 %v4921
    %v5781 = vunpack.c.l.b16 %v4922
    %v5782 = vunpack.c.h.b16 %v4922
    %v5783 = vunpack.c.l.b16 %v4923
    %v5784 = vunpack.c.h.b16 %v4923
    %v5785 = vunpack.c.l.b16 %v4924
    %v5786 = vunpack.c.h.b16 %v4924
    %v5787 = vunpack.c.l.b16 %v4925
    %v5788 = vunpack.c.h.b16 %v4925
    %v5789 = vunpack.c.l.b16 %v4926
    %v5790 = vunpack.c.h.b16 %v4926
    %v5791 = vunpack.c.l.b16 %v4927
    %v5792 = vunpack.c.h.b16 %v4927
    %v5793 = vunpack.c.l.b16 %v4928
    %v5794 = vunpack.c.h.b16 %v4928
    %v5795 = vunpack.c.l.b16 %v4929
    %v5796 = vunpack.c.h.b16 %v4929
    %v5797 = vunpack.c.l.b16 %v4930
    %v5798 = vunpack.c.h.b16 %v4930
    %v5799 = vunpack.c.l.b16 %v4931
    %v5800 = vunpack.c.h.b16 %v4931
    %v5801 = vunpack.c.l.b16 %v4932
    %v5802 = vunpack.c.h.b16 %v4932
    %v5803 = vunpack.c.l.b16 %v4933
    %v5804 = vunpack.c.h.b16 %v4933
    %v5805 = vunpack.c.l.b16 %v4934
    %v5806 = vunpack.c.h.b16 %v4934
    %v5807 = vunpack.c.l.b16 %v4935
    %v5808 = vunpack.c.h.b16 %v4935
    %v5809 = vunpack.c.l.b16 %v4936
    %v5810 = vunpack.c.h.b16 %v4936
    %v5811 = vunpack.c.l.b16 %v4937
    %v5812 = vunpack.c.h.b16 %v4937
    %v5813 = vunpack.c.l.b16 %v4938
    %v5814 = vunpack.c.h.b16 %v4938
    %v5815 = vunpack.c.l.b16 %v4939
    %v5816 = vunpack.c.h.b16 %v4939
    %v5817 = vunpack.c.l.b16 %v4940
    %v5818 = vunpack.c.h.b16 %v4940
    %v5819 = vunpack.c.l.b16 %v4941
    %v5820 = vunpack.c.h.b16 %v4941
    %v5821 = vunpack.c.l.b16 %v4942
    %v5822 = vunpack.c.h.b16 %v4942
    %v5823 = vunpack.c.l.b16 %v4943
    %v5824 = vunpack.c.h.b16 %v4943
    %v5825 = vunpack.c.l.b16 %v4944
    %v5826 = vunpack.c.h.b16 %v4944
    %v5827 = vunpack.c.l.b16 %v4945
    %v5828 = vunpack.c.h.b16 %v4945
    %v5829 = vunpack.c.l.b16 %v4946
    %v5830 = vunpack.c.h.b16 %v4946
    %v5831 = vunpack.c.l.b16 %v4947
    %v5832 = vunpack.c.h.b16 %v4947
    %v5833 = vunpack.c.l.b16 %v4948
    %v5834 = vunpack.c.h.b16 %v4948
    %v5835 = vunpack.c.l.b16 %v4949
    %v5836 = vunpack.c.h.b16 %v4949
    %v5837 = vunpack.c.l.b16 %v4950
    %v5838 = vunpack.c.h.b16 %v4950
    %v5839 = vunpack.c.l.b16 %v4951
    %v5840 = vunpack.c.h.b16 %v4951
    %v5841 = vunpack.c.l.b16 %v4952
    %v5842 = vunpack.c.h.b16 %v4952
    %v5843 = vunpack.c.l.b16 %v4953
    %v5844 = vunpack.c.h.b16 %v4953
    %v5845 = vunpack.c.l.b16 %v4954
    %v5846 = vunpack.c.h.b16 %v4954
    %v5847 = vunpack.c.l.b16 %v4955
    %v5848 = vunpack.c.h.b16 %v4955
    %v5849 = vunpack.c.l.b16 %v4956
    %v5850 = vunpack.c.h.b16 %v4956
    %v5851 = vunpack.c.l.b16 %v4957
    %v5852 = vunpack.c.h.b16 %v4957
    %v5853 = vunpack.c.l.b16 %v4958
    %v5854 = vunpack.c.h.b16 %v4958
    %v5855 = vunpack.c.l.b16 %v4959
    %v5856 = vunpack.c.h.b16 %v4959
    %v5857 = vpack.c.b16 %v5287, %v5281
    %v5858 = vpack.c.b16 %v5288, %v5282
    %v5859 = vpack.c.b16 %v5289, %v5283
    %v5860 = vpack.c.b16 %v5290, %v5284
    %v5861 = vpack.c.b16 %v5291, %v5285
    %v5862 = vpack.c.b16 %v5292, %v5286
    %v5863 = vpack.c.b16 %v5299, %v5293
    %v5864 = vpack.c.b16 %v5300, %v5294
    %v5865 = vpack.c.b16 %v5301, %v5295
    %v5866 = vpack.c.b16 %v5302, %v5296
    %v5867 = vpack.c.b16 %v5303, %v5297
    %v5868 = vpack.c.b16 %v5304, %v5298
    %v5869 = vpack.c.b16 %v5311, %v5305
    %v5870 = vpack.c.b16 %v5312, %v5306
    %v5871 = vpack.c.b16 %v5313, %v5307
    %v5872 = vpack.c.b16 %v5314, %v5308
    %v5873 = vpack.c.b16 %v5315, %v5309
    %v5874 = vpack.c.b16 %v5316, %v5310
    %v5875 = vpack.c.b16 %v5323, %v5317
    %v5876 = vpack.c.b16 %v5324, %v5318
    %v5877 = vpack.c.b16 %v5325, %v5319
    %v5878 = vpack.c.b16 %v5326, %v5320
    %v5879 = vpack.c.b16 %v5327, %v5321
    %v5880 = vpack.c.b16 %v5328, %v5322
    %v5881 = vpack.c.b16 %v5335, %v5329
    %v5882 = vpack.c.b16 %v5336, %v5330
    %v5883 = vpack.c.b16 %v5337, %v5331
    %v5884 = vpack.c.b16 %v5338, %v5332
    %v5885 = vpack.c.b16 %v5339, %v5333
    %v5886 = vpack.c.b16 %v5340, %v5334
    %v5887 = vpack.c.b16 %v5347, %v5341
    %v5888 = vpack.c.b16 %v5348, %v5342
    %v5889 = vpack.c.b16 %v5349, %v5343
    %v5890 = vpack.c.b16 %v5350, %v5344
    %v5891 = vpack.c.b16 %v5351, %v5345
    %v5892 = vpack.c.b16 %v5352, %v5346
    %v5893 = vpack.c.b16 %v5359, %v5353
    %v5894 = vpack.c.b16 %v5360, %v5354
    %v5895 = vpack.c.b16 %v5361, %v5355
    %v5896 = vpack.c.b16 %v5362, %v5356
    %v5897 = vpack.c.b16 %v5363, %v5357
    %v5898 = vpack.c.b16 %v5364, %v5358
    %v5899 = vpack.c.b16 %v5371, %v5365
    %v5900 = vpack.c.b16 %v5372, %v5366
    %v5901 = vpack.c.b16 %v5373, %v5367
    %v5902 = vpack.c.b16 %v5374, %v5368
    %v5903 = vpack.c.b16 %v5375, %v5369
    %v5904 = vpack.c.b16 %v5376, %v5370
    %v5905 = vpack.c.b16 %v5383, %v5377
    %v5906 = vpack.c.b16 %v5384, %v5378
    %v5907 = vpack.c.b16 %v5385, %v5379
    %v5908 = vpack.c.b16 %v5386, %v5380
    %v5909 = vpack.c.b16 %v5387, %v5381
    %v5910 = vpack.c.b16 %v5388, %v5382
    %v5911 = vpack.c.b16 %v5395, %v5389
    %v5912 = vpack.c.b16 %v5396, %v5390
    %v5913 = vpack.c.b16 %v5397, %v5391
    %v5914 = vpack.c.b16 %v5398, %v5392
    %v5915 = vpack.c.b16 %v5399, %v5393
    %v5916 = vpack.c.b16 %v5400, %v5394
    %v5917 = vpack.c.b16 %v5407, %v5401
    %v5918 = vpack.c.b16 %v5408, %v5402
    %v5919 = vpack.c.b16 %v5409, %v5403
    %v5920 = vpack.c.b16 %v5410, %v5404
    %v5921 = vpack.c.b16 %v5411, %v5405
    %v5922 = vpack.c.b16 %v5412, %v5406
    %v5923 = vpack.c.b16 %v5419, %v5413
    %v5924 = vpack.c.b16 %v5420, %v5414
    %v5925 = vpack.c.b16 %v5421, %v5415
    %v5926 = vpack.c.b16 %v5422, %v5416
    %v5927 = vpack.c.b16 %v5423, %v5417
    %v5928 = vpack.c.b16 %v5424, %v5418
    %v5929 = vpack.c.b16 %v5431, %v5425
    %v5930 = vpack.c.b16 %v5432, %v5426
    %v5931 = vpack.c.b16 %v5433, %v5427
    %v5932 = vpack.c.b16 %v5434, %v5428
    %v5933 = vpack.c.b16 %v5435, %v5429
    %v5934 = vpack.c.b16 %v5436, %v5430
    %v5935 = vpack.c.b16 %v5443, %v5437
    %v5936 = vpack.c.b16 %v5444, %v5438
    %v5937 = vpack.c.b16 %v5445, %v5439
    %v5938 = vpack.c.b16 %v5446, %v5440
    %v5939 = vpack.c.b16 %v5447, %v5441
    %v5940 = vpack.c.b16 %v5448, %v5442
    %v5941 = vpack.c.b16 %v5455, %v5449
    %v5942 = vpack.c.b16 %v5456, %v5450
    %v5943 = vpack.c.b16 %v5457, %v5451
    %v5944 = vpack.c.b16 %v5458, %v5452
    %v5945 = vpack.c.b16 %v5459, %v5453
    %v5946 = vpack.c.b16 %v5460, %v5454
    %v5947 = vpack.c.b16 %v5467, %v5461
    %v5948 = vpack.c.b16 %v5468, %v5462
    %v5949 = vpack.c.b16 %v5469, %v5463
    %v5950 = vpack.c.b16 %v5470, %v5464
    %v5951 = vpack.c.b16 %v5471, %v5465
    %v5952 = vpack.c.b16 %v5472, %v5466
    %v5953 = vpack.c.b16 %v5479, %v5473
    %v5954 = vpack.c.b16 %v5480, %v5474
    %v5955 = vpack.c.b16 %v5481, %v5475
    %v5956 = vpack.c.b16 %v5482, %v5476
    %v5957 = vpack.c.b16 %v5483, %v5477
    %v5958 = vpack.c.b16 %v5484, %v5478
    %v5959 = vpack.c.b16 %v5491, %v5485
    %v5960 = vpack.c.b16 %v5492, %v5486
    %v5961 = vpack.c.b16 %v5493, %v5487
    %v5962 = vpack.c.b16 %v5494, %v5488
    %v5963 = vpack.c.b16 %v5495, %v5489
    %v5964 = vpack.c.b16 %v5496, %v5490
    %v5965 = vpack.c.b16 %v5503, %v5497
    %v5966 = vpack.c.b16 %v5504, %v5498
    %v5967 = vpack.c.b16 %v5505, %v5499
    %v5968 = vpack.c.b16 %v5506, %v5500
    %v5969 = vpack.c.b16 %v5507, %v5501
    %v5970 = vpack.c.b16 %v5508, %v5502
    %v5971 = vpack.c.b16 %v5515, %v5509
    %v5972 = vpack.c.b16 %v5516, %v5510
    %v5973 = vpack.c.b16 %v5517, %v5511
    %v5974 = vpack.c.b16 %v5518, %v5512
    %v5975 = vpack.c.b16 %v5519, %v5513
    %v5976 = vpack.c.b16 %v5520, %v5514
    %v5977 = vpack.c.b16 %v5527, %v5521
    %v5978 = vpack.c.b16 %v5528, %v5522
    %v5979 = vpack.c.b16 %v5529, %v5523
    %v5980 = vpack.c.b16 %v5530, %v5524
    %v5981 = vpack.c.b16 %v5531, %v5525
    %v5982 = vpack.c.b16 %v5532, %v5526
    %v5983 = vpack.c.b16 %v5539, %v5533
    %v5984 = vpack.c.b16 %v5540, %v5534
    %v5985 = vpack.c.b16 %v5541, %v5535
    %v5986 = vpack.c.b16 %v5542, %v5536
    %v5987 = vpack.c.b16 %v5543, %v5537
    %v5988 = vpack.c.b16 %v5544, %v5538
    %v5989 = vpack.c.b16 %v5551, %v5545
    %v5990 = vpack.c.b16 %v5552, %v5546
    %v5991 = vpack.c.b16 %v5553, %v5547
    %v5992 = vpack.c.b16 %v5554, %v5548
    %v5993 = vpack.c.b16 %v5555, %v5549
    %v5994 = vpack.c.b16 %v5556, %v5550
    %v5995 = vpack.c.b16 %v5563, %v5557
    %v5996 = vpack.c.b16 %v5564, %v5558
    %v5997 = vpack.c.b16 %v5565, %v5559
    %v5998 = vpack.c.b16 %v5566, %v5560
    %v5999 = vpack.c.b16 %v5567, %v5561
    %v6000 = vpack.c.b16 %v5568, %v5562
    %v6001 = vpack.c.b16 %v5575, %v5569
    %v6002 = vpack.c.b16 %v5576, %v5570
    %v6003 = vpack.c.b16 %v5577, %v5571
    %v6004 = vpack.c.b16 %v5578, %v5572
    %v6005 = vpack.c.b16 %v5579, %v5573
    %v6006 = vpack.c.b16 %v5580, %v5574
    %v6007 = vpack.c.b16 %v5587, %v5581
    %v6008 = vpack.c.b16 %v5588, %v5582
    %v6009 = vpack.c.b16 %v5589, %v5583
    %v6010 = vpack.c.b16 %v5590, %v5584
    %v6011 = vpack.c.b16 %v5591, %v5585
    %v6012 = vpack.c.b16 %v5592, %v5586
    %v6013 = vpack.c.b16 %v5599, %v5593
    %v6014 = vpack.c.b16 %v5600, %v5594
    %v6015 = vpack.c.b16 %v5601, %v5595
    %v6016 = vpack.c.b16 %v5602, %v5596
    %v6017 = vpack.c.b16 %v5603, %v5597
    %v6018 = vpack.c.b16 %v5604, %v5598
    %v6019 = vpack.c.b16 %v5611, %v5605
    %v6020 = vpack.c.b16 %v5612, %v5606
    %v6021 = vpack.c.b16 %v5613, %v5607
    %v6022 = vpack.c.b16 %v5614, %v5608
    %v6023 = vpack.c.b16 %v5615, %v5609
    %v6024 = vpack.c.b16 %v5616, %v5610
    %v6025 = vpack.c.b16 %v5623, %v5617
    %v6026 = vpack.c.b16 %v5624, %v5618
    %v6027 = vpack.c.b16 %v5625, %v5619
    %v6028 = vpack.c.b16 %v5626, %v5620
    %v6029 = vpack.c.b16 %v5627, %v5621
    %v6030 = vpack.c.b16 %v5628, %v5622
    %v6031 = vpack.c.b16 %v5635, %v5629
    %v6032 = vpack.c.b16 %v5636, %v5630
    %v6033 = vpack.c.b16 %v5637, %v5631
    %v6034 = vpack.c.b16 %v5638, %v5632
    %v6035 = vpack.c.b16 %v5639, %v5633
    %v6036 = vpack.c.b16 %v5640, %v5634
    %v6037 = vpack.c.b16 %v5647, %v5641
    %v6038 = vpack.c.b16 %v5648, %v5642
    %v6039 = vpack.c.b16 %v5649, %v5643
    %v6040 = vpack.c.b16 %v5650, %v5644
    %v6041 = vpack.c.b16 %v5651, %v5645
    %v6042 = vpack.c.b16 %v5652, %v5646
    %v6043 = vpack.c.b16 %v5659, %v5653
    %v6044 = vpack.c.b16 %v5660, %v5654
    %v6045 = vpack.c.b16 %v5661, %v5655
    %v6046 = vpack.c.b16 %v5662, %v5656
    %v6047 = vpack.c.b16 %v5663, %v5657
    %v6048 = vpack.c.b16 %v5664, %v5658
    %v6049 = vpack.c.b16 %v5671, %v5665
    %v6050 = vpack.c.b16 %v5672, %v5666
    %v6051 = vpack.c.b16 %v5673, %v5667
    %v6052 = vpack.c.b16 %v5674, %v5668
    %v6053 = vpack.c.b16 %v5675, %v5669
    %v6054 = vpack.c.b16 %v5676, %v5670
    %v6055 = vpack.c.b16 %v5683, %v5677
    %v6056 = vpack.c.b16 %v5684, %v5678
    %v6057 = vpack.c.b16 %v5685, %v5679
    %v6058 = vpack.c.b16 %v5686, %v5680
    %v6059 = vpack.c.b16 %v5687, %v5681
    %v6060 = vpack.c.b16 %v5688, %v5682
    %v6061 = vpack.c.b16 %v5695, %v5689
    %v6062 = vpack.c.b16 %v5696, %v5690
    %v6063 = vpack.c.b16 %v5697, %v5691
    %v6064 = vpack.c.b16 %v5698, %v5692
    %v6065 = vpack.c.b16 %v5699, %v5693
    %v6066 = vpack.c.b16 %v5700, %v5694
    %v6067 = vpack.c.b16 %v5707, %v5701
    %v6068 = vpack.c.b16 %v5708, %v5702
    %v6069 = vpack.c.b16 %v5709, %v5703
    %v6070 = vpack.c.b16 %v5710, %v5704
    %v6071 = vpack.c.b16 %v5711, %v5705
    %v6072 = vpack.c.b16 %v5712, %v5706
    %v6073 = vpack.c.b16 %v5719, %v5713
    %v6074 = vpack.c.b16 %v5720, %v5714
    %v6075 = vpack.c.b16 %v5721, %v5715
    %v6076 = vpack.c.b16 %v5722, %v5716
    %v6077 = vpack.c.b16 %v5723, %v5717
    %v6078 = vpack.c.b16 %v5724, %v5718
    %v6079 = vpack.c.b16 %v5731, %v5725
    %v6080 = vpack.c.b16 %v5732, %v5726
    %v6081 = vpack.c.b16 %v5733, %v5727
    %v6082 = vpack.c.b16 %v5734, %v5728
    %v6083 = vpack.c.b16 %v5735, %v5729
    %v6084 = vpack.c.b16 %v5736, %v5730
    %v6085 = vpack.c.b16 %v5743, %v5737
    %v6086 = vpack.c.b16 %v5744, %v5738
    %v6087 = vpack.c.b16 %v5745, %v5739
    %v6088 = vpack.c.b16 %v5746, %v5740
    %v6089 = vpack.c.b16 %v5747, %v5741
    %v6090 = vpack.c.b16 %v5748, %v5742
    %v6091 = vpack.c.b16 %v5755, %v5749
    %v6092 = vpack.c.b16 %v5756, %v5750
    %v6093 = vpack.c.b16 %v5757, %v5751
    %v6094 = vpack.c.b16 %v5758, %v5752
    %v6095 = vpack.c.b16 %v5759, %v5753
    %v6096 = vpack.c.b16 %v5760, %v5754
    %v6097 = vpack.c.b16 %v5767, %v5761
    %v6098 = vpack.c.b16 %v5768, %v5762
    %v6099 = vpack.c.b16 %v5769, %v5763
    %v6100 = vpack.c.b16 %v5770, %v5764
    %v6101 = vpack.c.b16 %v5771, %v5765
    %v6102 = vpack.c.b16 %v5772, %v5766
    %v6103 = vpack.c.b16 %v5779, %v5773
    %v6104 = vpack.c.b16 %v5780, %v5774
    %v6105 = vpack.c.b16 %v5781, %v5775
    %v6106 = vpack.c.b16 %v5782, %v5776
    %v6107 = vpack.c.b16 %v5783, %v5777
    %v6108 = vpack.c.b16 %v5784, %v5778
    %v6109 = vpack.c.b16 %v5791, %v5785
    %v6110 = vpack.c.b16 %v5792, %v5786
    %v6111 = vpack.c.b16 %v5793, %v5787
    %v6112 = vpack.c.b16 %v5794, %v5788
    %v6113 = vpack.c.b16 %v5795, %v5789
    %v6114 = vpack.c.b16 %v5796, %v5790
    %v6115 = vpack.c.b16 %v5803, %v5797
    %v6116 = vpack.c.b16 %v5804, %v5798
    %v6117 = vpack.c.b16 %v5805, %v5799
    %v6118 = vpack.c.b16 %v5806, %v5800
    %v6119 = vpack.c.b16 %v5807, %v5801
    %v6120 = vpack.c.b16 %v5808, %v5802
    %v6121 = vpack.c.b16 %v5815, %v5809
    %v6122 = vpack.c.b16 %v5816, %v5810
    %v6123 = vpack.c.b16 %v5817, %v5811
    %v6124 = vpack.c.b16 %v5818, %v5812
    %v6125 = vpack.c.b16 %v5819, %v5813
    %v6126 = vpack.c.b16 %v5820, %v5814
    %v6127 = vpack.c.b16 %v5827, %v5821
    %v6128 = vpack.c.b16 %v5828, %v5822
    %v6129 = vpack.c.b16 %v5829, %v5823
    %v6130 = vpack.c.b16 %v5830, %v5824
    %v6131 = vpack.c.b16 %v5831, %v5825
    %v6132 = vpack.c.b16 %v5832, %v5826
    %v6133 = vpack.c.b16 %v5839, %v5833
    %v6134 = vpack.c.b16 %v5840, %v5834
    %v6135 = vpack.c.b16 %v5841, %v5835
    %v6136 = vpack.c.b16 %v5842, %v5836
    %v6137 = vpack.c.b16 %v5843, %v5837
    %v6138 = vpack.c.b16 %v5844, %v5838
    %v6139 = vpack.c.b16 %v5851, %v5845
    %v6140 = vpack.c.b16 %v5852, %v5846
    %v6141 = vpack.c.b16 %v5853, %v5847
    %v6142 = vpack.c.b16 %v5854, %v5848
    %v6143 = vpack.c.b16 %v5855, %v5849
    %v6144 = vpack.c.b16 %v5856, %v5850
    %6433 = vmatprep.subr.bf16.mxu0 %v5858
    %6434 = vmatpush1.bf16.msra.mxu0 %v5857
    %6435 = vmatprep.subr.bf16.mxu0 %v5864
    %6436 = vmatpush1.bf16.msra.mxu0 %v5863
    %6437 = vmatprep.subr.bf16.mxu0 %v5870
    %6438 = vmatpush1.bf16.msra.mxu0 %v5869
    %6439 = vmatprep.subr.bf16.mxu0 %v5876
    %6440 = vmatpush1.bf16.msra.mxu0 %v5875
    %6441 = vmatprep.subr.bf16.mxu0 %v5882
    %6442 = vmatpush1.bf16.msra.mxu0 %v5881
    %6443 = vmatprep.subr.bf16.mxu0 %v5888
    %6444 = vmatpush1.bf16.msra.mxu0 %v5887
    %6445 = vmatprep.subr.bf16.mxu0 %v5894
    %6446 = vmatpush1.bf16.msra.mxu0 %v5893
    %6447 = vmatprep.subr.bf16.mxu0 %v5900
    %6448 = vmatpush1.bf16.msra.mxu0 %v5899
    %6449 = vmatprep.subr.bf16.mxu0 %v5906
    %6450 = vmatpush1.bf16.msra.mxu0 %v5905
    %6451 = vmatprep.subr.bf16.mxu0 %v5912
    %6452 = vmatpush1.bf16.msra.mxu0 %v5911
    %6453 = vmatprep.subr.bf16.mxu0 %v5918
    %6454 = vmatpush1.bf16.msra.mxu0 %v5917
    %6455 = vmatprep.subr.bf16.mxu0 %v5924
    %6456 = vmatpush1.bf16.msra.mxu0 %v5923
    %6457 = vmatprep.subr.bf16.mxu0 %v5930
    %6458 = vmatpush1.bf16.msra.mxu0 %v5929
    %6459 = vmatprep.subr.bf16.mxu0 %v5936
    %6460 = vmatpush1.bf16.msra.mxu0 %v5935
    %6461 = vmatprep.subr.bf16.mxu0 %v5942
    %6462 = vmatpush1.bf16.msra.mxu0 %v5941
    %6463 = vmatprep.subr.bf16.mxu0 %v5948
    %6464 = vmatpush1.bf16.msra.mxu0 %v5947
    %6465 = vmatprep.mubr.bf16.mxu0 %v4667
    %6466 = vmatmul.mubr.bf16.gmra.mrb[0].mxu0 %v4666
    %v6467 = vpop.f32.mrb[0].mxu0
    %v6468 = vadd.f32 %v4966, %v6467
    %v6469 = vpop.f32.mrb[0].mxu0
    %v6470 = vadd.f32 %v4970, %v6469
    %v6471 = vpop.f32.mrb[0].mxu0
    %v6472 = vpop.f32.mrb[0].mxu0
    %6473 = vdwg.mxu0
    %6474 = vmatprep.subr.bf16.mxu0 %v5954
    %6475 = vmatpush1.bf16.msra.mxu0 %v5953
    %6476 = vmatprep.subr.bf16.mxu0 %v5960
    %6477 = vmatpush1.bf16.msra.mxu0 %v5959
    %6478 = vmatprep.subr.bf16.mxu0 %v5966
    %6479 = vmatpush1.bf16.msra.mxu0 %v5965
    %6480 = vmatprep.subr.bf16.mxu0 %v5972
    %6481 = vmatpush1.bf16.msra.mxu0 %v5971
    %6482 = vmatprep.subr.bf16.mxu0 %v5978
    %6483 = vmatpush1.bf16.msra.mxu0 %v5977
    %6484 = vmatprep.subr.bf16.mxu0 %v5984
    %6485 = vmatpush1.bf16.msra.mxu0 %v5983
    %6486 = vmatprep.subr.bf16.mxu0 %v5990
    %6487 = vmatpush1.bf16.msra.mxu0 %v5989
    %6488 = vmatprep.subr.bf16.mxu0 %v5996
    %6489 = vmatpush1.bf16.msra.mxu0 %v5995
    %6490 = vmatprep.subr.bf16.mxu0 %v6002
    %6491 = vmatpush1.bf16.msra.mxu0 %v6001
    %6492 = vmatprep.subr.bf16.mxu0 %v6008
    %6493 = vmatpush1.bf16.msra.mxu0 %v6007
    %6494 = vmatprep.subr.bf16.mxu0 %v6014
    %6495 = vmatpush1.bf16.msra.mxu0 %v6013
    %6496 = vmatprep.subr.bf16.mxu0 %v6020
    %6497 = vmatpush1.bf16.msra.mxu0 %v6019
    %6498 = vmatprep.subr.bf16.mxu0 %v6026
    %6499 = vmatpush1.bf16.msra.mxu0 %v6025
    %6500 = vmatprep.subr.bf16.mxu0 %v6032
    %6501 = vmatpush1.bf16.msra.mxu0 %v6031
    %6502 = vmatprep.subr.bf16.mxu0 %v6038
    %6503 = vmatpush1.bf16.msra.mxu0 %v6037
    %6504 = vmatprep.subr.bf16.mxu0 %v6044
    %6505 = vmatpush1.bf16.msra.mxu0 %v6043
    %6506 = vmatprep.mubr.bf16.mxu0 %v4669
    %6507 = vmatmul.mubr.bf16.gmra.mrb[0].mxu0 %v4668
    %v6508 = vpop.f32.mrb[0].mxu0
    %v6509 = vadd.f32 %v6468, %v6508
    %v6510 = vpop.f32.mrb[0].mxu0
    %v6511 = vadd.f32 %v6470, %v6510
    %v6512 = vpop.f32.mrb[0].mxu0
    %v6513 = vpop.f32.mrb[0].mxu0
    %6514 = vdwg.mxu0
    %6515 = vmatprep.subr.bf16.mxu0 %v6050
    %6516 = vmatpush1.bf16.msra.mxu0 %v6049
    %6517 = vmatprep.subr.bf16.mxu0 %v6056
    %6518 = vmatpush1.bf16.msra.mxu0 %v6055
    %6519 = vmatprep.subr.bf16.mxu0 %v6062
    %6520 = vmatpush1.bf16.msra.mxu0 %v6061
    %6521 = vmatprep.subr.bf16.mxu0 %v6068
    %6522 = vmatpush1.bf16.msra.mxu0 %v6067
    %6523 = vmatprep.subr.bf16.mxu0 %v6074
    %6524 = vmatpush1.bf16.msra.mxu0 %v6073
    %6525 = vmatprep.subr.bf16.mxu0 %v6080
    %6526 = vmatpush1.bf16.msra.mxu0 %v6079
    %6527 = vmatprep.subr.bf16.mxu0 %v6086
    %6528 = vmatpush1.bf16.msra.mxu0 %v6085
    %6529 = vmatprep.subr.bf16.mxu0 %v6092
    %6530 = vmatpush1.bf16.msra.mxu0 %v6091
    %6531 = vmatprep.subr.bf16.mxu0 %v6098
    %6532 = vmatpush1.bf16.msra.mxu0 %v6097
    %6533 = vmatprep.subr.bf16.mxu0 %v6104
    %6534 = vmatpush1.bf16.msra.mxu0 %v6103
    %6535 = vmatprep.subr.bf16.mxu0 %v6110
    %6536 = vmatpush1.bf16.msra.mxu0 %v6109
    %6537 = vmatprep.subr.bf16.mxu0 %v6116
    %6538 = vmatpush1.bf16.msra.mxu0 %v6115
    %6539 = vmatprep.subr.bf16.mxu0 %v6122
    %6540 = vmatpush1.bf16.msra.mxu0 %v6121
    %6541 = vmatprep.subr.bf16.mxu0 %v6128
    %6542 = vmatpush1.bf16.msra.mxu0 %v6127
    %6543 = vmatprep.subr.bf16.mxu0 %v6134
    %6544 = vmatpush1.bf16.msra.mxu0 %v6133
    %6545 = vmatprep.subr.bf16.mxu0 %v6140
    %6546 = vmatpush1.bf16.msra.mxu0 %v6139
    %6547 = vmatprep.mubr.bf16.mxu0 %v4671
    %6548 = vmatmul.mubr.bf16.gmra.mrb[0].mxu0 %v4670
    %v6549 = vpop.f32.mrb[0].mxu0
    %v6550 = vadd.f32 %v6509, %v6549
    %v6551 = vpop.f32.mrb[0].mxu0
    %v6552 = vadd.f32 %v6511, %v6551
    %v6553 = vpop.f32.mrb[0].mxu0
    %v6554 = vpop.f32.mrb[0].mxu0
    %6555 = vdwg.mxu0
    %6556 = vmatprep.subr.bf16.mxu0 %v5860
    %6557 = vmatpush1.bf16.msra.mxu0 %v5859
    %6558 = vmatprep.subr.bf16.mxu0 %v5866
    %6559 = vmatpush1.bf16.msra.mxu0 %v5865
    %6560 = vmatprep.subr.bf16.mxu0 %v5872
    %6561 = vmatpush1.bf16.msra.mxu0 %v5871
    %6562 = vmatprep.subr.bf16.mxu0 %v5878
    %6563 = vmatpush1.bf16.msra.mxu0 %v5877
    %6564 = vmatprep.subr.bf16.mxu0 %v5884
    %6565 = vmatpush1.bf16.msra.mxu0 %v5883
    %6566 = vmatprep.subr.bf16.mxu0 %v5890
    %6567 = vmatpush1.bf16.msra.mxu0 %v5889
    %6568 = vmatprep.subr.bf16.mxu0 %v5896
    %6569 = vmatpush1.bf16.msra.mxu0 %v5895
    %6570 = vmatprep.subr.bf16.mxu0 %v5902
    %6571 = vmatpush1.bf16.msra.mxu0 %v5901
    %6572 = vmatprep.subr.bf16.mxu0 %v5908
    %6573 = vmatpush1.bf16.msra.mxu0 %v5907
    %6574 = vmatprep.subr.bf16.mxu0 %v5914
    %6575 = vmatpush1.bf16.msra.mxu0 %v5913
    %6576 = vmatprep.subr.bf16.mxu0 %v5920
    %6577 = vmatpush1.bf16.msra.mxu0 %v5919
    %6578 = vmatprep.subr.bf16.mxu0 %v5926
    %6579 = vmatpush1.bf16.msra.mxu0 %v5925
    %6580 = vmatprep.subr.bf16.mxu0 %v5932
    %6581 = vmatpush1.bf16.msra.mxu0 %v5931
    %6582 = vmatprep.subr.bf16.mxu0 %v5938
    %6583 = vmatpush1.bf16.msra.mxu0 %v5937
    %6584 = vmatprep.subr.bf16.mxu0 %v5944
    %6585 = vmatpush1.bf16.msra.mxu0 %v5943
    %6586 = vmatprep.subr.bf16.mxu0 %v5950
    %6587 = vmatpush1.bf16.msra.mxu0 %v5949
    %6588 = vmatprep.mubr.bf16.mxu0 %v4667
    %6589 = vmatmul.mubr.bf16.gmra.mrb[0].mxu0 %v4666
    %v6590 = vpop.f32.mrb[0].mxu0
    %v6591 = vadd.f32 %v4974, %v6590
    %v6592 = vpop.f32.mrb[0].mxu0
    %v6593 = vadd.f32 %v4978, %v6592
    %v6594 = vpop.f32.mrb[0].mxu0
    %v6595 = vpop.f32.mrb[0].mxu0
    %6596 = vdwg.mxu0
    %6597 = vmatprep.subr.bf16.mxu0 %v5956
    %6598 = vmatpush1.bf16.msra.mxu0 %v5955
    %6599 = vmatprep.subr.bf16.mxu0 %v5962
    %6600 = vmatpush1.bf16.msra.mxu0 %v5961
    %6601 = vmatprep.subr.bf16.mxu0 %v5968
    %6602 = vmatpush1.bf16.msra.mxu0 %v5967
    %6603 = vmatprep.subr.bf16.mxu0 %v5974
    %6604 = vmatpush1.bf16.msra.mxu0 %v5973
    %6605 = vmatprep.subr.bf16.mxu0 %v5980
    %6606 = vmatpush1.bf16.msra.mxu0 %v5979
    %6607 = vmatprep.subr.bf16.mxu0 %v5986
    %6608 = vmatpush1.bf16.msra.mxu0 %v5985
    %6609 = vmatprep.subr.bf16.mxu0 %v5992
    %6610 = vmatpush1.bf16.msra.mxu0 %v5991
    %6611 = vmatprep.subr.bf16.mxu0 %v5998
    %6612 = vmatpush1.bf16.msra.mxu0 %v5997
    %6613 = vmatprep.subr.bf16.mxu0 %v6004
    %6614 = vmatpush1.bf16.msra.mxu0 %v6003
    %6615 = vmatprep.subr.bf16.mxu0 %v6010
    %6616 = vmatpush1.bf16.msra.mxu0 %v6009
    %6617 = vmatprep.subr.bf16.mxu0 %v6016
    %6618 = vmatpush1.bf16.msra.mxu0 %v6015
    %6619 = vmatprep.subr.bf16.mxu0 %v6022
    %6620 = vmatpush1.bf16.msra.mxu0 %v6021
    %6621 = vmatprep.subr.bf16.mxu0 %v6028
    %6622 = vmatpush1.bf16.msra.mxu0 %v6027
    %6623 = vmatprep.subr.bf16.mxu0 %v6034
    %6624 = vmatpush1.bf16.msra.mxu0 %v6033
    %6625 = vmatprep.subr.bf16.mxu0 %v6040
    %6626 = vmatpush1.bf16.msra.mxu0 %v6039
    %6627 = vmatprep.subr.bf16.mxu0 %v6046
    %6628 = vmatpush1.bf16.msra.mxu0 %v6045
    %6629 = vmatprep.mubr.bf16.mxu0 %v4669
    %6630 = vmatmul.mubr.bf16.gmra.mrb[0].mxu0 %v4668
    %v6631 = vpop.f32.mrb[0].mxu0
    %v6632 = vadd.f32 %v6591, %v6631
    %v6633 = vpop.f32.mrb[0].mxu0
    %v6634 = vadd.f32 %v6593, %v6633
    %v6635 = vpop.f32.mrb[0].mxu0
    %v6636 = vpop.f32.mrb[0].mxu0
    %6637 = vdwg.mxu0
    %6638 = vmatprep.subr.bf16.mxu0 %v6052
    %6639 = vmatpush1.bf16.msra.mxu0 %v6051
    %6640 = vmatprep.subr.bf16.mxu0 %v6058
    %6641 = vmatpush1.bf16.msra.mxu0 %v6057
    %6642 = vmatprep.subr.bf16.mxu0 %v6064
    %6643 = vmatpush1.bf16.msra.mxu0 %v6063
    %6644 = vmatprep.subr.bf16.mxu0 %v6070
    %6645 = vmatpush1.bf16.msra.mxu0 %v6069
    %6646 = vmatprep.subr.bf16.mxu0 %v6076
    %6647 = vmatpush1.bf16.msra.mxu0 %v6075
    %6648 = vmatprep.subr.bf16.mxu0 %v6082
    %6649 = vmatpush1.bf16.msra.mxu0 %v6081
    %6650 = vmatprep.subr.bf16.mxu0 %v6088
    %6651 = vmatpush1.bf16.msra.mxu0 %v6087
    %6652 = vmatprep.subr.bf16.mxu0 %v6094
    %6653 = vmatpush1.bf16.msra.mxu0 %v6093
    %6654 = vmatprep.subr.bf16.mxu0 %v6100
    %6655 = vmatpush1.bf16.msra.mxu0 %v6099
    %6656 = vmatprep.subr.bf16.mxu0 %v6106
    %6657 = vmatpush1.bf16.msra.mxu0 %v6105
    %6658 = vmatprep.subr.bf16.mxu0 %v6112
    %6659 = vmatpush1.bf16.msra.mxu0 %v6111
    %6660 = vmatprep.subr.bf16.mxu0 %v6118
    %6661 = vmatpush1.bf16.msra.mxu0 %v6117
    %6662 = vmatprep.subr.bf16.mxu0 %v6124
    %6663 = vmatpush1.bf16.msra.mxu0 %v6123
    %6664 = vmatprep.subr.bf16.mxu0 %v6130
    %6665 = vmatpush1.bf16.msra.mxu0 %v6129
    %6666 = vmatprep.subr.bf16.mxu0 %v6136
    %6667 = vmatpush1.bf16.msra.mxu0 %v6135
    %6668 = vmatprep.subr.bf16.mxu0 %v6142
    %6669 = vmatpush1.bf16.msra.mxu0 %v6141
    %6670 = vmatprep.mubr.bf16.mxu0 %v4671
    %6671 = vmatmul.mubr.bf16.gmra.mrb[0].mxu0 %v4670
    %v6672 = vpop.f32.mrb[0].mxu0
    %v6673 = vadd.f32 %v6632, %v6672
    %v6674 = vpop.f32.mrb[0].mxu0
    %v6675 = vadd.f32 %v6634, %v6674
    %v6676 = vpop.f32.mrb[0].mxu0
    %v6677 = vpop.f32.mrb[0].mxu0
    %6678 = vdwg.mxu0
    %6679 = vmatprep.subr.bf16.mxu0 %v5862
    %6680 = vmatpush1.bf16.msra.mxu0 %v5861
    %6681 = vmatprep.subr.bf16.mxu0 %v5868
    %6682 = vmatpush1.bf16.msra.mxu0 %v5867
    %6683 = vmatprep.subr.bf16.mxu0 %v5874
    %6684 = vmatpush1.bf16.msra.mxu0 %v5873
    %6685 = vmatprep.subr.bf16.mxu0 %v5880
    %6686 = vmatpush1.bf16.msra.mxu0 %v5879
    %6687 = vmatprep.subr.bf16.mxu0 %v5886
    %6688 = vmatpush1.bf16.msra.mxu0 %v5885
    %6689 = vmatprep.subr.bf16.mxu0 %v5892
    %6690 = vmatpush1.bf16.msra.mxu0 %v5891
    %6691 = vmatprep.subr.bf16.mxu0 %v5898
    %6692 = vmatpush1.bf16.msra.mxu0 %v5897
    %6693 = vmatprep.subr.bf16.mxu0 %v5904
    %6694 = vmatpush1.bf16.msra.mxu0 %v5903
    %6695 = vmatprep.subr.bf16.mxu0 %v5910
    %6696 = vmatpush1.bf16.msra.mxu0 %v5909
    %6697 = vmatprep.subr.bf16.mxu0 %v5916
    %6698 = vmatpush1.bf16.msra.mxu0 %v5915
    %6699 = vmatprep.subr.bf16.mxu0 %v5922
    %6700 = vmatpush1.bf16.msra.mxu0 %v5921
    %6701 = vmatprep.subr.bf16.mxu0 %v5928
    %6702 = vmatpush1.bf16.msra.mxu0 %v5927
    %6703 = vmatprep.subr.bf16.mxu0 %v5934
    %6704 = vmatpush1.bf16.msra.mxu0 %v5933
    %6705 = vmatprep.subr.bf16.mxu0 %v5940
    %6706 = vmatpush1.bf16.msra.mxu0 %v5939
    %6707 = vmatprep.subr.bf16.mxu0 %v5946
    %6708 = vmatpush1.bf16.msra.mxu0 %v5945
    %6709 = vmatprep.subr.bf16.mxu0 %v5952
    %6710 = vmatpush1.bf16.msra.mxu0 %v5951
    %6711 = vmatprep.mubr.bf16.mxu0 %v4667
    %6712 = vmatmul.mubr.bf16.gmra.mrb[0].mxu0 %v4666
    %v6713 = vpop.f32.mrb[0].mxu0
    %v6714 = vadd.f32 %v4982, %v6713
    %v6715 = vpop.f32.mrb[0].mxu0
    %v6716 = vadd.f32 %v4986, %v6715
    %v6717 = vpop.f32.mrb[0].mxu0
    %v6718 = vpop.f32.mrb[0].mxu0
    %6719 = vdwg.mxu0
    %6720 = vmatprep.subr.bf16.mxu0 %v5958
    %6721 = vmatpush1.bf16.msra.mxu0 %v5957
    %6722 = vmatprep.subr.bf16.mxu0 %v5964
    %6723 = vmatpush1.bf16.msra.mxu0 %v5963
    %6724 = vmatprep.subr.bf16.mxu0 %v5970
    %6725 = vmatpush1.bf16.msra.mxu0 %v5969
    %6726 = vmatprep.subr.bf16.mxu0 %v5976
    %6727 = vmatpush1.bf16.msra.mxu0 %v5975
    %6728 = vmatprep.subr.bf16.mxu0 %v5982
    %6729 = vmatpush1.bf16.msra.mxu0 %v5981
    %6730 = vmatprep.subr.bf16.mxu0 %v5988
    %6731 = vmatpush1.bf16.msra.mxu0 %v5987
    %6732 = vmatprep.subr.bf16.mxu0 %v5994
    %6733 = vmatpush1.bf16.msra.mxu0 %v5993
    %6734 = vmatprep.subr.bf16.mxu0 %v6000
    %6735 = vmatpush1.bf16.msra.mxu0 %v5999
    %6736 = vmatprep.subr.bf16.mxu0 %v6006
    %6737 = vmatpush1.bf16.msra.mxu0 %v6005
    %6738 = vmatprep.subr.bf16.mxu0 %v6012
    %6739 = vmatpush1.bf16.msra.mxu0 %v6011
    %6740 = vmatprep.subr.bf16.mxu0 %v6018
    %6741 = vmatpush1.bf16.msra.mxu0 %v6017
    %6742 = vmatprep.subr.bf16.mxu0 %v6024
    %6743 = vmatpush1.bf16.msra.mxu0 %v6023
    %6744 = vmatprep.subr.bf16.mxu0 %v6030
    %6745 = vmatpush1.bf16.msra.mxu0 %v6029
    %6746 = vmatprep.subr.bf16.mxu0 %v6036
    %6747 = vmatpush1.bf16.msra.mxu0 %v6035
    %6748 = vmatprep.subr.bf16.mxu0 %v6042
    %6749 = vmatpush1.bf16.msra.mxu0 %v6041
    %6750 = vmatprep.subr.bf16.mxu0 %v6048
    %6751 = vmatpush1.bf16.msra.mxu0 %v6047
    %6752 = vmatprep.mubr.bf16.mxu0 %v4669
    %6753 = vmatmul.mubr.bf16.gmra.mrb[0].mxu0 %v4668
    %v6754 = vpop.f32.mrb[0].mxu0
    %v6755 = vadd.f32 %v6714, %v6754
    %v6756 = vpop.f32.mrb[0].mxu0
    %v6757 = vadd.f32 %v6716, %v6756
    %v6758 = vpop.f32.mrb[0].mxu0
    %v6759 = vpop.f32.mrb[0].mxu0
    %6760 = vdwg.mxu0
    %6761 = vmatprep.subr.bf16.mxu0 %v6054
    %6762 = vmatpush1.bf16.msra.mxu0 %v6053
    %6763 = vmatprep.subr.bf16.mxu0 %v6060
    %6764 = vmatpush1.bf16.msra.mxu0 %v6059
    %6765 = vmatprep.subr.bf16.mxu0 %v6066
    %6766 = vmatpush1.bf16.msra.mxu0 %v6065
    %6767 = vmatprep.subr.bf16.mxu0 %v6072
    %6768 = vmatpush1.bf16.msra.mxu0 %v6071
    %6769 = vmatprep.subr.bf16.mxu0 %v6078
    %6770 = vmatpush1.bf16.msra.mxu0 %v6077
    %6771 = vmatprep.subr.bf16.mxu0 %v6084
    %6772 = vmatpush1.bf16.msra.mxu0 %v6083
    %6773 = vmatprep.subr.bf16.mxu0 %v6090
    %6774 = vmatpush1.bf16.msra.mxu0 %v6089
    %6775 = vmatprep.subr.bf16.mxu0 %v6096
    %6776 = vmatpush1.bf16.msra.mxu0 %v6095
    %6777 = vmatprep.subr.bf16.mxu0 %v6102
    %6778 = vmatpush1.bf16.msra.mxu0 %v6101
    %6779 = vmatprep.subr.bf16.mxu0 %v6108
    %6780 = vmatpush1.bf16.msra.mxu0 %v6107
    %6781 = vmatprep.subr.bf16.mxu0 %v6114
    %6782 = vmatpush1.bf16.msra.mxu0 %v6113
    %6783 = vmatprep.subr.bf16.mxu0 %v6120
    %6784 = vmatpush1.bf16.msra.mxu0 %v6119
    %6785 = vmatprep.subr.bf16.mxu0 %v6126
    %6786 = vmatpush1.bf16.msra.mxu0 %v6125
    %6787 = vmatprep.subr.bf16.mxu0 %v6132
    %6788 = vmatpush1.bf16.msra.mxu0 %v6131
    %6789 = vmatprep.subr.bf16.mxu0 %v6138
    %6790 = vmatpush1.bf16.msra.mxu0 %v6137
    %6791 = vmatprep.subr.bf16.mxu0 %v6144
    %6792 = vmatpush1.bf16.msra.mxu0 %v6143
    %6793 = vmatprep.mubr.bf16.mxu0 %v4671
    %6794 = vmatmul.mubr.bf16.gmra.mrb[0].mxu0 %v4670
    %v6795 = vpop.f32.mrb[0].mxu0
    %v6796 = vadd.f32 %v6755, %v6795
    %v6797 = vpop.f32.mrb[0].mxu0
    %v6798 = vadd.f32 %v6757, %v6797
    %v6799 = vpop.f32.mrb[0].mxu0
    %v6800 = vpop.f32.mrb[0].mxu0
    %6801 = vdwg.mxu0
    %v6802 = vmax.f32 %v6550, 0.0
    %v6803 = vmax.f32 %v6552, 0.0
    %v6804 = vmax.f32 %v6673, 0.0
    %v6805 = vmax.f32 %v6675, 0.0
    %v6806 = vmax.f32 %v6796, 0.0
    %v6807 = vmax.f32 %v6798, 0.0
    %s6808 = scalar_lea.vmem [#allocation8], 60
    %v6809 = vld [vmem:[%s6808] sm:$0x3f]
    %s6810 = scalar_lea.vmem [#allocation8], 66
    %v6811 = vld [vmem:[%s6810] sm:$0x3f]
    %v6812 = vsel %vm288, %v6802, 0.0
    %v6813 = vsel %vm288, %v6803, 0.0
    %v6814 = vadd.f32 %v6812, %v6813
    %v6815 = vsel %vm288, %v6804, 0.0
    %v6816 = vadd.f32 %v6814, %v6815
    %v6817 = vsel %vm288, %v6805, 0.0
    %v6818 = vadd.f32 %v6816, %v6817
    %v6819 = vsel %vm288, %v6806, 0.0
    %v6820 = vadd.f32 %v6818, %v6819
    %v6821 = vsel %vm288, %v6807, 0.0
    %v6822 = vadd.f32 %v6820, %v6821
    %6823 = vadd.xlane.f32.xlu0 %v6822
    %v6824 = vpop.xlane.xlu0 %6823
    %v6825 = vmul.f32 %v6824, %v648
    %v6826 = vsub.f32 %v6802, %v6825
    %v6827 = vsub.f32 %v6803, %v6825
    %v6828 = vsub.f32 %v6804, %v6825
    %v6829 = vsub.f32 %v6805, %v6825
    %v6830 = vsub.f32 %v6806, %v6825
    %v6831 = vsub.f32 %v6807, %v6825
    %v6832 = vsel %vm657, %v6826, 0.0
    %v6833 = vsel %vm658, %v6827, 0.0
    %v6834 = vsel %vm659, %v6828, 0.0
    %v6835 = vsel %vm660, %v6829, 0.0
    %v6836 = vsel %vm661, %v6830, 0.0
    %v6837 = vsel %vm662, %v6831, 0.0
    %v6838 = vmul.f32 %v6832, %v6832
    %v6839 = vmul.f32 %v6833, %v6833
    %v6840 = vmul.f32 %v6834, %v6834
    %v6841 = vmul.f32 %v6835, %v6835
    %v6842 = vmul.f32 %v6836, %v6836
    %v6843 = vmul.f32 %v6837, %v6837
    %v6844 = vsel %vm288, %v6838, 0.0
    %v6845 = vsel %vm288, %v6839, 0.0
    %v6846 = vadd.f32 %v6844, %v6845
    %v6847 = vsel %vm288, %v6840, 0.0
    %v6848 = vadd.f32 %v6846, %v6847
    %v6849 = vsel %vm288, %v6841, 0.0
    %v6850 = vadd.f32 %v6848, %v6849
    %v6851 = vsel %vm288, %v6842, 0.0
    %v6852 = vadd.f32 %v6850, %v6851
    %v6853 = vsel %vm288, %v6843, 0.0
    %v6854 = vadd.f32 %v6852, %v6853
    %6855 = vadd.xlane.f32.xlu0 %v6854
    %v6856 = vpop.xlane.xlu0 %6855
    %v6857 = vmul.f32 %v6856, %v648
    %v6858 = vadd.f32 %v6857, 1e-05
    %v6859 = vrsqrt.pop %v6858
    %v6860 = vmul.f32 %v6832, %v6859
    %v6861 = vmul.f32 %v6833, %v6859
    %v6862 = vmul.f32 %v6834, %v6859
    %v6863 = vmul.f32 %v6835, %v6859
    %v6864 = vmul.f32 %v6836, %v6859
    %v6865 = vmul.f32 %v6837, %v6859
    %v6867 = vlaneseq
    %v6868 = vshrl.u32 %v6867, 7
    %v6869 = vsub.s32 0, %v6868
    %v6870 = vrot.slane %v6809, %v6869
    %v6871 = vlaneseq
    %v6872 = vshrl.u32 %v6871, 7
    %v6873 = vsub.s32 1, %v6872
    %v6874 = vrot.slane %v6809, %v6873
    %v6875 = vlaneseq
    %v6876 = vshrl.u32 %v6875, 7
    %v6877 = vsub.s32 2, %v6876
    %v6878 = vrot.slane %v6809, %v6877
    %v6879 = vlaneseq
    %v6880 = vshrl.u32 %v6879, 7
    %v6881 = vsub.s32 3, %v6880
    %v6882 = vrot.slane %v6809, %v6881
    %v6883 = vlaneseq
    %v6884 = vshrl.u32 %v6883, 7
    %v6885 = vsub.s32 4, %v6884
    %v6886 = vrot.slane %v6809, %v6885
    %v6887 = vlaneseq
    %v6888 = vshrl.u32 %v6887, 7
    %v6889 = vsub.s32 5, %v6888
    %v6890 = vrot.slane %v6809, %v6889
    %v6897 = vmul.f32 %v6860, %v6870
    %v6898 = vmul.f32 %v6861, %v6874
    %v6899 = vmul.f32 %v6862, %v6878
    %v6900 = vmul.f32 %v6863, %v6882
    %v6901 = vmul.f32 %v6864, %v6886
    %v6902 = vmul.f32 %v6865, %v6890
    %v6904 = vlaneseq
    %v6905 = vshrl.u32 %v6904, 7
    %v6906 = vsub.s32 0, %v6905
    %v6907 = vrot.slane %v6811, %v6906
    %v6908 = vlaneseq
    %v6909 = vshrl.u32 %v6908, 7
    %v6910 = vsub.s32 1, %v6909
    %v6911 = vrot.slane %v6811, %v6910
    %v6912 = vlaneseq
    %v6913 = vshrl.u32 %v6912, 7
    %v6914 = vsub.s32 2, %v6913
    %v6915 = vrot.slane %v6811, %v6914
    %v6916 = vlaneseq
    %v6917 = vshrl.u32 %v6916, 7
    %v6918 = vsub.s32 3, %v6917
    %v6919 = vrot.slane %v6811, %v6918
    %v6920 = vlaneseq
    %v6921 = vshrl.u32 %v6920, 7
    %v6922 = vsub.s32 4, %v6921
    %v6923 = vrot.slane %v6811, %v6922
    %v6924 = vlaneseq
    %v6925 = vshrl.u32 %v6924, 7
    %v6926 = vsub.s32 5, %v6925
    %v6927 = vrot.slane %v6811, %v6926
    %v6934 = vadd.f32 %v6897, %v6907
    %v6935 = vadd.f32 %v6898, %v6911
    %v6936 = vadd.f32 %v6899, %v6915
    %v6937 = vadd.f32 %v6900, %v6919
    %v6938 = vadd.f32 %v6901, %v6923
    %v6939 = vadd.f32 %v6902, %v6927
    %v6940 = vpack.c.bf16 %v6934, %v6934
    %v6941 = vpack.c.bf16 %v6935, %v6935
    %v6942 = vpack.c.bf16 %v6936, %v6936
    %v6943 = vpack.c.bf16 %v6937, %v6937
    %v6944 = vpack.c.bf16 %v6938, %v6938
    %v6945 = vpack.c.bf16 %v6939, %v6939
    %v6946 = vld [vmem:[%s13] sm:$0xf]
    %v6947 = vld [vmem:[%s13 + $0x4] sm:$0xf]
    %v6948 = vld [vmem:[%s13 + $0x8] sm:$0xf]
    %v6949 = vld [vmem:[%s13 + $0xc] sm:$0xf]
    %v6950 = vld [vmem:[%s13 + $0x10] sm:$0xf]
    %v6951 = vld [vmem:[%s13 + $0x14] sm:$0xf]
    %v6952 = vld [vmem:[%s13 + $0x18] sm:$0xf]
    %v6953 = vld [vmem:[%s13 + $0x1c] sm:$0xf]
    %v6954 = vld [vmem:[%s13 + $0x20] sm:$0xf]
    %v6955 = vld [vmem:[%s13 + $0x24] sm:$0xf]
    %v6956 = vld [vmem:[%s13 + $0x28] sm:$0xf]
    %v6957 = vld [vmem:[%s13 + $0x2c] sm:$0xf]
    %v6958 = vld [vmem:[%s13 + $0x30] sm:$0xf]
    %v6959 = vld [vmem:[%s13 + $0x34] sm:$0xf]
    %v6960 = vld [vmem:[%s13 + $0x38] sm:$0xf]
    %v6961 = vld [vmem:[%s13 + $0x3c] sm:$0xf]
    %v6962 = vld [vmem:[%s13 + $0x40] sm:$0xf]
    %v6963 = vld [vmem:[%s13 + $0x44] sm:$0xf]
    %v6964 = vld [vmem:[%s13 + $0x48] sm:$0xf]
    %v6965 = vld [vmem:[%s13 + $0x4c] sm:$0xf]
    %v6966 = vld [vmem:[%s13 + $0x50] sm:$0xf]
    %v6967 = vld [vmem:[%s13 + $0x54] sm:$0xf]
    %v6968 = vld [vmem:[%s13 + $0x58] sm:$0xf]
    %v6969 = vld [vmem:[%s13 + $0x5c] sm:$0xf]
    %v6970 = vld [vmem:[%s13 + $0x60] sm:$0xf]
    %v6971 = vld [vmem:[%s13 + $0x64] sm:$0xf]
    %v6972 = vld [vmem:[%s13 + $0x68] sm:$0xf]
    %v6973 = vld [vmem:[%s13 + $0x6c] sm:$0xf]
    %v6974 = vld [vmem:[%s13 + $0x70] sm:$0xf]
    %v6975 = vld [vmem:[%s13 + $0x74] sm:$0xf]
    %v6976 = vld [vmem:[%s13 + $0x78] sm:$0xf]
    %v6977 = vld [vmem:[%s13 + $0x7c] sm:$0xf]
    %v6978 = vld [vmem:[%s13 + $0x80] sm:$0xf]
    %v6979 = vld [vmem:[%s13 + $0x84] sm:$0xf]
    %v6980 = vld [vmem:[%s13 + $0x88] sm:$0xf]
    %v6981 = vld [vmem:[%s13 + $0x8c] sm:$0xf]
    %v6982 = vld [vmem:[%s13 + $0x90] sm:$0xf]
    %v6983 = vld [vmem:[%s13 + $0x94] sm:$0xf]
    %v6984 = vld [vmem:[%s13 + $0x98] sm:$0xf]
    %v6985 = vld [vmem:[%s13 + $0x9c] sm:$0xf]
    %v6986 = vld [vmem:[%s13 + $0xa0] sm:$0xf]
    %v6987 = vld [vmem:[%s13 + $0xa4] sm:$0xf]
    %v6988 = vld [vmem:[%s13 + $0xa8] sm:$0xf]
    %v6989 = vld [vmem:[%s13 + $0xac] sm:$0xf]
    %v6990 = vld [vmem:[%s13 + $0xb0] sm:$0xf]
    %v6991 = vld [vmem:[%s13 + $0xb4] sm:$0xf]
    %v6992 = vld [vmem:[%s13 + $0xb8] sm:$0xf]
    %v6993 = vld [vmem:[%s13 + $0xbc] sm:$0xf]
    %v6994 = vld [vmem:[%s13 + $0xc0] sm:$0xf]
    %v6995 = vld [vmem:[%s13 + $0xc4] sm:$0xf]
    %v6996 = vld [vmem:[%s13 + $0xc8] sm:$0xf]
    %v6997 = vld [vmem:[%s13 + $0xcc] sm:$0xf]
    %v6998 = vld [vmem:[%s13 + $0xd0] sm:$0xf]
    %v6999 = vld [vmem:[%s13 + $0xd4] sm:$0xf]
    %v7000 = vld [vmem:[%s13 + $0xd8] sm:$0xf]
    %v7001 = vld [vmem:[%s13 + $0xdc] sm:$0xf]
    %v7002 = vld [vmem:[%s13 + $0xe0] sm:$0xf]
    %v7003 = vld [vmem:[%s13 + $0xe4] sm:$0xf]
    %v7004 = vld [vmem:[%s13 + $0xe8] sm:$0xf]
    %v7005 = vld [vmem:[%s13 + $0xec] sm:$0xf]
    %v7006 = vld [vmem:[%s13 + $0xf0] sm:$0xf]
    %v7007 = vld [vmem:[%s13 + $0xf4] sm:$0xf]
    %v7008 = vld [vmem:[%s13 + $0xf8] sm:$0xf]
    %v7009 = vld [vmem:[%s13 + $0xfc] sm:$0xf]
    %v7010 = vld [vmem:[%s13 + $0x100] sm:$0xf]
    %v7011 = vld [vmem:[%s13 + $0x104] sm:$0xf]
    %v7012 = vld [vmem:[%s13 + $0x108] sm:$0xf]
    %v7013 = vld [vmem:[%s13 + $0x10c] sm:$0xf]
    %v7014 = vld [vmem:[%s13 + $0x110] sm:$0xf]
    %v7015 = vld [vmem:[%s13 + $0x114] sm:$0xf]
    %v7016 = vld [vmem:[%s13 + $0x118] sm:$0xf]
    %v7017 = vld [vmem:[%s13 + $0x11c] sm:$0xf]
    %v7018 = vld [vmem:[%s13 + $0x120] sm:$0xf]
    %v7019 = vld [vmem:[%s13 + $0x124] sm:$0xf]
    %v7020 = vld [vmem:[%s13 + $0x128] sm:$0xf]
    %v7021 = vld [vmem:[%s13 + $0x12c] sm:$0xf]
    %v7022 = vld [vmem:[%s13 + $0x130] sm:$0xf]
    %v7023 = vld [vmem:[%s13 + $0x134] sm:$0xf]
    %v7024 = vld [vmem:[%s13 + $0x138] sm:$0xf]
    %v7025 = vld [vmem:[%s13 + $0x13c] sm:$0xf]
    %v7026 = vld [vmem:[%s13 + $0x140] sm:$0xf]
    %v7027 = vld [vmem:[%s13 + $0x144] sm:$0xf]
    %v7028 = vld [vmem:[%s13 + $0x148] sm:$0xf]
    %v7029 = vld [vmem:[%s13 + $0x14c] sm:$0xf]
    %v7030 = vld [vmem:[%s13 + $0x150] sm:$0xf]
    %v7031 = vld [vmem:[%s13 + $0x154] sm:$0xf]
    %v7032 = vld [vmem:[%s13 + $0x158] sm:$0xf]
    %v7033 = vld [vmem:[%s13 + $0x15c] sm:$0xf]
    %v7034 = vld [vmem:[%s13 + $0x160] sm:$0xf]
    %v7035 = vld [vmem:[%s13 + $0x164] sm:$0xf]
    %v7036 = vld [vmem:[%s13 + $0x168] sm:$0xf]
    %v7037 = vld [vmem:[%s13 + $0x16c] sm:$0xf]
    %v7038 = vld [vmem:[%s13 + $0x170] sm:$0xf]
    %v7039 = vld [vmem:[%s13 + $0x174] sm:$0xf]
    %v7040 = vld [vmem:[%s13 + $0x178] sm:$0xf]
    %v7041 = vld [vmem:[%s13 + $0x17c] sm:$0xf]
    %s7042 = scalar_lea.vmem [#allocation10], 10
    %v7043 = vld [vmem:[%s7042] sm:$0x1]
    %v7045 = vlaneseq
    %v7046 = vshrl.u32 %v7045, 7
    %v7047 = vsub.s32 0, %v7046
    %v7048 = vrot.slane %v7043, %v7047
    %v7146 = vunpack.c.l.b16 %v6946
    %v7147 = vunpack.c.l.b16 %v6947
    %v7148 = vunpack.c.l.b16 %v6948
    %v7149 = vunpack.c.l.b16 %v6949
    %v7150 = vunpack.c.l.b16 %v6950
    %v7151 = vunpack.c.l.b16 %v6951
    %v7152 = vunpack.c.l.b16 %v6952
    %v7153 = vunpack.c.l.b16 %v6953
    %v7154 = vunpack.c.l.b16 %v6954
    %v7155 = vunpack.c.l.b16 %v6955
    %v7156 = vunpack.c.l.b16 %v6956
    %v7157 = vunpack.c.l.b16 %v6957
    %v7158 = vunpack.c.l.b16 %v6958
    %v7159 = vunpack.c.l.b16 %v6959
    %v7160 = vunpack.c.l.b16 %v6960
    %v7161 = vunpack.c.l.b16 %v6961
    %v7162 = vunpack.c.l.b16 %v6962
    %v7163 = vunpack.c.l.b16 %v6963
    %v7164 = vunpack.c.l.b16 %v6964
    %v7165 = vunpack.c.l.b16 %v6965
    %v7166 = vunpack.c.l.b16 %v6966
    %v7167 = vunpack.c.l.b16 %v6967
    %v7168 = vunpack.c.l.b16 %v6968
    %v7169 = vunpack.c.l.b16 %v6969
    %v7170 = vunpack.c.l.b16 %v6970
    %v7171 = vunpack.c.l.b16 %v6971
    %v7172 = vunpack.c.l.b16 %v6972
    %v7173 = vunpack.c.l.b16 %v6973
    %v7174 = vunpack.c.l.b16 %v6974
    %v7175 = vunpack.c.l.b16 %v6975
    %v7176 = vunpack.c.l.b16 %v6976
    %v7177 = vunpack.c.l.b16 %v6977
    %v7178 = vunpack.c.l.b16 %v6978
    %v7179 = vunpack.c.l.b16 %v6979
    %v7180 = vunpack.c.l.b16 %v6980
    %v7181 = vunpack.c.l.b16 %v6981
    %v7182 = vunpack.c.l.b16 %v6982
    %v7183 = vunpack.c.l.b16 %v6983
    %v7184 = vunpack.c.l.b16 %v6984
    %v7185 = vunpack.c.l.b16 %v6985
    %v7186 = vunpack.c.l.b16 %v6986
    %v7187 = vunpack.c.l.b16 %v6987
    %v7188 = vunpack.c.l.b16 %v6988
    %v7189 = vunpack.c.l.b16 %v6989
    %v7190 = vunpack.c.l.b16 %v6990
    %v7191 = vunpack.c.l.b16 %v6991
    %v7192 = vunpack.c.l.b16 %v6992
    %v7193 = vunpack.c.l.b16 %v6993
    %v7194 = vunpack.c.l.b16 %v6994
    %v7195 = vunpack.c.l.b16 %v6995
    %v7196 = vunpack.c.l.b16 %v6996
    %v7197 = vunpack.c.l.b16 %v6997
    %v7198 = vunpack.c.l.b16 %v6998
    %v7199 = vunpack.c.l.b16 %v6999
    %v7200 = vunpack.c.l.b16 %v7000
    %v7201 = vunpack.c.l.b16 %v7001
    %v7202 = vunpack.c.l.b16 %v7002
    %v7203 = vunpack.c.l.b16 %v7003
    %v7204 = vunpack.c.l.b16 %v7004
    %v7205 = vunpack.c.l.b16 %v7005
    %v7206 = vunpack.c.l.b16 %v7006
    %v7207 = vunpack.c.l.b16 %v7007
    %v7208 = vunpack.c.l.b16 %v7008
    %v7209 = vunpack.c.l.b16 %v7009
    %v7210 = vunpack.c.l.b16 %v7010
    %v7211 = vunpack.c.l.b16 %v7011
    %v7212 = vunpack.c.l.b16 %v7012
    %v7213 = vunpack.c.l.b16 %v7013
    %v7214 = vunpack.c.l.b16 %v7014
    %v7215 = vunpack.c.l.b16 %v7015
    %v7216 = vunpack.c.l.b16 %v7016
    %v7217 = vunpack.c.l.b16 %v7017
    %v7218 = vunpack.c.l.b16 %v7018
    %v7219 = vunpack.c.l.b16 %v7019
    %v7220 = vunpack.c.l.b16 %v7020
    %v7221 = vunpack.c.l.b16 %v7021
    %v7222 = vunpack.c.l.b16 %v7022
    %v7223 = vunpack.c.l.b16 %v7023
    %v7224 = vunpack.c.l.b16 %v7024
    %v7225 = vunpack.c.l.b16 %v7025
    %v7226 = vunpack.c.l.b16 %v7026
    %v7227 = vunpack.c.l.b16 %v7027
    %v7228 = vunpack.c.l.b16 %v7028
    %v7229 = vunpack.c.l.b16 %v7029
    %v7230 = vunpack.c.l.b16 %v7030
    %v7231 = vunpack.c.l.b16 %v7031
    %v7232 = vunpack.c.l.b16 %v7032
    %v7233 = vunpack.c.l.b16 %v7033
    %v7234 = vunpack.c.l.b16 %v7034
    %v7235 = vunpack.c.l.b16 %v7035
    %v7236 = vunpack.c.l.b16 %v7036
    %v7237 = vunpack.c.l.b16 %v7037
    %v7238 = vunpack.c.l.b16 %v7038
    %v7239 = vunpack.c.l.b16 %v7039
    %v7240 = vunpack.c.l.b16 %v7040
    %v7241 = vunpack.c.l.b16 %v7041
    %v7242 = vpack.c.b16 %v7147, %v7146
    %v7243 = vpack.c.b16 %v7149, %v7148
    %v7244 = vpack.c.b16 %v7151, %v7150
    %v7245 = vpack.c.b16 %v7153, %v7152
    %v7246 = vpack.c.b16 %v7155, %v7154
    %v7247 = vpack.c.b16 %v7157, %v7156
    %v7248 = vpack.c.b16 %v7159, %v7158
    %v7249 = vpack.c.b16 %v7161, %v7160
    %v7250 = vpack.c.b16 %v7163, %v7162
    %v7251 = vpack.c.b16 %v7165, %v7164
    %v7252 = vpack.c.b16 %v7167, %v7166
    %v7253 = vpack.c.b16 %v7169, %v7168
    %v7254 = vpack.c.b16 %v7171, %v7170
    %v7255 = vpack.c.b16 %v7173, %v7172
    %v7256 = vpack.c.b16 %v7175, %v7174
    %v7257 = vpack.c.b16 %v7177, %v7176
    %v7258 = vpack.c.b16 %v7179, %v7178
    %v7259 = vpack.c.b16 %v7181, %v7180
    %v7260 = vpack.c.b16 %v7183, %v7182
    %v7261 = vpack.c.b16 %v7185, %v7184
    %v7262 = vpack.c.b16 %v7187, %v7186
    %v7263 = vpack.c.b16 %v7189, %v7188
    %v7264 = vpack.c.b16 %v7191, %v7190
    %v7265 = vpack.c.b16 %v7193, %v7192
    %v7266 = vpack.c.b16 %v7195, %v7194
    %v7267 = vpack.c.b16 %v7197, %v7196
    %v7268 = vpack.c.b16 %v7199, %v7198
    %v7269 = vpack.c.b16 %v7201, %v7200
    %v7270 = vpack.c.b16 %v7203, %v7202
    %v7271 = vpack.c.b16 %v7205, %v7204
    %v7272 = vpack.c.b16 %v7207, %v7206
    %v7273 = vpack.c.b16 %v7209, %v7208
    %v7274 = vpack.c.b16 %v7211, %v7210
    %v7275 = vpack.c.b16 %v7213, %v7212
    %v7276 = vpack.c.b16 %v7215, %v7214
    %v7277 = vpack.c.b16 %v7217, %v7216
    %v7278 = vpack.c.b16 %v7219, %v7218
    %v7279 = vpack.c.b16 %v7221, %v7220
    %v7280 = vpack.c.b16 %v7223, %v7222
    %v7281 = vpack.c.b16 %v7225, %v7224
    %v7282 = vpack.c.b16 %v7227, %v7226
    %v7283 = vpack.c.b16 %v7229, %v7228
    %v7284 = vpack.c.b16 %v7231, %v7230
    %v7285 = vpack.c.b16 %v7233, %v7232
    %v7286 = vpack.c.b16 %v7235, %v7234
    %v7287 = vpack.c.b16 %v7237, %v7236
    %v7288 = vpack.c.b16 %v7239, %v7238
    %v7289 = vpack.c.b16 %v7241, %v7240
    %7338 = vmatprep.subr.bf16.mxu0 0
    %7339 = vmatpush1.bf16.msra.mxu0 %v7242
    %7340 = vmatprep.subr.bf16.mxu0 0
    %7341 = vmatpush1.bf16.msra.mxu0 %v7243
    %7342 = vmatprep.subr.bf16.mxu0 0
    %7343 = vmatpush1.bf16.msra.mxu0 %v7244
    %7344 = vmatprep.subr.bf16.mxu0 0
    %7345 = vmatpush1.bf16.msra.mxu0 %v7245
    %7346 = vmatprep.subr.bf16.mxu0 0
    %7347 = vmatpush1.bf16.msra.mxu0 %v7246
    %7348 = vmatprep.subr.bf16.mxu0 0
    %7349 = vmatpush1.bf16.msra.mxu0 %v7247
    %7350 = vmatprep.subr.bf16.mxu0 0
    %7351 = vmatpush1.bf16.msra.mxu0 %v7248
    %7352 = vmatprep.subr.bf16.mxu0 0
    %7353 = vmatpush1.bf16.msra.mxu0 %v7249
    %7354 = vmatprep.subr.bf16.mxu0 0
    %7355 = vmatpush1.bf16.msra.mxu0 %v7250
    %7356 = vmatprep.subr.bf16.mxu0 0
    %7357 = vmatpush1.bf16.msra.mxu0 %v7251
    %7358 = vmatprep.subr.bf16.mxu0 0
    %7359 = vmatpush1.bf16.msra.mxu0 %v7252
    %7360 = vmatprep.subr.bf16.mxu0 0
    %7361 = vmatpush1.bf16.msra.mxu0 %v7253
    %7362 = vmatprep.subr.bf16.mxu0 0
    %7363 = vmatpush1.bf16.msra.mxu0 %v7254
    %7364 = vmatprep.subr.bf16.mxu0 0
    %7365 = vmatpush1.bf16.msra.mxu0 %v7255
    %7366 = vmatprep.subr.bf16.mxu0 0
    %7367 = vmatpush1.bf16.msra.mxu0 %v7256
    %7368 = vmatprep.subr.bf16.mxu0 0
    %7369 = vmatpush1.bf16.msra.mxu0 %v7257
    %7370 = vmatprep.mubr.bf16.mxu0 %v6941
    %7371 = vmatmul.mubr.bf16.gmra.mrb[0].mxu0 %v6940
    %v7372 = vpop.f32.mrb[0].mxu0
    %v7373 = vadd.f32 %v7048, %v7372
    %v7374 = vpop.f32.mrb[0].mxu0
    %v7375 = vpop.f32.mrb[0].mxu0
    %v7376 = vpop.f32.mrb[0].mxu0
    %7377 = vdwg.mxu0
    %7378 = vmatprep.subr.bf16.mxu0 0
    %7379 = vmatpush1.bf16.msra.mxu0 %v7258
    %7380 = vmatprep.subr.bf16.mxu0 0
    %7381 = vmatpush1.bf16.msra.mxu0 %v7259
    %7382 = vmatprep.subr.bf16.mxu0 0
    %7383 = vmatpush1.bf16.msra.mxu0 %v7260
    %7384 = vmatprep.subr.bf16.mxu0 0
    %7385 = vmatpush1.bf16.msra.mxu0 %v7261
    %7386 = vmatprep.subr.bf16.mxu0 0
    %7387 = vmatpush1.bf16.msra.mxu0 %v7262
    %7388 = vmatprep.subr.bf16.mxu0 0
    %7389 = vmatpush1.bf16.msra.mxu0 %v7263
    %7390 = vmatprep.subr.bf16.mxu0 0
    %7391 = vmatpush1.bf16.msra.mxu0 %v7264
    %7392 = vmatprep.subr.bf16.mxu0 0
    %7393 = vmatpush1.bf16.msra.mxu0 %v7265
    %7394 = vmatprep.subr.bf16.mxu0 0
    %7395 = vmatpush1.bf16.msra.mxu0 %v7266
    %7396 = vmatprep.subr.bf16.mxu0 0
    %7397 = vmatpush1.bf16.msra.mxu0 %v7267
    %7398 = vmatprep.subr.bf16.mxu0 0
    %7399 = vmatpush1.bf16.msra.mxu0 %v7268
    %7400 = vmatprep.subr.bf16.mxu0 0
    %7401 = vmatpush1.bf16.msra.mxu0 %v7269
    %7402 = vmatprep.subr.bf16.mxu0 0
    %7403 = vmatpush1.bf16.msra.mxu0 %v7270
    %7404 = vmatprep.subr.bf16.mxu0 0
    %7405 = vmatpush1.bf16.msra.mxu0 %v7271
    %7406 = vmatprep.subr.bf16.mxu0 0
    %7407 = vmatpush1.bf16.msra.mxu0 %v7272
    %7408 = vmatprep.subr.bf16.mxu0 0
    %7409 = vmatpush1.bf16.msra.mxu0 %v7273
    %7410 = vmatprep.mubr.bf16.mxu0 %v6943
    %7411 = vmatmul.mubr.bf16.gmra.mrb[0].mxu0 %v6942
    %v7412 = vpop.f32.mrb[0].mxu0
    %v7413 = vadd.f32 %v7373, %v7412
    %v7414 = vpop.f32.mrb[0].mxu0
    %v7415 = vpop.f32.mrb[0].mxu0
    %v7416 = vpop.f32.mrb[0].mxu0
    %7417 = vdwg.mxu0
    %7418 = vmatprep.subr.bf16.mxu0 0
    %7419 = vmatpush1.bf16.msra.mxu0 %v7274
    %7420 = vmatprep.subr.bf16.mxu0 0
    %7421 = vmatpush1.bf16.msra.mxu0 %v7275
    %7422 = vmatprep.subr.bf16.mxu0 0
    %7423 = vmatpush1.bf16.msra.mxu0 %v7276
    %7424 = vmatprep.subr.bf16.mxu0 0
    %7425 = vmatpush1.bf16.msra.mxu0 %v7277
    %7426 = vmatprep.subr.bf16.mxu0 0
    %7427 = vmatpush1.bf16.msra.mxu0 %v7278
    %7428 = vmatprep.subr.bf16.mxu0 0
    %7429 = vmatpush1.bf16.msra.mxu0 %v7279
    %7430 = vmatprep.subr.bf16.mxu0 0
    %7431 = vmatpush1.bf16.msra.mxu0 %v7280
    %7432 = vmatprep.subr.bf16.mxu0 0
    %7433 = vmatpush1.bf16.msra.mxu0 %v7281
    %7434 = vmatprep.subr.bf16.mxu0 0
    %7435 = vmatpush1.bf16.msra.mxu0 %v7282
    %7436 = vmatprep.subr.bf16.mxu0 0
    %7437 = vmatpush1.bf16.msra.mxu0 %v7283
    %7438 = vmatprep.subr.bf16.mxu0 0
    %7439 = vmatpush1.bf16.msra.mxu0 %v7284
    %7440 = vmatprep.subr.bf16.mxu0 0
    %7441 = vmatpush1.bf16.msra.mxu0 %v7285
    %7442 = vmatprep.subr.bf16.mxu0 0
    %7443 = vmatpush1.bf16.msra.mxu0 %v7286
    %7444 = vmatprep.subr.bf16.mxu0 0
    %7445 = vmatpush1.bf16.msra.mxu0 %v7287
    %7446 = vmatprep.subr.bf16.mxu0 0
    %7447 = vmatpush1.bf16.msra.mxu0 %v7288
    %7448 = vmatprep.subr.bf16.mxu0 0
    %7449 = vmatpush1.bf16.msra.mxu0 %v7289
    %7450 = vmatprep.mubr.bf16.mxu0 %v6945
    %7451 = vmatmul.mubr.bf16.gmra.mrb[0].mxu0 %v6944
    %v7452 = vpop.f32.mrb[0].mxu0
    %v7453 = vadd.f32 %v7413, %v7452
    %v7454 = vpop.f32.mrb[0].mxu0
    %v7455 = vpop.f32.mrb[0].mxu0
    %v7456 = vpop.f32.mrb[0].mxu0
    %7457 = vdwg.mxu0
    %v7458 = vtanh.pop %v7453
    %7459 = vst.msk [vmem:[#allocation20] sm:$0xf] %vm207, %v7458
    // Predicated region
    $region102: #{tpu_custom_call.1} parent=1 // pred_check
      _
    $region103: #{tpu_custom_call.1} parent=1 // pred_check_branch
      %7461 = sbr.rel (0) target = $region105
    $region104: #{tpu_custom_call.1} parent=1 // pred_region
      %s7463 = ssub.s32 64, 64
      %7464 = vsyncadd [#allocation4], %s7463
      %s7466 = sshll.u32 [#allocation20], 4
      %s7467 = int_to_ptr.vmem [resolvable:$true] %s7466
      %7469 = dma.vmem_to_hbm [thread:$0]  %s7467, 64, %s14, [#allocation4]
    $region105: #{tpu_custom_call.1} parent=1 // pred_fallthru
      _
    // Predicated region
    $region106: #{tpu_custom_call.1} parent=1 // pred_check
      _
    $region107: #{tpu_custom_call.1} parent=1 // pred_check_branch
      %7471 = sbr.rel (0) target = $region109
    $region108: #{tpu_custom_call.1} parent=1 // pred_region
      %s7473 = ssub.s32 64, 64
      %7474 = vsyncadd [#allocation22], %s7473
      %s7476 = sshll.u32 [#allocation21], 4
      %s7477 = int_to_ptr.vmem [resolvable:$true] %s7476
      %7479 = dma.vmem_to_hbm [thread:$0]  %s7477, 64, %s15, [#allocation22]
    $region109: #{tpu_custom_call.1} parent=1 // pred_fallthru
      _
    // Predicated region
    $region110: #{tpu_custom_call.1} parent=1 // pred_check
      _
    $region111: #{tpu_custom_call.1} parent=1 // pred_check_branch
      %7481 = sbr.rel (0) target = $region113
    $region112: #{tpu_custom_call.1} parent=1 // pred_region
      %s7483 = ssub.s32 64, 64
      %7484 = vsyncadd [#allocation22], %s7483
      %s7486 = sshll.u32 [#allocation23], 4
      %s7487 = int_to_ptr.vmem [resolvable:$true] %s7486
      %7489 = dma.vmem_to_hbm [thread:$0]  %s7487, 64, %s16, [#allocation22]
    $region113: #{tpu_custom_call.1} parent=1 // pred_fallthru
      _
    // Predicated region
    $region114: #{tpu_custom_call.1} parent=1 // pred_check
      _
    $region115: #{tpu_custom_call.1} parent=1 // pred_check_branch
      %7491 = sbr.rel (0) target = $region117
    $region116: #{tpu_custom_call.1} parent=1 // pred_region
      %7492 = dma.done [#allocation4], 64
    $region117: #{tpu_custom_call.1} parent=1 // pred_fallthru
      _
    // Predicated region
    $region118: #{tpu_custom_call.1} parent=1 // pred_check
      _
    $region119: #{tpu_custom_call.1} parent=1 // pred_check_branch
      %7494 = sbr.rel (0) target = $region121
    $region120: #{tpu_custom_call.1} parent=1 // pred_region
      %7495 = dma.done [#allocation22], 64
    $region121: #{tpu_custom_call.1} parent=1 // pred_fallthru
      _
    // Predicated region
    $region122: #{tpu_custom_call.1} parent=1 // pred_check
      _
    $region123: #{tpu_custom_call.1} parent=1 // pred_check_branch
      %7497 = sbr.rel (0) target = $region125
    $region124: #{tpu_custom_call.1} parent=1 // pred_region
      %7498 = dma.done [#allocation22], 64
    $region125: #{tpu_custom_call.1} parent=1 // pred_fallthru
      _
    %7499 = vsyncpa [#allocation3], 1
    %7500 = vsyncpa [#allocation6], 1
    %7501 = vsyncpa [#allocation9], 1
    %7502 = vsyncpa [#allocation12], 1
    %7503 = vsyncpa [#allocation15], 1
    %7504 = vsyncpa [#allocation18], 1
    %7505 = vsyncpa [#allocation4], 1
    %7506 = vsyncpa [#allocation22], 1

</llo_original>
